<compile_context>
chip_gen: v7x
topology: tpu7x:2x2x1
jax: 0.10.0
libtpu: 0.0.40
codegen_flags: <defaults>
</compile_context>

<pallas_src>
import functools

import jax
import jax.numpy as jnp
from jax import lax
from jax.experimental import pallas as pl
from jax.experimental.pallas import tpu as pltpu


def _round_up(x: int, m: int) -> int:
    return (x + m - 1) // m * m


def _conv1_grid_width(W: int) -> int:
    # conv1 is evaluated on an (H+2) x Wo1 grid: the 1-pixel ring that conv2 needs
    # as zero padding, plus a few extra columns so Wo1 is a multiple of 8 and every
    # in-kernel reshape keeps the sublane dimension tile-aligned.
    return _round_up(W + 2, 8)


def _vmem_bytes(shape, dtype) -> int:
    """Approximate VMEM footprint of one buffer (last two dims tile-padded)."""
    itemsize = jnp.dtype(dtype).itemsize
    row_mult = 8 * max(1, 4 // itemsize)          # (8,128) f32 tiles, (16,128) bf16
    rows = _round_up(shape[-2], row_mult)
    lanes = _round_up(shape[-1], 128)
    lead = 1
    for d in shape[:-2]:
        lead *= d
    return lead * rows * lanes * itemsize


def _resblock_kernel(x_ref, w1_ref, b1_ref, w2_ref, b2_ref, *rest,
                     H, W, has_skip, negative_slope):
    if has_skip:
        ws_ref, bs_ref, o_ref, h1_ref = rest
    else:
        o_ref, h1_ref = rest

    bn = x_ref.shape[0]
    Ci = x_ref.shape[-1]                  # input channels as laid out (true or padded)
    Co = o_ref.shape[-1]                  # output channels as laid out
    Ho1, Wo1 = H + 2, h1_ref.shape[2]     # conv1's ring-padded output grid
    M2 = bn * H * W

    def lrelu(v):
        return jnp.where(v > 0, v, negative_slope * v)

    def conv3x3(src_ref, w_ref, Ho, Wo):
        """3x3 conv as 9 tap matmuls accumulated in f32 (no im2col scratch).

        src_ref: (bn, >=Ho+2, >=Wo+2, K) VMEM ref, spatially zero-padded around the
                 (Ho, Wo) output grid.  w_ref: (9, K, Co) weights, taps ordered
                 t = kh*3 + kw.  Returns the (bn*Ho*Wo, Co) f32 result (no bias).
        """
        M, K = bn * Ho * Wo, src_ref.shape[-1]
        acc = None
        for t in range(9):
            dh, dw = t // 3, t % 3
            # Static window slice straight off the ref (no full-array SSA value).
            # dw = 1, 2 are sublane-offset windows; deriving them from the dw = 0
            # load with pltpu.roll (XLU) would shave the remaining relayout copies.
            lhs = src_ref[:, dh:dh + Ho, dw:dw + Wo, :].reshape(M, K)
            d = jnp.dot(lhs.astype(w_ref.dtype), w_ref[t],
                        preferred_element_type=jnp.float32)
            acc = d if acc is None else acc + d
        return acc

    # ---- conv1 + LeakyReLU, evaluated on the ring-padded (Ho1, Wo1) grid --------
    h1 = lrelu(conv3x3(x_ref, w1_ref, Ho1, Wo1) + b1_ref[...])
    h1 = h1.reshape(bn, Ho1, Wo1, Co)
    # Zero the ring / extra columns: the zero ring *is* conv2's padding.  Mask is
    # built from iota comparisons over dims 1 and 2 (no integer divide / modulo).
    ih = lax.broadcasted_iota(jnp.int32, (1, Ho1, 1, 1), 1)
    jw = lax.broadcasted_iota(jnp.int32, (1, 1, Wo1, 1), 2)
    keep = (ih >= 1) & (ih <= H) & (jw >= 1) & (jw <= W)
    # Stage in a named VMEM scratch (matmul dtype): conv2 reads taps from this ref.
    h1_ref[...] = jnp.where(keep, h1, 0.0).astype(h1_ref.dtype)

    # ---- conv2 + LeakyReLU on the true (H, W) grid -------------------------------
    h2 = lrelu(conv3x3(h1_ref, w2_ref, H, W) + b2_ref[...])

    # ---- skip path ----------------------------------------------------------------
    xc = x_ref[:, 2:2 + H, 2:2 + W, :].reshape(M2, Ci)
    if has_skip:
        skip = jnp.dot(xc.astype(ws_ref.dtype), ws_ref[...],
                       preferred_element_type=jnp.float32) + bs_ref[...]
    else:
        skip = xc                          # in_ch == out_ch: exact identity (f32)

    o_ref[...] = (h2 + skip).reshape(bn, H, W, Co).astype(o_ref.dtype)


def residual_block(x_nchw, w1, b1, w2, b2, ws=None, bs=None, *,
                   block_n=1, negative_slope=0.01,
                   matmul_dtype=jnp.bfloat16, pad_channels=None):
    """ResidualBlock forward.

    x_nchw : (N, Cin, H, W)
    w1, b1 : conv1 (Cout, Cin, 3, 3), (Cout,)
    w2, b2 : conv2 (Cout, Cout, 3, 3), (Cout,)
    ws, bs : optional 1x1 skip conv (Cout, Cin, 1, 1), (Cout,); None => identity
             skip (requires Cin == Cout, like the PyTorch module).
    block_n: images folded into one grid step.  Keep block_n <= N//2 on v7x so the
             "parallel" batch axis shards across both TensorCores; block_n=N is the
             right choice on single-TC chips (v5e/v6e) to amortise per-step overhead.
    matmul_dtype: MXU operand dtype (bf16 default, ~2-3x MXU throughput;
             accumulation / bias / LeakyReLU stay f32).  Use jnp.float32 for
             bit-tighter numerics.
    pad_channels: force (True) / disable (False) 128-lane channel padding.  By
             default channels are padded only when max(Cin, Cout) >= 64; small
             channel counts keep their true width so HBM DMA is not inflated by
             zero lanes.
    """
    N, Cin, H, W = x_nchw.shape
    Cout = w1.shape[0]
    assert w1.shape == (Cout, Cin, 3, 3), "conv1 must be 3x3"
    assert w2.shape == (Cout, Cout, 3, 3), "conv2 must be 3x3"
    has_skip = ws is not None
    if has_skip:
        assert ws.shape == (Cout, Cin, 1, 1) and bs.shape == (Cout,), "skip must be 1x1"
    else:
        assert Cin == Cout, "identity skip requires in_ch == out_ch"
    assert N % block_n == 0, "batch must be divisible by block_n"

    if pad_channels is None:
        pad_channels = max(Cin, Cout) >= 64
    Ci = _round_up(Cin, 128) if pad_channels else Cin
    Co = _round_up(Cout, 128) if pad_channels else Cout
    Wo1 = _conv1_grid_width(W)

    # Glue: NCHW -> NHWC, spatial pad (2 top/left; enough right/bottom for conv1's
    # ring-padded grid), optional channel pad.
    x_nhwc = jnp.transpose(x_nchw, (0, 2, 3, 1))
    x_p = jnp.pad(x_nhwc, ((0, 0), (2, 2), (2, Wo1 - W), (0, Ci - Cin)))

    def prep_conv3x3(w, cin, ci):
        wt = jnp.transpose(w, (2, 3, 1, 0))                           # (3,3,cin,Cout)
        wt = jnp.pad(wt, ((0, 0), (0, 0), (0, ci - cin), (0, Co - Cout)))
        return wt.reshape(9, ci, Co).astype(matmul_dtype)

    def prep_bias(b):
        return jnp.pad(b, (0, Co - Cout)).reshape(1, Co).astype(jnp.float32)

    args = [x_p, prep_conv3x3(w1, Cin, Ci), prep_bias(b1),
            prep_conv3x3(w2, Cout, Co), prep_bias(b2)]
    # Constant index_maps: weights/biases are DMA'd once and stay VMEM-resident.
    in_specs = [
        pl.BlockSpec((block_n, H + 4, Wo1 + 2, Ci), lambda n: (n, 0, 0, 0)),
        pl.BlockSpec((9, Ci, Co), lambda n: (0, 0, 0)),
        pl.BlockSpec((1, Co), lambda n: (0, 0)),
        pl.BlockSpec((9, Co, Co), lambda n: (0, 0, 0)),
        pl.BlockSpec((1, Co), lambda n: (0, 0)),
    ]
    if has_skip:
        ws_m = jnp.pad(jnp.transpose(ws[:, :, 0, 0], (1, 0)),
                       ((0, Ci - Cin), (0, Co - Cout))).astype(matmul_dtype)
        args += [ws_m, prep_bias(bs)]
        in_specs += [pl.BlockSpec((Ci, Co), lambda n: (0, 0)),
                     pl.BlockSpec((1, Co), lambda n: (0, 0))]

    # Scoped-VMEM budget from the real buffer sizes: double-buffered pipeline
    # blocks + resident weights/biases + h1 scratch + headroom for the f32 tap
    # accumulators the compiler keeps in VMEM.
    needed = (2 * _vmem_bytes((block_n, H + 4, Wo1 + 2, Ci), x_nchw.dtype)
              + 2 * _vmem_bytes((block_n, H, W, Co), x_nchw.dtype)
              + _vmem_bytes((block_n, H + 2, Wo1, Co), matmul_dtype)
              + 2 * (_vmem_bytes((9, Ci, Co), matmul_dtype)
                     + _vmem_bytes((9, Co, Co), matmul_dtype)
                     + 2 * _vmem_bytes((1, Co), jnp.float32))
              + 4 * _vmem_bytes((block_n * (H + 2) * Wo1, Co), jnp.float32))
    if has_skip:
        needed += 2 * (_vmem_bytes((Ci, Co), matmul_dtype)
                       + _vmem_bytes((1, Co), jnp.float32))
    vmem_limit = int(min(50 * 2**20, max(32 * 2**20, 2 * needed)))

    kernel = functools.partial(_resblock_kernel, H=H, W=W,
                               has_skip=has_skip, negative_slope=negative_slope)

    out = pl.pallas_call(
        kernel,
        out_shape=jax.ShapeDtypeStruct((N, H, W, Co), x_nchw.dtype),
        grid_spec=pltpu.PrefetchScalarGridSpec(
            num_scalar_prefetch=0,
            grid=(N // block_n,),
            in_specs=in_specs,
            out_specs=pl.BlockSpec((block_n, H, W, Co), lambda n: (n, 0, 0, 0)),
            scratch_shapes=[pltpu.VMEM((block_n, H + 2, Wo1, Co), matmul_dtype)],
        ),
        compiler_params=pltpu.CompilerParams(
            dimension_semantics=("parallel",),
            vmem_limit_bytes=vmem_limit),
    )(*args)

    # Glue: drop channel padding (no-op when unpadded), back to NCHW.
    return jnp.transpose(out[..., :Cout], (0, 3, 1, 2))


def _reference(x_nchw, w1, b1, w2, b2, ws=None, bs=None, negative_slope=0.01):
    """Plain-JAX reference (lax.conv) mirroring the PyTorch forward."""
    dn = ('NCHW', 'OIHW', 'NCHW')

    def conv(x, w, b, pad):
        y = lax.conv_general_dilated(x, w, (1, 1), [(pad, pad), (pad, pad)],
                                     dimension_numbers=dn)
        return y + b.reshape(1, -1, 1, 1)

    def lrelu(v):
        return jnp.where(v > 0, v, negative_slope * v)

    out = lrelu(conv(x_nchw, w1, b1, 1))
    out = lrelu(conv(out, w2, b2, 1))
    identity = x_nchw if ws is None else conv(x_nchw, ws, bs, 0)
    return out + identity


if __name__ == "__main__":
    # Case 1: in_ch != out_ch -> 1x1 skip-conv path; batch as a parallel grid axis
    # (2 grid steps -> shards across both v7x TensorCores).
    N, Cin, Cout, H, W = 2, 4, 8, 16, 16
    ks = jax.random.split(jax.random.PRNGKey(0), 7)
    x = jax.random.normal(ks[0], (N, Cin, H, W), jnp.float32)
    w1 = jax.random.normal(ks[1], (Cout, Cin, 3, 3), jnp.float32) * 0.1
    b1 = jax.random.normal(ks[2], (Cout,), jnp.float32) * 0.1
    w2 = jax.random.normal(ks[3], (Cout, Cout, 3, 3), jnp.float32) * 0.1
    b2 = jax.random.normal(ks[4], (Cout,), jnp.float32) * 0.1
    ws = jax.random.normal(ks[5], (Cout, Cin, 1, 1), jnp.float32) * 0.1
    bs = jax.random.normal(ks[6], (Cout,), jnp.float32) * 0.1
    ref = _reference(x, w1, b1, w2, b2, ws, bs)

    # 1a: default path -- true (unpadded) channels, bf16 MXU operands, f32 accum.
    out = jax.block_until_ready(residual_block(x, w1, b1, w2, b2, ws, bs))
    assert out.shape == (N, Cout, H, W)
    assert jnp.allclose(out, ref, rtol=5e-2, atol=3e-2), "bf16 skip-conv mismatch"

    # 1b: f32 MXU operands, tight tolerance.
    out32 = jax.block_until_ready(
        residual_block(x, w1, b1, w2, b2, ws, bs, matmul_dtype=jnp.float32))
    assert jnp.allclose(out32, ref, rtol=1e-4, atol=1e-4), "f32 skip-conv mismatch"

    # 1c: forced 128-lane channel padding (the lane-dense large-channel path).
    outp = jax.block_until_ready(
        residual_block(x, w1, b1, w2, b2, ws, bs, matmul_dtype=jnp.float32,
                       pad_channels=True))
    assert jnp.allclose(outp, ref, rtol=1e-4, atol=1e-4), "padded-channel mismatch"

    # Case 2: in_ch == out_ch -> identity skip (no 1x1 matmul / weight DMA), with
    # the whole batch folded into one grid step (block_n=N), the single-TensorCore
    # (v5e/v6e) configuration.
    C = 8
    ks2 = jax.random.split(jax.random.PRNGKey(1), 5)
    x2 = jax.random.normal(ks2[0], (N, C, H, W), jnp.float32)
    w1b = jax.random.normal(ks2[1], (C, C, 3, 3), jnp.float32) * 0.1
    b1b = jax.random.normal(ks2[2], (C,), jnp.float32) * 0.1
    w2b = jax.random.normal(ks2[3], (C, C, 3, 3), jnp.float32) * 0.1
    b2b = jax.random.normal(ks2[4], (C,), jnp.float32) * 0.1
    ref2 = _reference(x2, w1b, b1b, w2b, b2b)

    out2 = jax.block_until_ready(
        residual_block(x2, w1b, b1b, w2b, b2b, block_n=N, matmul_dtype=jnp.float32))
    assert out2.shape == (N, C, H, W)
    assert jnp.allclose(out2, ref2, rtol=1e-4, atol=1e-4), "identity-skip f32 mismatch"

    out2b = jax.block_until_ready(residual_block(x2, w1b, b1b, w2b, b2b))
    assert jnp.allclose(out2b, ref2, rtol=5e-2, atol=3e-2), "identity-skip bf16 mismatch"

    print("KERNEL_OK")
</pallas_src>

<mosaic_0001>
module attributes {stable_mosaic.version = 11 : i64} {
  func.func @_resblock_kernel(%arg0: i32, %arg1: memref<1x20x26x4xf32, #tpu.memory_space<vmem>>, %arg2: memref<9x4x8xbf16, #tpu.memory_space<vmem>>, %arg3: memref<1x8xf32, #tpu.memory_space<vmem>>, %arg4: memref<9x8x8xbf16, #tpu.memory_space<vmem>>, %arg5: memref<1x8xf32, #tpu.memory_space<vmem>>, %arg6: memref<4x8xbf16, #tpu.memory_space<vmem>>, %arg7: memref<1x8xf32, #tpu.memory_space<vmem>>, %arg8: memref<1x16x16x8xf32, #tpu.memory_space<vmem>>, %arg9: memref<1x18x24x8xbf16, #tpu.memory_space<vmem>>) attributes {dimension_semantics = [#tpu.dimension_semantics<parallel>], iteration_bounds = array<i64: 2>, scalar_prefetch = 0 : i64, scratch_operands = 1 : i64, tpu.core_type = #tpu.core_type<tc>, window_params = [{transform_indices = @transform_0, window_bounds = array<i64: 1, 20, 26, 4>}, {pipeline_mode = #tpu.pipeline_mode<synchronous>, transform_indices = @transform_1, window_bounds = array<i64: 9, 4, 8>}, {pipeline_mode = #tpu.pipeline_mode<synchronous>, transform_indices = @transform_2, window_bounds = array<i64: 1, 8>}, {pipeline_mode = #tpu.pipeline_mode<synchronous>, transform_indices = @transform_3, window_bounds = array<i64: 9, 8, 8>}, {pipeline_mode = #tpu.pipeline_mode<synchronous>, transform_indices = @transform_4, window_bounds = array<i64: 1, 8>}, {pipeline_mode = #tpu.pipeline_mode<synchronous>, transform_indices = @transform_5, window_bounds = array<i64: 4, 8>}, {pipeline_mode = #tpu.pipeline_mode<synchronous>, transform_indices = @transform_6, window_bounds = array<i64: 1, 8>}, {transform_indices = @transform_7, window_bounds = array<i64: 1, 16, 16, 8>}]} {
    %c0 = arith.constant 0 : index
    %c0_0 = arith.constant 0 : index
    %c0_1 = arith.constant 0 : index
    %c0_2 = arith.constant 0 : index
    %0 = vector.load %arg1[%c0, %c0_0, %c0_1, %c0_2] : memref<1x20x26x4xf32, #tpu.memory_space<vmem>>, vector<1x18x24x4xf32>
    %1 = vector.shape_cast %0 : vector<1x18x24x4xf32> to vector<432x4xf32>
    %2 = arith.truncf %1 : vector<432x4xf32> to vector<432x4xbf16>
    %c0_3 = arith.constant 0 : index
    %c0_4 = arith.constant 0 : index
    %c0_5 = arith.constant 0 : index
    %3 = vector.load %arg2[%c0_3, %c0_4, %c0_5] : memref<9x4x8xbf16, #tpu.memory_space<vmem>>, vector<1x4x8xbf16>
    %4 = vector.shape_cast %3 : vector<1x4x8xbf16> to vector<4x8xbf16>
    %cst = arith.constant dense<0.000000e+00> : vector<432x8xf32>
    %5 = tpu.matmul %2, %4, %cst {dimension_numbers = #tpu.dot_dimension_numbers<[1], [0], [0], [1], [0, 0, 1, 1], [], []>} : vector<432x4xbf16>, vector<4x8xbf16>, vector<432x8xf32> -> vector<432x8xf32>
    %c0_6 = arith.constant 0 : index
    %c0_7 = arith.constant 0 : index
    %c1 = arith.constant 1 : index
    %c0_8 = arith.constant 0 : index
    %6 = vector.load %arg1[%c0_6, %c0_7, %c1, %c0_8] : memref<1x20x26x4xf32, #tpu.memory_space<vmem>>, vector<1x18x24x4xf32>
    %7 = vector.shape_cast %6 : vector<1x18x24x4xf32> to vector<432x4xf32>
    %8 = arith.truncf %7 : vector<432x4xf32> to vector<432x4xbf16>
    %c1_9 = arith.constant 1 : index
    %c0_10 = arith.constant 0 : index
    %c0_11 = arith.constant 0 : index
    %9 = vector.load %arg2[%c1_9, %c0_10, %c0_11] : memref<9x4x8xbf16, #tpu.memory_space<vmem>>, vector<1x4x8xbf16>
    %10 = vector.shape_cast %9 : vector<1x4x8xbf16> to vector<4x8xbf16>
    %cst_12 = arith.constant dense<0.000000e+00> : vector<432x8xf32>
    %11 = tpu.matmul %8, %10, %cst_12 {dimension_numbers = #tpu.dot_dimension_numbers<[1], [0], [0], [1], [0, 0, 1, 1], [], []>} : vector<432x4xbf16>, vector<4x8xbf16>, vector<432x8xf32> -> vector<432x8xf32>
    %12 = arith.addf %5, %11 : vector<432x8xf32>
    %c0_13 = arith.constant 0 : index
    %c0_14 = arith.constant 0 : index
    %c2 = arith.constant 2 : index
    %c0_15 = arith.constant 0 : index
    %13 = vector.load %arg1[%c0_13, %c0_14, %c2, %c0_15] : memref<1x20x26x4xf32, #tpu.memory_space<vmem>>, vector<1x18x24x4xf32>
    %14 = vector.shape_cast %13 : vector<1x18x24x4xf32> to vector<432x4xf32>
    %15 = arith.truncf %14 : vector<432x4xf32> to vector<432x4xbf16>
    %c2_16 = arith.constant 2 : index
    %c0_17 = arith.constant 0 : index
    %c0_18 = arith.constant 0 : index
    %16 = vector.load %arg2[%c2_16, %c0_17, %c0_18] : memref<9x4x8xbf16, #tpu.memory_space<vmem>>, vector<1x4x8xbf16>
    %17 = vector.shape_cast %16 : vector<1x4x8xbf16> to vector<4x8xbf16>
    %cst_19 = arith.constant dense<0.000000e+00> : vector<432x8xf32>
    %18 = tpu.matmul %15, %17, %cst_19 {dimension_numbers = #tpu.dot_dimension_numbers<[1], [0], [0], [1], [0, 0, 1, 1], [], []>} : vector<432x4xbf16>, vector<4x8xbf16>, vector<432x8xf32> -> vector<432x8xf32>
    %19 = arith.addf %12, %18 : vector<432x8xf32>
    %c0_20 = arith.constant 0 : index
    %c1_21 = arith.constant 1 : index
    %c0_22 = arith.constant 0 : index
    %c0_23 = arith.constant 0 : index
    %20 = vector.load %arg1[%c0_20, %c1_21, %c0_22, %c0_23] : memref<1x20x26x4xf32, #tpu.memory_space<vmem>>, vector<1x18x24x4xf32>
    %21 = vector.shape_cast %20 : vector<1x18x24x4xf32> to vector<432x4xf32>
    %22 = arith.truncf %21 : vector<432x4xf32> to vector<432x4xbf16>
    %c3 = arith.constant 3 : index
    %c0_24 = arith.constant 0 : index
    %c0_25 = arith.constant 0 : index
    %23 = vector.load %arg2[%c3, %c0_24, %c0_25] : memref<9x4x8xbf16, #tpu.memory_space<vmem>>, vector<1x4x8xbf16>
    %24 = vector.shape_cast %23 : vector<1x4x8xbf16> to vector<4x8xbf16>
    %cst_26 = arith.constant dense<0.000000e+00> : vector<432x8xf32>
    %25 = tpu.matmul %22, %24, %cst_26 {dimension_numbers = #tpu.dot_dimension_numbers<[1], [0], [0], [1], [0, 0, 1, 1], [], []>} : vector<432x4xbf16>, vector<4x8xbf16>, vector<432x8xf32> -> vector<432x8xf32>
    %26 = arith.addf %19, %25 : vector<432x8xf32>
    %c0_27 = arith.constant 0 : index
    %c1_28 = arith.constant 1 : index
    %c1_29 = arith.constant 1 : index
    %c0_30 = arith.constant 0 : index
    %27 = vector.load %arg1[%c0_27, %c1_28, %c1_29, %c0_30] : memref<1x20x26x4xf32, #tpu.memory_space<vmem>>, vector<1x18x24x4xf32>
    %28 = vector.shape_cast %27 : vector<1x18x24x4xf32> to vector<432x4xf32>
    %29 = arith.truncf %28 : vector<432x4xf32> to vector<432x4xbf16>
    %c4 = arith.constant 4 : index
    %c0_31 = arith.constant 0 : index
    %c0_32 = arith.constant 0 : index
    %30 = vector.load %arg2[%c4, %c0_31, %c0_32] : memref<9x4x8xbf16, #tpu.memory_space<vmem>>, vector<1x4x8xbf16>
    %31 = vector.shape_cast %30 : vector<1x4x8xbf16> to vector<4x8xbf16>
    %cst_33 = arith.constant dense<0.000000e+00> : vector<432x8xf32>
    %32 = tpu.matmul %29, %31, %cst_33 {dimension_numbers = #tpu.dot_dimension_numbers<[1], [0], [0], [1], [0, 0, 1, 1], [], []>} : vector<432x4xbf16>, vector<4x8xbf16>, vector<432x8xf32> -> vector<432x8xf32>
    %33 = arith.addf %26, %32 : vector<432x8xf32>
    %c0_34 = arith.constant 0 : index
    %c1_35 = arith.constant 1 : index
    %c2_36 = arith.constant 2 : index
    %c0_37 = arith.constant 0 : index
    %34 = vector.load %arg1[%c0_34, %c1_35, %c2_36, %c0_37] : memref<1x20x26x4xf32, #tpu.memory_space<vmem>>, vector<1x18x24x4xf32>
    %35 = vector.shape_cast %34 : vector<1x18x24x4xf32> to vector<432x4xf32>
    %36 = arith.truncf %35 : vector<432x4xf32> to vector<432x4xbf16>
    %c5 = arith.constant 5 : index
    %c0_38 = arith.constant 0 : index
    %c0_39 = arith.constant 0 : index
    %37 = vector.load %arg2[%c5, %c0_38, %c0_39] : memref<9x4x8xbf16, #tpu.memory_space<vmem>>, vector<1x4x8xbf16>
    %38 = vector.shape_cast %37 : vector<1x4x8xbf16> to vector<4x8xbf16>
    %cst_40 = arith.constant dense<0.000000e+00> : vector<432x8xf32>
    %39 = tpu.matmul %36, %38, %cst_40 {dimension_numbers = #tpu.dot_dimension_numbers<[1], [0], [0], [1], [0, 0, 1, 1], [], []>} : vector<432x4xbf16>, vector<4x8xbf16>, vector<432x8xf32> -> vector<432x8xf32>
    %40 = arith.addf %33, %39 : vector<432x8xf32>
    %c0_41 = arith.constant 0 : index
    %c2_42 = arith.constant 2 : index
    %c0_43 = arith.constant 0 : index
    %c0_44 = arith.constant 0 : index
    %41 = vector.load %arg1[%c0_41, %c2_42, %c0_43, %c0_44] : memref<1x20x26x4xf32, #tpu.memory_space<vmem>>, vector<1x18x24x4xf32>
    %42 = vector.shape_cast %41 : vector<1x18x24x4xf32> to vector<432x4xf32>
    %43 = arith.truncf %42 : vector<432x4xf32> to vector<432x4xbf16>
    %c6 = arith.constant 6 : index
    %c0_45 = arith.constant 0 : index
    %c0_46 = arith.constant 0 : index
    %44 = vector.load %arg2[%c6, %c0_45, %c0_46] : memref<9x4x8xbf16, #tpu.memory_space<vmem>>, vector<1x4x8xbf16>
    %45 = vector.shape_cast %44 : vector<1x4x8xbf16> to vector<4x8xbf16>
    %cst_47 = arith.constant dense<0.000000e+00> : vector<432x8xf32>
    %46 = tpu.matmul %43, %45, %cst_47 {dimension_numbers = #tpu.dot_dimension_numbers<[1], [0], [0], [1], [0, 0, 1, 1], [], []>} : vector<432x4xbf16>, vector<4x8xbf16>, vector<432x8xf32> -> vector<432x8xf32>
    %47 = arith.addf %40, %46 : vector<432x8xf32>
    %c0_48 = arith.constant 0 : index
    %c2_49 = arith.constant 2 : index
    %c1_50 = arith.constant 1 : index
    %c0_51 = arith.constant 0 : index
    %48 = vector.load %arg1[%c0_48, %c2_49, %c1_50, %c0_51] : memref<1x20x26x4xf32, #tpu.memory_space<vmem>>, vector<1x18x24x4xf32>
    %49 = vector.shape_cast %48 : vector<1x18x24x4xf32> to vector<432x4xf32>
    %50 = arith.truncf %49 : vector<432x4xf32> to vector<432x4xbf16>
    %c7 = arith.constant 7 : index
    %c0_52 = arith.constant 0 : index
    %c0_53 = arith.constant 0 : index
    %51 = vector.load %arg2[%c7, %c0_52, %c0_53] : memref<9x4x8xbf16, #tpu.memory_space<vmem>>, vector<1x4x8xbf16>
    %52 = vector.shape_cast %51 : vector<1x4x8xbf16> to vector<4x8xbf16>
    %cst_54 = arith.constant dense<0.000000e+00> : vector<432x8xf32>
    %53 = tpu.matmul %50, %52, %cst_54 {dimension_numbers = #tpu.dot_dimension_numbers<[1], [0], [0], [1], [0, 0, 1, 1], [], []>} : vector<432x4xbf16>, vector<4x8xbf16>, vector<432x8xf32> -> vector<432x8xf32>
    %54 = arith.addf %47, %53 : vector<432x8xf32>
    %c0_55 = arith.constant 0 : index
    %c2_56 = arith.constant 2 : index
    %c2_57 = arith.constant 2 : index
    %c0_58 = arith.constant 0 : index
    %55 = vector.load %arg1[%c0_55, %c2_56, %c2_57, %c0_58] : memref<1x20x26x4xf32, #tpu.memory_space<vmem>>, vector<1x18x24x4xf32>
    %56 = vector.shape_cast %55 : vector<1x18x24x4xf32> to vector<432x4xf32>
    %57 = arith.truncf %56 : vector<432x4xf32> to vector<432x4xbf16>
    %c8 = arith.constant 8 : index
    %c0_59 = arith.constant 0 : index
    %c0_60 = arith.constant 0 : index
    %58 = vector.load %arg2[%c8, %c0_59, %c0_60] : memref<9x4x8xbf16, #tpu.memory_space<vmem>>, vector<1x4x8xbf16>
    %59 = vector.shape_cast %58 : vector<1x4x8xbf16> to vector<4x8xbf16>
    %cst_61 = arith.constant dense<0.000000e+00> : vector<432x8xf32>
    %60 = tpu.matmul %57, %59, %cst_61 {dimension_numbers = #tpu.dot_dimension_numbers<[1], [0], [0], [1], [0, 0, 1, 1], [], []>} : vector<432x4xbf16>, vector<4x8xbf16>, vector<432x8xf32> -> vector<432x8xf32>
    %61 = arith.addf %54, %60 : vector<432x8xf32>
    %c0_62 = arith.constant 0 : index
    %c0_63 = arith.constant 0 : index
    %62 = vector.load %arg3[%c0_62, %c0_63] : memref<1x8xf32, #tpu.memory_space<vmem>>, vector<1x8xf32>
    %63 = vector.broadcast %62 : vector<1x8xf32> to vector<432x8xf32>
    %64 = arith.addf %61, %63 : vector<432x8xf32>
    %cst_64 = arith.constant 0.000000e+00 : f32
    %65 = vector.broadcast %cst_64 : f32 to vector<432x8xf32>
    %66 = arith.cmpf ogt, %64, %65 : vector<432x8xf32>
    %cst_65 = arith.constant 0.00999999977 : f32
    %67 = vector.broadcast %cst_65 : f32 to vector<432x8xf32>
    %68 = arith.mulf %67, %64 : vector<432x8xf32>
    %69 = arith.select %66, %64, %68 : vector<432x8xi1>, vector<432x8xf32>
    %70 = vector.shape_cast %69 : vector<432x8xf32> to vector<1x18x24x8xf32>
    %71 = tpu.iota {dimensions = array<i32: 1>} : vector<1x18x1x1xi32>
    %72 = tpu.iota {dimensions = array<i32: 2>} : vector<1x1x24x1xi32>
    %c1_i32 = arith.constant 1 : i32
    %73 = vector.broadcast %c1_i32 : i32 to vector<1x18x1x1xi32>
    %74 = arith.cmpi sge, %71, %73 : vector<1x18x1x1xi32>
    %c16_i32 = arith.constant 16 : i32
    %75 = vector.broadcast %c16_i32 : i32 to vector<1x18x1x1xi32>
    %76 = arith.cmpi sle, %71, %75 : vector<1x18x1x1xi32>
    %77 = arith.andi %74, %76 : vector<1x18x1x1xi1>
    %c1_i32_66 = arith.constant 1 : i32
    %78 = vector.broadcast %c1_i32_66 : i32 to vector<1x1x24x1xi32>
    %79 = arith.cmpi sge, %72, %78 : vector<1x1x24x1xi32>
    %80 = vector.broadcast %77 : vector<1x18x1x1xi1> to vector<1x18x24x1xi1>
    %81 = vector.broadcast %79 : vector<1x1x24x1xi1> to vector<1x18x24x1xi1>
    %82 = arith.andi %80, %81 : vector<1x18x24x1xi1>
    %c16_i32_67 = arith.constant 16 : i32
    %83 = vector.broadcast %c16_i32_67 : i32 to vector<1x1x24x1xi32>
    %84 = arith.cmpi sle, %72, %83 : vector<1x1x24x1xi32>
    %85 = vector.broadcast %84 : vector<1x1x24x1xi1> to vector<1x18x24x1xi1>
    %86 = arith.andi %82, %85 : vector<1x18x24x1xi1>
    %cst_68 = arith.constant 0.000000e+00 : f32
    %87 = vector.shape_cast %86 : vector<1x18x24x1xi1> to vector<1x18x24x1xi1>
    %88 = vector.broadcast %87 : vector<1x18x24x1xi1> to vector<1x18x24x8xi1>
    %89 = vector.broadcast %cst_68 : f32 to vector<1x18x24x8xf32>
    %90 = arith.select %88, %70, %89 : vector<1x18x24x8xi1>, vector<1x18x24x8xf32>
    %91 = arith.truncf %90 : vector<1x18x24x8xf32> to vector<1x18x24x8xbf16>
    %c0_69 = arith.constant 0 : index
    %c0_70 = arith.constant 0 : index
    %c0_71 = arith.constant 0 : index
    %c0_72 = arith.constant 0 : index
    %92 = vector.load %arg9[%c0_69, %c0_70, %c0_71, %c0_72] : memref<1x18x24x8xbf16, #tpu.memory_space<vmem>>, vector<1x18x24x8xbf16>
    tpu.vector_store %arg9[%c0_69, %c0_70, %c0_71, %c0_72], %91 {strides = array<i32>} : memref<1x18x24x8xbf16, #tpu.memory_space<vmem>>, vector<1x18x24x8xbf16>,
    %c0_73 = arith.constant 0 : index
    %c0_74 = arith.constant 0 : index
    %c0_75 = arith.constant 0 : index
    %c0_76 = arith.constant 0 : index
    %93 = vector.load %arg9[%c0_73, %c0_74, %c0_75, %c0_76] : memref<1x18x24x8xbf16, #tpu.memory_space<vmem>>, vector<1x16x16x8xbf16>
    %94 = vector.shape_cast %93 : vector<1x16x16x8xbf16> to vector<256x8xbf16>
    %c0_77 = arith.constant 0 : index
    %c0_78 = arith.constant 0 : index
    %c0_79 = arith.constant 0 : index
    %95 = vector.load %arg4[%c0_77, %c0_78, %c0_79] : memref<9x8x8xbf16, #tpu.memory_space<vmem>>, vector<1x8x8xbf16>
    %96 = vector.shape_cast %95 : vector<1x8x8xbf16> to vector<8x8xbf16>
    %cst_80 = arith.constant dense<0.000000e+00> : vector<256x8xf32>
    %97 = tpu.matmul %94, %96, %cst_80 {dimension_numbers = #tpu.dot_dimension_numbers<[1], [0], [0], [1], [0, 0, 1, 1], [], []>} : vector<256x8xbf16>, vector<8x8xbf16>, vector<256x8xf32> -> vector<256x8xf32>
    %c0_81 = arith.constant 0 : index
    %c0_82 = arith.constant 0 : index
    %c1_83 = arith.constant 1 : index
    %c0_84 = arith.constant 0 : index
    %98 = vector.load %arg9[%c0_81, %c0_82, %c1_83, %c0_84] : memref<1x18x24x8xbf16, #tpu.memory_space<vmem>>, vector<1x16x16x8xbf16>
    %99 = vector.shape_cast %98 : vector<1x16x16x8xbf16> to vector<256x8xbf16>
    %c1_85 = arith.constant 1 : index
    %c0_86 = arith.constant 0 : index
    %c0_87 = arith.constant 0 : index
    %100 = vector.load %arg4[%c1_85, %c0_86, %c0_87] : memref<9x8x8xbf16, #tpu.memory_space<vmem>>, vector<1x8x8xbf16>
    %101 = vector.shape_cast %100 : vector<1x8x8xbf16> to vector<8x8xbf16>
    %cst_88 = arith.constant dense<0.000000e+00> : vector<256x8xf32>
    %102 = tpu.matmul %99, %101, %cst_88 {dimension_numbers = #tpu.dot_dimension_numbers<[1], [0], [0], [1], [0, 0, 1, 1], [], []>} : vector<256x8xbf16>, vector<8x8xbf16>, vector<256x8xf32> -> vector<256x8xf32>
    %103 = arith.addf %97, %102 : vector<256x8xf32>
    %c0_89 = arith.constant 0 : index
    %c0_90 = arith.constant 0 : index
    %c2_91 = arith.constant 2 : index
    %c0_92 = arith.constant 0 : index
    %104 = vector.load %arg9[%c0_89, %c0_90, %c2_91, %c0_92] : memref<1x18x24x8xbf16, #tpu.memory_space<vmem>>, vector<1x16x16x8xbf16>
    %105 = vector.shape_cast %104 : vector<1x16x16x8xbf16> to vector<256x8xbf16>
    %c2_93 = arith.constant 2 : index
    %c0_94 = arith.constant 0 : index
    %c0_95 = arith.constant 0 : index
    %106 = vector.load %arg4[%c2_93, %c0_94, %c0_95] : memref<9x8x8xbf16, #tpu.memory_space<vmem>>, vector<1x8x8xbf16>
    %107 = vector.shape_cast %106 : vector<1x8x8xbf16> to vector<8x8xbf16>
    %cst_96 = arith.constant dense<0.000000e+00> : vector<256x8xf32>
    %108 = tpu.matmul %105, %107, %cst_96 {dimension_numbers = #tpu.dot_dimension_numbers<[1], [0], [0], [1], [0, 0, 1, 1], [], []>} : vector<256x8xbf16>, vector<8x8xbf16>, vector<256x8xf32> -> vector<256x8xf32>
    %109 = arith.addf %103, %108 : vector<256x8xf32>
    %c0_97 = arith.constant 0 : index
    %c1_98 = arith.constant 1 : index
    %c0_99 = arith.constant 0 : index
    %c0_100 = arith.constant 0 : index
    %110 = vector.load %arg9[%c0_97, %c1_98, %c0_99, %c0_100] : memref<1x18x24x8xbf16, #tpu.memory_space<vmem>>, vector<1x16x16x8xbf16>
    %111 = vector.shape_cast %110 : vector<1x16x16x8xbf16> to vector<256x8xbf16>
    %c3_101 = arith.constant 3 : index
    %c0_102 = arith.constant 0 : index
    %c0_103 = arith.constant 0 : index
    %112 = vector.load %arg4[%c3_101, %c0_102, %c0_103] : memref<9x8x8xbf16, #tpu.memory_space<vmem>>, vector<1x8x8xbf16>
    %113 = vector.shape_cast %112 : vector<1x8x8xbf16> to vector<8x8xbf16>
    %cst_104 = arith.constant dense<0.000000e+00> : vector<256x8xf32>
    %114 = tpu.matmul %111, %113, %cst_104 {dimension_numbers = #tpu.dot_dimension_numbers<[1], [0], [0], [1], [0, 0, 1, 1], [], []>} : vector<256x8xbf16>, vector<8x8xbf16>, vector<256x8xf32> -> vector<256x8xf32>
    %115 = arith.addf %109, %114 : vector<256x8xf32>
    %c0_105 = arith.constant 0 : index
    %c1_106 = arith.constant 1 : index
    %c1_107 = arith.constant 1 : index
    %c0_108 = arith.constant 0 : index
    %116 = vector.load %arg9[%c0_105, %c1_106, %c1_107, %c0_108] : memref<1x18x24x8xbf16, #tpu.memory_space<vmem>>, vector<1x16x16x8xbf16>
    %117 = vector.shape_cast %116 : vector<1x16x16x8xbf16> to vector<256x8xbf16>
    %c4_109 = arith.constant 4 : index
    %c0_110 = arith.constant 0 : index
    %c0_111 = arith.constant 0 : index
    %118 = vector.load %arg4[%c4_109, %c0_110, %c0_111] : memref<9x8x8xbf16, #tpu.memory_space<vmem>>, vector<1x8x8xbf16>
    %119 = vector.shape_cast %118 : vector<1x8x8xbf16> to vector<8x8xbf16>
    %cst_112 = arith.constant dense<0.000000e+00> : vector<256x8xf32>
    %120 = tpu.matmul %117, %119, %cst_112 {dimension_numbers = #tpu.dot_dimension_numbers<[1], [0], [0], [1], [0, 0, 1, 1], [], []>} : vector<256x8xbf16>, vector<8x8xbf16>, vector<256x8xf32> -> vector<256x8xf32>
    %121 = arith.addf %115, %120 : vector<256x8xf32>
    %c0_113 = arith.constant 0 : index
    %c1_114 = arith.constant 1 : index
    %c2_115 = arith.constant 2 : index
    %c0_116 = arith.constant 0 : index
    %122 = vector.load %arg9[%c0_113, %c1_114, %c2_115, %c0_116] : memref<1x18x24x8xbf16, #tpu.memory_space<vmem>>, vector<1x16x16x8xbf16>
    %123 = vector.shape_cast %122 : vector<1x16x16x8xbf16> to vector<256x8xbf16>
    %c5_117 = arith.constant 5 : index
    %c0_118 = arith.constant 0 : index
    %c0_119 = arith.constant 0 : index
    %124 = vector.load %arg4[%c5_117, %c0_118, %c0_119] : memref<9x8x8xbf16, #tpu.memory_space<vmem>>, vector<1x8x8xbf16>
    %125 = vector.shape_cast %124 : vector<1x8x8xbf16> to vector<8x8xbf16>
    %cst_120 = arith.constant dense<0.000000e+00> : vector<256x8xf32>
    %126 = tpu.matmul %123, %125, %cst_120 {dimension_numbers = #tpu.dot_dimension_numbers<[1], [0], [0], [1], [0, 0, 1, 1], [], []>} : vector<256x8xbf16>, vector<8x8xbf16>, vector<256x8xf32> -> vector<256x8xf32>
    %127 = arith.addf %121, %126 : vector<256x8xf32>
    %c0_121 = arith.constant 0 : index
    %c2_122 = arith.constant 2 : index
    %c0_123 = arith.constant 0 : index
    %c0_124 = arith.constant 0 : index
    %128 = vector.load %arg9[%c0_121, %c2_122, %c0_123, %c0_124] : memref<1x18x24x8xbf16, #tpu.memory_space<vmem>>, vector<1x16x16x8xbf16>
    %129 = vector.shape_cast %128 : vector<1x16x16x8xbf16> to vector<256x8xbf16>
    %c6_125 = arith.constant 6 : index
    %c0_126 = arith.constant 0 : index
    %c0_127 = arith.constant 0 : index
    %130 = vector.load %arg4[%c6_125, %c0_126, %c0_127] : memref<9x8x8xbf16, #tpu.memory_space<vmem>>, vector<1x8x8xbf16>
    %131 = vector.shape_cast %130 : vector<1x8x8xbf16> to vector<8x8xbf16>
    %cst_128 = arith.constant dense<0.000000e+00> : vector<256x8xf32>
    %132 = tpu.matmul %129, %131, %cst_128 {dimension_numbers = #tpu.dot_dimension_numbers<[1], [0], [0], [1], [0, 0, 1, 1], [], []>} : vector<256x8xbf16>, vector<8x8xbf16>, vector<256x8xf32> -> vector<256x8xf32>
    %133 = arith.addf %127, %132 : vector<256x8xf32>
    %c0_129 = arith.constant 0 : index
    %c2_130 = arith.constant 2 : index
    %c1_131 = arith.constant 1 : index
    %c0_132 = arith.constant 0 : index
    %134 = vector.load %arg9[%c0_129, %c2_130, %c1_131, %c0_132] : memref<1x18x24x8xbf16, #tpu.memory_space<vmem>>, vector<1x16x16x8xbf16>
    %135 = vector.shape_cast %134 : vector<1x16x16x8xbf16> to vector<256x8xbf16>
    %c7_133 = arith.constant 7 : index
    %c0_134 = arith.constant 0 : index
    %c0_135 = arith.constant 0 : index
    %136 = vector.load %arg4[%c7_133, %c0_134, %c0_135] : memref<9x8x8xbf16, #tpu.memory_space<vmem>>, vector<1x8x8xbf16>
    %137 = vector.shape_cast %136 : vector<1x8x8xbf16> to vector<8x8xbf16>
    %cst_136 = arith.constant dense<0.000000e+00> : vector<256x8xf32>
    %138 = tpu.matmul %135, %137, %cst_136 {dimension_numbers = #tpu.dot_dimension_numbers<[1], [0], [0], [1], [0, 0, 1, 1], [], []>} : vector<256x8xbf16>, vector<8x8xbf16>, vector<256x8xf32> -> vector<256x8xf32>
    %139 = arith.addf %133, %138 : vector<256x8xf32>
    %c0_137 = arith.constant 0 : index
    %c2_138 = arith.constant 2 : index
    %c2_139 = arith.constant 2 : index
    %c0_140 = arith.constant 0 : index
    %140 = vector.load %arg9[%c0_137, %c2_138, %c2_139, %c0_140] : memref<1x18x24x8xbf16, #tpu.memory_space<vmem>>, vector<1x16x16x8xbf16>
    %141 = vector.shape_cast %140 : vector<1x16x16x8xbf16> to vector<256x8xbf16>
    %c8_141 = arith.constant 8 : index
    %c0_142 = arith.constant 0 : index
    %c0_143 = arith.constant 0 : index
    %142 = vector.load %arg4[%c8_141, %c0_142, %c0_143] : memref<9x8x8xbf16, #tpu.memory_space<vmem>>, vector<1x8x8xbf16>
    %143 = vector.shape_cast %142 : vector<1x8x8xbf16> to vector<8x8xbf16>
    %cst_144 = arith.constant dense<0.000000e+00> : vector<256x8xf32>
    %144 = tpu.matmul %141, %143, %cst_144 {dimension_numbers = #tpu.dot_dimension_numbers<[1], [0], [0], [1], [0, 0, 1, 1], [], []>} : vector<256x8xbf16>, vector<8x8xbf16>, vector<256x8xf32> -> vector<256x8xf32>
    %145 = arith.addf %139, %144 : vector<256x8xf32>
    %c0_145 = arith.constant 0 : index
    %c0_146 = arith.constant 0 : index
    %146 = vector.load %arg5[%c0_145, %c0_146] : memref<1x8xf32, #tpu.memory_space<vmem>>, vector<1x8xf32>
    %147 = vector.broadcast %146 : vector<1x8xf32> to vector<256x8xf32>
    %148 = arith.addf %145, %147 : vector<256x8xf32>
    %cst_147 = arith.constant 0.000000e+00 : f32
    %149 = vector.broadcast %cst_147 : f32 to vector<256x8xf32>
    %150 = arith.cmpf ogt, %148, %149 : vector<256x8xf32>
    %cst_148 = arith.constant 0.00999999977 : f32
    %151 = vector.broadcast %cst_148 : f32 to vector<256x8xf32>
    %152 = arith.mulf %151, %148 : vector<256x8xf32>
    %153 = arith.select %150, %148, %152 : vector<256x8xi1>, vector<256x8xf32>
    %c0_149 = arith.constant 0 : index
    %c2_150 = arith.constant 2 : index
    %c2_151 = arith.constant 2 : index
    %c0_152 = arith.constant 0 : index
    %154 = vector.load %arg1[%c0_149, %c2_150, %c2_151, %c0_152] : memref<1x20x26x4xf32, #tpu.memory_space<vmem>>, vector<1x16x16x4xf32>
    %155 = vector.shape_cast %154 : vector<1x16x16x4xf32> to vector<256x4xf32>
    %156 = arith.truncf %155 : vector<256x4xf32> to vector<256x4xbf16>
    %c0_153 = arith.constant 0 : index
    %c0_154 = arith.constant 0 : index
    %157 = vector.load %arg6[%c0_153, %c0_154] : memref<4x8xbf16, #tpu.memory_space<vmem>>, vector<4x8xbf16>
    %cst_155 = arith.constant dense<0.000000e+00> : vector<256x8xf32>
    %158 = tpu.matmul %156, %157, %cst_155 {dimension_numbers = #tpu.dot_dimension_numbers<[1], [0], [0], [1], [0, 0, 1, 1], [], []>} : vector<256x4xbf16>, vector<4x8xbf16>, vector<256x8xf32> -> vector<256x8xf32>
    %c0_156 = arith.constant 0 : index
    %c0_157 = arith.constant 0 : index
    %159 = vector.load %arg7[%c0_156, %c0_157] : memref<1x8xf32, #tpu.memory_space<vmem>>, vector<1x8xf32>
    %160 = vector.broadcast %159 : vector<1x8xf32> to vector<256x8xf32>
    %161 = arith.addf %158, %160 : vector<256x8xf32>
    %162 = arith.addf %153, %161 : vector<256x8xf32>
    %163 = vector.shape_cast %162 : vector<256x8xf32> to vector<1x16x16x8xf32>
    %c0_158 = arith.constant 0 : index
    %c0_159 = arith.constant 0 : index
    %c0_160 = arith.constant 0 : index
    %c0_161 = arith.constant 0 : index
    %164 = vector.load %arg8[%c0_158, %c0_159, %c0_160, %c0_161] : memref<1x16x16x8xf32, #tpu.memory_space<vmem>>, vector<1x16x16x8xf32>
    tpu.vector_store %arg8[%c0_158, %c0_159, %c0_160, %c0_161], %163 {strides = array<i32>} : memref<1x16x16x8xf32, #tpu.memory_space<vmem>>, vector<1x16x16x8xf32>,
    return
  }
  func.func @transform_0(%arg0: i32) -> (i32, i32, i32, i32) {
    %c0_i32 = arith.constant 0 : i32
    %c0_i32_0 = arith.constant 0 : i32
    %c0_i32_1 = arith.constant 0 : i32
    %c0_i32_2 = arith.constant 0 : i32
    return %arg0, %c0_i32, %c0_i32_0, %c0_i32_1 : i32, i32, i32, i32
  }
  func.func @transform_1(%arg0: i32) -> (i32, i32, i32) {
    %c0_i32 = arith.constant 0 : i32
    %c0_i32_0 = arith.constant 0 : i32
    %c0_i32_1 = arith.constant 0 : i32
    %c0_i32_2 = arith.constant 0 : i32
    return %c0_i32, %c0_i32_0, %c0_i32_1 : i32, i32, i32
  }
  func.func @transform_2(%arg0: i32) -> (i32, i32) {
    %c0_i32 = arith.constant 0 : i32
    %c0_i32_0 = arith.constant 0 : i32
    %c0_i32_1 = arith.constant 0 : i32
    return %c0_i32, %c0_i32_0 : i32, i32
  }
  func.func @transform_3(%arg0: i32) -> (i32, i32, i32) {
    %c0_i32 = arith.constant 0 : i32
    %c0_i32_0 = arith.constant 0 : i32
    %c0_i32_1 = arith.constant 0 : i32
    %c0_i32_2 = arith.constant 0 : i32
    return %c0_i32, %c0_i32_0, %c0_i32_1 : i32, i32, i32
  }
  func.func @transform_4(%arg0: i32) -> (i32, i32) {
    %c0_i32 = arith.constant 0 : i32
    %c0_i32_0 = arith.constant 0 : i32
    %c0_i32_1 = arith.constant 0 : i32
    return %c0_i32, %c0_i32_0 : i32, i32
  }
  func.func @transform_5(%arg0: i32) -> (i32, i32) {
    %c0_i32 = arith.constant 0 : i32
    %c0_i32_0 = arith.constant 0 : i32
    %c0_i32_1 = arith.constant 0 : i32
    return %c0_i32, %c0_i32_0 : i32, i32
  }
  func.func @transform_6(%arg0: i32) -> (i32, i32) {
    %c0_i32 = arith.constant 0 : i32
    %c0_i32_0 = arith.constant 0 : i32
    %c0_i32_1 = arith.constant 0 : i32
    return %c0_i32, %c0_i32_0 : i32, i32
  }
  func.func @transform_7(%arg0: i32) -> (i32, i32, i32, i32) {
    %c0_i32 = arith.constant 0 : i32
    %c0_i32_0 = arith.constant 0 : i32
    %c0_i32_1 = arith.constant 0 : i32
    %c0_i32_2 = arith.constant 0 : i32
    return %arg0, %c0_i32, %c0_i32_0, %c0_i32_1 : i32, i32, i32, i32
  }
}

</mosaic_0001>

<llo_original>
// kernel: tpu_custom_call.1
$region0: #{tpu_custom_call.1}
  #allocation0 [shape = 'u32[]', space=smem, size = 0x4, offset = 0x4, fixed_abs, tag = 'smem constant byte address 0x4 - core index']
  #allocation1 [shape = 'u32[144,128]{1,0:T(1,128)}', space=vmem, size = 0x12000, scoped, tag = 'internal scratch']
  #allocation2 [shape = 'bf16[1,18,24,8]{3,2,1,0:T(8,128)(2,1)}', space=vmem, size = 0x1b000, scoped, tag = 'scratch operand']
  %s0 = inlined_call_operand.vmem [shape: f32[2,20,26,4], index: 0, kind: input, shape index: {}]
  %s1 = inlined_call_operand.vmem [shape: bf16[9,4,8], index: 1, kind: input, shape index: {}]
  %s2 = inlined_call_operand.vmem [shape: f32[1,8], index: 2, kind: input, shape index: {}]
  %s3 = inlined_call_operand.vmem [shape: bf16[9,8,8], index: 3, kind: input, shape index: {}]
  %s4 = inlined_call_operand.vmem [shape: f32[1,8], index: 4, kind: input, shape index: {}]
  %s5 = inlined_call_operand.vmem [shape: bf16[4,8], index: 5, kind: input, shape index: {}]
  %s6 = inlined_call_operand.vmem [shape: f32[1,8], index: 6, kind: input, shape index: {}]
  %s7 = inlined_call_operand.vmem [shape: f32[2,16,16,8], index: 7, kind: output, shape index: {}]
  %s8 = sld [smem:[#allocation0]]
  $region61: #{tpu_custom_call.1} parent=0
    _
  %s10 = ssub.s32 1, %s8
  %s11 = scalar_select 0, %s10, %s8
  loop: start=0, step=1, limit=4
  $region2: #{tpu_custom_call.1} parent=0 // loop_pre_header
    _
  $region3: #{tpu_custom_call.1} parent=0 // loop_header
    %s13 = sphi 0, %s17
    %p14 = scmp.ge.s32.totalorder %s13, 4
    %s23 = sphi 0, %s25
    %s26 = sphi 0, %s23
    %s27 = sphi 0, %s26
    %s43 = sphi 0, %s27
    %s47 = sphi 0, %s47
    %s49 = sphi 0, %s47
    %s50 = sphi 0, %s49
    %s64 = sphi 0, %s50
    %s68 = sphi 0, %s68
    %s70 = sphi 0, %s68
    %s71 = sphi 0, %s70
    %s85 = sphi 0, %s71
    %s89 = sphi 0, %s89
    %s91 = sphi 0, %s89
    %s92 = sphi 0, %s91
    %s106 = sphi 0, %s92
    %s110 = sphi 0, %s110
    %s112 = sphi 0, %s110
    %s113 = sphi 0, %s112
    %s127 = sphi 0, %s113
    %s131 = sphi 0, %s131
    %s133 = sphi 0, %s131
    %s134 = sphi 0, %s133
    %s148 = sphi 0, %s134
    %s152 = sphi 0, %s152
    %s154 = sphi 0, %s152
    %s155 = sphi 0, %s154
    %s169 = sphi 0, %s155
    %s175 = sphi 0, %s177
    %s178 = sphi 0, %s175
    %s179 = sphi 0, %s178
    %s195 = sphi 0, %s179
  $region4: #{tpu_custom_call.1} parent=0 // loop_header_branch
    %16 = sbr.rel (%p14) target = $region8
  $region5: #{tpu_custom_call.1} parent=0 // loop_body
    %s18 = ssub.s32 %s13, 1
    %s19 = ssub.s32 %s13, 2
    %s20 = sadd.s32 %s13, 1
    %s21 = ssub.s32 %s13, %s20
    %p22 = scmp.eq.s32.totalorder %s21, 0
    %s24 = sadd.s32 %s23, 1
    %s25 = scalar_select %p22, %s23, %s24
    %p28 = pneg %p22
    %p29 = scmp.eq.s32.totalorder %s13, 1
    %p30 = por %p28, %p29
    %p31 = scmp.ne.s32.totalorder %s23, %s26
    %p32 = scmp.eq.s32.totalorder %s13, 0
    %p33 = por %p31, %p32
    %p34 = scmp.ne.s32.totalorder %s23, %s26
    %p35 = scmp.eq.s32.totalorder %s18, 1
    %p36 = por %p34, %p35
    %p37 = scmp.ne.s32.totalorder %s26, %s27
    %p38 = scmp.eq.s32.totalorder %s18, 0
    %p39 = por %p37, %p38
    %p40 = scmp.ne.s32.totalorder %s26, %s27
    %p41 = scmp.eq.s32.totalorder %s19, 1
    %p42 = por %p40, %p41
    %p44 = scmp.ne.s32.totalorder %s27, %s43
    %p45 = scmp.eq.s32.totalorder %s19, 0
    %p46 = por %p44, %p45
    %s48 = sadd.s32 %s47, 1
    %p51 = scmp.eq.s32.totalorder %s13, 1
    %p52 = scmp.ne.s32.totalorder %s47, %s49
    %p53 = scmp.eq.s32.totalorder %s13, 0
    %p54 = por %p52, %p53
    %p55 = scmp.ne.s32.totalorder %s47, %s49
    %p56 = scmp.eq.s32.totalorder %s18, 1
    %p57 = por %p55, %p56
    %p58 = scmp.ne.s32.totalorder %s49, %s50
    %p59 = scmp.eq.s32.totalorder %s18, 0
    %p60 = por %p58, %p59
    %p61 = scmp.ne.s32.totalorder %s49, %s50
    %p62 = scmp.eq.s32.totalorder %s19, 1
    %p63 = por %p61, %p62
    %p65 = scmp.ne.s32.totalorder %s50, %s64
    %p66 = scmp.eq.s32.totalorder %s19, 0
    %p67 = por %p65, %p66
    %s69 = sadd.s32 %s68, 1
    %p72 = scmp.eq.s32.totalorder %s13, 1
    %p73 = scmp.ne.s32.totalorder %s68, %s70
    %p74 = scmp.eq.s32.totalorder %s13, 0
    %p75 = por %p73, %p74
    %p76 = scmp.ne.s32.totalorder %s68, %s70
    %p77 = scmp.eq.s32.totalorder %s18, 1
    %p78 = por %p76, %p77
    %p79 = scmp.ne.s32.totalorder %s70, %s71
    %p80 = scmp.eq.s32.totalorder %s18, 0
    %p81 = por %p79, %p80
    %p82 = scmp.ne.s32.totalorder %s70, %s71
    %p83 = scmp.eq.s32.totalorder %s19, 1
    %p84 = por %p82, %p83
    %p86 = scmp.ne.s32.totalorder %s71, %s85
    %p87 = scmp.eq.s32.totalorder %s19, 0
    %p88 = por %p86, %p87
    %s90 = sadd.s32 %s89, 1
    %p93 = scmp.eq.s32.totalorder %s13, 1
    %p94 = scmp.ne.s32.totalorder %s89, %s91
    %p95 = scmp.eq.s32.totalorder %s13, 0
    %p96 = por %p94, %p95
    %p97 = scmp.ne.s32.totalorder %s89, %s91
    %p98 = scmp.eq.s32.totalorder %s18, 1
    %p99 = por %p97, %p98
    %p100 = scmp.ne.s32.totalorder %s91, %s92
    %p101 = scmp.eq.s32.totalorder %s18, 0
    %p102 = por %p100, %p101
    %p103 = scmp.ne.s32.totalorder %s91, %s92
    %p104 = scmp.eq.s32.totalorder %s19, 1
    %p105 = por %p103, %p104
    %p107 = scmp.ne.s32.totalorder %s92, %s106
    %p108 = scmp.eq.s32.totalorder %s19, 0
    %p109 = por %p107, %p108
    %s111 = sadd.s32 %s110, 1
    %p114 = scmp.eq.s32.totalorder %s13, 1
    %p115 = scmp.ne.s32.totalorder %s110, %s112
    %p116 = scmp.eq.s32.totalorder %s13, 0
    %p117 = por %p115, %p116
    %p118 = scmp.ne.s32.totalorder %s110, %s112
    %p119 = scmp.eq.s32.totalorder %s18, 1
    %p120 = por %p118, %p119
    %p121 = scmp.ne.s32.totalorder %s112, %s113
    %p122 = scmp.eq.s32.totalorder %s18, 0
    %p123 = por %p121, %p122
    %p124 = scmp.ne.s32.totalorder %s112, %s113
    %p125 = scmp.eq.s32.totalorder %s19, 1
    %p126 = por %p124, %p125
    %p128 = scmp.ne.s32.totalorder %s113, %s127
    %p129 = scmp.eq.s32.totalorder %s19, 0
    %p130 = por %p128, %p129
    %s132 = sadd.s32 %s131, 1
    %p135 = scmp.eq.s32.totalorder %s13, 1
    %p136 = scmp.ne.s32.totalorder %s131, %s133
    %p137 = scmp.eq.s32.totalorder %s13, 0
    %p138 = por %p136, %p137
    %p139 = scmp.ne.s32.totalorder %s131, %s133
    %p140 = scmp.eq.s32.totalorder %s18, 1
    %p141 = por %p139, %p140
    %p142 = scmp.ne.s32.totalorder %s133, %s134
    %p143 = scmp.eq.s32.totalorder %s18, 0
    %p144 = por %p142, %p143
    %p145 = scmp.ne.s32.totalorder %s133, %s134
    %p146 = scmp.eq.s32.totalorder %s19, 1
    %p147 = por %p145, %p146
    %p149 = scmp.ne.s32.totalorder %s134, %s148
    %p150 = scmp.eq.s32.totalorder %s19, 0
    %p151 = por %p149, %p150
    %s153 = sadd.s32 %s152, 1
    %p156 = scmp.eq.s32.totalorder %s13, 1
    %p157 = scmp.ne.s32.totalorder %s152, %s154
    %p158 = scmp.eq.s32.totalorder %s13, 0
    %p159 = por %p157, %p158
    %p160 = scmp.ne.s32.totalorder %s152, %s154
    %p161 = scmp.eq.s32.totalorder %s18, 1
    %p162 = por %p160, %p161
    %p163 = scmp.ne.s32.totalorder %s154, %s155
    %p164 = scmp.eq.s32.totalorder %s18, 0
    %p165 = por %p163, %p164
    %p166 = scmp.ne.s32.totalorder %s154, %s155
    %p167 = scmp.eq.s32.totalorder %s19, 1
    %p168 = por %p166, %p167
    %p170 = scmp.ne.s32.totalorder %s155, %s169
    %p171 = scmp.eq.s32.totalorder %s19, 0
    %p172 = por %p170, %p171
    %s173 = ssub.s32 %s13, %s20
    %p174 = scmp.eq.s32.totalorder %s173, 0
    %s176 = sadd.s32 %s175, 1
    %s177 = scalar_select %p174, %s175, %s176
    %p180 = pneg %p174
    %p181 = scmp.eq.s32.totalorder %s13, 1
    %p182 = por %p180, %p181
    %p183 = scmp.ne.s32.totalorder %s175, %s178
    %p184 = scmp.eq.s32.totalorder %s13, 0
    %p185 = por %p183, %p184
    %p186 = scmp.ne.s32.totalorder %s175, %s178
    %p187 = scmp.eq.s32.totalorder %s18, 1
    %p188 = por %p186, %p187
    %p189 = scmp.ne.s32.totalorder %s178, %s179
    %p190 = scmp.eq.s32.totalorder %s18, 0
    %p191 = por %p189, %p190
    %p192 = scmp.ne.s32.totalorder %s178, %s179
    %p193 = scmp.eq.s32.totalorder %s19, 1
    %p194 = por %p192, %p193
    %p196 = scmp.ne.s32.totalorder %s179, %s195
    %p197 = scmp.eq.s32.totalorder %s19, 0
    %p198 = por %p196, %p197
    %p199 = scmp.le.s32.totalorder 1, %s13
    %p200 = scmp.lt.s32.totalorder %s13, 3
    %p201 = pnand %p199, %p200
    %p202 = pneg %p201
    // Predicated region
    $region9: #{tpu_custom_call.1} parent=5 // pred_check
      _
    $region10: #{tpu_custom_call.1} parent=5 // pred_check_branch
      %204 = sbr.rel (%p201) target = $region12
    $region11: #{tpu_custom_call.1} parent=5 // pred_region
      %s205 = ssub.s32 %s13, 1
      // Predicated region
      $region13: #{tpu_custom_call.1} parent=11 // pred_check
        %p206 = pneg %p60
      $region14: #{tpu_custom_call.1} parent=11 // pred_check_branch
        %208 = sbr.rel (%p206) target = $region16
      $region15: #{tpu_custom_call.1} parent=11 // pred_region
        _
      $region16: #{tpu_custom_call.1} parent=11 // pred_fallthru
        _
      // Predicated region
      $region17: #{tpu_custom_call.1} parent=11 // pred_check
        %p209 = pneg %p81
      $region18: #{tpu_custom_call.1} parent=11 // pred_check_branch
        %211 = sbr.rel (%p209) target = $region20
      $region19: #{tpu_custom_call.1} parent=11 // pred_region
        _
      $region20: #{tpu_custom_call.1} parent=11 // pred_fallthru
        _
      // Predicated region
      $region21: #{tpu_custom_call.1} parent=11 // pred_check
        %p212 = pneg %p102
      $region22: #{tpu_custom_call.1} parent=11 // pred_check_branch
        %214 = sbr.rel (%p212) target = $region24
      $region23: #{tpu_custom_call.1} parent=11 // pred_region
        _
      $region24: #{tpu_custom_call.1} parent=11 // pred_fallthru
        _
      // Predicated region
      $region25: #{tpu_custom_call.1} parent=11 // pred_check
        %p215 = pneg %p123
      $region26: #{tpu_custom_call.1} parent=11 // pred_check_branch
        %217 = sbr.rel (%p215) target = $region28
      $region27: #{tpu_custom_call.1} parent=11 // pred_region
        _
      $region28: #{tpu_custom_call.1} parent=11 // pred_fallthru
        _
      // Predicated region
      $region29: #{tpu_custom_call.1} parent=11 // pred_check
        %p218 = pneg %p144
      $region30: #{tpu_custom_call.1} parent=11 // pred_check_branch
        %220 = sbr.rel (%p218) target = $region32
      $region31: #{tpu_custom_call.1} parent=11 // pred_region
        _
      $region32: #{tpu_custom_call.1} parent=11 // pred_fallthru
        _
      // Predicated region
      $region33: #{tpu_custom_call.1} parent=11 // pred_check
        %p221 = pneg %p165
      $region34: #{tpu_custom_call.1} parent=11 // pred_check_branch
        %223 = sbr.rel (%p221) target = $region36
      $region35: #{tpu_custom_call.1} parent=11 // pred_region
        _
      $region36: #{tpu_custom_call.1} parent=11 // pred_fallthru
        _
    $region12: #{tpu_custom_call.1} parent=5 // pred_fallthru
      _
    %p224 = scmp.lt.s32.totalorder %s13, 2
    // Predicated region
    $region37: #{tpu_custom_call.1} parent=5 // pred_check
      %p225 = pneg %p224
    $region38: #{tpu_custom_call.1} parent=5 // pred_check_branch
      %227 = sbr.rel (%p225) target = $region40
    $region39: #{tpu_custom_call.1} parent=5 // pred_region
      // Predicated region
      $region41: #{tpu_custom_call.1} parent=39 // pred_check
        %p228 = pneg %p33
      $region42: #{tpu_custom_call.1} parent=39 // pred_check_branch
        %230 = sbr.rel (%p228) target = $region44
      $region43: #{tpu_custom_call.1} parent=39 // pred_region
        %p231 = scmp.lt.s32.totalorder %s13, 1
        %s232 = scalar_select %p231, %s13, 1
        %s233 = smul.addr %s232, 80
        %s234 = smul.addr %s233, 8
        %s235 = scalar_lea.vmem %s0, %s234
      $region44: #{tpu_custom_call.1} parent=39 // pred_fallthru
        _
    $region40: #{tpu_custom_call.1} parent=5 // pred_fallthru
      _
    %p236 = scmp.le.s32.totalorder 1, %s13
    %p237 = scmp.lt.s32.totalorder %s13, 3
    %p238 = pnand %p236, %p237
    %p239 = pneg %p238
    // Predicated region
    $region45: #{tpu_custom_call.1} parent=5 // pred_check
      _
    $region46: #{tpu_custom_call.1} parent=5 // pred_check_branch
      %241 = sbr.rel (%p238) target = $region48
    $region47: #{tpu_custom_call.1} parent=5 // pred_region
      %s242 = ssub.s32 %s13, 1
      %p243 = scmp.lt.s32.totalorder %s18, 1
      %s244 = scalar_select %p243, %s18, 1
      %s245 = smul.addr %s244, 80
      %s246 = smul.addr %s245, 8
      %s247 = scalar_lea.vmem %s0, %s246
      %p248 = pneg %p39
      %p249 = pneg %p36
      %p250 = pneg %p60
      %p251 = pneg %p57
      %p252 = pneg %p81
      %p253 = pneg %p78
      %p254 = pneg %p102
      %p255 = pneg %p99
      %p256 = pneg %p123
      %p257 = pneg %p120
      %p258 = pneg %p144
      %p259 = pneg %p141
      %p260 = pneg %p165
      %p261 = pneg %p162
      %p262 = pneg %p191
      %p263 = pneg %p188
      %p264 = scmp.lt.s32.totalorder %s18, 1
      %s265 = scalar_select %p264, %s18, 1
      %s266 = smul.addr %s265, 32
      %s267 = smul.addr %s266, 8
      %s268 = scalar_lea.vmem %s7, %s267
      %p269 = scmp.lt.s32.totalorder %s18, 1
      %s270 = scalar_select %p269, %s18, 1
      %s271 = smul.addr %s270, 80
      %s272 = smul.addr %s271, 8
      %s273 = scalar_lea.vmem %s0, %s272
      %p274 = scmp.lt.s32.totalorder %s18, 1
      %s275 = scalar_select %p274, %s18, 1
      %s276 = smul.addr %s275, 32
      %s277 = smul.addr %s276, 8
      %s278 = scalar_lea.vmem %s7, %s277
      %v280 = vld [vmem:[%s273] sm:$0xff]
      %v281 = vld [vmem:[%s273 + $0x8] sm:$0xff]
      %v282 = vld [vmem:[%s273 + $0x10] sm:$0xff]
      %v283 = vld [vmem:[%s273 + $0x20] sm:$0xff]
      %v284 = vld [vmem:[%s273 + $0x28] sm:$0xff]
      %v285 = vld [vmem:[%s273 + $0x30] sm:$0xff]
      %v286 = vld [vmem:[%s273 + $0x40] sm:$0xff]
      %v287 = vld [vmem:[%s273 + $0x48] sm:$0xff]
      %v288 = vld [vmem:[%s273 + $0x50] sm:$0xff]
      %v289 = vld [vmem:[%s273 + $0x60] sm:$0xff]
      %v290 = vld [vmem:[%s273 + $0x68] sm:$0xff]
      %v291 = vld [vmem:[%s273 + $0x70] sm:$0xff]
      %v292 = vld [vmem:[%s273 + $0x80] sm:$0xff]
      %v293 = vld [vmem:[%s273 + $0x88] sm:$0xff]
      %v294 = vld [vmem:[%s273 + $0x90] sm:$0xff]
      %v295 = vld [vmem:[%s273 + $0xa0] sm:$0xff]
      %v296 = vld [vmem:[%s273 + $0xa8] sm:$0xff]
      %v297 = vld [vmem:[%s273 + $0xb0] sm:$0xff]
      %v298 = vld [vmem:[%s273 + $0xc0] sm:$0xff]
      %v299 = vld [vmem:[%s273 + $0xc8] sm:$0xff]
      %v300 = vld [vmem:[%s273 + $0xd0] sm:$0xff]
      %v301 = vld [vmem:[%s273 + $0xe0] sm:$0xff]
      %v302 = vld [vmem:[%s273 + $0xe8] sm:$0xff]
      %v303 = vld [vmem:[%s273 + $0xf0] sm:$0xff]
      %v304 = vld [vmem:[%s273 + $0x100] sm:$0xff]
      %v305 = vld [vmem:[%s273 + $0x108] sm:$0xff]
      %v306 = vld [vmem:[%s273 + $0x110] sm:$0xff]
      %v307 = vld [vmem:[%s273 + $0x120] sm:$0xff]
      %v308 = vld [vmem:[%s273 + $0x128] sm:$0xff]
      %v309 = vld [vmem:[%s273 + $0x130] sm:$0xff]
      %v310 = vld [vmem:[%s273 + $0x140] sm:$0xff]
      %v311 = vld [vmem:[%s273 + $0x148] sm:$0xff]
      %v312 = vld [vmem:[%s273 + $0x150] sm:$0xff]
      %v313 = vld [vmem:[%s273 + $0x160] sm:$0xff]
      %v314 = vld [vmem:[%s273 + $0x168] sm:$0xff]
      %v315 = vld [vmem:[%s273 + $0x170] sm:$0xff]
      %v316 = vld [vmem:[%s273 + $0x180] sm:$0xff]
      %v317 = vld [vmem:[%s273 + $0x188] sm:$0xff]
      %v318 = vld [vmem:[%s273 + $0x190] sm:$0xff]
      %v319 = vld [vmem:[%s273 + $0x1a0] sm:$0xff]
      %v320 = vld [vmem:[%s273 + $0x1a8] sm:$0xff]
      %v321 = vld [vmem:[%s273 + $0x1b0] sm:$0xff]
      %v322 = vld [vmem:[%s273 + $0x1c0] sm:$0xff]
      %v323 = vld [vmem:[%s273 + $0x1c8] sm:$0xff]
      %v324 = vld [vmem:[%s273 + $0x1d0] sm:$0xff]
      %v325 = vld [vmem:[%s273 + $0x1e0] sm:$0xff]
      %v326 = vld [vmem:[%s273 + $0x1e8] sm:$0xff]
      %v327 = vld [vmem:[%s273 + $0x1f0] sm:$0xff]
      %v328 = vld [vmem:[%s273 + $0x200] sm:$0xff]
      %v329 = vld [vmem:[%s273 + $0x208] sm:$0xff]
      %v330 = vld [vmem:[%s273 + $0x210] sm:$0xff]
      %v331 = vld [vmem:[%s273 + $0x220] sm:$0xff]
      %v332 = vld [vmem:[%s273 + $0x228] sm:$0xff]
      %v333 = vld [vmem:[%s273 + $0x230] sm:$0xff]
      %v334 = vpack.c.bf16 %v281, %v280
      %v335 = vpack.c.bf16 %v283, %v282
      %v336 = vpack.c.bf16 %v285, %v284
      %v337 = vpack.c.bf16 %v287, %v286
      %v338 = vpack.c.bf16 %v289, %v288
      %v339 = vpack.c.bf16 %v291, %v290
      %v340 = vpack.c.bf16 %v293, %v292
      %v341 = vpack.c.bf16 %v295, %v294
      %v342 = vpack.c.bf16 %v297, %v296
      %v343 = vpack.c.bf16 %v299, %v298
      %v344 = vpack.c.bf16 %v301, %v300
      %v345 = vpack.c.bf16 %v303, %v302
      %v346 = vpack.c.bf16 %v305, %v304
      %v347 = vpack.c.bf16 %v307, %v306
      %v348 = vpack.c.bf16 %v309, %v308
      %v349 = vpack.c.bf16 %v311, %v310
      %v350 = vpack.c.bf16 %v313, %v312
      %v351 = vpack.c.bf16 %v315, %v314
      %v352 = vpack.c.bf16 %v317, %v316
      %v353 = vpack.c.bf16 %v319, %v318
      %v354 = vpack.c.bf16 %v321, %v320
      %v355 = vpack.c.bf16 %v323, %v322
      %v356 = vpack.c.bf16 %v325, %v324
      %v357 = vpack.c.bf16 %v327, %v326
      %v358 = vpack.c.bf16 %v329, %v328
      %v359 = vpack.c.bf16 %v331, %v330
      %v360 = vpack.c.bf16 %v333, %v332
      %v361 = vld [vmem:[%s1] sm:$0x3]
      %v362 = vld [vmem:[%s273 + $0x1] sm:$0xff]
      %v363 = vld [vmem:[%s273 + $0x9] sm:$0xff]
      %v364 = vld [vmem:[%s273 + $0x11] sm:$0xff]
      %v365 = vld [vmem:[%s273 + $0x21] sm:$0xff]
      %v366 = vld [vmem:[%s273 + $0x29] sm:$0xff]
      %v367 = vld [vmem:[%s273 + $0x31] sm:$0xff]
      %v368 = vld [vmem:[%s273 + $0x41] sm:$0xff]
      %v369 = vld [vmem:[%s273 + $0x49] sm:$0xff]
      %v370 = vld [vmem:[%s273 + $0x51] sm:$0xff]
      %v371 = vld [vmem:[%s273 + $0x61] sm:$0xff]
      %v372 = vld [vmem:[%s273 + $0x69] sm:$0xff]
      %v373 = vld [vmem:[%s273 + $0x71] sm:$0xff]
      %v374 = vld [vmem:[%s273 + $0x81] sm:$0xff]
      %v375 = vld [vmem:[%s273 + $0x89] sm:$0xff]
      %v376 = vld [vmem:[%s273 + $0x91] sm:$0xff]
      %v377 = vld [vmem:[%s273 + $0xa1] sm:$0xff]
      %v378 = vld [vmem:[%s273 + $0xa9] sm:$0xff]
      %v379 = vld [vmem:[%s273 + $0xb1] sm:$0xff]
      %v380 = vld [vmem:[%s273 + $0xc1] sm:$0xff]
      %v381 = vld [vmem:[%s273 + $0xc9] sm:$0xff]
      %v382 = vld [vmem:[%s273 + $0xd1] sm:$0xff]
      %v383 = vld [vmem:[%s273 + $0xe1] sm:$0xff]
      %v384 = vld [vmem:[%s273 + $0xe9] sm:$0xff]
      %v385 = vld [vmem:[%s273 + $0xf1] sm:$0xff]
      %v386 = vld [vmem:[%s273 + $0x101] sm:$0xff]
      %v387 = vld [vmem:[%s273 + $0x109] sm:$0xff]
      %v388 = vld [vmem:[%s273 + $0x111] sm:$0xff]
      %v389 = vld [vmem:[%s273 + $0x121] sm:$0xff]
      %v390 = vld [vmem:[%s273 + $0x129] sm:$0xff]
      %v391 = vld [vmem:[%s273 + $0x131] sm:$0xff]
      %v392 = vld [vmem:[%s273 + $0x141] sm:$0xff]
      %v393 = vld [vmem:[%s273 + $0x149] sm:$0xff]
      %v394 = vld [vmem:[%s273 + $0x151] sm:$0xff]
      %v395 = vld [vmem:[%s273 + $0x161] sm:$0xff]
      %v396 = vld [vmem:[%s273 + $0x169] sm:$0xff]
      %v397 = vld [vmem:[%s273 + $0x171] sm:$0xff]
      %v398 = vld [vmem:[%s273 + $0x181] sm:$0xff]
      %v399 = vld [vmem:[%s273 + $0x189] sm:$0xff]
      %v400 = vld [vmem:[%s273 + $0x191] sm:$0xff]
      %v401 = vld [vmem:[%s273 + $0x1a1] sm:$0xff]
      %v402 = vld [vmem:[%s273 + $0x1a9] sm:$0xff]
      %v403 = vld [vmem:[%s273 + $0x1b1] sm:$0xff]
      %v404 = vld [vmem:[%s273 + $0x1c1] sm:$0xff]
      %v405 = vld [vmem:[%s273 + $0x1c9] sm:$0xff]
      %v406 = vld [vmem:[%s273 + $0x1d1] sm:$0xff]
      %v407 = vld [vmem:[%s273 + $0x1e1] sm:$0xff]
      %v408 = vld [vmem:[%s273 + $0x1e9] sm:$0xff]
      %v409 = vld [vmem:[%s273 + $0x1f1] sm:$0xff]
      %v410 = vld [vmem:[%s273 + $0x201] sm:$0xff]
      %v411 = vld [vmem:[%s273 + $0x209] sm:$0xff]
      %v412 = vld [vmem:[%s273 + $0x211] sm:$0xff]
      %v413 = vld [vmem:[%s273 + $0x221] sm:$0xff]
      %v414 = vld [vmem:[%s273 + $0x229] sm:$0xff]
      %v415 = vld [vmem:[%s273 + $0x231] sm:$0xff]
      %v416 = vpack.c.bf16 %v363, %v362
      %v417 = vpack.c.bf16 %v365, %v364
      %v418 = vpack.c.bf16 %v367, %v366
      %v419 = vpack.c.bf16 %v369, %v368
      %v420 = vpack.c.bf16 %v371, %v370
      %v421 = vpack.c.bf16 %v373, %v372
      %v422 = vpack.c.bf16 %v375, %v374
      %v423 = vpack.c.bf16 %v377, %v376
      %v424 = vpack.c.bf16 %v379, %v378
      %v425 = vpack.c.bf16 %v381, %v380
      %v426 = vpack.c.bf16 %v383, %v382
      %v427 = vpack.c.bf16 %v385, %v384
      %v428 = vpack.c.bf16 %v387, %v386
      %v429 = vpack.c.bf16 %v389, %v388
      %v430 = vpack.c.bf16 %v391, %v390
      %v431 = vpack.c.bf16 %v393, %v392
      %v432 = vpack.c.bf16 %v395, %v394
      %v433 = vpack.c.bf16 %v397, %v396
      %v434 = vpack.c.bf16 %v399, %v398
      %v435 = vpack.c.bf16 %v401, %v400
      %v436 = vpack.c.bf16 %v403, %v402
      %v437 = vpack.c.bf16 %v405, %v404
      %v438 = vpack.c.bf16 %v407, %v406
      %v439 = vpack.c.bf16 %v409, %v408
      %v440 = vpack.c.bf16 %v411, %v410
      %v441 = vpack.c.bf16 %v413, %v412
      %v442 = vpack.c.bf16 %v415, %v414
      %s443 = scalar_lea.vmem %s1, 2
      %v444 = vld [vmem:[%s443] sm:$0x3]
      %vm445 = vcmask 31744
      %v447 = vsel %vm445, %v416, 0
      %v450 = vsel %vm445, %v417, 0
      %v453 = vsel %vm445, %v418, 0
      %v456 = vsel %vm445, %v419, 0
      %v459 = vsel %vm445, %v420, 0
      %v462 = vsel %vm445, %v421, 0
      %v465 = vsel %vm445, %v422, 0
      %v468 = vsel %vm445, %v423, 0
      %v471 = vsel %vm445, %v424, 0
      %v474 = vsel %vm445, %v425, 0
      %v477 = vsel %vm445, %v426, 0
      %v480 = vsel %vm445, %v427, 0
      %v483 = vsel %vm445, %v428, 0
      %v486 = vsel %vm445, %v429, 0
      %v489 = vsel %vm445, %v430, 0
      %v492 = vsel %vm445, %v431, 0
      %v495 = vsel %vm445, %v432, 0
      %v498 = vsel %vm445, %v433, 0
      %v501 = vsel %vm445, %v434, 0
      %v504 = vsel %vm445, %v435, 0
      %v507 = vsel %vm445, %v436, 0
      %v510 = vsel %vm445, %v437, 0
      %v513 = vsel %vm445, %v438, 0
      %v516 = vsel %vm445, %v439, 0
      %v519 = vsel %vm445, %v440, 0
      %v522 = vsel %vm445, %v441, 0
      %v525 = vsel %vm445, %v442, 0
      %vm527 = vcmask 1041408
      %v529 = vsel %vm527, %v444, 0
      %531 = vmatprep.subr.bf16.mxu0 0
      %532 = vmatpush1.bf16.msra.mxu0 %v529
      %533 = vmatprep.subr.bf16.mxu0 0
      %534 = vmatpush1.bf16.msra.mxu0 0
      %535 = vmatprep.subr.bf16.mxu0 0
      %536 = vmatpush1.bf16.msra.mxu0 0
      %537 = vmatprep.subr.bf16.mxu0 0
      %538 = vmatpush1.bf16.msra.mxu0 0
      %539 = vmatprep.subr.bf16.mxu0 0
      %540 = vmatpush1.bf16.msra.mxu0 0
      %541 = vmatprep.subr.bf16.mxu0 0
      %542 = vmatpush1.bf16.msra.mxu0 0
      %543 = vmatprep.subr.bf16.mxu0 0
      %544 = vmatpush1.bf16.msra.mxu0 0
      %545 = vmatprep.subr.bf16.mxu0 0
      %546 = vmatpush1.bf16.msra.mxu0 0
      %547 = vmatprep.subr.bf16.mxu0 0
      %548 = vmatpush1.bf16.msra.mxu0 0
      %549 = vmatprep.subr.bf16.mxu0 0
      %550 = vmatpush1.bf16.msra.mxu0 0
      %551 = vmatprep.subr.bf16.mxu0 0
      %552 = vmatpush1.bf16.msra.mxu0 0
      %553 = vmatprep.subr.bf16.mxu0 0
      %554 = vmatpush1.bf16.msra.mxu0 0
      %555 = vmatprep.subr.bf16.mxu0 0
      %556 = vmatpush1.bf16.msra.mxu0 0
      %557 = vmatprep.subr.bf16.mxu0 0
      %558 = vmatpush1.bf16.msra.mxu0 0
      %559 = vmatprep.subr.bf16.mxu0 0
      %560 = vmatpush1.bf16.msra.mxu0 0
      %561 = vmatprep.subr.bf16.mxu0 0
      %562 = vmatpush1.bf16.msra.mxu0 0
      %563 = vmatprep.mubr.bf16.mxu0 0
      %564 = vmatmul.mubr.bf16.gmra.mrb[0].mxu0 %v447
      %v565 = vpop.f32.mrb[0].mxu0
      %v566 = vadd.f32 0.0, %v565
      %v567 = vpop.f32.mrb[0].mxu0
      %v568 = vpop.f32.mrb[0].mxu0
      %v569 = vadd.f32 0.0, %v568
      %v570 = vpop.f32.mrb[0].mxu0
      %571 = vmatprep.mubr.bf16.mxu0 0
      %572 = vmatmul.mubr.bf16.gmra.mrb[0].mxu0 %v450
      %v573 = vpop.f32.mrb[0].mxu0
      %v574 = vadd.f32 0.0, %v573
      %v575 = vpop.f32.mrb[0].mxu0
      %v576 = vpop.f32.mrb[0].mxu0
      %v577 = vadd.f32 0.0, %v576
      %v578 = vpop.f32.mrb[0].mxu0
      %579 = vmatprep.mubr.bf16.mxu0 0
      %580 = vmatmul.mubr.bf16.gmra.mrb[0].mxu0 %v453
      %v581 = vpop.f32.mrb[0].mxu0
      %v582 = vadd.f32 0.0, %v581
      %v583 = vpop.f32.mrb[0].mxu0
      %v584 = vpop.f32.mrb[0].mxu0
      %v585 = vadd.f32 0.0, %v584
      %v586 = vpop.f32.mrb[0].mxu0
      %587 = vmatprep.mubr.bf16.mxu0 0
      %588 = vmatmul.mubr.bf16.gmra.mrb[0].mxu0 %v456
      %v589 = vpop.f32.mrb[0].mxu0
      %v590 = vadd.f32 0.0, %v589
      %v591 = vpop.f32.mrb[0].mxu0
      %v592 = vpop.f32.mrb[0].mxu0
      %v593 = vadd.f32 0.0, %v592
      %v594 = vpop.f32.mrb[0].mxu0
      %595 = vmatprep.mubr.bf16.mxu0 0
      %596 = vmatmul.mubr.bf16.gmra.mrb[0].mxu0 %v459
      %v597 = vpop.f32.mrb[0].mxu0
      %v598 = vadd.f32 0.0, %v597
      %v599 = vpop.f32.mrb[0].mxu0
      %v600 = vpop.f32.mrb[0].mxu0
      %v601 = vadd.f32 0.0, %v600
      %v602 = vpop.f32.mrb[0].mxu0
      %603 = vmatprep.mubr.bf16.mxu0 0
      %604 = vmatmul.mubr.bf16.gmra.mrb[0].mxu0 %v462
      %v605 = vpop.f32.mrb[0].mxu0
      %v606 = vadd.f32 0.0, %v605
      %v607 = vpop.f32.mrb[0].mxu0
      %v608 = vpop.f32.mrb[0].mxu0
      %v609 = vadd.f32 0.0, %v608
      %v610 = vpop.f32.mrb[0].mxu0
      %611 = vmatprep.mubr.bf16.mxu0 0
      %612 = vmatmul.mubr.bf16.gmra.mrb[0].mxu0 %v465
      %v613 = vpop.f32.mrb[0].mxu0
      %v614 = vadd.f32 0.0, %v613
      %v615 = vpop.f32.mrb[0].mxu0
      %v616 = vpop.f32.mrb[0].mxu0
      %v617 = vadd.f32 0.0, %v616
      %v618 = vpop.f32.mrb[0].mxu0
      %619 = vmatprep.mubr.bf16.mxu0 0
      %620 = vmatmul.mubr.bf16.gmra.mrb[0].mxu0 %v468
      %v621 = vpop.f32.mrb[0].mxu0
      %v622 = vadd.f32 0.0, %v621
      %v623 = vpop.f32.mrb[0].mxu0
      %v624 = vpop.f32.mrb[0].mxu0
      %v625 = vadd.f32 0.0, %v624
      %v626 = vpop.f32.mrb[0].mxu0
      %627 = vmatprep.mubr.bf16.mxu0 0
      %628 = vmatmul.mubr.bf16.gmra.mrb[0].mxu0 %v471
      %v629 = vpop.f32.mrb[0].mxu0
      %v630 = vadd.f32 0.0, %v629
      %v631 = vpop.f32.mrb[0].mxu0
      %v632 = vpop.f32.mrb[0].mxu0
      %v633 = vadd.f32 0.0, %v632
      %v634 = vpop.f32.mrb[0].mxu0
      %635 = vmatprep.mubr.bf16.mxu0 0
      %636 = vmatmul.mubr.bf16.gmra.mrb[0].mxu0 %v474
      %v637 = vpop.f32.mrb[0].mxu0
      %v638 = vadd.f32 0.0, %v637
      %v639 = vpop.f32.mrb[0].mxu0
      %v640 = vpop.f32.mrb[0].mxu0
      %v641 = vadd.f32 0.0, %v640
      %v642 = vpop.f32.mrb[0].mxu0
      %643 = vmatprep.mubr.bf16.mxu0 0
      %644 = vmatmul.mubr.bf16.gmra.mrb[0].mxu0 %v477
      %v645 = vpop.f32.mrb[0].mxu0
      %v646 = vadd.f32 0.0, %v645
      %v647 = vpop.f32.mrb[0].mxu0
      %v648 = vpop.f32.mrb[0].mxu0
      %v649 = vadd.f32 0.0, %v648
      %v650 = vpop.f32.mrb[0].mxu0
      %651 = vmatprep.mubr.bf16.mxu0 0
      %652 = vmatmul.mubr.bf16.gmra.mrb[0].mxu0 %v480
      %v653 = vpop.f32.mrb[0].mxu0
      %v654 = vadd.f32 0.0, %v653
      %v655 = vpop.f32.mrb[0].mxu0
      %v656 = vpop.f32.mrb[0].mxu0
      %v657 = vadd.f32 0.0, %v656
      %v658 = vpop.f32.mrb[0].mxu0
      %659 = vmatprep.mubr.bf16.mxu0 0
      %660 = vmatmul.mubr.bf16.gmra.mrb[0].mxu0 %v483
      %v661 = vpop.f32.mrb[0].mxu0
      %v662 = vadd.f32 0.0, %v661
      %v663 = vpop.f32.mrb[0].mxu0
      %v664 = vpop.f32.mrb[0].mxu0
      %v665 = vadd.f32 0.0, %v664
      %v666 = vpop.f32.mrb[0].mxu0
      %667 = vmatprep.mubr.bf16.mxu0 0
      %668 = vmatmul.mubr.bf16.gmra.mrb[0].mxu0 %v486
      %v669 = vpop.f32.mrb[0].mxu0
      %v670 = vadd.f32 0.0, %v669
      %v671 = vpop.f32.mrb[0].mxu0
      %v672 = vpop.f32.mrb[0].mxu0
      %v673 = vadd.f32 0.0, %v672
      %v674 = vpop.f32.mrb[0].mxu0
      %675 = vmatprep.mubr.bf16.mxu0 0
      %676 = vmatmul.mubr.bf16.gmra.mrb[0].mxu0 %v489
      %v677 = vpop.f32.mrb[0].mxu0
      %v678 = vadd.f32 0.0, %v677
      %v679 = vpop.f32.mrb[0].mxu0
      %v680 = vpop.f32.mrb[0].mxu0
      %v681 = vadd.f32 0.0, %v680
      %v682 = vpop.f32.mrb[0].mxu0
      %683 = vmatprep.mubr.bf16.mxu0 0
      %684 = vmatmul.mubr.bf16.gmra.mrb[0].mxu0 %v492
      %v685 = vpop.f32.mrb[0].mxu0
      %v686 = vadd.f32 0.0, %v685
      %v687 = vpop.f32.mrb[0].mxu0
      %v688 = vpop.f32.mrb[0].mxu0
      %v689 = vadd.f32 0.0, %v688
      %v690 = vpop.f32.mrb[0].mxu0
      %691 = vmatprep.mubr.bf16.mxu0 0
      %692 = vmatmul.mubr.bf16.gmra.mrb[0].mxu0 %v495
      %v693 = vpop.f32.mrb[0].mxu0
      %v694 = vadd.f32 0.0, %v693
      %v695 = vpop.f32.mrb[0].mxu0
      %v696 = vpop.f32.mrb[0].mxu0
      %v697 = vadd.f32 0.0, %v696
      %v698 = vpop.f32.mrb[0].mxu0
      %699 = vmatprep.mubr.bf16.mxu0 0
      %700 = vmatmul.mubr.bf16.gmra.mrb[0].mxu0 %v498
      %v701 = vpop.f32.mrb[0].mxu0
      %v702 = vadd.f32 0.0, %v701
      %v703 = vpop.f32.mrb[0].mxu0
      %v704 = vpop.f32.mrb[0].mxu0
      %v705 = vadd.f32 0.0, %v704
      %v706 = vpop.f32.mrb[0].mxu0
      %707 = vmatprep.mubr.bf16.mxu0 0
      %708 = vmatmul.mubr.bf16.gmra.mrb[0].mxu0 %v501
      %v709 = vpop.f32.mrb[0].mxu0
      %v710 = vadd.f32 0.0, %v709
      %v711 = vpop.f32.mrb[0].mxu0
      %v712 = vpop.f32.mrb[0].mxu0
      %v713 = vadd.f32 0.0, %v712
      %v714 = vpop.f32.mrb[0].mxu0
      %715 = vmatprep.mubr.bf16.mxu0 0
      %716 = vmatmul.mubr.bf16.gmra.mrb[0].mxu0 %v504
      %v717 = vpop.f32.mrb[0].mxu0
      %v718 = vadd.f32 0.0, %v717
      %v719 = vpop.f32.mrb[0].mxu0
      %v720 = vpop.f32.mrb[0].mxu0
      %v721 = vadd.f32 0.0, %v720
      %v722 = vpop.f32.mrb[0].mxu0
      %723 = vmatprep.mubr.bf16.mxu0 0
      %724 = vmatmul.mubr.bf16.gmra.mrb[0].mxu0 %v507
      %v725 = vpop.f32.mrb[0].mxu0
      %v726 = vadd.f32 0.0, %v725
      %v727 = vpop.f32.mrb[0].mxu0
      %v728 = vpop.f32.mrb[0].mxu0
      %v729 = vadd.f32 0.0, %v728
      %v730 = vpop.f32.mrb[0].mxu0
      %731 = vmatprep.mubr.bf16.mxu0 0
      %732 = vmatmul.mubr.bf16.gmra.mrb[0].mxu0 %v510
      %v733 = vpop.f32.mrb[0].mxu0
      %v734 = vadd.f32 0.0, %v733
      %v735 = vpop.f32.mrb[0].mxu0
      %v736 = vpop.f32.mrb[0].mxu0
      %v737 = vadd.f32 0.0, %v736
      %v738 = vpop.f32.mrb[0].mxu0
      %739 = vmatprep.mubr.bf16.mxu0 0
      %740 = vmatmul.mubr.bf16.gmra.mrb[0].mxu0 %v513
      %v741 = vpop.f32.mrb[0].mxu0
      %v742 = vadd.f32 0.0, %v741
      %v743 = vpop.f32.mrb[0].mxu0
      %v744 = vpop.f32.mrb[0].mxu0
      %v745 = vadd.f32 0.0, %v744
      %v746 = vpop.f32.mrb[0].mxu0
      %747 = vmatprep.mubr.bf16.mxu0 0
      %748 = vmatmul.mubr.bf16.gmra.mrb[0].mxu0 %v516
      %v749 = vpop.f32.mrb[0].mxu0
      %v750 = vadd.f32 0.0, %v749
      %v751 = vpop.f32.mrb[0].mxu0
      %v752 = vpop.f32.mrb[0].mxu0
      %v753 = vadd.f32 0.0, %v752
      %v754 = vpop.f32.mrb[0].mxu0
      %755 = vmatprep.mubr.bf16.mxu0 0
      %756 = vmatmul.mubr.bf16.gmra.mrb[0].mxu0 %v519
      %v757 = vpop.f32.mrb[0].mxu0
      %v758 = vadd.f32 0.0, %v757
      %v759 = vpop.f32.mrb[0].mxu0
      %v760 = vpop.f32.mrb[0].mxu0
      %v761 = vadd.f32 0.0, %v760
      %v762 = vpop.f32.mrb[0].mxu0
      %763 = vmatprep.mubr.bf16.mxu0 0
      %764 = vmatmul.mubr.bf16.gmra.mrb[0].mxu0 %v522
      %v765 = vpop.f32.mrb[0].mxu0
      %v766 = vadd.f32 0.0, %v765
      %v767 = vpop.f32.mrb[0].mxu0
      %v768 = vpop.f32.mrb[0].mxu0
      %v769 = vadd.f32 0.0, %v768
      %v770 = vpop.f32.mrb[0].mxu0
      %771 = vmatprep.mubr.bf16.mxu0 0
      %772 = vmatmul.mubr.bf16.gmra.mrb[0].mxu0 %v525
      %v773 = vpop.f32.mrb[0].mxu0
      %v774 = vadd.f32 0.0, %v773
      %v775 = vpop.f32.mrb[0].mxu0
      %v776 = vpop.f32.mrb[0].mxu0
      %v777 = vadd.f32 0.0, %v776
      %v778 = vpop.f32.mrb[0].mxu0
      %779 = vdwg.mxu0
      %v781 = vsel %vm445, %v334, 0
      %v784 = vsel %vm445, %v335, 0
      %v787 = vsel %vm445, %v336, 0
      %v790 = vsel %vm445, %v337, 0
      %v793 = vsel %vm445, %v338, 0
      %v796 = vsel %vm445, %v339, 0
      %v799 = vsel %vm445, %v340, 0
      %v802 = vsel %vm445, %v341, 0
      %v805 = vsel %vm445, %v342, 0
      %v808 = vsel %vm445, %v343, 0
      %v811 = vsel %vm445, %v344, 0
      %v814 = vsel %vm445, %v345, 0
      %v817 = vsel %vm445, %v346, 0
      %v820 = vsel %vm445, %v347, 0
      %v823 = vsel %vm445, %v348, 0
      %v826 = vsel %vm445, %v349, 0
      %v829 = vsel %vm445, %v350, 0
      %v832 = vsel %vm445, %v351, 0
      %v835 = vsel %vm445, %v352, 0
      %v838 = vsel %vm445, %v353, 0
      %v841 = vsel %vm445, %v354, 0
      %v844 = vsel %vm445, %v355, 0
      %v847 = vsel %vm445, %v356, 0
      %v850 = vsel %vm445, %v357, 0
      %v853 = vsel %vm445, %v358, 0
      %v856 = vsel %vm445, %v359, 0
      %v859 = vsel %vm445, %v360, 0
      %v862 = vsel %vm527, %v361, 0
      %864 = vmatprep.subr.bf16.mxu0 0
      %865 = vmatpush1.bf16.msra.mxu0 %v862
      %866 = vmatprep.subr.bf16.mxu0 0
      %867 = vmatpush1.bf16.msra.mxu0 0
      %868 = vmatprep.subr.bf16.mxu0 0
      %869 = vmatpush1.bf16.msra.mxu0 0
      %870 = vmatprep.subr.bf16.mxu0 0
      %871 = vmatpush1.bf16.msra.mxu0 0
      %872 = vmatprep.subr.bf16.mxu0 0
      %873 = vmatpush1.bf16.msra.mxu0 0
      %874 = vmatprep.subr.bf16.mxu0 0
      %875 = vmatpush1.bf16.msra.mxu0 0
      %876 = vmatprep.subr.bf16.mxu0 0
      %877 = vmatpush1.bf16.msra.mxu0 0
      %878 = vmatprep.subr.bf16.mxu0 0
      %879 = vmatpush1.bf16.msra.mxu0 0
      %880 = vmatprep.subr.bf16.mxu0 0
      %881 = vmatpush1.bf16.msra.mxu0 0
      %882 = vmatprep.subr.bf16.mxu0 0
      %883 = vmatpush1.bf16.msra.mxu0 0
      %884 = vmatprep.subr.bf16.mxu0 0
      %885 = vmatpush1.bf16.msra.mxu0 0
      %886 = vmatprep.subr.bf16.mxu0 0
      %887 = vmatpush1.bf16.msra.mxu0 0
      %888 = vmatprep.subr.bf16.mxu0 0
      %889 = vmatpush1.bf16.msra.mxu0 0
      %890 = vmatprep.subr.bf16.mxu0 0
      %891 = vmatpush1.bf16.msra.mxu0 0
      %892 = vmatprep.subr.bf16.mxu0 0
      %893 = vmatpush1.bf16.msra.mxu0 0
      %894 = vmatprep.subr.bf16.mxu0 0
      %895 = vmatpush1.bf16.msra.mxu0 0
      %896 = vmatprep.mubr.bf16.mxu0 0
      %897 = vmatmul.mubr.bf16.gmra.mrb[0].mxu0 %v781
      %v898 = vpop.f32.mrb[0].mxu0
      %v899 = vadd.f32 %v566, %v898
      %v900 = vpop.f32.mrb[0].mxu0
      %v901 = vpop.f32.mrb[0].mxu0
      %v902 = vadd.f32 %v569, %v901
      %v903 = vpop.f32.mrb[0].mxu0
      %904 = vmatprep.mubr.bf16.mxu0 0
      %905 = vmatmul.mubr.bf16.gmra.mrb[0].mxu0 %v784
      %v906 = vpop.f32.mrb[0].mxu0
      %v907 = vadd.f32 %v574, %v906
      %v908 = vpop.f32.mrb[0].mxu0
      %v909 = vpop.f32.mrb[0].mxu0
      %v910 = vadd.f32 %v577, %v909
      %v911 = vpop.f32.mrb[0].mxu0
      %912 = vmatprep.mubr.bf16.mxu0 0
      %913 = vmatmul.mubr.bf16.gmra.mrb[0].mxu0 %v787
      %v914 = vpop.f32.mrb[0].mxu0
      %v915 = vadd.f32 %v582, %v914
      %v916 = vpop.f32.mrb[0].mxu0
      %v917 = vpop.f32.mrb[0].mxu0
      %v918 = vadd.f32 %v585, %v917
      %v919 = vpop.f32.mrb[0].mxu0
      %920 = vmatprep.mubr.bf16.mxu0 0
      %921 = vmatmul.mubr.bf16.gmra.mrb[0].mxu0 %v790
      %v922 = vpop.f32.mrb[0].mxu0
      %v923 = vadd.f32 %v590, %v922
      %v924 = vpop.f32.mrb[0].mxu0
      %v925 = vpop.f32.mrb[0].mxu0
      %v926 = vadd.f32 %v593, %v925
      %v927 = vpop.f32.mrb[0].mxu0
      %928 = vmatprep.mubr.bf16.mxu0 0
      %929 = vmatmul.mubr.bf16.gmra.mrb[0].mxu0 %v793
      %v930 = vpop.f32.mrb[0].mxu0
      %v931 = vadd.f32 %v598, %v930
      %v932 = vpop.f32.mrb[0].mxu0
      %v933 = vpop.f32.mrb[0].mxu0
      %v934 = vadd.f32 %v601, %v933
      %v935 = vpop.f32.mrb[0].mxu0
      %936 = vmatprep.mubr.bf16.mxu0 0
      %937 = vmatmul.mubr.bf16.gmra.mrb[0].mxu0 %v796
      %v938 = vpop.f32.mrb[0].mxu0
      %v939 = vadd.f32 %v606, %v938
      %v940 = vpop.f32.mrb[0].mxu0
      %v941 = vpop.f32.mrb[0].mxu0
      %v942 = vadd.f32 %v609, %v941
      %v943 = vpop.f32.mrb[0].mxu0
      %944 = vmatprep.mubr.bf16.mxu0 0
      %945 = vmatmul.mubr.bf16.gmra.mrb[0].mxu0 %v799
      %v946 = vpop.f32.mrb[0].mxu0
      %v947 = vadd.f32 %v614, %v946
      %v948 = vpop.f32.mrb[0].mxu0
      %v949 = vpop.f32.mrb[0].mxu0
      %v950 = vadd.f32 %v617, %v949
      %v951 = vpop.f32.mrb[0].mxu0
      %952 = vmatprep.mubr.bf16.mxu0 0
      %953 = vmatmul.mubr.bf16.gmra.mrb[0].mxu0 %v802
      %v954 = vpop.f32.mrb[0].mxu0
      %v955 = vadd.f32 %v622, %v954
      %v956 = vpop.f32.mrb[0].mxu0
      %v957 = vpop.f32.mrb[0].mxu0
      %v958 = vadd.f32 %v625, %v957
      %v959 = vpop.f32.mrb[0].mxu0
      %960 = vmatprep.mubr.bf16.mxu0 0
      %961 = vmatmul.mubr.bf16.gmra.mrb[0].mxu0 %v805
      %v962 = vpop.f32.mrb[0].mxu0
      %v963 = vadd.f32 %v630, %v962
      %v964 = vpop.f32.mrb[0].mxu0
      %v965 = vpop.f32.mrb[0].mxu0
      %v966 = vadd.f32 %v633, %v965
      %v967 = vpop.f32.mrb[0].mxu0
      %968 = vmatprep.mubr.bf16.mxu0 0
      %969 = vmatmul.mubr.bf16.gmra.mrb[0].mxu0 %v808
      %v970 = vpop.f32.mrb[0].mxu0
      %v971 = vadd.f32 %v638, %v970
      %v972 = vpop.f32.mrb[0].mxu0
      %v973 = vpop.f32.mrb[0].mxu0
      %v974 = vadd.f32 %v641, %v973
      %v975 = vpop.f32.mrb[0].mxu0
      %976 = vmatprep.mubr.bf16.mxu0 0
      %977 = vmatmul.mubr.bf16.gmra.mrb[0].mxu0 %v811
      %v978 = vpop.f32.mrb[0].mxu0
      %v979 = vadd.f32 %v646, %v978
      %v980 = vpop.f32.mrb[0].mxu0
      %v981 = vpop.f32.mrb[0].mxu0
      %v982 = vadd.f32 %v649, %v981
      %v983 = vpop.f32.mrb[0].mxu0
      %984 = vmatprep.mubr.bf16.mxu0 0
      %985 = vmatmul.mubr.bf16.gmra.mrb[0].mxu0 %v814
      %v986 = vpop.f32.mrb[0].mxu0
      %v987 = vadd.f32 %v654, %v986
      %v988 = vpop.f32.mrb[0].mxu0
      %v989 = vpop.f32.mrb[0].mxu0
      %v990 = vadd.f32 %v657, %v989
      %v991 = vpop.f32.mrb[0].mxu0
      %992 = vmatprep.mubr.bf16.mxu0 0
      %993 = vmatmul.mubr.bf16.gmra.mrb[0].mxu0 %v817
      %v994 = vpop.f32.mrb[0].mxu0
      %v995 = vadd.f32 %v662, %v994
      %v996 = vpop.f32.mrb[0].mxu0
      %v997 = vpop.f32.mrb[0].mxu0
      %v998 = vadd.f32 %v665, %v997
      %v999 = vpop.f32.mrb[0].mxu0
      %1000 = vmatprep.mubr.bf16.mxu0 0
      %1001 = vmatmul.mubr.bf16.gmra.mrb[0].mxu0 %v820
      %v1002 = vpop.f32.mrb[0].mxu0
      %v1003 = vadd.f32 %v670, %v1002
      %v1004 = vpop.f32.mrb[0].mxu0
      %v1005 = vpop.f32.mrb[0].mxu0
      %v1006 = vadd.f32 %v673, %v1005
      %v1007 = vpop.f32.mrb[0].mxu0
      %1008 = vmatprep.mubr.bf16.mxu0 0
      %1009 = vmatmul.mubr.bf16.gmra.mrb[0].mxu0 %v823
      %v1010 = vpop.f32.mrb[0].mxu0
      %v1011 = vadd.f32 %v678, %v1010
      %v1012 = vpop.f32.mrb[0].mxu0
      %v1013 = vpop.f32.mrb[0].mxu0
      %v1014 = vadd.f32 %v681, %v1013
      %v1015 = vpop.f32.mrb[0].mxu0
      %1016 = vmatprep.mubr.bf16.mxu0 0
      %1017 = vmatmul.mubr.bf16.gmra.mrb[0].mxu0 %v826
      %v1018 = vpop.f32.mrb[0].mxu0
      %v1019 = vadd.f32 %v686, %v1018
      %v1020 = vpop.f32.mrb[0].mxu0
      %v1021 = vpop.f32.mrb[0].mxu0
      %v1022 = vadd.f32 %v689, %v1021
      %v1023 = vpop.f32.mrb[0].mxu0
      %1024 = vmatprep.mubr.bf16.mxu0 0
      %1025 = vmatmul.mubr.bf16.gmra.mrb[0].mxu0 %v829
      %v1026 = vpop.f32.mrb[0].mxu0
      %v1027 = vadd.f32 %v694, %v1026
      %v1028 = vpop.f32.mrb[0].mxu0
      %v1029 = vpop.f32.mrb[0].mxu0
      %v1030 = vadd.f32 %v697, %v1029
      %v1031 = vpop.f32.mrb[0].mxu0
      %1032 = vmatprep.mubr.bf16.mxu0 0
      %1033 = vmatmul.mubr.bf16.gmra.mrb[0].mxu0 %v832
      %v1034 = vpop.f32.mrb[0].mxu0
      %v1035 = vadd.f32 %v702, %v1034
      %v1036 = vpop.f32.mrb[0].mxu0
      %v1037 = vpop.f32.mrb[0].mxu0
      %v1038 = vadd.f32 %v705, %v1037
      %v1039 = vpop.f32.mrb[0].mxu0
      %1040 = vmatprep.mubr.bf16.mxu0 0
      %1041 = vmatmul.mubr.bf16.gmra.mrb[0].mxu0 %v835
      %v1042 = vpop.f32.mrb[0].mxu0
      %v1043 = vadd.f32 %v710, %v1042
      %v1044 = vpop.f32.mrb[0].mxu0
      %v1045 = vpop.f32.mrb[0].mxu0
      %v1046 = vadd.f32 %v713, %v1045
      %v1047 = vpop.f32.mrb[0].mxu0
      %1048 = vmatprep.mubr.bf16.mxu0 0
      %1049 = vmatmul.mubr.bf16.gmra.mrb[0].mxu0 %v838
      %v1050 = vpop.f32.mrb[0].mxu0
      %v1051 = vadd.f32 %v718, %v1050
      %v1052 = vpop.f32.mrb[0].mxu0
      %v1053 = vpop.f32.mrb[0].mxu0
      %v1054 = vadd.f32 %v721, %v1053
      %v1055 = vpop.f32.mrb[0].mxu0
      %1056 = vmatprep.mubr.bf16.mxu0 0
      %1057 = vmatmul.mubr.bf16.gmra.mrb[0].mxu0 %v841
      %v1058 = vpop.f32.mrb[0].mxu0
      %v1059 = vadd.f32 %v726, %v1058
      %v1060 = vpop.f32.mrb[0].mxu0
      %v1061 = vpop.f32.mrb[0].mxu0
      %v1062 = vadd.f32 %v729, %v1061
      %v1063 = vpop.f32.mrb[0].mxu0
      %1064 = vmatprep.mubr.bf16.mxu0 0
      %1065 = vmatmul.mubr.bf16.gmra.mrb[0].mxu0 %v844
      %v1066 = vpop.f32.mrb[0].mxu0
      %v1067 = vadd.f32 %v734, %v1066
      %v1068 = vpop.f32.mrb[0].mxu0
      %v1069 = vpop.f32.mrb[0].mxu0
      %v1070 = vadd.f32 %v737, %v1069
      %v1071 = vpop.f32.mrb[0].mxu0
      %1072 = vmatprep.mubr.bf16.mxu0 0
      %1073 = vmatmul.mubr.bf16.gmra.mrb[0].mxu0 %v847
      %v1074 = vpop.f32.mrb[0].mxu0
      %v1075 = vadd.f32 %v742, %v1074
      %v1076 = vpop.f32.mrb[0].mxu0
      %v1077 = vpop.f32.mrb[0].mxu0
      %v1078 = vadd.f32 %v745, %v1077
      %v1079 = vpop.f32.mrb[0].mxu0
      %1080 = vmatprep.mubr.bf16.mxu0 0
      %1081 = vmatmul.mubr.bf16.gmra.mrb[0].mxu0 %v850
      %v1082 = vpop.f32.mrb[0].mxu0
      %v1083 = vadd.f32 %v750, %v1082
      %v1084 = vpop.f32.mrb[0].mxu0
      %v1085 = vpop.f32.mrb[0].mxu0
      %v1086 = vadd.f32 %v753, %v1085
      %v1087 = vpop.f32.mrb[0].mxu0
      %1088 = vmatprep.mubr.bf16.mxu0 0
      %1089 = vmatmul.mubr.bf16.gmra.mrb[0].mxu0 %v853
      %v1090 = vpop.f32.mrb[0].mxu0
      %v1091 = vadd.f32 %v758, %v1090
      %v1092 = vpop.f32.mrb[0].mxu0
      %v1093 = vpop.f32.mrb[0].mxu0
      %v1094 = vadd.f32 %v761, %v1093
      %v1095 = vpop.f32.mrb[0].mxu0
      %1096 = vmatprep.mubr.bf16.mxu0 0
      %1097 = vmatmul.mubr.bf16.gmra.mrb[0].mxu0 %v856
      %v1098 = vpop.f32.mrb[0].mxu0
      %v1099 = vadd.f32 %v766, %v1098
      %v1100 = vpop.f32.mrb[0].mxu0
      %v1101 = vpop.f32.mrb[0].mxu0
      %v1102 = vadd.f32 %v769, %v1101
      %v1103 = vpop.f32.mrb[0].mxu0
      %1104 = vmatprep.mubr.bf16.mxu0 0
      %1105 = vmatmul.mubr.bf16.gmra.mrb[0].mxu0 %v859
      %v1106 = vpop.f32.mrb[0].mxu0
      %v1107 = vadd.f32 %v774, %v1106
      %v1108 = vpop.f32.mrb[0].mxu0
      %v1109 = vpop.f32.mrb[0].mxu0
      %v1110 = vadd.f32 %v777, %v1109
      %v1111 = vpop.f32.mrb[0].mxu0
      %1112 = vdwg.mxu0
      %v1113 = vld [vmem:[%s273 + $0x2] sm:$0xff]
      %v1114 = vld [vmem:[%s273 + $0xa] sm:$0xff]
      %v1115 = vld [vmem:[%s273 + $0x12] sm:$0xff]
      %v1116 = vld [vmem:[%s273 + $0x22] sm:$0xff]
      %v1117 = vld [vmem:[%s273 + $0x2a] sm:$0xff]
      %v1118 = vld [vmem:[%s273 + $0x32] sm:$0xff]
      %v1119 = vld [vmem:[%s273 + $0x42] sm:$0xff]
      %v1120 = vld [vmem:[%s273 + $0x4a] sm:$0xff]
      %v1121 = vld [vmem:[%s273 + $0x52] sm:$0xff]
      %v1122 = vld [vmem:[%s273 + $0x62] sm:$0xff]
      %v1123 = vld [vmem:[%s273 + $0x6a] sm:$0xff]
      %v1124 = vld [vmem:[%s273 + $0x72] sm:$0xff]
      %v1125 = vld [vmem:[%s273 + $0x82] sm:$0xff]
      %v1126 = vld [vmem:[%s273 + $0x8a] sm:$0xff]
      %v1127 = vld [vmem:[%s273 + $0x92] sm:$0xff]
      %v1128 = vld [vmem:[%s273 + $0xa2] sm:$0xff]
      %v1129 = vld [vmem:[%s273 + $0xaa] sm:$0xff]
      %v1130 = vld [vmem:[%s273 + $0xb2] sm:$0xff]
      %v1131 = vld [vmem:[%s273 + $0xc2] sm:$0xff]
      %v1132 = vld [vmem:[%s273 + $0xca] sm:$0xff]
      %v1133 = vld [vmem:[%s273 + $0xd2] sm:$0xff]
      %v1134 = vld [vmem:[%s273 + $0xe2] sm:$0xff]
      %v1135 = vld [vmem:[%s273 + $0xea] sm:$0xff]
      %v1136 = vld [vmem:[%s273 + $0xf2] sm:$0xff]
      %v1137 = vld [vmem:[%s273 + $0x102] sm:$0xff]
      %v1138 = vld [vmem:[%s273 + $0x10a] sm:$0xff]
      %v1139 = vld [vmem:[%s273 + $0x112] sm:$0xff]
      %v1140 = vld [vmem:[%s273 + $0x122] sm:$0xff]
      %v1141 = vld [vmem:[%s273 + $0x12a] sm:$0xff]
      %v1142 = vld [vmem:[%s273 + $0x132] sm:$0xff]
      %v1143 = vld [vmem:[%s273 + $0x142] sm:$0xff]
      %v1144 = vld [vmem:[%s273 + $0x14a] sm:$0xff]
      %v1145 = vld [vmem:[%s273 + $0x152] sm:$0xff]
      %v1146 = vld [vmem:[%s273 + $0x162] sm:$0xff]
      %v1147 = vld [vmem:[%s273 + $0x16a] sm:$0xff]
      %v1148 = vld [vmem:[%s273 + $0x172] sm:$0xff]
      %v1149 = vld [vmem:[%s273 + $0x182] sm:$0xff]
      %v1150 = vld [vmem:[%s273 + $0x18a] sm:$0xff]
      %v1151 = vld [vmem:[%s273 + $0x192] sm:$0xff]
      %v1152 = vld [vmem:[%s273 + $0x1a2] sm:$0xff]
      %v1153 = vld [vmem:[%s273 + $0x1aa] sm:$0xff]
      %v1154 = vld [vmem:[%s273 + $0x1b2] sm:$0xff]
      %v1155 = vld [vmem:[%s273 + $0x1c2] sm:$0xff]
      %v1156 = vld [vmem:[%s273 + $0x1ca] sm:$0xff]
      %v1157 = vld [vmem:[%s273 + $0x1d2] sm:$0xff]
      %v1158 = vld [vmem:[%s273 + $0x1e2] sm:$0xff]
      %v1159 = vld [vmem:[%s273 + $0x1ea] sm:$0xff]
      %v1160 = vld [vmem:[%s273 + $0x1f2] sm:$0xff]
      %v1161 = vld [vmem:[%s273 + $0x202] sm:$0xff]
      %v1162 = vld [vmem:[%s273 + $0x20a] sm:$0xff]
      %v1163 = vld [vmem:[%s273 + $0x212] sm:$0xff]
      %v1164 = vld [vmem:[%s273 + $0x222] sm:$0xff]
      %v1165 = vld [vmem:[%s273 + $0x22a] sm:$0xff]
      %v1166 = vld [vmem:[%s273 + $0x232] sm:$0xff]
      %v1167 = vpack.c.bf16 %v1114, %v1113
      %v1168 = vpack.c.bf16 %v1116, %v1115
      %v1169 = vpack.c.bf16 %v1118, %v1117
      %v1170 = vpack.c.bf16 %v1120, %v1119
      %v1171 = vpack.c.bf16 %v1122, %v1121
      %v1172 = vpack.c.bf16 %v1124, %v1123
      %v1173 = vpack.c.bf16 %v1126, %v1125
      %v1174 = vpack.c.bf16 %v1128, %v1127
      %v1175 = vpack.c.bf16 %v1130, %v1129
      %v1176 = vpack.c.bf16 %v1132, %v1131
      %v1177 = vpack.c.bf16 %v1134, %v1133
      %v1178 = vpack.c.bf16 %v1136, %v1135
      %v1179 = vpack.c.bf16 %v1138, %v1137
      %v1180 = vpack.c.bf16 %v1140, %v1139
      %v1181 = vpack.c.bf16 %v1142, %v1141
      %v1182 = vpack.c.bf16 %v1144, %v1143
      %v1183 = vpack.c.bf16 %v1146, %v1145
      %v1184 = vpack.c.bf16 %v1148, %v1147
      %v1185 = vpack.c.bf16 %v1150, %v1149
      %v1186 = vpack.c.bf16 %v1152, %v1151
      %v1187 = vpack.c.bf16 %v1154, %v1153
      %v1188 = vpack.c.bf16 %v1156, %v1155
      %v1189 = vpack.c.bf16 %v1158, %v1157
      %v1190 = vpack.c.bf16 %v1160, %v1159
      %v1191 = vpack.c.bf16 %v1162, %v1161
      %v1192 = vpack.c.bf16 %v1164, %v1163
      %v1193 = vpack.c.bf16 %v1166, %v1165
      %s1194 = scalar_lea.vmem %s1, 4
      %v1195 = vld [vmem:[%s1194] sm:$0x3]
      %v1197 = vsel %vm445, %v1167, 0
      %v1200 = vsel %vm445, %v1168, 0
      %v1203 = vsel %vm445, %v1169, 0
      %v1206 = vsel %vm445, %v1170, 0
      %v1209 = vsel %vm445, %v1171, 0
      %v1212 = vsel %vm445, %v1172, 0
      %v1215 = vsel %vm445, %v1173, 0
      %v1218 = vsel %vm445, %v1174, 0
      %v1221 = vsel %vm445, %v1175, 0
      %v1224 = vsel %vm445, %v1176, 0
      %v1227 = vsel %vm445, %v1177, 0
      %v1230 = vsel %vm445, %v1178, 0
      %v1233 = vsel %vm445, %v1179, 0
      %v1236 = vsel %vm445, %v1180, 0
      %v1239 = vsel %vm445, %v1181, 0
      %v1242 = vsel %vm445, %v1182, 0
      %v1245 = vsel %vm445, %v1183, 0
      %v1248 = vsel %vm445, %v1184, 0
      %v1251 = vsel %vm445, %v1185, 0
      %v1254 = vsel %vm445, %v1186, 0
      %v1257 = vsel %vm445, %v1187, 0
      %v1260 = vsel %vm445, %v1188, 0
      %v1263 = vsel %vm445, %v1189, 0
      %v1266 = vsel %vm445, %v1190, 0
      %v1269 = vsel %vm445, %v1191, 0
      %v1272 = vsel %vm445, %v1192, 0
      %v1275 = vsel %vm445, %v1193, 0
      %v1278 = vsel %vm527, %v1195, 0
      %1280 = vmatprep.subr.bf16.mxu0 0
      %1281 = vmatpush1.bf16.msra.mxu0 %v1278
      %1282 = vmatprep.subr.bf16.mxu0 0
      %1283 = vmatpush1.bf16.msra.mxu0 0
      %1284 = vmatprep.subr.bf16.mxu0 0
      %1285 = vmatpush1.bf16.msra.mxu0 0
      %1286 = vmatprep.subr.bf16.mxu0 0
      %1287 = vmatpush1.bf16.msra.mxu0 0
      %1288 = vmatprep.subr.bf16.mxu0 0
      %1289 = vmatpush1.bf16.msra.mxu0 0
      %1290 = vmatprep.subr.bf16.mxu0 0
      %1291 = vmatpush1.bf16.msra.mxu0 0
      %1292 = vmatprep.subr.bf16.mxu0 0
      %1293 = vmatpush1.bf16.msra.mxu0 0
      %1294 = vmatprep.subr.bf16.mxu0 0
      %1295 = vmatpush1.bf16.msra.mxu0 0
      %1296 = vmatprep.subr.bf16.mxu0 0
      %1297 = vmatpush1.bf16.msra.mxu0 0
      %1298 = vmatprep.subr.bf16.mxu0 0
      %1299 = vmatpush1.bf16.msra.mxu0 0
      %1300 = vmatprep.subr.bf16.mxu0 0
      %1301 = vmatpush1.bf16.msra.mxu0 0
      %1302 = vmatprep.subr.bf16.mxu0 0
      %1303 = vmatpush1.bf16.msra.mxu0 0
      %1304 = vmatprep.subr.bf16.mxu0 0
      %1305 = vmatpush1.bf16.msra.mxu0 0
      %1306 = vmatprep.subr.bf16.mxu0 0
      %1307 = vmatpush1.bf16.msra.mxu0 0
      %1308 = vmatprep.subr.bf16.mxu0 0
      %1309 = vmatpush1.bf16.msra.mxu0 0
      %1310 = vmatprep.subr.bf16.mxu0 0
      %1311 = vmatpush1.bf16.msra.mxu0 0
      %1312 = vmatprep.mubr.bf16.mxu0 0
      %1313 = vmatmul.mubr.bf16.gmra.mrb[0].mxu0 %v1197
      %v1314 = vpop.f32.mrb[0].mxu0
      %v1315 = vadd.f32 0.0, %v1314
      %v1316 = vpop.f32.mrb[0].mxu0
      %v1317 = vpop.f32.mrb[0].mxu0
      %v1318 = vadd.f32 0.0, %v1317
      %v1319 = vpop.f32.mrb[0].mxu0
      %1320 = vmatprep.mubr.bf16.mxu0 0
      %1321 = vmatmul.mubr.bf16.gmra.mrb[0].mxu0 %v1200
      %v1322 = vpop.f32.mrb[0].mxu0
      %v1323 = vadd.f32 0.0, %v1322
      %v1324 = vpop.f32.mrb[0].mxu0
      %v1325 = vpop.f32.mrb[0].mxu0
      %v1326 = vadd.f32 0.0, %v1325
      %v1327 = vpop.f32.mrb[0].mxu0
      %1328 = vmatprep.mubr.bf16.mxu0 0
      %1329 = vmatmul.mubr.bf16.gmra.mrb[0].mxu0 %v1203
      %v1330 = vpop.f32.mrb[0].mxu0
      %v1331 = vadd.f32 0.0, %v1330
      %v1332 = vpop.f32.mrb[0].mxu0
      %v1333 = vpop.f32.mrb[0].mxu0
      %v1334 = vadd.f32 0.0, %v1333
      %v1335 = vpop.f32.mrb[0].mxu0
      %1336 = vmatprep.mubr.bf16.mxu0 0
      %1337 = vmatmul.mubr.bf16.gmra.mrb[0].mxu0 %v1206
      %v1338 = vpop.f32.mrb[0].mxu0
      %v1339 = vadd.f32 0.0, %v1338
      %v1340 = vpop.f32.mrb[0].mxu0
      %v1341 = vpop.f32.mrb[0].mxu0
      %v1342 = vadd.f32 0.0, %v1341
      %v1343 = vpop.f32.mrb[0].mxu0
      %1344 = vmatprep.mubr.bf16.mxu0 0
      %1345 = vmatmul.mubr.bf16.gmra.mrb[0].mxu0 %v1209
      %v1346 = vpop.f32.mrb[0].mxu0
      %v1347 = vadd.f32 0.0, %v1346
      %v1348 = vpop.f32.mrb[0].mxu0
      %v1349 = vpop.f32.mrb[0].mxu0
      %v1350 = vadd.f32 0.0, %v1349
      %v1351 = vpop.f32.mrb[0].mxu0
      %1352 = vmatprep.mubr.bf16.mxu0 0
      %1353 = vmatmul.mubr.bf16.gmra.mrb[0].mxu0 %v1212
      %v1354 = vpop.f32.mrb[0].mxu0
      %v1355 = vadd.f32 0.0, %v1354
      %v1356 = vpop.f32.mrb[0].mxu0
      %v1357 = vpop.f32.mrb[0].mxu0
      %v1358 = vadd.f32 0.0, %v1357
      %v1359 = vpop.f32.mrb[0].mxu0
      %1360 = vmatprep.mubr.bf16.mxu0 0
      %1361 = vmatmul.mubr.bf16.gmra.mrb[0].mxu0 %v1215
      %v1362 = vpop.f32.mrb[0].mxu0
      %v1363 = vadd.f32 0.0, %v1362
      %v1364 = vpop.f32.mrb[0].mxu0
      %v1365 = vpop.f32.mrb[0].mxu0
      %v1366 = vadd.f32 0.0, %v1365
      %v1367 = vpop.f32.mrb[0].mxu0
      %1368 = vmatprep.mubr.bf16.mxu0 0
      %1369 = vmatmul.mubr.bf16.gmra.mrb[0].mxu0 %v1218
      %v1370 = vpop.f32.mrb[0].mxu0
      %v1371 = vadd.f32 0.0, %v1370
      %v1372 = vpop.f32.mrb[0].mxu0
      %v1373 = vpop.f32.mrb[0].mxu0
      %v1374 = vadd.f32 0.0, %v1373
      %v1375 = vpop.f32.mrb[0].mxu0
      %1376 = vmatprep.mubr.bf16.mxu0 0
      %1377 = vmatmul.mubr.bf16.gmra.mrb[0].mxu0 %v1221
      %v1378 = vpop.f32.mrb[0].mxu0
      %v1379 = vadd.f32 0.0, %v1378
      %v1380 = vpop.f32.mrb[0].mxu0
      %v1381 = vpop.f32.mrb[0].mxu0
      %v1382 = vadd.f32 0.0, %v1381
      %v1383 = vpop.f32.mrb[0].mxu0
      %1384 = vmatprep.mubr.bf16.mxu0 0
      %1385 = vmatmul.mubr.bf16.gmra.mrb[0].mxu0 %v1224
      %v1386 = vpop.f32.mrb[0].mxu0
      %v1387 = vadd.f32 0.0, %v1386
      %v1388 = vpop.f32.mrb[0].mxu0
      %v1389 = vpop.f32.mrb[0].mxu0
      %v1390 = vadd.f32 0.0, %v1389
      %v1391 = vpop.f32.mrb[0].mxu0
      %1392 = vmatprep.mubr.bf16.mxu0 0
      %1393 = vmatmul.mubr.bf16.gmra.mrb[0].mxu0 %v1227
      %v1394 = vpop.f32.mrb[0].mxu0
      %v1395 = vadd.f32 0.0, %v1394
      %v1396 = vpop.f32.mrb[0].mxu0
      %v1397 = vpop.f32.mrb[0].mxu0
      %v1398 = vadd.f32 0.0, %v1397
      %v1399 = vpop.f32.mrb[0].mxu0
      %1400 = vmatprep.mubr.bf16.mxu0 0
      %1401 = vmatmul.mubr.bf16.gmra.mrb[0].mxu0 %v1230
      %v1402 = vpop.f32.mrb[0].mxu0
      %v1403 = vadd.f32 0.0, %v1402
      %v1404 = vpop.f32.mrb[0].mxu0
      %v1405 = vpop.f32.mrb[0].mxu0
      %v1406 = vadd.f32 0.0, %v1405
      %v1407 = vpop.f32.mrb[0].mxu0
      %1408 = vmatprep.mubr.bf16.mxu0 0
      %1409 = vmatmul.mubr.bf16.gmra.mrb[0].mxu0 %v1233
      %v1410 = vpop.f32.mrb[0].mxu0
      %v1411 = vadd.f32 0.0, %v1410
      %v1412 = vpop.f32.mrb[0].mxu0
      %v1413 = vpop.f32.mrb[0].mxu0
      %v1414 = vadd.f32 0.0, %v1413
      %v1415 = vpop.f32.mrb[0].mxu0
      %1416 = vmatprep.mubr.bf16.mxu0 0
      %1417 = vmatmul.mubr.bf16.gmra.mrb[0].mxu0 %v1236
      %v1418 = vpop.f32.mrb[0].mxu0
      %v1419 = vadd.f32 0.0, %v1418
      %v1420 = vpop.f32.mrb[0].mxu0
      %v1421 = vpop.f32.mrb[0].mxu0
      %v1422 = vadd.f32 0.0, %v1421
      %v1423 = vpop.f32.mrb[0].mxu0
      %1424 = vmatprep.mubr.bf16.mxu0 0
      %1425 = vmatmul.mubr.bf16.gmra.mrb[0].mxu0 %v1239
      %v1426 = vpop.f32.mrb[0].mxu0
      %v1427 = vadd.f32 0.0, %v1426
      %v1428 = vpop.f32.mrb[0].mxu0
      %v1429 = vpop.f32.mrb[0].mxu0
      %v1430 = vadd.f32 0.0, %v1429
      %v1431 = vpop.f32.mrb[0].mxu0
      %1432 = vmatprep.mubr.bf16.mxu0 0
      %1433 = vmatmul.mubr.bf16.gmra.mrb[0].mxu0 %v1242
      %v1434 = vpop.f32.mrb[0].mxu0
      %v1435 = vadd.f32 0.0, %v1434
      %v1436 = vpop.f32.mrb[0].mxu0
      %v1437 = vpop.f32.mrb[0].mxu0
      %v1438 = vadd.f32 0.0, %v1437
      %v1439 = vpop.f32.mrb[0].mxu0
      %1440 = vmatprep.mubr.bf16.mxu0 0
      %1441 = vmatmul.mubr.bf16.gmra.mrb[0].mxu0 %v1245
      %v1442 = vpop.f32.mrb[0].mxu0
      %v1443 = vadd.f32 0.0, %v1442
      %v1444 = vpop.f32.mrb[0].mxu0
      %v1445 = vpop.f32.mrb[0].mxu0
      %v1446 = vadd.f32 0.0, %v1445
      %v1447 = vpop.f32.mrb[0].mxu0
      %1448 = vmatprep.mubr.bf16.mxu0 0
      %1449 = vmatmul.mubr.bf16.gmra.mrb[0].mxu0 %v1248
      %v1450 = vpop.f32.mrb[0].mxu0
      %v1451 = vadd.f32 0.0, %v1450
      %v1452 = vpop.f32.mrb[0].mxu0
      %v1453 = vpop.f32.mrb[0].mxu0
      %v1454 = vadd.f32 0.0, %v1453
      %v1455 = vpop.f32.mrb[0].mxu0
      %1456 = vmatprep.mubr.bf16.mxu0 0
      %1457 = vmatmul.mubr.bf16.gmra.mrb[0].mxu0 %v1251
      %v1458 = vpop.f32.mrb[0].mxu0
      %v1459 = vadd.f32 0.0, %v1458
      %v1460 = vpop.f32.mrb[0].mxu0
      %v1461 = vpop.f32.mrb[0].mxu0
      %v1462 = vadd.f32 0.0, %v1461
      %v1463 = vpop.f32.mrb[0].mxu0
      %1464 = vmatprep.mubr.bf16.mxu0 0
      %1465 = vmatmul.mubr.bf16.gmra.mrb[0].mxu0 %v1254
      %v1466 = vpop.f32.mrb[0].mxu0
      %v1467 = vadd.f32 0.0, %v1466
      %v1468 = vpop.f32.mrb[0].mxu0
      %v1469 = vpop.f32.mrb[0].mxu0
      %v1470 = vadd.f32 0.0, %v1469
      %v1471 = vpop.f32.mrb[0].mxu0
      %1472 = vmatprep.mubr.bf16.mxu0 0
      %1473 = vmatmul.mubr.bf16.gmra.mrb[0].mxu0 %v1257
      %v1474 = vpop.f32.mrb[0].mxu0
      %v1475 = vadd.f32 0.0, %v1474
      %v1476 = vpop.f32.mrb[0].mxu0
      %v1477 = vpop.f32.mrb[0].mxu0
      %v1478 = vadd.f32 0.0, %v1477
      %v1479 = vpop.f32.mrb[0].mxu0
      %1480 = vmatprep.mubr.bf16.mxu0 0
      %1481 = vmatmul.mubr.bf16.gmra.mrb[0].mxu0 %v1260
      %v1482 = vpop.f32.mrb[0].mxu0
      %v1483 = vadd.f32 0.0, %v1482
      %v1484 = vpop.f32.mrb[0].mxu0
      %v1485 = vpop.f32.mrb[0].mxu0
      %v1486 = vadd.f32 0.0, %v1485
      %v1487 = vpop.f32.mrb[0].mxu0
      %1488 = vmatprep.mubr.bf16.mxu0 0
      %1489 = vmatmul.mubr.bf16.gmra.mrb[0].mxu0 %v1263
      %v1490 = vpop.f32.mrb[0].mxu0
      %v1491 = vadd.f32 0.0, %v1490
      %v1492 = vpop.f32.mrb[0].mxu0
      %v1493 = vpop.f32.mrb[0].mxu0
      %v1494 = vadd.f32 0.0, %v1493
      %v1495 = vpop.f32.mrb[0].mxu0
      %1496 = vmatprep.mubr.bf16.mxu0 0
      %1497 = vmatmul.mubr.bf16.gmra.mrb[0].mxu0 %v1266
      %v1498 = vpop.f32.mrb[0].mxu0
      %v1499 = vadd.f32 0.0, %v1498
      %v1500 = vpop.f32.mrb[0].mxu0
      %v1501 = vpop.f32.mrb[0].mxu0
      %v1502 = vadd.f32 0.0, %v1501
      %v1503 = vpop.f32.mrb[0].mxu0
      %1504 = vmatprep.mubr.bf16.mxu0 0
      %1505 = vmatmul.mubr.bf16.gmra.mrb[0].mxu0 %v1269
      %v1506 = vpop.f32.mrb[0].mxu0
      %v1507 = vadd.f32 0.0, %v1506
      %v1508 = vpop.f32.mrb[0].mxu0
      %v1509 = vpop.f32.mrb[0].mxu0
      %v1510 = vadd.f32 0.0, %v1509
      %v1511 = vpop.f32.mrb[0].mxu0
      %1512 = vmatprep.mubr.bf16.mxu0 0
      %1513 = vmatmul.mubr.bf16.gmra.mrb[0].mxu0 %v1272
      %v1514 = vpop.f32.mrb[0].mxu0
      %v1515 = vadd.f32 0.0, %v1514
      %v1516 = vpop.f32.mrb[0].mxu0
      %v1517 = vpop.f32.mrb[0].mxu0
      %v1518 = vadd.f32 0.0, %v1517
      %v1519 = vpop.f32.mrb[0].mxu0
      %1520 = vmatprep.mubr.bf16.mxu0 0
      %1521 = vmatmul.mubr.bf16.gmra.mrb[0].mxu0 %v1275
      %v1522 = vpop.f32.mrb[0].mxu0
      %v1523 = vadd.f32 0.0, %v1522
      %v1524 = vpop.f32.mrb[0].mxu0
      %v1525 = vpop.f32.mrb[0].mxu0
      %v1526 = vadd.f32 0.0, %v1525
      %v1527 = vpop.f32.mrb[0].mxu0
      %1528 = vdwg.mxu0
      %v1529 = vadd.f32 %v899, %v1315
      %v1530 = vadd.f32 %v902, %v1318
      %v1531 = vadd.f32 %v907, %v1323
      %v1532 = vadd.f32 %v910, %v1326
      %v1533 = vadd.f32 %v915, %v1331
      %v1534 = vadd.f32 %v918, %v1334
      %v1535 = vadd.f32 %v923, %v1339
      %v1536 = vadd.f32 %v926, %v1342
      %v1537 = vadd.f32 %v931, %v1347
      %v1538 = vadd.f32 %v934, %v1350
      %v1539 = vadd.f32 %v939, %v1355
      %v1540 = vadd.f32 %v942, %v1358
      %v1541 = vadd.f32 %v947, %v1363
      %v1542 = vadd.f32 %v950, %v1366
      %v1543 = vadd.f32 %v955, %v1371
      %v1544 = vadd.f32 %v958, %v1374
      %v1545 = vadd.f32 %v963, %v1379
      %v1546 = vadd.f32 %v966, %v1382
      %v1547 = vadd.f32 %v971, %v1387
      %v1548 = vadd.f32 %v974, %v1390
      %v1549 = vadd.f32 %v979, %v1395
      %v1550 = vadd.f32 %v982, %v1398
      %v1551 = vadd.f32 %v987, %v1403
      %v1552 = vadd.f32 %v990, %v1406
      %v1553 = vadd.f32 %v995, %v1411
      %v1554 = vadd.f32 %v998, %v1414
      %v1555 = vadd.f32 %v1003, %v1419
      %v1556 = vadd.f32 %v1006, %v1422
      %v1557 = vadd.f32 %v1011, %v1427
      %v1558 = vadd.f32 %v1014, %v1430
      %v1559 = vadd.f32 %v1019, %v1435
      %v1560 = vadd.f32 %v1022, %v1438
      %v1561 = vadd.f32 %v1027, %v1443
      %v1562 = vadd.f32 %v1030, %v1446
      %v1563 = vadd.f32 %v1035, %v1451
      %v1564 = vadd.f32 %v1038, %v1454
      %v1565 = vadd.f32 %v1043, %v1459
      %v1566 = vadd.f32 %v1046, %v1462
      %v1567 = vadd.f32 %v1051, %v1467
      %v1568 = vadd.f32 %v1054, %v1470
      %v1569 = vadd.f32 %v1059, %v1475
      %v1570 = vadd.f32 %v1062, %v1478
      %v1571 = vadd.f32 %v1067, %v1483
      %v1572 = vadd.f32 %v1070, %v1486
      %v1573 = vadd.f32 %v1075, %v1491
      %v1574 = vadd.f32 %v1078, %v1494
      %v1575 = vadd.f32 %v1083, %v1499
      %v1576 = vadd.f32 %v1086, %v1502
      %v1577 = vadd.f32 %v1091, %v1507
      %v1578 = vadd.f32 %v1094, %v1510
      %v1579 = vadd.f32 %v1099, %v1515
      %v1580 = vadd.f32 %v1102, %v1518
      %v1581 = vadd.f32 %v1107, %v1523
      %v1582 = vadd.f32 %v1110, %v1526
      %s1583 = scalar_lea.vmem %s273, 32
      %v1584 = vld [vmem:[%s1583] sm:$0xff]
      %v1585 = vld [vmem:[%s1583 + $0x8] sm:$0xff]
      %v1586 = vld [vmem:[%s1583 + $0x10] sm:$0xff]
      %v1587 = vld [vmem:[%s1583 + $0x20] sm:$0xff]
      %v1588 = vld [vmem:[%s1583 + $0x28] sm:$0xff]
      %v1589 = vld [vmem:[%s1583 + $0x30] sm:$0xff]
      %v1590 = vld [vmem:[%s1583 + $0x40] sm:$0xff]
      %v1591 = vld [vmem:[%s1583 + $0x48] sm:$0xff]
      %v1592 = vld [vmem:[%s1583 + $0x50] sm:$0xff]
      %v1593 = vld [vmem:[%s1583 + $0x60] sm:$0xff]
      %v1594 = vld [vmem:[%s1583 + $0x68] sm:$0xff]
      %v1595 = vld [vmem:[%s1583 + $0x70] sm:$0xff]
      %v1596 = vld [vmem:[%s1583 + $0x80] sm:$0xff]
      %v1597 = vld [vmem:[%s1583 + $0x88] sm:$0xff]
      %v1598 = vld [vmem:[%s1583 + $0x90] sm:$0xff]
      %v1599 = vld [vmem:[%s1583 + $0xa0] sm:$0xff]
      %v1600 = vld [vmem:[%s1583 + $0xa8] sm:$0xff]
      %v1601 = vld [vmem:[%s1583 + $0xb0] sm:$0xff]
      %v1602 = vld [vmem:[%s1583 + $0xc0] sm:$0xff]
      %v1603 = vld [vmem:[%s1583 + $0xc8] sm:$0xff]
      %v1604 = vld [vmem:[%s1583 + $0xd0] sm:$0xff]
      %v1605 = vld [vmem:[%s1583 + $0xe0] sm:$0xff]
      %v1606 = vld [vmem:[%s1583 + $0xe8] sm:$0xff]
      %v1607 = vld [vmem:[%s1583 + $0xf0] sm:$0xff]
      %v1608 = vld [vmem:[%s1583 + $0x100] sm:$0xff]
      %v1609 = vld [vmem:[%s1583 + $0x108] sm:$0xff]
      %v1610 = vld [vmem:[%s1583 + $0x110] sm:$0xff]
      %v1611 = vld [vmem:[%s1583 + $0x120] sm:$0xff]
      %v1612 = vld [vmem:[%s1583 + $0x128] sm:$0xff]
      %v1613 = vld [vmem:[%s1583 + $0x130] sm:$0xff]
      %v1614 = vld [vmem:[%s1583 + $0x140] sm:$0xff]
      %v1615 = vld [vmem:[%s1583 + $0x148] sm:$0xff]
      %v1616 = vld [vmem:[%s1583 + $0x150] sm:$0xff]
      %v1617 = vld [vmem:[%s1583 + $0x160] sm:$0xff]
      %v1618 = vld [vmem:[%s1583 + $0x168] sm:$0xff]
      %v1619 = vld [vmem:[%s1583 + $0x170] sm:$0xff]
      %v1620 = vld [vmem:[%s1583 + $0x180] sm:$0xff]
      %v1621 = vld [vmem:[%s1583 + $0x188] sm:$0xff]
      %v1622 = vld [vmem:[%s1583 + $0x190] sm:$0xff]
      %v1623 = vld [vmem:[%s1583 + $0x1a0] sm:$0xff]
      %v1624 = vld [vmem:[%s1583 + $0x1a8] sm:$0xff]
      %v1625 = vld [vmem:[%s1583 + $0x1b0] sm:$0xff]
      %v1626 = vld [vmem:[%s1583 + $0x1c0] sm:$0xff]
      %v1627 = vld [vmem:[%s1583 + $0x1c8] sm:$0xff]
      %v1628 = vld [vmem:[%s1583 + $0x1d0] sm:$0xff]
      %v1629 = vld [vmem:[%s1583 + $0x1e0] sm:$0xff]
      %v1630 = vld [vmem:[%s1583 + $0x1e8] sm:$0xff]
      %v1631 = vld [vmem:[%s1583 + $0x1f0] sm:$0xff]
      %v1632 = vld [vmem:[%s1583 + $0x200] sm:$0xff]
      %v1633 = vld [vmem:[%s1583 + $0x208] sm:$0xff]
      %v1634 = vld [vmem:[%s1583 + $0x210] sm:$0xff]
      %v1635 = vld [vmem:[%s1583 + $0x220] sm:$0xff]
      %v1636 = vld [vmem:[%s1583 + $0x228] sm:$0xff]
      %v1637 = vld [vmem:[%s1583 + $0x230] sm:$0xff]
      %v1638 = vpack.c.bf16 %v1585, %v1584
      %v1639 = vpack.c.bf16 %v1587, %v1586
      %v1640 = vpack.c.bf16 %v1589, %v1588
      %v1641 = vpack.c.bf16 %v1591, %v1590
      %v1642 = vpack.c.bf16 %v1593, %v1592
      %v1643 = vpack.c.bf16 %v1595, %v1594
      %v1644 = vpack.c.bf16 %v1597, %v1596
      %v1645 = vpack.c.bf16 %v1599, %v1598
      %v1646 = vpack.c.bf16 %v1601, %v1600
      %v1647 = vpack.c.bf16 %v1603, %v1602
      %v1648 = vpack.c.bf16 %v1605, %v1604
      %v1649 = vpack.c.bf16 %v1607, %v1606
      %v1650 = vpack.c.bf16 %v1609, %v1608
      %v1651 = vpack.c.bf16 %v1611, %v1610
      %v1652 = vpack.c.bf16 %v1613, %v1612
      %v1653 = vpack.c.bf16 %v1615, %v1614
      %v1654 = vpack.c.bf16 %v1617, %v1616
      %v1655 = vpack.c.bf16 %v1619, %v1618
      %v1656 = vpack.c.bf16 %v1621, %v1620
      %v1657 = vpack.c.bf16 %v1623, %v1622
      %v1658 = vpack.c.bf16 %v1625, %v1624
      %v1659 = vpack.c.bf16 %v1627, %v1626
      %v1660 = vpack.c.bf16 %v1629, %v1628
      %v1661 = vpack.c.bf16 %v1631, %v1630
      %v1662 = vpack.c.bf16 %v1633, %v1632
      %v1663 = vpack.c.bf16 %v1635, %v1634
      %v1664 = vpack.c.bf16 %v1637, %v1636
      %s1665 = scalar_lea.vmem %s1, 6
      %v1666 = vld [vmem:[%s1665] sm:$0x3]
      %v1668 = vsel %vm445, %v1638, 0
      %v1671 = vsel %vm445, %v1639, 0
      %v1674 = vsel %vm445, %v1640, 0
      %v1677 = vsel %vm445, %v1641, 0
      %v1680 = vsel %vm445, %v1642, 0
      %v1683 = vsel %vm445, %v1643, 0
      %v1686 = vsel %vm445, %v1644, 0
      %v1689 = vsel %vm445, %v1645, 0
      %v1692 = vsel %vm445, %v1646, 0
      %v1695 = vsel %vm445, %v1647, 0
      %v1698 = vsel %vm445, %v1648, 0
      %v1701 = vsel %vm445, %v1649, 0
      %v1704 = vsel %vm445, %v1650, 0
      %v1707 = vsel %vm445, %v1651, 0
      %v1710 = vsel %vm445, %v1652, 0
      %v1713 = vsel %vm445, %v1653, 0
      %v1716 = vsel %vm445, %v1654, 0
      %v1719 = vsel %vm445, %v1655, 0
      %v1722 = vsel %vm445, %v1656, 0
      %v1725 = vsel %vm445, %v1657, 0
      %v1728 = vsel %vm445, %v1658, 0
      %v1731 = vsel %vm445, %v1659, 0
      %v1734 = vsel %vm445, %v1660, 0
      %v1737 = vsel %vm445, %v1661, 0
      %v1740 = vsel %vm445, %v1662, 0
      %v1743 = vsel %vm445, %v1663, 0
      %v1746 = vsel %vm445, %v1664, 0
      %v1749 = vsel %vm527, %v1666, 0
      %1751 = vmatprep.subr.bf16.mxu0 0
      %1752 = vmatpush1.bf16.msra.mxu0 %v1749
      %1753 = vmatprep.subr.bf16.mxu0 0
      %1754 = vmatpush1.bf16.msra.mxu0 0
      %1755 = vmatprep.subr.bf16.mxu0 0
      %1756 = vmatpush1.bf16.msra.mxu0 0
      %1757 = vmatprep.subr.bf16.mxu0 0
      %1758 = vmatpush1.bf16.msra.mxu0 0
      %1759 = vmatprep.subr.bf16.mxu0 0
      %1760 = vmatpush1.bf16.msra.mxu0 0
      %1761 = vmatprep.subr.bf16.mxu0 0
      %1762 = vmatpush1.bf16.msra.mxu0 0
      %1763 = vmatprep.subr.bf16.mxu0 0
      %1764 = vmatpush1.bf16.msra.mxu0 0
      %1765 = vmatprep.subr.bf16.mxu0 0
      %1766 = vmatpush1.bf16.msra.mxu0 0
      %1767 = vmatprep.subr.bf16.mxu0 0
      %1768 = vmatpush1.bf16.msra.mxu0 0
      %1769 = vmatprep.subr.bf16.mxu0 0
      %1770 = vmatpush1.bf16.msra.mxu0 0
      %1771 = vmatprep.subr.bf16.mxu0 0
      %1772 = vmatpush1.bf16.msra.mxu0 0
      %1773 = vmatprep.subr.bf16.mxu0 0
      %1774 = vmatpush1.bf16.msra.mxu0 0
      %1775 = vmatprep.subr.bf16.mxu0 0
      %1776 = vmatpush1.bf16.msra.mxu0 0
      %1777 = vmatprep.subr.bf16.mxu0 0
      %1778 = vmatpush1.bf16.msra.mxu0 0
      %1779 = vmatprep.subr.bf16.mxu0 0
      %1780 = vmatpush1.bf16.msra.mxu0 0
      %1781 = vmatprep.subr.bf16.mxu0 0
      %1782 = vmatpush1.bf16.msra.mxu0 0
      %1783 = vmatprep.mubr.bf16.mxu0 0
      %1784 = vmatmul.mubr.bf16.gmra.mrb[0].mxu0 %v1668
      %v1785 = vpop.f32.mrb[0].mxu0
      %v1786 = vadd.f32 0.0, %v1785
      %v1787 = vpop.f32.mrb[0].mxu0
      %v1788 = vpop.f32.mrb[0].mxu0
      %v1789 = vadd.f32 0.0, %v1788
      %v1790 = vpop.f32.mrb[0].mxu0
      %1791 = vmatprep.mubr.bf16.mxu0 0
      %1792 = vmatmul.mubr.bf16.gmra.mrb[0].mxu0 %v1671
      %v1793 = vpop.f32.mrb[0].mxu0
      %v1794 = vadd.f32 0.0, %v1793
      %v1795 = vpop.f32.mrb[0].mxu0
      %v1796 = vpop.f32.mrb[0].mxu0
      %v1797 = vadd.f32 0.0, %v1796
      %v1798 = vpop.f32.mrb[0].mxu0
      %1799 = vmatprep.mubr.bf16.mxu0 0
      %1800 = vmatmul.mubr.bf16.gmra.mrb[0].mxu0 %v1674
      %v1801 = vpop.f32.mrb[0].mxu0
      %v1802 = vadd.f32 0.0, %v1801
      %v1803 = vpop.f32.mrb[0].mxu0
      %v1804 = vpop.f32.mrb[0].mxu0
      %v1805 = vadd.f32 0.0, %v1804
      %v1806 = vpop.f32.mrb[0].mxu0
      %1807 = vmatprep.mubr.bf16.mxu0 0
      %1808 = vmatmul.mubr.bf16.gmra.mrb[0].mxu0 %v1677
      %v1809 = vpop.f32.mrb[0].mxu0
      %v1810 = vadd.f32 0.0, %v1809
      %v1811 = vpop.f32.mrb[0].mxu0
      %v1812 = vpop.f32.mrb[0].mxu0
      %v1813 = vadd.f32 0.0, %v1812
      %v1814 = vpop.f32.mrb[0].mxu0
      %1815 = vmatprep.mubr.bf16.mxu0 0
      %1816 = vmatmul.mubr.bf16.gmra.mrb[0].mxu0 %v1680
      %v1817 = vpop.f32.mrb[0].mxu0
      %v1818 = vadd.f32 0.0, %v1817
      %v1819 = vpop.f32.mrb[0].mxu0
      %v1820 = vpop.f32.mrb[0].mxu0
      %v1821 = vadd.f32 0.0, %v1820
      %v1822 = vpop.f32.mrb[0].mxu0
      %1823 = vmatprep.mubr.bf16.mxu0 0
      %1824 = vmatmul.mubr.bf16.gmra.mrb[0].mxu0 %v1683
      %v1825 = vpop.f32.mrb[0].mxu0
      %v1826 = vadd.f32 0.0, %v1825
      %v1827 = vpop.f32.mrb[0].mxu0
      %v1828 = vpop.f32.mrb[0].mxu0
      %v1829 = vadd.f32 0.0, %v1828
      %v1830 = vpop.f32.mrb[0].mxu0
      %1831 = vmatprep.mubr.bf16.mxu0 0
      %1832 = vmatmul.mubr.bf16.gmra.mrb[0].mxu0 %v1686
      %v1833 = vpop.f32.mrb[0].mxu0
      %v1834 = vadd.f32 0.0, %v1833
      %v1835 = vpop.f32.mrb[0].mxu0
      %v1836 = vpop.f32.mrb[0].mxu0
      %v1837 = vadd.f32 0.0, %v1836
      %v1838 = vpop.f32.mrb[0].mxu0
      %1839 = vmatprep.mubr.bf16.mxu0 0
      %1840 = vmatmul.mubr.bf16.gmra.mrb[0].mxu0 %v1689
      %v1841 = vpop.f32.mrb[0].mxu0
      %v1842 = vadd.f32 0.0, %v1841
      %v1843 = vpop.f32.mrb[0].mxu0
      %v1844 = vpop.f32.mrb[0].mxu0
      %v1845 = vadd.f32 0.0, %v1844
      %v1846 = vpop.f32.mrb[0].mxu0
      %1847 = vmatprep.mubr.bf16.mxu0 0
      %1848 = vmatmul.mubr.bf16.gmra.mrb[0].mxu0 %v1692
      %v1849 = vpop.f32.mrb[0].mxu0
      %v1850 = vadd.f32 0.0, %v1849
      %v1851 = vpop.f32.mrb[0].mxu0
      %v1852 = vpop.f32.mrb[0].mxu0
      %v1853 = vadd.f32 0.0, %v1852
      %v1854 = vpop.f32.mrb[0].mxu0
      %1855 = vmatprep.mubr.bf16.mxu0 0
      %1856 = vmatmul.mubr.bf16.gmra.mrb[0].mxu0 %v1695
      %v1857 = vpop.f32.mrb[0].mxu0
      %v1858 = vadd.f32 0.0, %v1857
      %v1859 = vpop.f32.mrb[0].mxu0
      %v1860 = vpop.f32.mrb[0].mxu0
      %v1861 = vadd.f32 0.0, %v1860
      %v1862 = vpop.f32.mrb[0].mxu0
      %1863 = vmatprep.mubr.bf16.mxu0 0
      %1864 = vmatmul.mubr.bf16.gmra.mrb[0].mxu0 %v1698
      %v1865 = vpop.f32.mrb[0].mxu0
      %v1866 = vadd.f32 0.0, %v1865
      %v1867 = vpop.f32.mrb[0].mxu0
      %v1868 = vpop.f32.mrb[0].mxu0
      %v1869 = vadd.f32 0.0, %v1868
      %v1870 = vpop.f32.mrb[0].mxu0
      %1871 = vmatprep.mubr.bf16.mxu0 0
      %1872 = vmatmul.mubr.bf16.gmra.mrb[0].mxu0 %v1701
      %v1873 = vpop.f32.mrb[0].mxu0
      %v1874 = vadd.f32 0.0, %v1873
      %v1875 = vpop.f32.mrb[0].mxu0
      %v1876 = vpop.f32.mrb[0].mxu0
      %v1877 = vadd.f32 0.0, %v1876
      %v1878 = vpop.f32.mrb[0].mxu0
      %1879 = vmatprep.mubr.bf16.mxu0 0
      %1880 = vmatmul.mubr.bf16.gmra.mrb[0].mxu0 %v1704
      %v1881 = vpop.f32.mrb[0].mxu0
      %v1882 = vadd.f32 0.0, %v1881
      %v1883 = vpop.f32.mrb[0].mxu0
      %v1884 = vpop.f32.mrb[0].mxu0
      %v1885 = vadd.f32 0.0, %v1884
      %v1886 = vpop.f32.mrb[0].mxu0
      %1887 = vmatprep.mubr.bf16.mxu0 0
      %1888 = vmatmul.mubr.bf16.gmra.mrb[0].mxu0 %v1707
      %v1889 = vpop.f32.mrb[0].mxu0
      %v1890 = vadd.f32 0.0, %v1889
      %v1891 = vpop.f32.mrb[0].mxu0
      %v1892 = vpop.f32.mrb[0].mxu0
      %v1893 = vadd.f32 0.0, %v1892
      %v1894 = vpop.f32.mrb[0].mxu0
      %1895 = vmatprep.mubr.bf16.mxu0 0
      %1896 = vmatmul.mubr.bf16.gmra.mrb[0].mxu0 %v1710
      %v1897 = vpop.f32.mrb[0].mxu0
      %v1898 = vadd.f32 0.0, %v1897
      %v1899 = vpop.f32.mrb[0].mxu0
      %v1900 = vpop.f32.mrb[0].mxu0
      %v1901 = vadd.f32 0.0, %v1900
      %v1902 = vpop.f32.mrb[0].mxu0
      %1903 = vmatprep.mubr.bf16.mxu0 0
      %1904 = vmatmul.mubr.bf16.gmra.mrb[0].mxu0 %v1713
      %v1905 = vpop.f32.mrb[0].mxu0
      %v1906 = vadd.f32 0.0, %v1905
      %v1907 = vpop.f32.mrb[0].mxu0
      %v1908 = vpop.f32.mrb[0].mxu0
      %v1909 = vadd.f32 0.0, %v1908
      %v1910 = vpop.f32.mrb[0].mxu0
      %1911 = vmatprep.mubr.bf16.mxu0 0
      %1912 = vmatmul.mubr.bf16.gmra.mrb[0].mxu0 %v1716
      %v1913 = vpop.f32.mrb[0].mxu0
      %v1914 = vadd.f32 0.0, %v1913
      %v1915 = vpop.f32.mrb[0].mxu0
      %v1916 = vpop.f32.mrb[0].mxu0
      %v1917 = vadd.f32 0.0, %v1916
      %v1918 = vpop.f32.mrb[0].mxu0
      %1919 = vmatprep.mubr.bf16.mxu0 0
      %1920 = vmatmul.mubr.bf16.gmra.mrb[0].mxu0 %v1719
      %v1921 = vpop.f32.mrb[0].mxu0
      %v1922 = vadd.f32 0.0, %v1921
      %v1923 = vpop.f32.mrb[0].mxu0
      %v1924 = vpop.f32.mrb[0].mxu0
      %v1925 = vadd.f32 0.0, %v1924
      %v1926 = vpop.f32.mrb[0].mxu0
      %1927 = vmatprep.mubr.bf16.mxu0 0
      %1928 = vmatmul.mubr.bf16.gmra.mrb[0].mxu0 %v1722
      %v1929 = vpop.f32.mrb[0].mxu0
      %v1930 = vadd.f32 0.0, %v1929
      %v1931 = vpop.f32.mrb[0].mxu0
      %v1932 = vpop.f32.mrb[0].mxu0
      %v1933 = vadd.f32 0.0, %v1932
      %v1934 = vpop.f32.mrb[0].mxu0
      %1935 = vmatprep.mubr.bf16.mxu0 0
      %1936 = vmatmul.mubr.bf16.gmra.mrb[0].mxu0 %v1725
      %v1937 = vpop.f32.mrb[0].mxu0
      %v1938 = vadd.f32 0.0, %v1937
      %v1939 = vpop.f32.mrb[0].mxu0
      %v1940 = vpop.f32.mrb[0].mxu0
      %v1941 = vadd.f32 0.0, %v1940
      %v1942 = vpop.f32.mrb[0].mxu0
      %1943 = vmatprep.mubr.bf16.mxu0 0
      %1944 = vmatmul.mubr.bf16.gmra.mrb[0].mxu0 %v1728
      %v1945 = vpop.f32.mrb[0].mxu0
      %v1946 = vadd.f32 0.0, %v1945
      %v1947 = vpop.f32.mrb[0].mxu0
      %v1948 = vpop.f32.mrb[0].mxu0
      %v1949 = vadd.f32 0.0, %v1948
      %v1950 = vpop.f32.mrb[0].mxu0
      %1951 = vmatprep.mubr.bf16.mxu0 0
      %1952 = vmatmul.mubr.bf16.gmra.mrb[0].mxu0 %v1731
      %v1953 = vpop.f32.mrb[0].mxu0
      %v1954 = vadd.f32 0.0, %v1953
      %v1955 = vpop.f32.mrb[0].mxu0
      %v1956 = vpop.f32.mrb[0].mxu0
      %v1957 = vadd.f32 0.0, %v1956
      %v1958 = vpop.f32.mrb[0].mxu0
      %1959 = vmatprep.mubr.bf16.mxu0 0
      %1960 = vmatmul.mubr.bf16.gmra.mrb[0].mxu0 %v1734
      %v1961 = vpop.f32.mrb[0].mxu0
      %v1962 = vadd.f32 0.0, %v1961
      %v1963 = vpop.f32.mrb[0].mxu0
      %v1964 = vpop.f32.mrb[0].mxu0
      %v1965 = vadd.f32 0.0, %v1964
      %v1966 = vpop.f32.mrb[0].mxu0
      %1967 = vmatprep.mubr.bf16.mxu0 0
      %1968 = vmatmul.mubr.bf16.gmra.mrb[0].mxu0 %v1737
      %v1969 = vpop.f32.mrb[0].mxu0
      %v1970 = vadd.f32 0.0, %v1969
      %v1971 = vpop.f32.mrb[0].mxu0
      %v1972 = vpop.f32.mrb[0].mxu0
      %v1973 = vadd.f32 0.0, %v1972
      %v1974 = vpop.f32.mrb[0].mxu0
      %1975 = vmatprep.mubr.bf16.mxu0 0
      %1976 = vmatmul.mubr.bf16.gmra.mrb[0].mxu0 %v1740
      %v1977 = vpop.f32.mrb[0].mxu0
      %v1978 = vadd.f32 0.0, %v1977
      %v1979 = vpop.f32.mrb[0].mxu0
      %v1980 = vpop.f32.mrb[0].mxu0
      %v1981 = vadd.f32 0.0, %v1980
      %v1982 = vpop.f32.mrb[0].mxu0
      %1983 = vmatprep.mubr.bf16.mxu0 0
      %1984 = vmatmul.mubr.bf16.gmra.mrb[0].mxu0 %v1743
      %v1985 = vpop.f32.mrb[0].mxu0
      %v1986 = vadd.f32 0.0, %v1985
      %v1987 = vpop.f32.mrb[0].mxu0
      %v1988 = vpop.f32.mrb[0].mxu0
      %v1989 = vadd.f32 0.0, %v1988
      %v1990 = vpop.f32.mrb[0].mxu0
      %1991 = vmatprep.mubr.bf16.mxu0 0
      %1992 = vmatmul.mubr.bf16.gmra.mrb[0].mxu0 %v1746
      %v1993 = vpop.f32.mrb[0].mxu0
      %v1994 = vadd.f32 0.0, %v1993
      %v1995 = vpop.f32.mrb[0].mxu0
      %v1996 = vpop.f32.mrb[0].mxu0
      %v1997 = vadd.f32 0.0, %v1996
      %v1998 = vpop.f32.mrb[0].mxu0
      %1999 = vdwg.mxu0
      %v2000 = vadd.f32 %v1529, %v1786
      %v2001 = vadd.f32 %v1530, %v1789
      %v2002 = vadd.f32 %v1531, %v1794
      %v2003 = vadd.f32 %v1532, %v1797
      %v2004 = vadd.f32 %v1533, %v1802
      %v2005 = vadd.f32 %v1534, %v1805
      %v2006 = vadd.f32 %v1535, %v1810
      %v2007 = vadd.f32 %v1536, %v1813
      %v2008 = vadd.f32 %v1537, %v1818
      %v2009 = vadd.f32 %v1538, %v1821
      %v2010 = vadd.f32 %v1539, %v1826
      %v2011 = vadd.f32 %v1540, %v1829
      %v2012 = vadd.f32 %v1541, %v1834
      %v2013 = vadd.f32 %v1542, %v1837
      %v2014 = vadd.f32 %v1543, %v1842
      %v2015 = vadd.f32 %v1544, %v1845
      %v2016 = vadd.f32 %v1545, %v1850
      %v2017 = vadd.f32 %v1546, %v1853
      %v2018 = vadd.f32 %v1547, %v1858
      %v2019 = vadd.f32 %v1548, %v1861
      %v2020 = vadd.f32 %v1549, %v1866
      %v2021 = vadd.f32 %v1550, %v1869
      %v2022 = vadd.f32 %v1551, %v1874
      %v2023 = vadd.f32 %v1552, %v1877
      %v2024 = vadd.f32 %v1553, %v1882
      %v2025 = vadd.f32 %v1554, %v1885
      %v2026 = vadd.f32 %v1555, %v1890
      %v2027 = vadd.f32 %v1556, %v1893
      %v2028 = vadd.f32 %v1557, %v1898
      %v2029 = vadd.f32 %v1558, %v1901
      %v2030 = vadd.f32 %v1559, %v1906
      %v2031 = vadd.f32 %v1560, %v1909
      %v2032 = vadd.f32 %v1561, %v1914
      %v2033 = vadd.f32 %v1562, %v1917
      %v2034 = vadd.f32 %v1563, %v1922
      %v2035 = vadd.f32 %v1564, %v1925
      %v2036 = vadd.f32 %v1565, %v1930
      %v2037 = vadd.f32 %v1566, %v1933
      %v2038 = vadd.f32 %v1567, %v1938
      %v2039 = vadd.f32 %v1568, %v1941
      %v2040 = vadd.f32 %v1569, %v1946
      %v2041 = vadd.f32 %v1570, %v1949
      %v2042 = vadd.f32 %v1571, %v1954
      %v2043 = vadd.f32 %v1572, %v1957
      %v2044 = vadd.f32 %v1573, %v1962
      %v2045 = vadd.f32 %v1574, %v1965
      %v2046 = vadd.f32 %v1575, %v1970
      %v2047 = vadd.f32 %v1576, %v1973
      %v2048 = vadd.f32 %v1577, %v1978
      %v2049 = vadd.f32 %v1578, %v1981
      %v2050 = vadd.f32 %v1579, %v1986
      %v2051 = vadd.f32 %v1580, %v1989
      %v2052 = vadd.f32 %v1581, %v1994
      %v2053 = vadd.f32 %v1582, %v1997
      %v2054 = vld [vmem:[%s1583 + $0x1] sm:$0xff]
      %v2055 = vld [vmem:[%s1583 + $0x9] sm:$0xff]
      %v2056 = vld [vmem:[%s1583 + $0x11] sm:$0xff]
      %v2057 = vld [vmem:[%s1583 + $0x21] sm:$0xff]
      %v2058 = vld [vmem:[%s1583 + $0x29] sm:$0xff]
      %v2059 = vld [vmem:[%s1583 + $0x31] sm:$0xff]
      %v2060 = vld [vmem:[%s1583 + $0x41] sm:$0xff]
      %v2061 = vld [vmem:[%s1583 + $0x49] sm:$0xff]
      %v2062 = vld [vmem:[%s1583 + $0x51] sm:$0xff]
      %v2063 = vld [vmem:[%s1583 + $0x61] sm:$0xff]
      %v2064 = vld [vmem:[%s1583 + $0x69] sm:$0xff]
      %v2065 = vld [vmem:[%s1583 + $0x71] sm:$0xff]
      %v2066 = vld [vmem:[%s1583 + $0x81] sm:$0xff]
      %v2067 = vld [vmem:[%s1583 + $0x89] sm:$0xff]
      %v2068 = vld [vmem:[%s1583 + $0x91] sm:$0xff]
      %v2069 = vld [vmem:[%s1583 + $0xa1] sm:$0xff]
      %v2070 = vld [vmem:[%s1583 + $0xa9] sm:$0xff]
      %v2071 = vld [vmem:[%s1583 + $0xb1] sm:$0xff]
      %v2072 = vld [vmem:[%s1583 + $0xc1] sm:$0xff]
      %v2073 = vld [vmem:[%s1583 + $0xc9] sm:$0xff]
      %v2074 = vld [vmem:[%s1583 + $0xd1] sm:$0xff]
      %v2075 = vld [vmem:[%s1583 + $0xe1] sm:$0xff]
      %v2076 = vld [vmem:[%s1583 + $0xe9] sm:$0xff]
      %v2077 = vld [vmem:[%s1583 + $0xf1] sm:$0xff]
      %v2078 = vld [vmem:[%s1583 + $0x101] sm:$0xff]
      %v2079 = vld [vmem:[%s1583 + $0x109] sm:$0xff]
      %v2080 = vld [vmem:[%s1583 + $0x111] sm:$0xff]
      %v2081 = vld [vmem:[%s1583 + $0x121] sm:$0xff]
      %v2082 = vld [vmem:[%s1583 + $0x129] sm:$0xff]
      %v2083 = vld [vmem:[%s1583 + $0x131] sm:$0xff]
      %v2084 = vld [vmem:[%s1583 + $0x141] sm:$0xff]
      %v2085 = vld [vmem:[%s1583 + $0x149] sm:$0xff]
      %v2086 = vld [vmem:[%s1583 + $0x151] sm:$0xff]
      %v2087 = vld [vmem:[%s1583 + $0x161] sm:$0xff]
      %v2088 = vld [vmem:[%s1583 + $0x169] sm:$0xff]
      %v2089 = vld [vmem:[%s1583 + $0x171] sm:$0xff]
      %v2090 = vld [vmem:[%s1583 + $0x181] sm:$0xff]
      %v2091 = vld [vmem:[%s1583 + $0x189] sm:$0xff]
      %v2092 = vld [vmem:[%s1583 + $0x191] sm:$0xff]
      %v2093 = vld [vmem:[%s1583 + $0x1a1] sm:$0xff]
      %v2094 = vld [vmem:[%s1583 + $0x1a9] sm:$0xff]
      %v2095 = vld [vmem:[%s1583 + $0x1b1] sm:$0xff]
      %v2096 = vld [vmem:[%s1583 + $0x1c1] sm:$0xff]
      %v2097 = vld [vmem:[%s1583 + $0x1c9] sm:$0xff]
      %v2098 = vld [vmem:[%s1583 + $0x1d1] sm:$0xff]
      %v2099 = vld [vmem:[%s1583 + $0x1e1] sm:$0xff]
      %v2100 = vld [vmem:[%s1583 + $0x1e9] sm:$0xff]
      %v2101 = vld [vmem:[%s1583 + $0x1f1] sm:$0xff]
      %v2102 = vld [vmem:[%s1583 + $0x201] sm:$0xff]
      %v2103 = vld [vmem:[%s1583 + $0x209] sm:$0xff]
      %v2104 = vld [vmem:[%s1583 + $0x211] sm:$0xff]
      %v2105 = vld [vmem:[%s1583 + $0x221] sm:$0xff]
      %v2106 = vld [vmem:[%s1583 + $0x229] sm:$0xff]
      %v2107 = vld [vmem:[%s1583 + $0x231] sm:$0xff]
      %v2108 = vpack.c.bf16 %v2055, %v2054
      %v2109 = vpack.c.bf16 %v2057, %v2056
      %v2110 = vpack.c.bf16 %v2059, %v2058
      %v2111 = vpack.c.bf16 %v2061, %v2060
      %v2112 = vpack.c.bf16 %v2063, %v2062
      %v2113 = vpack.c.bf16 %v2065, %v2064
      %v2114 = vpack.c.bf16 %v2067, %v2066
      %v2115 = vpack.c.bf16 %v2069, %v2068
      %v2116 = vpack.c.bf16 %v2071, %v2070
      %v2117 = vpack.c.bf16 %v2073, %v2072
      %v2118 = vpack.c.bf16 %v2075, %v2074
      %v2119 = vpack.c.bf16 %v2077, %v2076
      %v2120 = vpack.c.bf16 %v2079, %v2078
      %v2121 = vpack.c.bf16 %v2081, %v2080
      %v2122 = vpack.c.bf16 %v2083, %v2082
      %v2123 = vpack.c.bf16 %v2085, %v2084
      %v2124 = vpack.c.bf16 %v2087, %v2086
      %v2125 = vpack.c.bf16 %v2089, %v2088
      %v2126 = vpack.c.bf16 %v2091, %v2090
      %v2127 = vpack.c.bf16 %v2093, %v2092
      %v2128 = vpack.c.bf16 %v2095, %v2094
      %v2129 = vpack.c.bf16 %v2097, %v2096
      %v2130 = vpack.c.bf16 %v2099, %v2098
      %v2131 = vpack.c.bf16 %v2101, %v2100
      %v2132 = vpack.c.bf16 %v2103, %v2102
      %v2133 = vpack.c.bf16 %v2105, %v2104
      %v2134 = vpack.c.bf16 %v2107, %v2106
      %s2135 = scalar_lea.vmem %s1, 8
      %v2136 = vld [vmem:[%s2135] sm:$0x3]
      %v2138 = vsel %vm445, %v2108, 0
      %v2141 = vsel %vm445, %v2109, 0
      %v2144 = vsel %vm445, %v2110, 0
      %v2147 = vsel %vm445, %v2111, 0
      %v2150 = vsel %vm445, %v2112, 0
      %v2153 = vsel %vm445, %v2113, 0
      %v2156 = vsel %vm445, %v2114, 0
      %v2159 = vsel %vm445, %v2115, 0
      %v2162 = vsel %vm445, %v2116, 0
      %v2165 = vsel %vm445, %v2117, 0
      %v2168 = vsel %vm445, %v2118, 0
      %v2171 = vsel %vm445, %v2119, 0
      %v2174 = vsel %vm445, %v2120, 0
      %v2177 = vsel %vm445, %v2121, 0
      %v2180 = vsel %vm445, %v2122, 0
      %v2183 = vsel %vm445, %v2123, 0
      %v2186 = vsel %vm445, %v2124, 0
      %v2189 = vsel %vm445, %v2125, 0
      %v2192 = vsel %vm445, %v2126, 0
      %v2195 = vsel %vm445, %v2127, 0
      %v2198 = vsel %vm445, %v2128, 0
      %v2201 = vsel %vm445, %v2129, 0
      %v2204 = vsel %vm445, %v2130, 0
      %v2207 = vsel %vm445, %v2131, 0
      %v2210 = vsel %vm445, %v2132, 0
      %v2213 = vsel %vm445, %v2133, 0
      %v2216 = vsel %vm445, %v2134, 0
      %v2219 = vsel %vm527, %v2136, 0
      %2221 = vmatprep.subr.bf16.mxu0 0
      %2222 = vmatpush1.bf16.msra.mxu0 %v2219
      %2223 = vmatprep.subr.bf16.mxu0 0
      %2224 = vmatpush1.bf16.msra.mxu0 0
      %2225 = vmatprep.subr.bf16.mxu0 0
      %2226 = vmatpush1.bf16.msra.mxu0 0
      %2227 = vmatprep.subr.bf16.mxu0 0
      %2228 = vmatpush1.bf16.msra.mxu0 0
      %2229 = vmatprep.subr.bf16.mxu0 0
      %2230 = vmatpush1.bf16.msra.mxu0 0
      %2231 = vmatprep.subr.bf16.mxu0 0
      %2232 = vmatpush1.bf16.msra.mxu0 0
      %2233 = vmatprep.subr.bf16.mxu0 0
      %2234 = vmatpush1.bf16.msra.mxu0 0
      %2235 = vmatprep.subr.bf16.mxu0 0
      %2236 = vmatpush1.bf16.msra.mxu0 0
      %2237 = vmatprep.subr.bf16.mxu0 0
      %2238 = vmatpush1.bf16.msra.mxu0 0
      %2239 = vmatprep.subr.bf16.mxu0 0
      %2240 = vmatpush1.bf16.msra.mxu0 0
      %2241 = vmatprep.subr.bf16.mxu0 0
      %2242 = vmatpush1.bf16.msra.mxu0 0
      %2243 = vmatprep.subr.bf16.mxu0 0
      %2244 = vmatpush1.bf16.msra.mxu0 0
      %2245 = vmatprep.subr.bf16.mxu0 0
      %2246 = vmatpush1.bf16.msra.mxu0 0
      %2247 = vmatprep.subr.bf16.mxu0 0
      %2248 = vmatpush1.bf16.msra.mxu0 0
      %2249 = vmatprep.subr.bf16.mxu0 0
      %2250 = vmatpush1.bf16.msra.mxu0 0
      %2251 = vmatprep.subr.bf16.mxu0 0
      %2252 = vmatpush1.bf16.msra.mxu0 0
      %2253 = vmatprep.mubr.bf16.mxu0 0
      %2254 = vmatmul.mubr.bf16.gmra.mrb[0].mxu0 %v2138
      %v2255 = vpop.f32.mrb[0].mxu0
      %v2256 = vadd.f32 0.0, %v2255
      %v2257 = vpop.f32.mrb[0].mxu0
      %v2258 = vpop.f32.mrb[0].mxu0
      %v2259 = vadd.f32 0.0, %v2258
      %v2260 = vpop.f32.mrb[0].mxu0
      %2261 = vmatprep.mubr.bf16.mxu0 0
      %2262 = vmatmul.mubr.bf16.gmra.mrb[0].mxu0 %v2141
      %v2263 = vpop.f32.mrb[0].mxu0
      %v2264 = vadd.f32 0.0, %v2263
      %v2265 = vpop.f32.mrb[0].mxu0
      %v2266 = vpop.f32.mrb[0].mxu0
      %v2267 = vadd.f32 0.0, %v2266
      %v2268 = vpop.f32.mrb[0].mxu0
      %2269 = vmatprep.mubr.bf16.mxu0 0
      %2270 = vmatmul.mubr.bf16.gmra.mrb[0].mxu0 %v2144
      %v2271 = vpop.f32.mrb[0].mxu0
      %v2272 = vadd.f32 0.0, %v2271
      %v2273 = vpop.f32.mrb[0].mxu0
      %v2274 = vpop.f32.mrb[0].mxu0
      %v2275 = vadd.f32 0.0, %v2274
      %v2276 = vpop.f32.mrb[0].mxu0
      %2277 = vmatprep.mubr.bf16.mxu0 0
      %2278 = vmatmul.mubr.bf16.gmra.mrb[0].mxu0 %v2147
      %v2279 = vpop.f32.mrb[0].mxu0
      %v2280 = vadd.f32 0.0, %v2279
      %v2281 = vpop.f32.mrb[0].mxu0
      %v2282 = vpop.f32.mrb[0].mxu0
      %v2283 = vadd.f32 0.0, %v2282
      %v2284 = vpop.f32.mrb[0].mxu0
      %2285 = vmatprep.mubr.bf16.mxu0 0
      %2286 = vmatmul.mubr.bf16.gmra.mrb[0].mxu0 %v2150
      %v2287 = vpop.f32.mrb[0].mxu0
      %v2288 = vadd.f32 0.0, %v2287
      %v2289 = vpop.f32.mrb[0].mxu0
      %v2290 = vpop.f32.mrb[0].mxu0
      %v2291 = vadd.f32 0.0, %v2290
      %v2292 = vpop.f32.mrb[0].mxu0
      %2293 = vmatprep.mubr.bf16.mxu0 0
      %2294 = vmatmul.mubr.bf16.gmra.mrb[0].mxu0 %v2153
      %v2295 = vpop.f32.mrb[0].mxu0
      %v2296 = vadd.f32 0.0, %v2295
      %v2297 = vpop.f32.mrb[0].mxu0
      %v2298 = vpop.f32.mrb[0].mxu0
      %v2299 = vadd.f32 0.0, %v2298
      %v2300 = vpop.f32.mrb[0].mxu0
      %2301 = vmatprep.mubr.bf16.mxu0 0
      %2302 = vmatmul.mubr.bf16.gmra.mrb[0].mxu0 %v2156
      %v2303 = vpop.f32.mrb[0].mxu0
      %v2304 = vadd.f32 0.0, %v2303
      %v2305 = vpop.f32.mrb[0].mxu0
      %v2306 = vpop.f32.mrb[0].mxu0
      %v2307 = vadd.f32 0.0, %v2306
      %v2308 = vpop.f32.mrb[0].mxu0
      %2309 = vmatprep.mubr.bf16.mxu0 0
      %2310 = vmatmul.mubr.bf16.gmra.mrb[0].mxu0 %v2159
      %v2311 = vpop.f32.mrb[0].mxu0
      %v2312 = vadd.f32 0.0, %v2311
      %v2313 = vpop.f32.mrb[0].mxu0
      %v2314 = vpop.f32.mrb[0].mxu0
      %v2315 = vadd.f32 0.0, %v2314
      %v2316 = vpop.f32.mrb[0].mxu0
      %2317 = vmatprep.mubr.bf16.mxu0 0
      %2318 = vmatmul.mubr.bf16.gmra.mrb[0].mxu0 %v2162
      %v2319 = vpop.f32.mrb[0].mxu0
      %v2320 = vadd.f32 0.0, %v2319
      %v2321 = vpop.f32.mrb[0].mxu0
      %v2322 = vpop.f32.mrb[0].mxu0
      %v2323 = vadd.f32 0.0, %v2322
      %v2324 = vpop.f32.mrb[0].mxu0
      %2325 = vmatprep.mubr.bf16.mxu0 0
      %2326 = vmatmul.mubr.bf16.gmra.mrb[0].mxu0 %v2165
      %v2327 = vpop.f32.mrb[0].mxu0
      %v2328 = vadd.f32 0.0, %v2327
      %v2329 = vpop.f32.mrb[0].mxu0
      %v2330 = vpop.f32.mrb[0].mxu0
      %v2331 = vadd.f32 0.0, %v2330
      %v2332 = vpop.f32.mrb[0].mxu0
      %2333 = vmatprep.mubr.bf16.mxu0 0
      %2334 = vmatmul.mubr.bf16.gmra.mrb[0].mxu0 %v2168
      %v2335 = vpop.f32.mrb[0].mxu0
      %v2336 = vadd.f32 0.0, %v2335
      %v2337 = vpop.f32.mrb[0].mxu0
      %v2338 = vpop.f32.mrb[0].mxu0
      %v2339 = vadd.f32 0.0, %v2338
      %v2340 = vpop.f32.mrb[0].mxu0
      %2341 = vmatprep.mubr.bf16.mxu0 0
      %2342 = vmatmul.mubr.bf16.gmra.mrb[0].mxu0 %v2171
      %v2343 = vpop.f32.mrb[0].mxu0
      %v2344 = vadd.f32 0.0, %v2343
      %v2345 = vpop.f32.mrb[0].mxu0
      %v2346 = vpop.f32.mrb[0].mxu0
      %v2347 = vadd.f32 0.0, %v2346
      %v2348 = vpop.f32.mrb[0].mxu0
      %2349 = vmatprep.mubr.bf16.mxu0 0
      %2350 = vmatmul.mubr.bf16.gmra.mrb[0].mxu0 %v2174
      %v2351 = vpop.f32.mrb[0].mxu0
      %v2352 = vadd.f32 0.0, %v2351
      %v2353 = vpop.f32.mrb[0].mxu0
      %v2354 = vpop.f32.mrb[0].mxu0
      %v2355 = vadd.f32 0.0, %v2354
      %v2356 = vpop.f32.mrb[0].mxu0
      %2357 = vmatprep.mubr.bf16.mxu0 0
      %2358 = vmatmul.mubr.bf16.gmra.mrb[0].mxu0 %v2177
      %v2359 = vpop.f32.mrb[0].mxu0
      %v2360 = vadd.f32 0.0, %v2359
      %v2361 = vpop.f32.mrb[0].mxu0
      %v2362 = vpop.f32.mrb[0].mxu0
      %v2363 = vadd.f32 0.0, %v2362
      %v2364 = vpop.f32.mrb[0].mxu0
      %2365 = vmatprep.mubr.bf16.mxu0 0
      %2366 = vmatmul.mubr.bf16.gmra.mrb[0].mxu0 %v2180
      %v2367 = vpop.f32.mrb[0].mxu0
      %v2368 = vadd.f32 0.0, %v2367
      %v2369 = vpop.f32.mrb[0].mxu0
      %v2370 = vpop.f32.mrb[0].mxu0
      %v2371 = vadd.f32 0.0, %v2370
      %v2372 = vpop.f32.mrb[0].mxu0
      %2373 = vmatprep.mubr.bf16.mxu0 0
      %2374 = vmatmul.mubr.bf16.gmra.mrb[0].mxu0 %v2183
      %v2375 = vpop.f32.mrb[0].mxu0
      %v2376 = vadd.f32 0.0, %v2375
      %v2377 = vpop.f32.mrb[0].mxu0
      %v2378 = vpop.f32.mrb[0].mxu0
      %v2379 = vadd.f32 0.0, %v2378
      %v2380 = vpop.f32.mrb[0].mxu0
      %2381 = vmatprep.mubr.bf16.mxu0 0
      %2382 = vmatmul.mubr.bf16.gmra.mrb[0].mxu0 %v2186
      %v2383 = vpop.f32.mrb[0].mxu0
      %v2384 = vadd.f32 0.0, %v2383
      %v2385 = vpop.f32.mrb[0].mxu0
      %v2386 = vpop.f32.mrb[0].mxu0
      %v2387 = vadd.f32 0.0, %v2386
      %v2388 = vpop.f32.mrb[0].mxu0
      %2389 = vmatprep.mubr.bf16.mxu0 0
      %2390 = vmatmul.mubr.bf16.gmra.mrb[0].mxu0 %v2189
      %v2391 = vpop.f32.mrb[0].mxu0
      %v2392 = vadd.f32 0.0, %v2391
      %v2393 = vpop.f32.mrb[0].mxu0
      %v2394 = vpop.f32.mrb[0].mxu0
      %v2395 = vadd.f32 0.0, %v2394
      %v2396 = vpop.f32.mrb[0].mxu0
      %2397 = vmatprep.mubr.bf16.mxu0 0
      %2398 = vmatmul.mubr.bf16.gmra.mrb[0].mxu0 %v2192
      %v2399 = vpop.f32.mrb[0].mxu0
      %v2400 = vadd.f32 0.0, %v2399
      %v2401 = vpop.f32.mrb[0].mxu0
      %v2402 = vpop.f32.mrb[0].mxu0
      %v2403 = vadd.f32 0.0, %v2402
      %v2404 = vpop.f32.mrb[0].mxu0
      %2405 = vmatprep.mubr.bf16.mxu0 0
      %2406 = vmatmul.mubr.bf16.gmra.mrb[0].mxu0 %v2195
      %v2407 = vpop.f32.mrb[0].mxu0
      %v2408 = vadd.f32 0.0, %v2407
      %v2409 = vpop.f32.mrb[0].mxu0
      %v2410 = vpop.f32.mrb[0].mxu0
      %v2411 = vadd.f32 0.0, %v2410
      %v2412 = vpop.f32.mrb[0].mxu0
      %2413 = vmatprep.mubr.bf16.mxu0 0
      %2414 = vmatmul.mubr.bf16.gmra.mrb[0].mxu0 %v2198
      %v2415 = vpop.f32.mrb[0].mxu0
      %v2416 = vadd.f32 0.0, %v2415
      %v2417 = vpop.f32.mrb[0].mxu0
      %v2418 = vpop.f32.mrb[0].mxu0
      %v2419 = vadd.f32 0.0, %v2418
      %v2420 = vpop.f32.mrb[0].mxu0
      %2421 = vmatprep.mubr.bf16.mxu0 0
      %2422 = vmatmul.mubr.bf16.gmra.mrb[0].mxu0 %v2201
      %v2423 = vpop.f32.mrb[0].mxu0
      %v2424 = vadd.f32 0.0, %v2423
      %v2425 = vpop.f32.mrb[0].mxu0
      %v2426 = vpop.f32.mrb[0].mxu0
      %v2427 = vadd.f32 0.0, %v2426
      %v2428 = vpop.f32.mrb[0].mxu0
      %2429 = vmatprep.mubr.bf16.mxu0 0
      %2430 = vmatmul.mubr.bf16.gmra.mrb[0].mxu0 %v2204
      %v2431 = vpop.f32.mrb[0].mxu0
      %v2432 = vadd.f32 0.0, %v2431
      %v2433 = vpop.f32.mrb[0].mxu0
      %v2434 = vpop.f32.mrb[0].mxu0
      %v2435 = vadd.f32 0.0, %v2434
      %v2436 = vpop.f32.mrb[0].mxu0
      %2437 = vmatprep.mubr.bf16.mxu0 0
      %2438 = vmatmul.mubr.bf16.gmra.mrb[0].mxu0 %v2207
      %v2439 = vpop.f32.mrb[0].mxu0
      %v2440 = vadd.f32 0.0, %v2439
      %v2441 = vpop.f32.mrb[0].mxu0
      %v2442 = vpop.f32.mrb[0].mxu0
      %v2443 = vadd.f32 0.0, %v2442
      %v2444 = vpop.f32.mrb[0].mxu0
      %2445 = vmatprep.mubr.bf16.mxu0 0
      %2446 = vmatmul.mubr.bf16.gmra.mrb[0].mxu0 %v2210
      %v2447 = vpop.f32.mrb[0].mxu0
      %v2448 = vadd.f32 0.0, %v2447
      %v2449 = vpop.f32.mrb[0].mxu0
      %v2450 = vpop.f32.mrb[0].mxu0
      %v2451 = vadd.f32 0.0, %v2450
      %v2452 = vpop.f32.mrb[0].mxu0
      %2453 = vmatprep.mubr.bf16.mxu0 0
      %2454 = vmatmul.mubr.bf16.gmra.mrb[0].mxu0 %v2213
      %v2455 = vpop.f32.mrb[0].mxu0
      %v2456 = vadd.f32 0.0, %v2455
      %v2457 = vpop.f32.mrb[0].mxu0
      %v2458 = vpop.f32.mrb[0].mxu0
      %v2459 = vadd.f32 0.0, %v2458
      %v2460 = vpop.f32.mrb[0].mxu0
      %2461 = vmatprep.mubr.bf16.mxu0 0
      %2462 = vmatmul.mubr.bf16.gmra.mrb[0].mxu0 %v2216
      %v2463 = vpop.f32.mrb[0].mxu0
      %v2464 = vadd.f32 0.0, %v2463
      %v2465 = vpop.f32.mrb[0].mxu0
      %v2466 = vpop.f32.mrb[0].mxu0
      %v2467 = vadd.f32 0.0, %v2466
      %v2468 = vpop.f32.mrb[0].mxu0
      %2469 = vdwg.mxu0
      %v2470 = vadd.f32 %v2000, %v2256
      %v2471 = vadd.f32 %v2001, %v2259
      %v2472 = vadd.f32 %v2002, %v2264
      %v2473 = vadd.f32 %v2003, %v2267
      %v2474 = vadd.f32 %v2004, %v2272
      %v2475 = vadd.f32 %v2005, %v2275
      %v2476 = vadd.f32 %v2006, %v2280
      %v2477 = vadd.f32 %v2007, %v2283
      %v2478 = vadd.f32 %v2008, %v2288
      %v2479 = vadd.f32 %v2009, %v2291
      %v2480 = vadd.f32 %v2010, %v2296
      %v2481 = vadd.f32 %v2011, %v2299
      %v2482 = vadd.f32 %v2012, %v2304
      %v2483 = vadd.f32 %v2013, %v2307
      %v2484 = vadd.f32 %v2014, %v2312
      %v2485 = vadd.f32 %v2015, %v2315
      %v2486 = vadd.f32 %v2016, %v2320
      %v2487 = vadd.f32 %v2017, %v2323
      %v2488 = vadd.f32 %v2018, %v2328
      %v2489 = vadd.f32 %v2019, %v2331
      %v2490 = vadd.f32 %v2020, %v2336
      %v2491 = vadd.f32 %v2021, %v2339
      %v2492 = vadd.f32 %v2022, %v2344
      %v2493 = vadd.f32 %v2023, %v2347
      %v2494 = vadd.f32 %v2024, %v2352
      %v2495 = vadd.f32 %v2025, %v2355
      %v2496 = vadd.f32 %v2026, %v2360
      %v2497 = vadd.f32 %v2027, %v2363
      %v2498 = vadd.f32 %v2028, %v2368
      %v2499 = vadd.f32 %v2029, %v2371
      %v2500 = vadd.f32 %v2030, %v2376
      %v2501 = vadd.f32 %v2031, %v2379
      %v2502 = vadd.f32 %v2032, %v2384
      %v2503 = vadd.f32 %v2033, %v2387
      %v2504 = vadd.f32 %v2034, %v2392
      %v2505 = vadd.f32 %v2035, %v2395
      %v2506 = vadd.f32 %v2036, %v2400
      %v2507 = vadd.f32 %v2037, %v2403
      %v2508 = vadd.f32 %v2038, %v2408
      %v2509 = vadd.f32 %v2039, %v2411
      %v2510 = vadd.f32 %v2040, %v2416
      %v2511 = vadd.f32 %v2041, %v2419
      %v2512 = vadd.f32 %v2042, %v2424
      %v2513 = vadd.f32 %v2043, %v2427
      %v2514 = vadd.f32 %v2044, %v2432
      %v2515 = vadd.f32 %v2045, %v2435
      %v2516 = vadd.f32 %v2046, %v2440
      %v2517 = vadd.f32 %v2047, %v2443
      %v2518 = vadd.f32 %v2048, %v2448
      %v2519 = vadd.f32 %v2049, %v2451
      %v2520 = vadd.f32 %v2050, %v2456
      %v2521 = vadd.f32 %v2051, %v2459
      %v2522 = vadd.f32 %v2052, %v2464
      %v2523 = vadd.f32 %v2053, %v2467
      %v2524 = vld [vmem:[%s1583 + $0x2] sm:$0xff]
      %v2525 = vld [vmem:[%s1583 + $0xa] sm:$0xff]
      %v2526 = vld [vmem:[%s1583 + $0x12] sm:$0xff]
      %v2527 = vld [vmem:[%s1583 + $0x22] sm:$0xff]
      %v2528 = vld [vmem:[%s1583 + $0x2a] sm:$0xff]
      %v2529 = vld [vmem:[%s1583 + $0x32] sm:$0xff]
      %v2530 = vld [vmem:[%s1583 + $0x42] sm:$0xff]
      %v2531 = vld [vmem:[%s1583 + $0x4a] sm:$0xff]
      %v2532 = vld [vmem:[%s1583 + $0x52] sm:$0xff]
      %v2533 = vld [vmem:[%s1583 + $0x62] sm:$0xff]
      %v2534 = vld [vmem:[%s1583 + $0x6a] sm:$0xff]
      %v2535 = vld [vmem:[%s1583 + $0x72] sm:$0xff]
      %v2536 = vld [vmem:[%s1583 + $0x82] sm:$0xff]
      %v2537 = vld [vmem:[%s1583 + $0x8a] sm:$0xff]
      %v2538 = vld [vmem:[%s1583 + $0x92] sm:$0xff]
      %v2539 = vld [vmem:[%s1583 + $0xa2] sm:$0xff]
      %v2540 = vld [vmem:[%s1583 + $0xaa] sm:$0xff]
      %v2541 = vld [vmem:[%s1583 + $0xb2] sm:$0xff]
      %v2542 = vld [vmem:[%s1583 + $0xc2] sm:$0xff]
      %v2543 = vld [vmem:[%s1583 + $0xca] sm:$0xff]
      %v2544 = vld [vmem:[%s1583 + $0xd2] sm:$0xff]
      %v2545 = vld [vmem:[%s1583 + $0xe2] sm:$0xff]
      %v2546 = vld [vmem:[%s1583 + $0xea] sm:$0xff]
      %v2547 = vld [vmem:[%s1583 + $0xf2] sm:$0xff]
      %v2548 = vld [vmem:[%s1583 + $0x102] sm:$0xff]
      %v2549 = vld [vmem:[%s1583 + $0x10a] sm:$0xff]
      %v2550 = vld [vmem:[%s1583 + $0x112] sm:$0xff]
      %v2551 = vld [vmem:[%s1583 + $0x122] sm:$0xff]
      %v2552 = vld [vmem:[%s1583 + $0x12a] sm:$0xff]
      %v2553 = vld [vmem:[%s1583 + $0x132] sm:$0xff]
      %v2554 = vld [vmem:[%s1583 + $0x142] sm:$0xff]
      %v2555 = vld [vmem:[%s1583 + $0x14a] sm:$0xff]
      %v2556 = vld [vmem:[%s1583 + $0x152] sm:$0xff]
      %v2557 = vld [vmem:[%s1583 + $0x162] sm:$0xff]
      %v2558 = vld [vmem:[%s1583 + $0x16a] sm:$0xff]
      %v2559 = vld [vmem:[%s1583 + $0x172] sm:$0xff]
      %v2560 = vld [vmem:[%s1583 + $0x182] sm:$0xff]
      %v2561 = vld [vmem:[%s1583 + $0x18a] sm:$0xff]
      %v2562 = vld [vmem:[%s1583 + $0x192] sm:$0xff]
      %v2563 = vld [vmem:[%s1583 + $0x1a2] sm:$0xff]
      %v2564 = vld [vmem:[%s1583 + $0x1aa] sm:$0xff]
      %v2565 = vld [vmem:[%s1583 + $0x1b2] sm:$0xff]
      %v2566 = vld [vmem:[%s1583 + $0x1c2] sm:$0xff]
      %v2567 = vld [vmem:[%s1583 + $0x1ca] sm:$0xff]
      %v2568 = vld [vmem:[%s1583 + $0x1d2] sm:$0xff]
      %v2569 = vld [vmem:[%s1583 + $0x1e2] sm:$0xff]
      %v2570 = vld [vmem:[%s1583 + $0x1ea] sm:$0xff]
      %v2571 = vld [vmem:[%s1583 + $0x1f2] sm:$0xff]
      %v2572 = vld [vmem:[%s1583 + $0x202] sm:$0xff]
      %v2573 = vld [vmem:[%s1583 + $0x20a] sm:$0xff]
      %v2574 = vld [vmem:[%s1583 + $0x212] sm:$0xff]
      %v2575 = vld [vmem:[%s1583 + $0x222] sm:$0xff]
      %v2576 = vld [vmem:[%s1583 + $0x22a] sm:$0xff]
      %v2577 = vld [vmem:[%s1583 + $0x232] sm:$0xff]
      %v2578 = vpack.c.bf16 %v2525, %v2524
      %v2579 = vpack.c.bf16 %v2527, %v2526
      %v2580 = vpack.c.bf16 %v2529, %v2528
      %v2581 = vpack.c.bf16 %v2531, %v2530
      %v2582 = vpack.c.bf16 %v2533, %v2532
      %v2583 = vpack.c.bf16 %v2535, %v2534
      %v2584 = vpack.c.bf16 %v2537, %v2536
      %v2585 = vpack.c.bf16 %v2539, %v2538
      %v2586 = vpack.c.bf16 %v2541, %v2540
      %v2587 = vpack.c.bf16 %v2543, %v2542
      %v2588 = vpack.c.bf16 %v2545, %v2544
      %v2589 = vpack.c.bf16 %v2547, %v2546
      %v2590 = vpack.c.bf16 %v2549, %v2548
      %v2591 = vpack.c.bf16 %v2551, %v2550
      %v2592 = vpack.c.bf16 %v2553, %v2552
      %v2593 = vpack.c.bf16 %v2555, %v2554
      %v2594 = vpack.c.bf16 %v2557, %v2556
      %v2595 = vpack.c.bf16 %v2559, %v2558
      %v2596 = vpack.c.bf16 %v2561, %v2560
      %v2597 = vpack.c.bf16 %v2563, %v2562
      %v2598 = vpack.c.bf16 %v2565, %v2564
      %v2599 = vpack.c.bf16 %v2567, %v2566
      %v2600 = vpack.c.bf16 %v2569, %v2568
      %v2601 = vpack.c.bf16 %v2571, %v2570
      %v2602 = vpack.c.bf16 %v2573, %v2572
      %v2603 = vpack.c.bf16 %v2575, %v2574
      %v2604 = vpack.c.bf16 %v2577, %v2576
      %s2605 = scalar_lea.vmem %s1, 10
      %v2606 = vld [vmem:[%s2605] sm:$0x3]
      %v2608 = vsel %vm445, %v2578, 0
      %v2611 = vsel %vm445, %v2579, 0
      %v2614 = vsel %vm445, %v2580, 0
      %v2617 = vsel %vm445, %v2581, 0
      %v2620 = vsel %vm445, %v2582, 0
      %v2623 = vsel %vm445, %v2583, 0
      %v2626 = vsel %vm445, %v2584, 0
      %v2629 = vsel %vm445, %v2585, 0
      %v2632 = vsel %vm445, %v2586, 0
      %v2635 = vsel %vm445, %v2587, 0
      %v2638 = vsel %vm445, %v2588, 0
      %v2641 = vsel %vm445, %v2589, 0
      %v2644 = vsel %vm445, %v2590, 0
      %v2647 = vsel %vm445, %v2591, 0
      %v2650 = vsel %vm445, %v2592, 0
      %v2653 = vsel %vm445, %v2593, 0
      %v2656 = vsel %vm445, %v2594, 0
      %v2659 = vsel %vm445, %v2595, 0
      %v2662 = vsel %vm445, %v2596, 0
      %v2665 = vsel %vm445, %v2597, 0
      %v2668 = vsel %vm445, %v2598, 0
      %v2671 = vsel %vm445, %v2599, 0
      %v2674 = vsel %vm445, %v2600, 0
      %v2677 = vsel %vm445, %v2601, 0
      %v2680 = vsel %vm445, %v2602, 0
      %v2683 = vsel %vm445, %v2603, 0
      %v2686 = vsel %vm445, %v2604, 0
      %v2689 = vsel %vm527, %v2606, 0
      %2691 = vmatprep.subr.bf16.mxu0 0
      %2692 = vmatpush1.bf16.msra.mxu0 %v2689
      %2693 = vmatprep.subr.bf16.mxu0 0
      %2694 = vmatpush1.bf16.msra.mxu0 0
      %2695 = vmatprep.subr.bf16.mxu0 0
      %2696 = vmatpush1.bf16.msra.mxu0 0
      %2697 = vmatprep.subr.bf16.mxu0 0
      %2698 = vmatpush1.bf16.msra.mxu0 0
      %2699 = vmatprep.subr.bf16.mxu0 0
      %2700 = vmatpush1.bf16.msra.mxu0 0
      %2701 = vmatprep.subr.bf16.mxu0 0
      %2702 = vmatpush1.bf16.msra.mxu0 0
      %2703 = vmatprep.subr.bf16.mxu0 0
      %2704 = vmatpush1.bf16.msra.mxu0 0
      %2705 = vmatprep.subr.bf16.mxu0 0
      %2706 = vmatpush1.bf16.msra.mxu0 0
      %2707 = vmatprep.subr.bf16.mxu0 0
      %2708 = vmatpush1.bf16.msra.mxu0 0
      %2709 = vmatprep.subr.bf16.mxu0 0
      %2710 = vmatpush1.bf16.msra.mxu0 0
      %2711 = vmatprep.subr.bf16.mxu0 0
      %2712 = vmatpush1.bf16.msra.mxu0 0
      %2713 = vmatprep.subr.bf16.mxu0 0
      %2714 = vmatpush1.bf16.msra.mxu0 0
      %2715 = vmatprep.subr.bf16.mxu0 0
      %2716 = vmatpush1.bf16.msra.mxu0 0
      %2717 = vmatprep.subr.bf16.mxu0 0
      %2718 = vmatpush1.bf16.msra.mxu0 0
      %2719 = vmatprep.subr.bf16.mxu0 0
      %2720 = vmatpush1.bf16.msra.mxu0 0
      %2721 = vmatprep.subr.bf16.mxu0 0
      %2722 = vmatpush1.bf16.msra.mxu0 0
      %2723 = vmatprep.mubr.bf16.mxu0 0
      %2724 = vmatmul.mubr.bf16.gmra.mrb[0].mxu0 %v2608
      %v2725 = vpop.f32.mrb[0].mxu0
      %v2726 = vadd.f32 0.0, %v2725
      %v2727 = vpop.f32.mrb[0].mxu0
      %v2728 = vpop.f32.mrb[0].mxu0
      %v2729 = vadd.f32 0.0, %v2728
      %v2730 = vpop.f32.mrb[0].mxu0
      %2731 = vmatprep.mubr.bf16.mxu0 0
      %2732 = vmatmul.mubr.bf16.gmra.mrb[0].mxu0 %v2611
      %v2733 = vpop.f32.mrb[0].mxu0
      %v2734 = vadd.f32 0.0, %v2733
      %v2735 = vpop.f32.mrb[0].mxu0
      %v2736 = vpop.f32.mrb[0].mxu0
      %v2737 = vadd.f32 0.0, %v2736
      %v2738 = vpop.f32.mrb[0].mxu0
      %2739 = vmatprep.mubr.bf16.mxu0 0
      %2740 = vmatmul.mubr.bf16.gmra.mrb[0].mxu0 %v2614
      %v2741 = vpop.f32.mrb[0].mxu0
      %v2742 = vadd.f32 0.0, %v2741
      %v2743 = vpop.f32.mrb[0].mxu0
      %v2744 = vpop.f32.mrb[0].mxu0
      %v2745 = vadd.f32 0.0, %v2744
      %v2746 = vpop.f32.mrb[0].mxu0
      %2747 = vmatprep.mubr.bf16.mxu0 0
      %2748 = vmatmul.mubr.bf16.gmra.mrb[0].mxu0 %v2617
      %v2749 = vpop.f32.mrb[0].mxu0
      %v2750 = vadd.f32 0.0, %v2749
      %v2751 = vpop.f32.mrb[0].mxu0
      %v2752 = vpop.f32.mrb[0].mxu0
      %v2753 = vadd.f32 0.0, %v2752
      %v2754 = vpop.f32.mrb[0].mxu0
      %2755 = vmatprep.mubr.bf16.mxu0 0
      %2756 = vmatmul.mubr.bf16.gmra.mrb[0].mxu0 %v2620
      %v2757 = vpop.f32.mrb[0].mxu0
      %v2758 = vadd.f32 0.0, %v2757
      %v2759 = vpop.f32.mrb[0].mxu0
      %v2760 = vpop.f32.mrb[0].mxu0
      %v2761 = vadd.f32 0.0, %v2760
      %v2762 = vpop.f32.mrb[0].mxu0
      %2763 = vmatprep.mubr.bf16.mxu0 0
      %2764 = vmatmul.mubr.bf16.gmra.mrb[0].mxu0 %v2623
      %v2765 = vpop.f32.mrb[0].mxu0
      %v2766 = vadd.f32 0.0, %v2765
      %v2767 = vpop.f32.mrb[0].mxu0
      %v2768 = vpop.f32.mrb[0].mxu0
      %v2769 = vadd.f32 0.0, %v2768
      %v2770 = vpop.f32.mrb[0].mxu0
      %2771 = vmatprep.mubr.bf16.mxu0 0
      %2772 = vmatmul.mubr.bf16.gmra.mrb[0].mxu0 %v2626
      %v2773 = vpop.f32.mrb[0].mxu0
      %v2774 = vadd.f32 0.0, %v2773
      %v2775 = vpop.f32.mrb[0].mxu0
      %v2776 = vpop.f32.mrb[0].mxu0
      %v2777 = vadd.f32 0.0, %v2776
      %v2778 = vpop.f32.mrb[0].mxu0
      %2779 = vmatprep.mubr.bf16.mxu0 0
      %2780 = vmatmul.mubr.bf16.gmra.mrb[0].mxu0 %v2629
      %v2781 = vpop.f32.mrb[0].mxu0
      %v2782 = vadd.f32 0.0, %v2781
      %v2783 = vpop.f32.mrb[0].mxu0
      %v2784 = vpop.f32.mrb[0].mxu0
      %v2785 = vadd.f32 0.0, %v2784
      %v2786 = vpop.f32.mrb[0].mxu0
      %2787 = vmatprep.mubr.bf16.mxu0 0
      %2788 = vmatmul.mubr.bf16.gmra.mrb[0].mxu0 %v2632
      %v2789 = vpop.f32.mrb[0].mxu0
      %v2790 = vadd.f32 0.0, %v2789
      %v2791 = vpop.f32.mrb[0].mxu0
      %v2792 = vpop.f32.mrb[0].mxu0
      %v2793 = vadd.f32 0.0, %v2792
      %v2794 = vpop.f32.mrb[0].mxu0
      %2795 = vmatprep.mubr.bf16.mxu0 0
      %2796 = vmatmul.mubr.bf16.gmra.mrb[0].mxu0 %v2635
      %v2797 = vpop.f32.mrb[0].mxu0
      %v2798 = vadd.f32 0.0, %v2797
      %v2799 = vpop.f32.mrb[0].mxu0
      %v2800 = vpop.f32.mrb[0].mxu0
      %v2801 = vadd.f32 0.0, %v2800
      %v2802 = vpop.f32.mrb[0].mxu0
      %2803 = vmatprep.mubr.bf16.mxu0 0
      %2804 = vmatmul.mubr.bf16.gmra.mrb[0].mxu0 %v2638
      %v2805 = vpop.f32.mrb[0].mxu0
      %v2806 = vadd.f32 0.0, %v2805
      %v2807 = vpop.f32.mrb[0].mxu0
      %v2808 = vpop.f32.mrb[0].mxu0
      %v2809 = vadd.f32 0.0, %v2808
      %v2810 = vpop.f32.mrb[0].mxu0
      %2811 = vmatprep.mubr.bf16.mxu0 0
      %2812 = vmatmul.mubr.bf16.gmra.mrb[0].mxu0 %v2641
      %v2813 = vpop.f32.mrb[0].mxu0
      %v2814 = vadd.f32 0.0, %v2813
      %v2815 = vpop.f32.mrb[0].mxu0
      %v2816 = vpop.f32.mrb[0].mxu0
      %v2817 = vadd.f32 0.0, %v2816
      %v2818 = vpop.f32.mrb[0].mxu0
      %2819 = vmatprep.mubr.bf16.mxu0 0
      %2820 = vmatmul.mubr.bf16.gmra.mrb[0].mxu0 %v2644
      %v2821 = vpop.f32.mrb[0].mxu0
      %v2822 = vadd.f32 0.0, %v2821
      %v2823 = vpop.f32.mrb[0].mxu0
      %v2824 = vpop.f32.mrb[0].mxu0
      %v2825 = vadd.f32 0.0, %v2824
      %v2826 = vpop.f32.mrb[0].mxu0
      %2827 = vmatprep.mubr.bf16.mxu0 0
      %2828 = vmatmul.mubr.bf16.gmra.mrb[0].mxu0 %v2647
      %v2829 = vpop.f32.mrb[0].mxu0
      %v2830 = vadd.f32 0.0, %v2829
      %v2831 = vpop.f32.mrb[0].mxu0
      %v2832 = vpop.f32.mrb[0].mxu0
      %v2833 = vadd.f32 0.0, %v2832
      %v2834 = vpop.f32.mrb[0].mxu0
      %2835 = vmatprep.mubr.bf16.mxu0 0
      %2836 = vmatmul.mubr.bf16.gmra.mrb[0].mxu0 %v2650
      %v2837 = vpop.f32.mrb[0].mxu0
      %v2838 = vadd.f32 0.0, %v2837
      %v2839 = vpop.f32.mrb[0].mxu0
      %v2840 = vpop.f32.mrb[0].mxu0
      %v2841 = vadd.f32 0.0, %v2840
      %v2842 = vpop.f32.mrb[0].mxu0
      %2843 = vmatprep.mubr.bf16.mxu0 0
      %2844 = vmatmul.mubr.bf16.gmra.mrb[0].mxu0 %v2653
      %v2845 = vpop.f32.mrb[0].mxu0
      %v2846 = vadd.f32 0.0, %v2845
      %v2847 = vpop.f32.mrb[0].mxu0
      %v2848 = vpop.f32.mrb[0].mxu0
      %v2849 = vadd.f32 0.0, %v2848
      %v2850 = vpop.f32.mrb[0].mxu0
      %2851 = vmatprep.mubr.bf16.mxu0 0
      %2852 = vmatmul.mubr.bf16.gmra.mrb[0].mxu0 %v2656
      %v2853 = vpop.f32.mrb[0].mxu0
      %v2854 = vadd.f32 0.0, %v2853
      %v2855 = vpop.f32.mrb[0].mxu0
      %v2856 = vpop.f32.mrb[0].mxu0
      %v2857 = vadd.f32 0.0, %v2856
      %v2858 = vpop.f32.mrb[0].mxu0
      %2859 = vmatprep.mubr.bf16.mxu0 0
      %2860 = vmatmul.mubr.bf16.gmra.mrb[0].mxu0 %v2659
      %v2861 = vpop.f32.mrb[0].mxu0
      %v2862 = vadd.f32 0.0, %v2861
      %v2863 = vpop.f32.mrb[0].mxu0
      %v2864 = vpop.f32.mrb[0].mxu0
      %v2865 = vadd.f32 0.0, %v2864
      %v2866 = vpop.f32.mrb[0].mxu0
      %2867 = vmatprep.mubr.bf16.mxu0 0
      %2868 = vmatmul.mubr.bf16.gmra.mrb[0].mxu0 %v2662
      %v2869 = vpop.f32.mrb[0].mxu0
      %v2870 = vadd.f32 0.0, %v2869
      %v2871 = vpop.f32.mrb[0].mxu0
      %v2872 = vpop.f32.mrb[0].mxu0
      %v2873 = vadd.f32 0.0, %v2872
      %v2874 = vpop.f32.mrb[0].mxu0
      %2875 = vmatprep.mubr.bf16.mxu0 0
      %2876 = vmatmul.mubr.bf16.gmra.mrb[0].mxu0 %v2665
      %v2877 = vpop.f32.mrb[0].mxu0
      %v2878 = vadd.f32 0.0, %v2877
      %v2879 = vpop.f32.mrb[0].mxu0
      %v2880 = vpop.f32.mrb[0].mxu0
      %v2881 = vadd.f32 0.0, %v2880
      %v2882 = vpop.f32.mrb[0].mxu0
      %2883 = vmatprep.mubr.bf16.mxu0 0
      %2884 = vmatmul.mubr.bf16.gmra.mrb[0].mxu0 %v2668
      %v2885 = vpop.f32.mrb[0].mxu0
      %v2886 = vadd.f32 0.0, %v2885
      %v2887 = vpop.f32.mrb[0].mxu0
      %v2888 = vpop.f32.mrb[0].mxu0
      %v2889 = vadd.f32 0.0, %v2888
      %v2890 = vpop.f32.mrb[0].mxu0
      %2891 = vmatprep.mubr.bf16.mxu0 0
      %2892 = vmatmul.mubr.bf16.gmra.mrb[0].mxu0 %v2671
      %v2893 = vpop.f32.mrb[0].mxu0
      %v2894 = vadd.f32 0.0, %v2893
      %v2895 = vpop.f32.mrb[0].mxu0
      %v2896 = vpop.f32.mrb[0].mxu0
      %v2897 = vadd.f32 0.0, %v2896
      %v2898 = vpop.f32.mrb[0].mxu0
      %2899 = vmatprep.mubr.bf16.mxu0 0
      %2900 = vmatmul.mubr.bf16.gmra.mrb[0].mxu0 %v2674
      %v2901 = vpop.f32.mrb[0].mxu0
      %v2902 = vadd.f32 0.0, %v2901
      %v2903 = vpop.f32.mrb[0].mxu0
      %v2904 = vpop.f32.mrb[0].mxu0
      %v2905 = vadd.f32 0.0, %v2904
      %v2906 = vpop.f32.mrb[0].mxu0
      %2907 = vmatprep.mubr.bf16.mxu0 0
      %2908 = vmatmul.mubr.bf16.gmra.mrb[0].mxu0 %v2677
      %v2909 = vpop.f32.mrb[0].mxu0
      %v2910 = vadd.f32 0.0, %v2909
      %v2911 = vpop.f32.mrb[0].mxu0
      %v2912 = vpop.f32.mrb[0].mxu0
      %v2913 = vadd.f32 0.0, %v2912
      %v2914 = vpop.f32.mrb[0].mxu0
      %2915 = vmatprep.mubr.bf16.mxu0 0
      %2916 = vmatmul.mubr.bf16.gmra.mrb[0].mxu0 %v2680
      %v2917 = vpop.f32.mrb[0].mxu0
      %v2918 = vadd.f32 0.0, %v2917
      %v2919 = vpop.f32.mrb[0].mxu0
      %v2920 = vpop.f32.mrb[0].mxu0
      %v2921 = vadd.f32 0.0, %v2920
      %v2922 = vpop.f32.mrb[0].mxu0
      %2923 = vmatprep.mubr.bf16.mxu0 0
      %2924 = vmatmul.mubr.bf16.gmra.mrb[0].mxu0 %v2683
      %v2925 = vpop.f32.mrb[0].mxu0
      %v2926 = vadd.f32 0.0, %v2925
      %v2927 = vpop.f32.mrb[0].mxu0
      %v2928 = vpop.f32.mrb[0].mxu0
      %v2929 = vadd.f32 0.0, %v2928
      %v2930 = vpop.f32.mrb[0].mxu0
      %2931 = vmatprep.mubr.bf16.mxu0 0
      %2932 = vmatmul.mubr.bf16.gmra.mrb[0].mxu0 %v2686
      %v2933 = vpop.f32.mrb[0].mxu0
      %v2934 = vadd.f32 0.0, %v2933
      %v2935 = vpop.f32.mrb[0].mxu0
      %v2936 = vpop.f32.mrb[0].mxu0
      %v2937 = vadd.f32 0.0, %v2936
      %v2938 = vpop.f32.mrb[0].mxu0
      %2939 = vdwg.mxu0
      %v2940 = vadd.f32 %v2470, %v2726
      %v2941 = vadd.f32 %v2471, %v2729
      %v2942 = vadd.f32 %v2472, %v2734
      %v2943 = vadd.f32 %v2473, %v2737
      %v2944 = vadd.f32 %v2474, %v2742
      %v2945 = vadd.f32 %v2475, %v2745
      %v2946 = vadd.f32 %v2476, %v2750
      %v2947 = vadd.f32 %v2477, %v2753
      %v2948 = vadd.f32 %v2478, %v2758
      %v2949 = vadd.f32 %v2479, %v2761
      %v2950 = vadd.f32 %v2480, %v2766
      %v2951 = vadd.f32 %v2481, %v2769
      %v2952 = vadd.f32 %v2482, %v2774
      %v2953 = vadd.f32 %v2483, %v2777
      %v2954 = vadd.f32 %v2484, %v2782
      %v2955 = vadd.f32 %v2485, %v2785
      %v2956 = vadd.f32 %v2486, %v2790
      %v2957 = vadd.f32 %v2487, %v2793
      %v2958 = vadd.f32 %v2488, %v2798
      %v2959 = vadd.f32 %v2489, %v2801
      %v2960 = vadd.f32 %v2490, %v2806
      %v2961 = vadd.f32 %v2491, %v2809
      %v2962 = vadd.f32 %v2492, %v2814
      %v2963 = vadd.f32 %v2493, %v2817
      %v2964 = vadd.f32 %v2494, %v2822
      %v2965 = vadd.f32 %v2495, %v2825
      %v2966 = vadd.f32 %v2496, %v2830
      %v2967 = vadd.f32 %v2497, %v2833
      %v2968 = vadd.f32 %v2498, %v2838
      %v2969 = vadd.f32 %v2499, %v2841
      %v2970 = vadd.f32 %v2500, %v2846
      %v2971 = vadd.f32 %v2501, %v2849
      %v2972 = vadd.f32 %v2502, %v2854
      %v2973 = vadd.f32 %v2503, %v2857
      %v2974 = vadd.f32 %v2504, %v2862
      %v2975 = vadd.f32 %v2505, %v2865
      %v2976 = vadd.f32 %v2506, %v2870
      %v2977 = vadd.f32 %v2507, %v2873
      %v2978 = vadd.f32 %v2508, %v2878
      %v2979 = vadd.f32 %v2509, %v2881
      %v2980 = vadd.f32 %v2510, %v2886
      %v2981 = vadd.f32 %v2511, %v2889
      %v2982 = vadd.f32 %v2512, %v2894
      %v2983 = vadd.f32 %v2513, %v2897
      %v2984 = vadd.f32 %v2514, %v2902
      %v2985 = vadd.f32 %v2515, %v2905
      %v2986 = vadd.f32 %v2516, %v2910
      %v2987 = vadd.f32 %v2517, %v2913
      %v2988 = vadd.f32 %v2518, %v2918
      %v2989 = vadd.f32 %v2519, %v2921
      %v2990 = vadd.f32 %v2520, %v2926
      %v2991 = vadd.f32 %v2521, %v2929
      %v2992 = vadd.f32 %v2522, %v2934
      %v2993 = vadd.f32 %v2523, %v2937
      %s2994 = scalar_lea.vmem %s273, 64
      %v2995 = vld [vmem:[%s2994] sm:$0xff]
      %v2996 = vld [vmem:[%s2994 + $0x8] sm:$0xff]
      %v2997 = vld [vmem:[%s2994 + $0x10] sm:$0xff]
      %v2998 = vld [vmem:[%s2994 + $0x20] sm:$0xff]
      %v2999 = vld [vmem:[%s2994 + $0x28] sm:$0xff]
      %v3000 = vld [vmem:[%s2994 + $0x30] sm:$0xff]
      %v3001 = vld [vmem:[%s2994 + $0x40] sm:$0xff]
      %v3002 = vld [vmem:[%s2994 + $0x48] sm:$0xff]
      %v3003 = vld [vmem:[%s2994 + $0x50] sm:$0xff]
      %v3004 = vld [vmem:[%s2994 + $0x60] sm:$0xff]
      %v3005 = vld [vmem:[%s2994 + $0x68] sm:$0xff]
      %v3006 = vld [vmem:[%s2994 + $0x70] sm:$0xff]
      %v3007 = vld [vmem:[%s2994 + $0x80] sm:$0xff]
      %v3008 = vld [vmem:[%s2994 + $0x88] sm:$0xff]
      %v3009 = vld [vmem:[%s2994 + $0x90] sm:$0xff]
      %v3010 = vld [vmem:[%s2994 + $0xa0] sm:$0xff]
      %v3011 = vld [vmem:[%s2994 + $0xa8] sm:$0xff]
      %v3012 = vld [vmem:[%s2994 + $0xb0] sm:$0xff]
      %v3013 = vld [vmem:[%s2994 + $0xc0] sm:$0xff]
      %v3014 = vld [vmem:[%s2994 + $0xc8] sm:$0xff]
      %v3015 = vld [vmem:[%s2994 + $0xd0] sm:$0xff]
      %v3016 = vld [vmem:[%s2994 + $0xe0] sm:$0xff]
      %v3017 = vld [vmem:[%s2994 + $0xe8] sm:$0xff]
      %v3018 = vld [vmem:[%s2994 + $0xf0] sm:$0xff]
      %v3019 = vld [vmem:[%s2994 + $0x100] sm:$0xff]
      %v3020 = vld [vmem:[%s2994 + $0x108] sm:$0xff]
      %v3021 = vld [vmem:[%s2994 + $0x110] sm:$0xff]
      %v3022 = vld [vmem:[%s2994 + $0x120] sm:$0xff]
      %v3023 = vld [vmem:[%s2994 + $0x128] sm:$0xff]
      %v3024 = vld [vmem:[%s2994 + $0x130] sm:$0xff]
      %v3025 = vld [vmem:[%s2994 + $0x140] sm:$0xff]
      %v3026 = vld [vmem:[%s2994 + $0x148] sm:$0xff]
      %v3027 = vld [vmem:[%s2994 + $0x150] sm:$0xff]
      %v3028 = vld [vmem:[%s2994 + $0x160] sm:$0xff]
      %v3029 = vld [vmem:[%s2994 + $0x168] sm:$0xff]
      %v3030 = vld [vmem:[%s2994 + $0x170] sm:$0xff]
      %v3031 = vld [vmem:[%s2994 + $0x180] sm:$0xff]
      %v3032 = vld [vmem:[%s2994 + $0x188] sm:$0xff]
      %v3033 = vld [vmem:[%s2994 + $0x190] sm:$0xff]
      %v3034 = vld [vmem:[%s2994 + $0x1a0] sm:$0xff]
      %v3035 = vld [vmem:[%s2994 + $0x1a8] sm:$0xff]
      %v3036 = vld [vmem:[%s2994 + $0x1b0] sm:$0xff]
      %v3037 = vld [vmem:[%s2994 + $0x1c0] sm:$0xff]
      %v3038 = vld [vmem:[%s2994 + $0x1c8] sm:$0xff]
      %v3039 = vld [vmem:[%s2994 + $0x1d0] sm:$0xff]
      %v3040 = vld [vmem:[%s2994 + $0x1e0] sm:$0xff]
      %v3041 = vld [vmem:[%s2994 + $0x1e8] sm:$0xff]
      %v3042 = vld [vmem:[%s2994 + $0x1f0] sm:$0xff]
      %v3043 = vld [vmem:[%s2994 + $0x200] sm:$0xff]
      %v3044 = vld [vmem:[%s2994 + $0x208] sm:$0xff]
      %v3045 = vld [vmem:[%s2994 + $0x210] sm:$0xff]
      %v3046 = vld [vmem:[%s2994 + $0x220] sm:$0xff]
      %v3047 = vld [vmem:[%s2994 + $0x228] sm:$0xff]
      %v3048 = vld [vmem:[%s2994 + $0x230] sm:$0xff]
      %v3049 = vpack.c.bf16 %v2996, %v2995
      %v3050 = vpack.c.bf16 %v2998, %v2997
      %v3051 = vpack.c.bf16 %v3000, %v2999
      %v3052 = vpack.c.bf16 %v3002, %v3001
      %v3053 = vpack.c.bf16 %v3004, %v3003
      %v3054 = vpack.c.bf16 %v3006, %v3005
      %v3055 = vpack.c.bf16 %v3008, %v3007
      %v3056 = vpack.c.bf16 %v3010, %v3009
      %v3057 = vpack.c.bf16 %v3012, %v3011
      %v3058 = vpack.c.bf16 %v3014, %v3013
      %v3059 = vpack.c.bf16 %v3016, %v3015
      %v3060 = vpack.c.bf16 %v3018, %v3017
      %v3061 = vpack.c.bf16 %v3020, %v3019
      %v3062 = vpack.c.bf16 %v3022, %v3021
      %v3063 = vpack.c.bf16 %v3024, %v3023
      %v3064 = vpack.c.bf16 %v3026, %v3025
      %v3065 = vpack.c.bf16 %v3028, %v3027
      %v3066 = vpack.c.bf16 %v3030, %v3029
      %v3067 = vpack.c.bf16 %v3032, %v3031
      %v3068 = vpack.c.bf16 %v3034, %v3033
      %v3069 = vpack.c.bf16 %v3036, %v3035
      %v3070 = vpack.c.bf16 %v3038, %v3037
      %v3071 = vpack.c.bf16 %v3040, %v3039
      %v3072 = vpack.c.bf16 %v3042, %v3041
      %v3073 = vpack.c.bf16 %v3044, %v3043
      %v3074 = vpack.c.bf16 %v3046, %v3045
      %v3075 = vpack.c.bf16 %v3048, %v3047
      %s3076 = scalar_lea.vmem %s1, 12
      %v3077 = vld [vmem:[%s3076] sm:$0x3]
      %v3079 = vsel %vm445, %v3049, 0
      %v3082 = vsel %vm445, %v3050, 0
      %v3085 = vsel %vm445, %v3051, 0
      %v3088 = vsel %vm445, %v3052, 0
      %v3091 = vsel %vm445, %v3053, 0
      %v3094 = vsel %vm445, %v3054, 0
      %v3097 = vsel %vm445, %v3055, 0
      %v3100 = vsel %vm445, %v3056, 0
      %v3103 = vsel %vm445, %v3057, 0
      %v3106 = vsel %vm445, %v3058, 0
      %v3109 = vsel %vm445, %v3059, 0
      %v3112 = vsel %vm445, %v3060, 0
      %v3115 = vsel %vm445, %v3061, 0
      %v3118 = vsel %vm445, %v3062, 0
      %v3121 = vsel %vm445, %v3063, 0
      %v3124 = vsel %vm445, %v3064, 0
      %v3127 = vsel %vm445, %v3065, 0
      %v3130 = vsel %vm445, %v3066, 0
      %v3133 = vsel %vm445, %v3067, 0
      %v3136 = vsel %vm445, %v3068, 0
      %v3139 = vsel %vm445, %v3069, 0
      %v3142 = vsel %vm445, %v3070, 0
      %v3145 = vsel %vm445, %v3071, 0
      %v3148 = vsel %vm445, %v3072, 0
      %v3151 = vsel %vm445, %v3073, 0
      %v3154 = vsel %vm445, %v3074, 0
      %v3157 = vsel %vm445, %v3075, 0
      %v3160 = vsel %vm527, %v3077, 0
      %3162 = vmatprep.subr.bf16.mxu0 0
      %3163 = vmatpush1.bf16.msra.mxu0 %v3160
      %3164 = vmatprep.subr.bf16.mxu0 0
      %3165 = vmatpush1.bf16.msra.mxu0 0
      %3166 = vmatprep.subr.bf16.mxu0 0
      %3167 = vmatpush1.bf16.msra.mxu0 0
      %3168 = vmatprep.subr.bf16.mxu0 0
      %3169 = vmatpush1.bf16.msra.mxu0 0
      %3170 = vmatprep.subr.bf16.mxu0 0
      %3171 = vmatpush1.bf16.msra.mxu0 0
      %3172 = vmatprep.subr.bf16.mxu0 0
      %3173 = vmatpush1.bf16.msra.mxu0 0
      %3174 = vmatprep.subr.bf16.mxu0 0
      %3175 = vmatpush1.bf16.msra.mxu0 0
      %3176 = vmatprep.subr.bf16.mxu0 0
      %3177 = vmatpush1.bf16.msra.mxu0 0
      %3178 = vmatprep.subr.bf16.mxu0 0
      %3179 = vmatpush1.bf16.msra.mxu0 0
      %3180 = vmatprep.subr.bf16.mxu0 0
      %3181 = vmatpush1.bf16.msra.mxu0 0
      %3182 = vmatprep.subr.bf16.mxu0 0
      %3183 = vmatpush1.bf16.msra.mxu0 0
      %3184 = vmatprep.subr.bf16.mxu0 0
      %3185 = vmatpush1.bf16.msra.mxu0 0
      %3186 = vmatprep.subr.bf16.mxu0 0
      %3187 = vmatpush1.bf16.msra.mxu0 0
      %3188 = vmatprep.subr.bf16.mxu0 0
      %3189 = vmatpush1.bf16.msra.mxu0 0
      %3190 = vmatprep.subr.bf16.mxu0 0
      %3191 = vmatpush1.bf16.msra.mxu0 0
      %3192 = vmatprep.subr.bf16.mxu0 0
      %3193 = vmatpush1.bf16.msra.mxu0 0
      %3194 = vmatprep.mubr.bf16.mxu0 0
      %3195 = vmatmul.mubr.bf16.gmra.mrb[0].mxu0 %v3079
      %v3196 = vpop.f32.mrb[0].mxu0
      %v3197 = vadd.f32 0.0, %v3196
      %v3198 = vpop.f32.mrb[0].mxu0
      %v3199 = vpop.f32.mrb[0].mxu0
      %v3200 = vadd.f32 0.0, %v3199
      %v3201 = vpop.f32.mrb[0].mxu0
      %3202 = vmatprep.mubr.bf16.mxu0 0
      %3203 = vmatmul.mubr.bf16.gmra.mrb[0].mxu0 %v3082
      %v3204 = vpop.f32.mrb[0].mxu0
      %v3205 = vadd.f32 0.0, %v3204
      %v3206 = vpop.f32.mrb[0].mxu0
      %v3207 = vpop.f32.mrb[0].mxu0
      %v3208 = vadd.f32 0.0, %v3207
      %v3209 = vpop.f32.mrb[0].mxu0
      %3210 = vmatprep.mubr.bf16.mxu0 0
      %3211 = vmatmul.mubr.bf16.gmra.mrb[0].mxu0 %v3085
      %v3212 = vpop.f32.mrb[0].mxu0
      %v3213 = vadd.f32 0.0, %v3212
      %v3214 = vpop.f32.mrb[0].mxu0
      %v3215 = vpop.f32.mrb[0].mxu0
      %v3216 = vadd.f32 0.0, %v3215
      %v3217 = vpop.f32.mrb[0].mxu0
      %3218 = vmatprep.mubr.bf16.mxu0 0
      %3219 = vmatmul.mubr.bf16.gmra.mrb[0].mxu0 %v3088
      %v3220 = vpop.f32.mrb[0].mxu0
      %v3221 = vadd.f32 0.0, %v3220
      %v3222 = vpop.f32.mrb[0].mxu0
      %v3223 = vpop.f32.mrb[0].mxu0
      %v3224 = vadd.f32 0.0, %v3223
      %v3225 = vpop.f32.mrb[0].mxu0
      %3226 = vmatprep.mubr.bf16.mxu0 0
      %3227 = vmatmul.mubr.bf16.gmra.mrb[0].mxu0 %v3091
      %v3228 = vpop.f32.mrb[0].mxu0
      %v3229 = vadd.f32 0.0, %v3228
      %v3230 = vpop.f32.mrb[0].mxu0
      %v3231 = vpop.f32.mrb[0].mxu0
      %v3232 = vadd.f32 0.0, %v3231
      %v3233 = vpop.f32.mrb[0].mxu0
      %3234 = vmatprep.mubr.bf16.mxu0 0
      %3235 = vmatmul.mubr.bf16.gmra.mrb[0].mxu0 %v3094
      %v3236 = vpop.f32.mrb[0].mxu0
      %v3237 = vadd.f32 0.0, %v3236
      %v3238 = vpop.f32.mrb[0].mxu0
      %v3239 = vpop.f32.mrb[0].mxu0
      %v3240 = vadd.f32 0.0, %v3239
      %v3241 = vpop.f32.mrb[0].mxu0
      %3242 = vmatprep.mubr.bf16.mxu0 0
      %3243 = vmatmul.mubr.bf16.gmra.mrb[0].mxu0 %v3097
      %v3244 = vpop.f32.mrb[0].mxu0
      %v3245 = vadd.f32 0.0, %v3244
      %v3246 = vpop.f32.mrb[0].mxu0
      %v3247 = vpop.f32.mrb[0].mxu0
      %v3248 = vadd.f32 0.0, %v3247
      %v3249 = vpop.f32.mrb[0].mxu0
      %3250 = vmatprep.mubr.bf16.mxu0 0
      %3251 = vmatmul.mubr.bf16.gmra.mrb[0].mxu0 %v3100
      %v3252 = vpop.f32.mrb[0].mxu0
      %v3253 = vadd.f32 0.0, %v3252
      %v3254 = vpop.f32.mrb[0].mxu0
      %v3255 = vpop.f32.mrb[0].mxu0
      %v3256 = vadd.f32 0.0, %v3255
      %v3257 = vpop.f32.mrb[0].mxu0
      %3258 = vmatprep.mubr.bf16.mxu0 0
      %3259 = vmatmul.mubr.bf16.gmra.mrb[0].mxu0 %v3103
      %v3260 = vpop.f32.mrb[0].mxu0
      %v3261 = vadd.f32 0.0, %v3260
      %v3262 = vpop.f32.mrb[0].mxu0
      %v3263 = vpop.f32.mrb[0].mxu0
      %v3264 = vadd.f32 0.0, %v3263
      %v3265 = vpop.f32.mrb[0].mxu0
      %3266 = vmatprep.mubr.bf16.mxu0 0
      %3267 = vmatmul.mubr.bf16.gmra.mrb[0].mxu0 %v3106
      %v3268 = vpop.f32.mrb[0].mxu0
      %v3269 = vadd.f32 0.0, %v3268
      %v3270 = vpop.f32.mrb[0].mxu0
      %v3271 = vpop.f32.mrb[0].mxu0
      %v3272 = vadd.f32 0.0, %v3271
      %v3273 = vpop.f32.mrb[0].mxu0
      %3274 = vmatprep.mubr.bf16.mxu0 0
      %3275 = vmatmul.mubr.bf16.gmra.mrb[0].mxu0 %v3109
      %v3276 = vpop.f32.mrb[0].mxu0
      %v3277 = vadd.f32 0.0, %v3276
      %v3278 = vpop.f32.mrb[0].mxu0
      %v3279 = vpop.f32.mrb[0].mxu0
      %v3280 = vadd.f32 0.0, %v3279
      %v3281 = vpop.f32.mrb[0].mxu0
      %3282 = vmatprep.mubr.bf16.mxu0 0
      %3283 = vmatmul.mubr.bf16.gmra.mrb[0].mxu0 %v3112
      %v3284 = vpop.f32.mrb[0].mxu0
      %v3285 = vadd.f32 0.0, %v3284
      %v3286 = vpop.f32.mrb[0].mxu0
      %v3287 = vpop.f32.mrb[0].mxu0
      %v3288 = vadd.f32 0.0, %v3287
      %v3289 = vpop.f32.mrb[0].mxu0
      %3290 = vmatprep.mubr.bf16.mxu0 0
      %3291 = vmatmul.mubr.bf16.gmra.mrb[0].mxu0 %v3115
      %v3292 = vpop.f32.mrb[0].mxu0
      %v3293 = vadd.f32 0.0, %v3292
      %v3294 = vpop.f32.mrb[0].mxu0
      %v3295 = vpop.f32.mrb[0].mxu0
      %v3296 = vadd.f32 0.0, %v3295
      %v3297 = vpop.f32.mrb[0].mxu0
      %3298 = vmatprep.mubr.bf16.mxu0 0
      %3299 = vmatmul.mubr.bf16.gmra.mrb[0].mxu0 %v3118
      %v3300 = vpop.f32.mrb[0].mxu0
      %v3301 = vadd.f32 0.0, %v3300
      %v3302 = vpop.f32.mrb[0].mxu0
      %v3303 = vpop.f32.mrb[0].mxu0
      %v3304 = vadd.f32 0.0, %v3303
      %v3305 = vpop.f32.mrb[0].mxu0
      %3306 = vmatprep.mubr.bf16.mxu0 0
      %3307 = vmatmul.mubr.bf16.gmra.mrb[0].mxu0 %v3121
      %v3308 = vpop.f32.mrb[0].mxu0
      %v3309 = vadd.f32 0.0, %v3308
      %v3310 = vpop.f32.mrb[0].mxu0
      %v3311 = vpop.f32.mrb[0].mxu0
      %v3312 = vadd.f32 0.0, %v3311
      %v3313 = vpop.f32.mrb[0].mxu0
      %3314 = vmatprep.mubr.bf16.mxu0 0
      %3315 = vmatmul.mubr.bf16.gmra.mrb[0].mxu0 %v3124
      %v3316 = vpop.f32.mrb[0].mxu0
      %v3317 = vadd.f32 0.0, %v3316
      %v3318 = vpop.f32.mrb[0].mxu0
      %v3319 = vpop.f32.mrb[0].mxu0
      %v3320 = vadd.f32 0.0, %v3319
      %v3321 = vpop.f32.mrb[0].mxu0
      %3322 = vmatprep.mubr.bf16.mxu0 0
      %3323 = vmatmul.mubr.bf16.gmra.mrb[0].mxu0 %v3127
      %v3324 = vpop.f32.mrb[0].mxu0
      %v3325 = vadd.f32 0.0, %v3324
      %v3326 = vpop.f32.mrb[0].mxu0
      %v3327 = vpop.f32.mrb[0].mxu0
      %v3328 = vadd.f32 0.0, %v3327
      %v3329 = vpop.f32.mrb[0].mxu0
      %3330 = vmatprep.mubr.bf16.mxu0 0
      %3331 = vmatmul.mubr.bf16.gmra.mrb[0].mxu0 %v3130
      %v3332 = vpop.f32.mrb[0].mxu0
      %v3333 = vadd.f32 0.0, %v3332
      %v3334 = vpop.f32.mrb[0].mxu0
      %v3335 = vpop.f32.mrb[0].mxu0
      %v3336 = vadd.f32 0.0, %v3335
      %v3337 = vpop.f32.mrb[0].mxu0
      %3338 = vmatprep.mubr.bf16.mxu0 0
      %3339 = vmatmul.mubr.bf16.gmra.mrb[0].mxu0 %v3133
      %v3340 = vpop.f32.mrb[0].mxu0
      %v3341 = vadd.f32 0.0, %v3340
      %v3342 = vpop.f32.mrb[0].mxu0
      %v3343 = vpop.f32.mrb[0].mxu0
      %v3344 = vadd.f32 0.0, %v3343
      %v3345 = vpop.f32.mrb[0].mxu0
      %3346 = vmatprep.mubr.bf16.mxu0 0
      %3347 = vmatmul.mubr.bf16.gmra.mrb[0].mxu0 %v3136
      %v3348 = vpop.f32.mrb[0].mxu0
      %v3349 = vadd.f32 0.0, %v3348
      %v3350 = vpop.f32.mrb[0].mxu0
      %v3351 = vpop.f32.mrb[0].mxu0
      %v3352 = vadd.f32 0.0, %v3351
      %v3353 = vpop.f32.mrb[0].mxu0
      %3354 = vmatprep.mubr.bf16.mxu0 0
      %3355 = vmatmul.mubr.bf16.gmra.mrb[0].mxu0 %v3139
      %v3356 = vpop.f32.mrb[0].mxu0
      %v3357 = vadd.f32 0.0, %v3356
      %v3358 = vpop.f32.mrb[0].mxu0
      %v3359 = vpop.f32.mrb[0].mxu0
      %v3360 = vadd.f32 0.0, %v3359
      %v3361 = vpop.f32.mrb[0].mxu0
      %3362 = vmatprep.mubr.bf16.mxu0 0
      %3363 = vmatmul.mubr.bf16.gmra.mrb[0].mxu0 %v3142
      %v3364 = vpop.f32.mrb[0].mxu0
      %v3365 = vadd.f32 0.0, %v3364
      %v3366 = vpop.f32.mrb[0].mxu0
      %v3367 = vpop.f32.mrb[0].mxu0
      %v3368 = vadd.f32 0.0, %v3367
      %v3369 = vpop.f32.mrb[0].mxu0
      %3370 = vmatprep.mubr.bf16.mxu0 0
      %3371 = vmatmul.mubr.bf16.gmra.mrb[0].mxu0 %v3145
      %v3372 = vpop.f32.mrb[0].mxu0
      %v3373 = vadd.f32 0.0, %v3372
      %v3374 = vpop.f32.mrb[0].mxu0
      %v3375 = vpop.f32.mrb[0].mxu0
      %v3376 = vadd.f32 0.0, %v3375
      %v3377 = vpop.f32.mrb[0].mxu0
      %3378 = vmatprep.mubr.bf16.mxu0 0
      %3379 = vmatmul.mubr.bf16.gmra.mrb[0].mxu0 %v3148
      %v3380 = vpop.f32.mrb[0].mxu0
      %v3381 = vadd.f32 0.0, %v3380
      %v3382 = vpop.f32.mrb[0].mxu0
      %v3383 = vpop.f32.mrb[0].mxu0
      %v3384 = vadd.f32 0.0, %v3383
      %v3385 = vpop.f32.mrb[0].mxu0
      %3386 = vmatprep.mubr.bf16.mxu0 0
      %3387 = vmatmul.mubr.bf16.gmra.mrb[0].mxu0 %v3151
      %v3388 = vpop.f32.mrb[0].mxu0
      %v3389 = vadd.f32 0.0, %v3388
      %v3390 = vpop.f32.mrb[0].mxu0
      %v3391 = vpop.f32.mrb[0].mxu0
      %v3392 = vadd.f32 0.0, %v3391
      %v3393 = vpop.f32.mrb[0].mxu0
      %3394 = vmatprep.mubr.bf16.mxu0 0
      %3395 = vmatmul.mubr.bf16.gmra.mrb[0].mxu0 %v3154
      %v3396 = vpop.f32.mrb[0].mxu0
      %v3397 = vadd.f32 0.0, %v3396
      %v3398 = vpop.f32.mrb[0].mxu0
      %v3399 = vpop.f32.mrb[0].mxu0
      %v3400 = vadd.f32 0.0, %v3399
      %v3401 = vpop.f32.mrb[0].mxu0
      %3402 = vmatprep.mubr.bf16.mxu0 0
      %3403 = vmatmul.mubr.bf16.gmra.mrb[0].mxu0 %v3157
      %v3404 = vpop.f32.mrb[0].mxu0
      %v3405 = vadd.f32 0.0, %v3404
      %v3406 = vpop.f32.mrb[0].mxu0
      %v3407 = vpop.f32.mrb[0].mxu0
      %v3408 = vadd.f32 0.0, %v3407
      %v3409 = vpop.f32.mrb[0].mxu0
      %3410 = vdwg.mxu0
      %v3411 = vadd.f32 %v2940, %v3197
      %v3412 = vadd.f32 %v2941, %v3200
      %v3413 = vadd.f32 %v2942, %v3205
      %v3414 = vadd.f32 %v2943, %v3208
      %v3415 = vadd.f32 %v2944, %v3213
      %v3416 = vadd.f32 %v2945, %v3216
      %v3417 = vadd.f32 %v2946, %v3221
      %v3418 = vadd.f32 %v2947, %v3224
      %v3419 = vadd.f32 %v2948, %v3229
      %v3420 = vadd.f32 %v2949, %v3232
      %v3421 = vadd.f32 %v2950, %v3237
      %v3422 = vadd.f32 %v2951, %v3240
      %v3423 = vadd.f32 %v2952, %v3245
      %v3424 = vadd.f32 %v2953, %v3248
      %v3425 = vadd.f32 %v2954, %v3253
      %v3426 = vadd.f32 %v2955, %v3256
      %v3427 = vadd.f32 %v2956, %v3261
      %v3428 = vadd.f32 %v2957, %v3264
      %v3429 = vadd.f32 %v2958, %v3269
      %v3430 = vadd.f32 %v2959, %v3272
      %v3431 = vadd.f32 %v2960, %v3277
      %v3432 = vadd.f32 %v2961, %v3280
      %v3433 = vadd.f32 %v2962, %v3285
      %v3434 = vadd.f32 %v2963, %v3288
      %v3435 = vadd.f32 %v2964, %v3293
      %v3436 = vadd.f32 %v2965, %v3296
      %v3437 = vadd.f32 %v2966, %v3301
      %v3438 = vadd.f32 %v2967, %v3304
      %v3439 = vadd.f32 %v2968, %v3309
      %v3440 = vadd.f32 %v2969, %v3312
      %v3441 = vadd.f32 %v2970, %v3317
      %v3442 = vadd.f32 %v2971, %v3320
      %v3443 = vadd.f32 %v2972, %v3325
      %v3444 = vadd.f32 %v2973, %v3328
      %v3445 = vadd.f32 %v2974, %v3333
      %v3446 = vadd.f32 %v2975, %v3336
      %v3447 = vadd.f32 %v2976, %v3341
      %v3448 = vadd.f32 %v2977, %v3344
      %v3449 = vadd.f32 %v2978, %v3349
      %v3450 = vadd.f32 %v2979, %v3352
      %v3451 = vadd.f32 %v2980, %v3357
      %v3452 = vadd.f32 %v2981, %v3360
      %v3453 = vadd.f32 %v2982, %v3365
      %v3454 = vadd.f32 %v2983, %v3368
      %v3455 = vadd.f32 %v2984, %v3373
      %v3456 = vadd.f32 %v2985, %v3376
      %v3457 = vadd.f32 %v2986, %v3381
      %v3458 = vadd.f32 %v2987, %v3384
      %v3459 = vadd.f32 %v2988, %v3389
      %v3460 = vadd.f32 %v2989, %v3392
      %v3461 = vadd.f32 %v2990, %v3397
      %v3462 = vadd.f32 %v2991, %v3400
      %v3463 = vadd.f32 %v2992, %v3405
      %v3464 = vadd.f32 %v2993, %v3408
      %v3465 = vld [vmem:[%s2994 + $0x1] sm:$0xff]
      %v3466 = vld [vmem:[%s2994 + $0x9] sm:$0xff]
      %v3467 = vld [vmem:[%s2994 + $0x11] sm:$0xff]
      %v3468 = vld [vmem:[%s2994 + $0x21] sm:$0xff]
      %v3469 = vld [vmem:[%s2994 + $0x29] sm:$0xff]
      %v3470 = vld [vmem:[%s2994 + $0x31] sm:$0xff]
      %v3471 = vld [vmem:[%s2994 + $0x41] sm:$0xff]
      %v3472 = vld [vmem:[%s2994 + $0x49] sm:$0xff]
      %v3473 = vld [vmem:[%s2994 + $0x51] sm:$0xff]
      %v3474 = vld [vmem:[%s2994 + $0x61] sm:$0xff]
      %v3475 = vld [vmem:[%s2994 + $0x69] sm:$0xff]
      %v3476 = vld [vmem:[%s2994 + $0x71] sm:$0xff]
      %v3477 = vld [vmem:[%s2994 + $0x81] sm:$0xff]
      %v3478 = vld [vmem:[%s2994 + $0x89] sm:$0xff]
      %v3479 = vld [vmem:[%s2994 + $0x91] sm:$0xff]
      %v3480 = vld [vmem:[%s2994 + $0xa1] sm:$0xff]
      %v3481 = vld [vmem:[%s2994 + $0xa9] sm:$0xff]
      %v3482 = vld [vmem:[%s2994 + $0xb1] sm:$0xff]
      %v3483 = vld [vmem:[%s2994 + $0xc1] sm:$0xff]
      %v3484 = vld [vmem:[%s2994 + $0xc9] sm:$0xff]
      %v3485 = vld [vmem:[%s2994 + $0xd1] sm:$0xff]
      %v3486 = vld [vmem:[%s2994 + $0xe1] sm:$0xff]
      %v3487 = vld [vmem:[%s2994 + $0xe9] sm:$0xff]
      %v3488 = vld [vmem:[%s2994 + $0xf1] sm:$0xff]
      %v3489 = vld [vmem:[%s2994 + $0x101] sm:$0xff]
      %v3490 = vld [vmem:[%s2994 + $0x109] sm:$0xff]
      %v3491 = vld [vmem:[%s2994 + $0x111] sm:$0xff]
      %v3492 = vld [vmem:[%s2994 + $0x121] sm:$0xff]
      %v3493 = vld [vmem:[%s2994 + $0x129] sm:$0xff]
      %v3494 = vld [vmem:[%s2994 + $0x131] sm:$0xff]
      %v3495 = vld [vmem:[%s2994 + $0x141] sm:$0xff]
      %v3496 = vld [vmem:[%s2994 + $0x149] sm:$0xff]
      %v3497 = vld [vmem:[%s2994 + $0x151] sm:$0xff]
      %v3498 = vld [vmem:[%s2994 + $0x161] sm:$0xff]
      %v3499 = vld [vmem:[%s2994 + $0x169] sm:$0xff]
      %v3500 = vld [vmem:[%s2994 + $0x171] sm:$0xff]
      %v3501 = vld [vmem:[%s2994 + $0x181] sm:$0xff]
      %v3502 = vld [vmem:[%s2994 + $0x189] sm:$0xff]
      %v3503 = vld [vmem:[%s2994 + $0x191] sm:$0xff]
      %v3504 = vld [vmem:[%s2994 + $0x1a1] sm:$0xff]
      %v3505 = vld [vmem:[%s2994 + $0x1a9] sm:$0xff]
      %v3506 = vld [vmem:[%s2994 + $0x1b1] sm:$0xff]
      %v3507 = vld [vmem:[%s2994 + $0x1c1] sm:$0xff]
      %v3508 = vld [vmem:[%s2994 + $0x1c9] sm:$0xff]
      %v3509 = vld [vmem:[%s2994 + $0x1d1] sm:$0xff]
      %v3510 = vld [vmem:[%s2994 + $0x1e1] sm:$0xff]
      %v3511 = vld [vmem:[%s2994 + $0x1e9] sm:$0xff]
      %v3512 = vld [vmem:[%s2994 + $0x1f1] sm:$0xff]
      %v3513 = vld [vmem:[%s2994 + $0x201] sm:$0xff]
      %v3514 = vld [vmem:[%s2994 + $0x209] sm:$0xff]
      %v3515 = vld [vmem:[%s2994 + $0x211] sm:$0xff]
      %v3516 = vld [vmem:[%s2994 + $0x221] sm:$0xff]
      %v3517 = vld [vmem:[%s2994 + $0x229] sm:$0xff]
      %v3518 = vld [vmem:[%s2994 + $0x231] sm:$0xff]
      %v3519 = vpack.c.bf16 %v3466, %v3465
      %v3520 = vpack.c.bf16 %v3468, %v3467
      %v3521 = vpack.c.bf16 %v3470, %v3469
      %v3522 = vpack.c.bf16 %v3472, %v3471
      %v3523 = vpack.c.bf16 %v3474, %v3473
      %v3524 = vpack.c.bf16 %v3476, %v3475
      %v3525 = vpack.c.bf16 %v3478, %v3477
      %v3526 = vpack.c.bf16 %v3480, %v3479
      %v3527 = vpack.c.bf16 %v3482, %v3481
      %v3528 = vpack.c.bf16 %v3484, %v3483
      %v3529 = vpack.c.bf16 %v3486, %v3485
      %v3530 = vpack.c.bf16 %v3488, %v3487
      %v3531 = vpack.c.bf16 %v3490, %v3489
      %v3532 = vpack.c.bf16 %v3492, %v3491
      %v3533 = vpack.c.bf16 %v3494, %v3493
      %v3534 = vpack.c.bf16 %v3496, %v3495
      %v3535 = vpack.c.bf16 %v3498, %v3497
      %v3536 = vpack.c.bf16 %v3500, %v3499
      %v3537 = vpack.c.bf16 %v3502, %v3501
      %v3538 = vpack.c.bf16 %v3504, %v3503
      %v3539 = vpack.c.bf16 %v3506, %v3505
      %v3540 = vpack.c.bf16 %v3508, %v3507
      %v3541 = vpack.c.bf16 %v3510, %v3509
      %v3542 = vpack.c.bf16 %v3512, %v3511
      %v3543 = vpack.c.bf16 %v3514, %v3513
      %v3544 = vpack.c.bf16 %v3516, %v3515
      %v3545 = vpack.c.bf16 %v3518, %v3517
      %s3546 = scalar_lea.vmem %s1, 14
      %v3547 = vld [vmem:[%s3546] sm:$0x3]
      %v3549 = vsel %vm445, %v3519, 0
      %v3552 = vsel %vm445, %v3520, 0
      %v3555 = vsel %vm445, %v3521, 0
      %v3558 = vsel %vm445, %v3522, 0
      %v3561 = vsel %vm445, %v3523, 0
      %v3564 = vsel %vm445, %v3524, 0
      %v3567 = vsel %vm445, %v3525, 0
      %v3570 = vsel %vm445, %v3526, 0
      %v3573 = vsel %vm445, %v3527, 0
      %v3576 = vsel %vm445, %v3528, 0
      %v3579 = vsel %vm445, %v3529, 0
      %v3582 = vsel %vm445, %v3530, 0
      %v3585 = vsel %vm445, %v3531, 0
      %v3588 = vsel %vm445, %v3532, 0
      %v3591 = vsel %vm445, %v3533, 0
      %v3594 = vsel %vm445, %v3534, 0
      %v3597 = vsel %vm445, %v3535, 0
      %v3600 = vsel %vm445, %v3536, 0
      %v3603 = vsel %vm445, %v3537, 0
      %v3606 = vsel %vm445, %v3538, 0
      %v3609 = vsel %vm445, %v3539, 0
      %v3612 = vsel %vm445, %v3540, 0
      %v3615 = vsel %vm445, %v3541, 0
      %v3618 = vsel %vm445, %v3542, 0
      %v3621 = vsel %vm445, %v3543, 0
      %v3624 = vsel %vm445, %v3544, 0
      %v3627 = vsel %vm445, %v3545, 0
      %v3630 = vsel %vm527, %v3547, 0
      %3632 = vmatprep.subr.bf16.mxu0 0
      %3633 = vmatpush1.bf16.msra.mxu0 %v3630
      %3634 = vmatprep.subr.bf16.mxu0 0
      %3635 = vmatpush1.bf16.msra.mxu0 0
      %3636 = vmatprep.subr.bf16.mxu0 0
      %3637 = vmatpush1.bf16.msra.mxu0 0
      %3638 = vmatprep.subr.bf16.mxu0 0
      %3639 = vmatpush1.bf16.msra.mxu0 0
      %3640 = vmatprep.subr.bf16.mxu0 0
      %3641 = vmatpush1.bf16.msra.mxu0 0
      %3642 = vmatprep.subr.bf16.mxu0 0
      %3643 = vmatpush1.bf16.msra.mxu0 0
      %3644 = vmatprep.subr.bf16.mxu0 0
      %3645 = vmatpush1.bf16.msra.mxu0 0
      %3646 = vmatprep.subr.bf16.mxu0 0
      %3647 = vmatpush1.bf16.msra.mxu0 0
      %3648 = vmatprep.subr.bf16.mxu0 0
      %3649 = vmatpush1.bf16.msra.mxu0 0
      %3650 = vmatprep.subr.bf16.mxu0 0
      %3651 = vmatpush1.bf16.msra.mxu0 0
      %3652 = vmatprep.subr.bf16.mxu0 0
      %3653 = vmatpush1.bf16.msra.mxu0 0
      %3654 = vmatprep.subr.bf16.mxu0 0
      %3655 = vmatpush1.bf16.msra.mxu0 0
      %3656 = vmatprep.subr.bf16.mxu0 0
      %3657 = vmatpush1.bf16.msra.mxu0 0
      %3658 = vmatprep.subr.bf16.mxu0 0
      %3659 = vmatpush1.bf16.msra.mxu0 0
      %3660 = vmatprep.subr.bf16.mxu0 0
      %3661 = vmatpush1.bf16.msra.mxu0 0
      %3662 = vmatprep.subr.bf16.mxu0 0
      %3663 = vmatpush1.bf16.msra.mxu0 0
      %3664 = vmatprep.mubr.bf16.mxu0 0
      %3665 = vmatmul.mubr.bf16.gmra.mrb[0].mxu0 %v3549
      %v3666 = vpop.f32.mrb[0].mxu0
      %v3667 = vadd.f32 0.0, %v3666
      %v3668 = vpop.f32.mrb[0].mxu0
      %v3669 = vpop.f32.mrb[0].mxu0
      %v3670 = vadd.f32 0.0, %v3669
      %v3671 = vpop.f32.mrb[0].mxu0
      %3672 = vmatprep.mubr.bf16.mxu0 0
      %3673 = vmatmul.mubr.bf16.gmra.mrb[0].mxu0 %v3552
      %v3674 = vpop.f32.mrb[0].mxu0
      %v3675 = vadd.f32 0.0, %v3674
      %v3676 = vpop.f32.mrb[0].mxu0
      %v3677 = vpop.f32.mrb[0].mxu0
      %v3678 = vadd.f32 0.0, %v3677
      %v3679 = vpop.f32.mrb[0].mxu0
      %3680 = vmatprep.mubr.bf16.mxu0 0
      %3681 = vmatmul.mubr.bf16.gmra.mrb[0].mxu0 %v3555
      %v3682 = vpop.f32.mrb[0].mxu0
      %v3683 = vadd.f32 0.0, %v3682
      %v3684 = vpop.f32.mrb[0].mxu0
      %v3685 = vpop.f32.mrb[0].mxu0
      %v3686 = vadd.f32 0.0, %v3685
      %v3687 = vpop.f32.mrb[0].mxu0
      %3688 = vmatprep.mubr.bf16.mxu0 0
      %3689 = vmatmul.mubr.bf16.gmra.mrb[0].mxu0 %v3558
      %v3690 = vpop.f32.mrb[0].mxu0
      %v3691 = vadd.f32 0.0, %v3690
      %v3692 = vpop.f32.mrb[0].mxu0
      %v3693 = vpop.f32.mrb[0].mxu0
      %v3694 = vadd.f32 0.0, %v3693
      %v3695 = vpop.f32.mrb[0].mxu0
      %3696 = vmatprep.mubr.bf16.mxu0 0
      %3697 = vmatmul.mubr.bf16.gmra.mrb[0].mxu0 %v3561
      %v3698 = vpop.f32.mrb[0].mxu0
      %v3699 = vadd.f32 0.0, %v3698
      %v3700 = vpop.f32.mrb[0].mxu0
      %v3701 = vpop.f32.mrb[0].mxu0
      %v3702 = vadd.f32 0.0, %v3701
      %v3703 = vpop.f32.mrb[0].mxu0
      %3704 = vmatprep.mubr.bf16.mxu0 0
      %3705 = vmatmul.mubr.bf16.gmra.mrb[0].mxu0 %v3564
      %v3706 = vpop.f32.mrb[0].mxu0
      %v3707 = vadd.f32 0.0, %v3706
      %v3708 = vpop.f32.mrb[0].mxu0
      %v3709 = vpop.f32.mrb[0].mxu0
      %v3710 = vadd.f32 0.0, %v3709
      %v3711 = vpop.f32.mrb[0].mxu0
      %3712 = vmatprep.mubr.bf16.mxu0 0
      %3713 = vmatmul.mubr.bf16.gmra.mrb[0].mxu0 %v3567
      %v3714 = vpop.f32.mrb[0].mxu0
      %v3715 = vadd.f32 0.0, %v3714
      %v3716 = vpop.f32.mrb[0].mxu0
      %v3717 = vpop.f32.mrb[0].mxu0
      %v3718 = vadd.f32 0.0, %v3717
      %v3719 = vpop.f32.mrb[0].mxu0
      %3720 = vmatprep.mubr.bf16.mxu0 0
      %3721 = vmatmul.mubr.bf16.gmra.mrb[0].mxu0 %v3570
      %v3722 = vpop.f32.mrb[0].mxu0
      %v3723 = vadd.f32 0.0, %v3722
      %v3724 = vpop.f32.mrb[0].mxu0
      %v3725 = vpop.f32.mrb[0].mxu0
      %v3726 = vadd.f32 0.0, %v3725
      %v3727 = vpop.f32.mrb[0].mxu0
      %3728 = vmatprep.mubr.bf16.mxu0 0
      %3729 = vmatmul.mubr.bf16.gmra.mrb[0].mxu0 %v3573
      %v3730 = vpop.f32.mrb[0].mxu0
      %v3731 = vadd.f32 0.0, %v3730
      %v3732 = vpop.f32.mrb[0].mxu0
      %v3733 = vpop.f32.mrb[0].mxu0
      %v3734 = vadd.f32 0.0, %v3733
      %v3735 = vpop.f32.mrb[0].mxu0
      %3736 = vmatprep.mubr.bf16.mxu0 0
      %3737 = vmatmul.mubr.bf16.gmra.mrb[0].mxu0 %v3576
      %v3738 = vpop.f32.mrb[0].mxu0
      %v3739 = vadd.f32 0.0, %v3738
      %v3740 = vpop.f32.mrb[0].mxu0
      %v3741 = vpop.f32.mrb[0].mxu0
      %v3742 = vadd.f32 0.0, %v3741
      %v3743 = vpop.f32.mrb[0].mxu0
      %3744 = vmatprep.mubr.bf16.mxu0 0
      %3745 = vmatmul.mubr.bf16.gmra.mrb[0].mxu0 %v3579
      %v3746 = vpop.f32.mrb[0].mxu0
      %v3747 = vadd.f32 0.0, %v3746
      %v3748 = vpop.f32.mrb[0].mxu0
      %v3749 = vpop.f32.mrb[0].mxu0
      %v3750 = vadd.f32 0.0, %v3749
      %v3751 = vpop.f32.mrb[0].mxu0
      %3752 = vmatprep.mubr.bf16.mxu0 0
      %3753 = vmatmul.mubr.bf16.gmra.mrb[0].mxu0 %v3582
      %v3754 = vpop.f32.mrb[0].mxu0
      %v3755 = vadd.f32 0.0, %v3754
      %v3756 = vpop.f32.mrb[0].mxu0
      %v3757 = vpop.f32.mrb[0].mxu0
      %v3758 = vadd.f32 0.0, %v3757
      %v3759 = vpop.f32.mrb[0].mxu0
      %3760 = vmatprep.mubr.bf16.mxu0 0
      %3761 = vmatmul.mubr.bf16.gmra.mrb[0].mxu0 %v3585
      %v3762 = vpop.f32.mrb[0].mxu0
      %v3763 = vadd.f32 0.0, %v3762
      %v3764 = vpop.f32.mrb[0].mxu0
      %v3765 = vpop.f32.mrb[0].mxu0
      %v3766 = vadd.f32 0.0, %v3765
      %v3767 = vpop.f32.mrb[0].mxu0
      %3768 = vmatprep.mubr.bf16.mxu0 0
      %3769 = vmatmul.mubr.bf16.gmra.mrb[0].mxu0 %v3588
      %v3770 = vpop.f32.mrb[0].mxu0
      %v3771 = vadd.f32 0.0, %v3770
      %v3772 = vpop.f32.mrb[0].mxu0
      %v3773 = vpop.f32.mrb[0].mxu0
      %v3774 = vadd.f32 0.0, %v3773
      %v3775 = vpop.f32.mrb[0].mxu0
      %3776 = vmatprep.mubr.bf16.mxu0 0
      %3777 = vmatmul.mubr.bf16.gmra.mrb[0].mxu0 %v3591
      %v3778 = vpop.f32.mrb[0].mxu0
      %v3779 = vadd.f32 0.0, %v3778
      %v3780 = vpop.f32.mrb[0].mxu0
      %v3781 = vpop.f32.mrb[0].mxu0
      %v3782 = vadd.f32 0.0, %v3781
      %v3783 = vpop.f32.mrb[0].mxu0
      %3784 = vmatprep.mubr.bf16.mxu0 0
      %3785 = vmatmul.mubr.bf16.gmra.mrb[0].mxu0 %v3594
      %v3786 = vpop.f32.mrb[0].mxu0
      %v3787 = vadd.f32 0.0, %v3786
      %v3788 = vpop.f32.mrb[0].mxu0
      %v3789 = vpop.f32.mrb[0].mxu0
      %v3790 = vadd.f32 0.0, %v3789
      %v3791 = vpop.f32.mrb[0].mxu0
      %3792 = vmatprep.mubr.bf16.mxu0 0
      %3793 = vmatmul.mubr.bf16.gmra.mrb[0].mxu0 %v3597
      %v3794 = vpop.f32.mrb[0].mxu0
      %v3795 = vadd.f32 0.0, %v3794
      %v3796 = vpop.f32.mrb[0].mxu0
      %v3797 = vpop.f32.mrb[0].mxu0
      %v3798 = vadd.f32 0.0, %v3797
      %v3799 = vpop.f32.mrb[0].mxu0
      %3800 = vmatprep.mubr.bf16.mxu0 0
      %3801 = vmatmul.mubr.bf16.gmra.mrb[0].mxu0 %v3600
      %v3802 = vpop.f32.mrb[0].mxu0
      %v3803 = vadd.f32 0.0, %v3802
      %v3804 = vpop.f32.mrb[0].mxu0
      %v3805 = vpop.f32.mrb[0].mxu0
      %v3806 = vadd.f32 0.0, %v3805
      %v3807 = vpop.f32.mrb[0].mxu0
      %3808 = vmatprep.mubr.bf16.mxu0 0
      %3809 = vmatmul.mubr.bf16.gmra.mrb[0].mxu0 %v3603
      %v3810 = vpop.f32.mrb[0].mxu0
      %v3811 = vadd.f32 0.0, %v3810
      %v3812 = vpop.f32.mrb[0].mxu0
      %v3813 = vpop.f32.mrb[0].mxu0
      %v3814 = vadd.f32 0.0, %v3813
      %v3815 = vpop.f32.mrb[0].mxu0
      %3816 = vmatprep.mubr.bf16.mxu0 0
      %3817 = vmatmul.mubr.bf16.gmra.mrb[0].mxu0 %v3606
      %v3818 = vpop.f32.mrb[0].mxu0
      %v3819 = vadd.f32 0.0, %v3818
      %v3820 = vpop.f32.mrb[0].mxu0
      %v3821 = vpop.f32.mrb[0].mxu0
      %v3822 = vadd.f32 0.0, %v3821
      %v3823 = vpop.f32.mrb[0].mxu0
      %3824 = vmatprep.mubr.bf16.mxu0 0
      %3825 = vmatmul.mubr.bf16.gmra.mrb[0].mxu0 %v3609
      %v3826 = vpop.f32.mrb[0].mxu0
      %v3827 = vadd.f32 0.0, %v3826
      %v3828 = vpop.f32.mrb[0].mxu0
      %v3829 = vpop.f32.mrb[0].mxu0
      %v3830 = vadd.f32 0.0, %v3829
      %v3831 = vpop.f32.mrb[0].mxu0
      %3832 = vmatprep.mubr.bf16.mxu0 0
      %3833 = vmatmul.mubr.bf16.gmra.mrb[0].mxu0 %v3612
      %v3834 = vpop.f32.mrb[0].mxu0
      %v3835 = vadd.f32 0.0, %v3834
      %v3836 = vpop.f32.mrb[0].mxu0
      %v3837 = vpop.f32.mrb[0].mxu0
      %v3838 = vadd.f32 0.0, %v3837
      %v3839 = vpop.f32.mrb[0].mxu0
      %3840 = vmatprep.mubr.bf16.mxu0 0
      %3841 = vmatmul.mubr.bf16.gmra.mrb[0].mxu0 %v3615
      %v3842 = vpop.f32.mrb[0].mxu0
      %v3843 = vadd.f32 0.0, %v3842
      %v3844 = vpop.f32.mrb[0].mxu0
      %v3845 = vpop.f32.mrb[0].mxu0
      %v3846 = vadd.f32 0.0, %v3845
      %v3847 = vpop.f32.mrb[0].mxu0
      %3848 = vmatprep.mubr.bf16.mxu0 0
      %3849 = vmatmul.mubr.bf16.gmra.mrb[0].mxu0 %v3618
      %v3850 = vpop.f32.mrb[0].mxu0
      %v3851 = vadd.f32 0.0, %v3850
      %v3852 = vpop.f32.mrb[0].mxu0
      %v3853 = vpop.f32.mrb[0].mxu0
      %v3854 = vadd.f32 0.0, %v3853
      %v3855 = vpop.f32.mrb[0].mxu0
      %3856 = vmatprep.mubr.bf16.mxu0 0
      %3857 = vmatmul.mubr.bf16.gmra.mrb[0].mxu0 %v3621
      %v3858 = vpop.f32.mrb[0].mxu0
      %v3859 = vadd.f32 0.0, %v3858
      %v3860 = vpop.f32.mrb[0].mxu0
      %v3861 = vpop.f32.mrb[0].mxu0
      %v3862 = vadd.f32 0.0, %v3861
      %v3863 = vpop.f32.mrb[0].mxu0
      %3864 = vmatprep.mubr.bf16.mxu0 0
      %3865 = vmatmul.mubr.bf16.gmra.mrb[0].mxu0 %v3624
      %v3866 = vpop.f32.mrb[0].mxu0
      %v3867 = vadd.f32 0.0, %v3866
      %v3868 = vpop.f32.mrb[0].mxu0
      %v3869 = vpop.f32.mrb[0].mxu0
      %v3870 = vadd.f32 0.0, %v3869
      %v3871 = vpop.f32.mrb[0].mxu0
      %3872 = vmatprep.mubr.bf16.mxu0 0
      %3873 = vmatmul.mubr.bf16.gmra.mrb[0].mxu0 %v3627
      %v3874 = vpop.f32.mrb[0].mxu0
      %v3875 = vadd.f32 0.0, %v3874
      %v3876 = vpop.f32.mrb[0].mxu0
      %v3877 = vpop.f32.mrb[0].mxu0
      %v3878 = vadd.f32 0.0, %v3877
      %v3879 = vpop.f32.mrb[0].mxu0
      %3880 = vdwg.mxu0
      %v3881 = vadd.f32 %v3411, %v3667
      %v3882 = vadd.f32 %v3412, %v3670
      %v3883 = vadd.f32 %v3413, %v3675
      %v3884 = vadd.f32 %v3414, %v3678
      %v3885 = vadd.f32 %v3415, %v3683
      %v3886 = vadd.f32 %v3416, %v3686
      %v3887 = vadd.f32 %v3417, %v3691
      %v3888 = vadd.f32 %v3418, %v3694
      %v3889 = vadd.f32 %v3419, %v3699
      %v3890 = vadd.f32 %v3420, %v3702
      %v3891 = vadd.f32 %v3421, %v3707
      %v3892 = vadd.f32 %v3422, %v3710
      %v3893 = vadd.f32 %v3423, %v3715
      %v3894 = vadd.f32 %v3424, %v3718
      %v3895 = vadd.f32 %v3425, %v3723
      %v3896 = vadd.f32 %v3426, %v3726
      %v3897 = vadd.f32 %v3427, %v3731
      %v3898 = vadd.f32 %v3428, %v3734
      %v3899 = vadd.f32 %v3429, %v3739
      %v3900 = vadd.f32 %v3430, %v3742
      %v3901 = vadd.f32 %v3431, %v3747
      %v3902 = vadd.f32 %v3432, %v3750
      %v3903 = vadd.f32 %v3433, %v3755
      %v3904 = vadd.f32 %v3434, %v3758
      %v3905 = vadd.f32 %v3435, %v3763
      %v3906 = vadd.f32 %v3436, %v3766
      %v3907 = vadd.f32 %v3437, %v3771
      %v3908 = vadd.f32 %v3438, %v3774
      %v3909 = vadd.f32 %v3439, %v3779
      %v3910 = vadd.f32 %v3440, %v3782
      %v3911 = vadd.f32 %v3441, %v3787
      %v3912 = vadd.f32 %v3442, %v3790
      %v3913 = vadd.f32 %v3443, %v3795
      %v3914 = vadd.f32 %v3444, %v3798
      %v3915 = vadd.f32 %v3445, %v3803
      %v3916 = vadd.f32 %v3446, %v3806
      %v3917 = vadd.f32 %v3447, %v3811
      %v3918 = vadd.f32 %v3448, %v3814
      %v3919 = vadd.f32 %v3449, %v3819
      %v3920 = vadd.f32 %v3450, %v3822
      %v3921 = vadd.f32 %v3451, %v3827
      %v3922 = vadd.f32 %v3452, %v3830
      %v3923 = vadd.f32 %v3453, %v3835
      %v3924 = vadd.f32 %v3454, %v3838
      %v3925 = vadd.f32 %v3455, %v3843
      %v3926 = vadd.f32 %v3456, %v3846
      %v3927 = vadd.f32 %v3457, %v3851
      %v3928 = vadd.f32 %v3458, %v3854
      %v3929 = vadd.f32 %v3459, %v3859
      %v3930 = vadd.f32 %v3460, %v3862
      %v3931 = vadd.f32 %v3461, %v3867
      %v3932 = vadd.f32 %v3462, %v3870
      %v3933 = vadd.f32 %v3463, %v3875
      %v3934 = vadd.f32 %v3464, %v3878
      %v3935 = vld [vmem:[%s2994 + $0x2] sm:$0xff]
      %v3936 = vld [vmem:[%s2994 + $0xa] sm:$0xff]
      %v3937 = vld [vmem:[%s2994 + $0x12] sm:$0xff]
      %v3938 = vld [vmem:[%s2994 + $0x22] sm:$0xff]
      %v3939 = vld [vmem:[%s2994 + $0x2a] sm:$0xff]
      %v3940 = vld [vmem:[%s2994 + $0x32] sm:$0xff]
      %v3941 = vld [vmem:[%s2994 + $0x42] sm:$0xff]
      %v3942 = vld [vmem:[%s2994 + $0x4a] sm:$0xff]
      %v3943 = vld [vmem:[%s2994 + $0x52] sm:$0xff]
      %v3944 = vld [vmem:[%s2994 + $0x62] sm:$0xff]
      %v3945 = vld [vmem:[%s2994 + $0x6a] sm:$0xff]
      %v3946 = vld [vmem:[%s2994 + $0x72] sm:$0xff]
      %v3947 = vld [vmem:[%s2994 + $0x82] sm:$0xff]
      %v3948 = vld [vmem:[%s2994 + $0x8a] sm:$0xff]
      %v3949 = vld [vmem:[%s2994 + $0x92] sm:$0xff]
      %v3950 = vld [vmem:[%s2994 + $0xa2] sm:$0xff]
      %v3951 = vld [vmem:[%s2994 + $0xaa] sm:$0xff]
      %v3952 = vld [vmem:[%s2994 + $0xb2] sm:$0xff]
      %v3953 = vld [vmem:[%s2994 + $0xc2] sm:$0xff]
      %v3954 = vld [vmem:[%s2994 + $0xca] sm:$0xff]
      %v3955 = vld [vmem:[%s2994 + $0xd2] sm:$0xff]
      %v3956 = vld [vmem:[%s2994 + $0xe2] sm:$0xff]
      %v3957 = vld [vmem:[%s2994 + $0xea] sm:$0xff]
      %v3958 = vld [vmem:[%s2994 + $0xf2] sm:$0xff]
      %v3959 = vld [vmem:[%s2994 + $0x102] sm:$0xff]
      %v3960 = vld [vmem:[%s2994 + $0x10a] sm:$0xff]
      %v3961 = vld [vmem:[%s2994 + $0x112] sm:$0xff]
      %v3962 = vld [vmem:[%s2994 + $0x122] sm:$0xff]
      %v3963 = vld [vmem:[%s2994 + $0x12a] sm:$0xff]
      %v3964 = vld [vmem:[%s2994 + $0x132] sm:$0xff]
      %v3965 = vld [vmem:[%s2994 + $0x142] sm:$0xff]
      %v3966 = vld [vmem:[%s2994 + $0x14a] sm:$0xff]
      %v3967 = vld [vmem:[%s2994 + $0x152] sm:$0xff]
      %v3968 = vld [vmem:[%s2994 + $0x162] sm:$0xff]
      %v3969 = vld [vmem:[%s2994 + $0x16a] sm:$0xff]
      %v3970 = vld [vmem:[%s2994 + $0x172] sm:$0xff]
      %v3971 = vld [vmem:[%s2994 + $0x182] sm:$0xff]
      %v3972 = vld [vmem:[%s2994 + $0x18a] sm:$0xff]
      %v3973 = vld [vmem:[%s2994 + $0x192] sm:$0xff]
      %v3974 = vld [vmem:[%s2994 + $0x1a2] sm:$0xff]
      %v3975 = vld [vmem:[%s2994 + $0x1aa] sm:$0xff]
      %v3976 = vld [vmem:[%s2994 + $0x1b2] sm:$0xff]
      %v3977 = vld [vmem:[%s2994 + $0x1c2] sm:$0xff]
      %v3978 = vld [vmem:[%s2994 + $0x1ca] sm:$0xff]
      %v3979 = vld [vmem:[%s2994 + $0x1d2] sm:$0xff]
      %v3980 = vld [vmem:[%s2994 + $0x1e2] sm:$0xff]
      %v3981 = vld [vmem:[%s2994 + $0x1ea] sm:$0xff]
      %v3982 = vld [vmem:[%s2994 + $0x1f2] sm:$0xff]
      %v3983 = vld [vmem:[%s2994 + $0x202] sm:$0xff]
      %v3984 = vld [vmem:[%s2994 + $0x20a] sm:$0xff]
      %v3985 = vld [vmem:[%s2994 + $0x212] sm:$0xff]
      %v3986 = vld [vmem:[%s2994 + $0x222] sm:$0xff]
      %v3987 = vld [vmem:[%s2994 + $0x22a] sm:$0xff]
      %v3988 = vld [vmem:[%s2994 + $0x232] sm:$0xff]
      %v3989 = vpack.c.bf16 %v3936, %v3935
      %v3990 = vpack.c.bf16 %v3938, %v3937
      %v3991 = vpack.c.bf16 %v3940, %v3939
      %v3992 = vpack.c.bf16 %v3942, %v3941
      %v3993 = vpack.c.bf16 %v3944, %v3943
      %v3994 = vpack.c.bf16 %v3946, %v3945
      %v3995 = vpack.c.bf16 %v3948, %v3947
      %v3996 = vpack.c.bf16 %v3950, %v3949
      %v3997 = vpack.c.bf16 %v3952, %v3951
      %v3998 = vpack.c.bf16 %v3954, %v3953
      %v3999 = vpack.c.bf16 %v3956, %v3955
      %v4000 = vpack.c.bf16 %v3958, %v3957
      %v4001 = vpack.c.bf16 %v3960, %v3959
      %v4002 = vpack.c.bf16 %v3962, %v3961
      %v4003 = vpack.c.bf16 %v3964, %v3963
      %v4004 = vpack.c.bf16 %v3966, %v3965
      %v4005 = vpack.c.bf16 %v3968, %v3967
      %v4006 = vpack.c.bf16 %v3970, %v3969
      %v4007 = vpack.c.bf16 %v3972, %v3971
      %v4008 = vpack.c.bf16 %v3974, %v3973
      %v4009 = vpack.c.bf16 %v3976, %v3975
      %v4010 = vpack.c.bf16 %v3978, %v3977
      %v4011 = vpack.c.bf16 %v3980, %v3979
      %v4012 = vpack.c.bf16 %v3982, %v3981
      %v4013 = vpack.c.bf16 %v3984, %v3983
      %v4014 = vpack.c.bf16 %v3986, %v3985
      %v4015 = vpack.c.bf16 %v3988, %v3987
      %s4016 = scalar_lea.vmem %s1, 16
      %v4017 = vld [vmem:[%s4016] sm:$0x3]
      %v4019 = vsel %vm445, %v3989, 0
      %v4022 = vsel %vm445, %v3990, 0
      %v4025 = vsel %vm445, %v3991, 0
      %v4028 = vsel %vm445, %v3992, 0
      %v4031 = vsel %vm445, %v3993, 0
      %v4034 = vsel %vm445, %v3994, 0
      %v4037 = vsel %vm445, %v3995, 0
      %v4040 = vsel %vm445, %v3996, 0
      %v4043 = vsel %vm445, %v3997, 0
      %v4046 = vsel %vm445, %v3998, 0
      %v4049 = vsel %vm445, %v3999, 0
      %v4052 = vsel %vm445, %v4000, 0
      %v4055 = vsel %vm445, %v4001, 0
      %v4058 = vsel %vm445, %v4002, 0
      %v4061 = vsel %vm445, %v4003, 0
      %v4064 = vsel %vm445, %v4004, 0
      %v4067 = vsel %vm445, %v4005, 0
      %v4070 = vsel %vm445, %v4006, 0
      %v4073 = vsel %vm445, %v4007, 0
      %v4076 = vsel %vm445, %v4008, 0
      %v4079 = vsel %vm445, %v4009, 0
      %v4082 = vsel %vm445, %v4010, 0
      %v4085 = vsel %vm445, %v4011, 0
      %v4088 = vsel %vm445, %v4012, 0
      %v4091 = vsel %vm445, %v4013, 0
      %v4094 = vsel %vm445, %v4014, 0
      %v4097 = vsel %vm445, %v4015, 0
      %v4100 = vsel %vm527, %v4017, 0
      %4102 = vmatprep.subr.bf16.mxu0 0
      %4103 = vmatpush1.bf16.msra.mxu0 %v4100
      %4104 = vmatprep.subr.bf16.mxu0 0
      %4105 = vmatpush1.bf16.msra.mxu0 0
      %4106 = vmatprep.subr.bf16.mxu0 0
      %4107 = vmatpush1.bf16.msra.mxu0 0
      %4108 = vmatprep.subr.bf16.mxu0 0
      %4109 = vmatpush1.bf16.msra.mxu0 0
      %4110 = vmatprep.subr.bf16.mxu0 0
      %4111 = vmatpush1.bf16.msra.mxu0 0
      %4112 = vmatprep.subr.bf16.mxu0 0
      %4113 = vmatpush1.bf16.msra.mxu0 0
      %4114 = vmatprep.subr.bf16.mxu0 0
      %4115 = vmatpush1.bf16.msra.mxu0 0
      %4116 = vmatprep.subr.bf16.mxu0 0
      %4117 = vmatpush1.bf16.msra.mxu0 0
      %4118 = vmatprep.subr.bf16.mxu0 0
      %4119 = vmatpush1.bf16.msra.mxu0 0
      %4120 = vmatprep.subr.bf16.mxu0 0
      %4121 = vmatpush1.bf16.msra.mxu0 0
      %4122 = vmatprep.subr.bf16.mxu0 0
      %4123 = vmatpush1.bf16.msra.mxu0 0
      %4124 = vmatprep.subr.bf16.mxu0 0
      %4125 = vmatpush1.bf16.msra.mxu0 0
      %4126 = vmatprep.subr.bf16.mxu0 0
      %4127 = vmatpush1.bf16.msra.mxu0 0
      %4128 = vmatprep.subr.bf16.mxu0 0
      %4129 = vmatpush1.bf16.msra.mxu0 0
      %4130 = vmatprep.subr.bf16.mxu0 0
      %4131 = vmatpush1.bf16.msra.mxu0 0
      %4132 = vmatprep.subr.bf16.mxu0 0
      %4133 = vmatpush1.bf16.msra.mxu0 0
      %4134 = vmatprep.mubr.bf16.mxu0 0
      %4135 = vmatmul.mubr.bf16.gmra.mrb[0].mxu0 %v4019
      %v4136 = vpop.f32.mrb[0].mxu0
      %v4137 = vadd.f32 0.0, %v4136
      %v4138 = vpop.f32.mrb[0].mxu0
      %v4139 = vpop.f32.mrb[0].mxu0
      %v4140 = vadd.f32 0.0, %v4139
      %v4141 = vpop.f32.mrb[0].mxu0
      %4142 = vmatprep.mubr.bf16.mxu0 0
      %4143 = vmatmul.mubr.bf16.gmra.mrb[0].mxu0 %v4022
      %v4144 = vpop.f32.mrb[0].mxu0
      %v4145 = vadd.f32 0.0, %v4144
      %v4146 = vpop.f32.mrb[0].mxu0
      %v4147 = vpop.f32.mrb[0].mxu0
      %v4148 = vadd.f32 0.0, %v4147
      %v4149 = vpop.f32.mrb[0].mxu0
      %4150 = vmatprep.mubr.bf16.mxu0 0
      %4151 = vmatmul.mubr.bf16.gmra.mrb[0].mxu0 %v4025
      %v4152 = vpop.f32.mrb[0].mxu0
      %v4153 = vadd.f32 0.0, %v4152
      %v4154 = vpop.f32.mrb[0].mxu0
      %v4155 = vpop.f32.mrb[0].mxu0
      %v4156 = vadd.f32 0.0, %v4155
      %v4157 = vpop.f32.mrb[0].mxu0
      %4158 = vmatprep.mubr.bf16.mxu0 0
      %4159 = vmatmul.mubr.bf16.gmra.mrb[0].mxu0 %v4028
      %v4160 = vpop.f32.mrb[0].mxu0
      %v4161 = vadd.f32 0.0, %v4160
      %v4162 = vpop.f32.mrb[0].mxu0
      %v4163 = vpop.f32.mrb[0].mxu0
      %v4164 = vadd.f32 0.0, %v4163
      %v4165 = vpop.f32.mrb[0].mxu0
      %4166 = vmatprep.mubr.bf16.mxu0 0
      %4167 = vmatmul.mubr.bf16.gmra.mrb[0].mxu0 %v4031
      %v4168 = vpop.f32.mrb[0].mxu0
      %v4169 = vadd.f32 0.0, %v4168
      %v4170 = vpop.f32.mrb[0].mxu0
      %v4171 = vpop.f32.mrb[0].mxu0
      %v4172 = vadd.f32 0.0, %v4171
      %v4173 = vpop.f32.mrb[0].mxu0
      %4174 = vmatprep.mubr.bf16.mxu0 0
      %4175 = vmatmul.mubr.bf16.gmra.mrb[0].mxu0 %v4034
      %v4176 = vpop.f32.mrb[0].mxu0
      %v4177 = vadd.f32 0.0, %v4176
      %v4178 = vpop.f32.mrb[0].mxu0
      %v4179 = vpop.f32.mrb[0].mxu0
      %v4180 = vadd.f32 0.0, %v4179
      %v4181 = vpop.f32.mrb[0].mxu0
      %4182 = vmatprep.mubr.bf16.mxu0 0
      %4183 = vmatmul.mubr.bf16.gmra.mrb[0].mxu0 %v4037
      %v4184 = vpop.f32.mrb[0].mxu0
      %v4185 = vadd.f32 0.0, %v4184
      %v4186 = vpop.f32.mrb[0].mxu0
      %v4187 = vpop.f32.mrb[0].mxu0
      %v4188 = vadd.f32 0.0, %v4187
      %v4189 = vpop.f32.mrb[0].mxu0
      %4190 = vmatprep.mubr.bf16.mxu0 0
      %4191 = vmatmul.mubr.bf16.gmra.mrb[0].mxu0 %v4040
      %v4192 = vpop.f32.mrb[0].mxu0
      %v4193 = vadd.f32 0.0, %v4192
      %v4194 = vpop.f32.mrb[0].mxu0
      %v4195 = vpop.f32.mrb[0].mxu0
      %v4196 = vadd.f32 0.0, %v4195
      %v4197 = vpop.f32.mrb[0].mxu0
      %4198 = vmatprep.mubr.bf16.mxu0 0
      %4199 = vmatmul.mubr.bf16.gmra.mrb[0].mxu0 %v4043
      %v4200 = vpop.f32.mrb[0].mxu0
      %v4201 = vadd.f32 0.0, %v4200
      %v4202 = vpop.f32.mrb[0].mxu0
      %v4203 = vpop.f32.mrb[0].mxu0
      %v4204 = vadd.f32 0.0, %v4203
      %v4205 = vpop.f32.mrb[0].mxu0
      %4206 = vmatprep.mubr.bf16.mxu0 0
      %4207 = vmatmul.mubr.bf16.gmra.mrb[0].mxu0 %v4046
      %v4208 = vpop.f32.mrb[0].mxu0
      %v4209 = vadd.f32 0.0, %v4208
      %v4210 = vpop.f32.mrb[0].mxu0
      %v4211 = vpop.f32.mrb[0].mxu0
      %v4212 = vadd.f32 0.0, %v4211
      %v4213 = vpop.f32.mrb[0].mxu0
      %4214 = vmatprep.mubr.bf16.mxu0 0
      %4215 = vmatmul.mubr.bf16.gmra.mrb[0].mxu0 %v4049
      %v4216 = vpop.f32.mrb[0].mxu0
      %v4217 = vadd.f32 0.0, %v4216
      %v4218 = vpop.f32.mrb[0].mxu0
      %v4219 = vpop.f32.mrb[0].mxu0
      %v4220 = vadd.f32 0.0, %v4219
      %v4221 = vpop.f32.mrb[0].mxu0
      %4222 = vmatprep.mubr.bf16.mxu0 0
      %4223 = vmatmul.mubr.bf16.gmra.mrb[0].mxu0 %v4052
      %v4224 = vpop.f32.mrb[0].mxu0
      %v4225 = vadd.f32 0.0, %v4224
      %v4226 = vpop.f32.mrb[0].mxu0
      %v4227 = vpop.f32.mrb[0].mxu0
      %v4228 = vadd.f32 0.0, %v4227
      %v4229 = vpop.f32.mrb[0].mxu0
      %4230 = vmatprep.mubr.bf16.mxu0 0
      %4231 = vmatmul.mubr.bf16.gmra.mrb[0].mxu0 %v4055
      %v4232 = vpop.f32.mrb[0].mxu0
      %v4233 = vadd.f32 0.0, %v4232
      %v4234 = vpop.f32.mrb[0].mxu0
      %v4235 = vpop.f32.mrb[0].mxu0
      %v4236 = vadd.f32 0.0, %v4235
      %v4237 = vpop.f32.mrb[0].mxu0
      %4238 = vmatprep.mubr.bf16.mxu0 0
      %4239 = vmatmul.mubr.bf16.gmra.mrb[0].mxu0 %v4058
      %v4240 = vpop.f32.mrb[0].mxu0
      %v4241 = vadd.f32 0.0, %v4240
      %v4242 = vpop.f32.mrb[0].mxu0
      %v4243 = vpop.f32.mrb[0].mxu0
      %v4244 = vadd.f32 0.0, %v4243
      %v4245 = vpop.f32.mrb[0].mxu0
      %4246 = vmatprep.mubr.bf16.mxu0 0
      %4247 = vmatmul.mubr.bf16.gmra.mrb[0].mxu0 %v4061
      %v4248 = vpop.f32.mrb[0].mxu0
      %v4249 = vadd.f32 0.0, %v4248
      %v4250 = vpop.f32.mrb[0].mxu0
      %v4251 = vpop.f32.mrb[0].mxu0
      %v4252 = vadd.f32 0.0, %v4251
      %v4253 = vpop.f32.mrb[0].mxu0
      %4254 = vmatprep.mubr.bf16.mxu0 0
      %4255 = vmatmul.mubr.bf16.gmra.mrb[0].mxu0 %v4064
      %v4256 = vpop.f32.mrb[0].mxu0
      %v4257 = vadd.f32 0.0, %v4256
      %v4258 = vpop.f32.mrb[0].mxu0
      %v4259 = vpop.f32.mrb[0].mxu0
      %v4260 = vadd.f32 0.0, %v4259
      %v4261 = vpop.f32.mrb[0].mxu0
      %4262 = vmatprep.mubr.bf16.mxu0 0
      %4263 = vmatmul.mubr.bf16.gmra.mrb[0].mxu0 %v4067
      %v4264 = vpop.f32.mrb[0].mxu0
      %v4265 = vadd.f32 0.0, %v4264
      %v4266 = vpop.f32.mrb[0].mxu0
      %v4267 = vpop.f32.mrb[0].mxu0
      %v4268 = vadd.f32 0.0, %v4267
      %v4269 = vpop.f32.mrb[0].mxu0
      %4270 = vmatprep.mubr.bf16.mxu0 0
      %4271 = vmatmul.mubr.bf16.gmra.mrb[0].mxu0 %v4070
      %v4272 = vpop.f32.mrb[0].mxu0
      %v4273 = vadd.f32 0.0, %v4272
      %v4274 = vpop.f32.mrb[0].mxu0
      %v4275 = vpop.f32.mrb[0].mxu0
      %v4276 = vadd.f32 0.0, %v4275
      %v4277 = vpop.f32.mrb[0].mxu0
      %4278 = vmatprep.mubr.bf16.mxu0 0
      %4279 = vmatmul.mubr.bf16.gmra.mrb[0].mxu0 %v4073
      %v4280 = vpop.f32.mrb[0].mxu0
      %v4281 = vadd.f32 0.0, %v4280
      %v4282 = vpop.f32.mrb[0].mxu0
      %v4283 = vpop.f32.mrb[0].mxu0
      %v4284 = vadd.f32 0.0, %v4283
      %v4285 = vpop.f32.mrb[0].mxu0
      %4286 = vmatprep.mubr.bf16.mxu0 0
      %4287 = vmatmul.mubr.bf16.gmra.mrb[0].mxu0 %v4076
      %v4288 = vpop.f32.mrb[0].mxu0
      %v4289 = vadd.f32 0.0, %v4288
      %v4290 = vpop.f32.mrb[0].mxu0
      %v4291 = vpop.f32.mrb[0].mxu0
      %v4292 = vadd.f32 0.0, %v4291
      %v4293 = vpop.f32.mrb[0].mxu0
      %4294 = vmatprep.mubr.bf16.mxu0 0
      %4295 = vmatmul.mubr.bf16.gmra.mrb[0].mxu0 %v4079
      %v4296 = vpop.f32.mrb[0].mxu0
      %v4297 = vadd.f32 0.0, %v4296
      %v4298 = vpop.f32.mrb[0].mxu0
      %v4299 = vpop.f32.mrb[0].mxu0
      %v4300 = vadd.f32 0.0, %v4299
      %v4301 = vpop.f32.mrb[0].mxu0
      %4302 = vmatprep.mubr.bf16.mxu0 0
      %4303 = vmatmul.mubr.bf16.gmra.mrb[0].mxu0 %v4082
      %v4304 = vpop.f32.mrb[0].mxu0
      %v4305 = vadd.f32 0.0, %v4304
      %v4306 = vpop.f32.mrb[0].mxu0
      %v4307 = vpop.f32.mrb[0].mxu0
      %v4308 = vadd.f32 0.0, %v4307
      %v4309 = vpop.f32.mrb[0].mxu0
      %4310 = vmatprep.mubr.bf16.mxu0 0
      %4311 = vmatmul.mubr.bf16.gmra.mrb[0].mxu0 %v4085
      %v4312 = vpop.f32.mrb[0].mxu0
      %v4313 = vadd.f32 0.0, %v4312
      %v4314 = vpop.f32.mrb[0].mxu0
      %v4315 = vpop.f32.mrb[0].mxu0
      %v4316 = vadd.f32 0.0, %v4315
      %v4317 = vpop.f32.mrb[0].mxu0
      %4318 = vmatprep.mubr.bf16.mxu0 0
      %4319 = vmatmul.mubr.bf16.gmra.mrb[0].mxu0 %v4088
      %v4320 = vpop.f32.mrb[0].mxu0
      %v4321 = vadd.f32 0.0, %v4320
      %v4322 = vpop.f32.mrb[0].mxu0
      %v4323 = vpop.f32.mrb[0].mxu0
      %v4324 = vadd.f32 0.0, %v4323
      %v4325 = vpop.f32.mrb[0].mxu0
      %4326 = vmatprep.mubr.bf16.mxu0 0
      %4327 = vmatmul.mubr.bf16.gmra.mrb[0].mxu0 %v4091
      %v4328 = vpop.f32.mrb[0].mxu0
      %v4329 = vadd.f32 0.0, %v4328
      %v4330 = vpop.f32.mrb[0].mxu0
      %v4331 = vpop.f32.mrb[0].mxu0
      %v4332 = vadd.f32 0.0, %v4331
      %v4333 = vpop.f32.mrb[0].mxu0
      %4334 = vmatprep.mubr.bf16.mxu0 0
      %4335 = vmatmul.mubr.bf16.gmra.mrb[0].mxu0 %v4094
      %v4336 = vpop.f32.mrb[0].mxu0
      %v4337 = vadd.f32 0.0, %v4336
      %v4338 = vpop.f32.mrb[0].mxu0
      %v4339 = vpop.f32.mrb[0].mxu0
      %v4340 = vadd.f32 0.0, %v4339
      %v4341 = vpop.f32.mrb[0].mxu0
      %4342 = vmatprep.mubr.bf16.mxu0 0
      %4343 = vmatmul.mubr.bf16.gmra.mrb[0].mxu0 %v4097
      %v4344 = vpop.f32.mrb[0].mxu0
      %v4345 = vadd.f32 0.0, %v4344
      %v4346 = vpop.f32.mrb[0].mxu0
      %v4347 = vpop.f32.mrb[0].mxu0
      %v4348 = vadd.f32 0.0, %v4347
      %v4349 = vpop.f32.mrb[0].mxu0
      %4350 = vdwg.mxu0
      %v4351 = vadd.f32 %v3881, %v4137
      %v4352 = vadd.f32 %v3882, %v4140
      %v4353 = vadd.f32 %v3883, %v4145
      %v4354 = vadd.f32 %v3884, %v4148
      %v4355 = vadd.f32 %v3885, %v4153
      %v4356 = vadd.f32 %v3886, %v4156
      %v4357 = vadd.f32 %v3887, %v4161
      %v4358 = vadd.f32 %v3888, %v4164
      %v4359 = vadd.f32 %v3889, %v4169
      %v4360 = vadd.f32 %v3890, %v4172
      %v4361 = vadd.f32 %v3891, %v4177
      %v4362 = vadd.f32 %v3892, %v4180
      %v4363 = vadd.f32 %v3893, %v4185
      %v4364 = vadd.f32 %v3894, %v4188
      %v4365 = vadd.f32 %v3895, %v4193
      %v4366 = vadd.f32 %v3896, %v4196
      %v4367 = vadd.f32 %v3897, %v4201
      %v4368 = vadd.f32 %v3898, %v4204
      %v4369 = vadd.f32 %v3899, %v4209
      %v4370 = vadd.f32 %v3900, %v4212
      %v4371 = vadd.f32 %v3901, %v4217
      %v4372 = vadd.f32 %v3902, %v4220
      %v4373 = vadd.f32 %v3903, %v4225
      %v4374 = vadd.f32 %v3904, %v4228
      %v4375 = vadd.f32 %v3905, %v4233
      %v4376 = vadd.f32 %v3906, %v4236
      %v4377 = vadd.f32 %v3907, %v4241
      %v4378 = vadd.f32 %v3908, %v4244
      %v4379 = vadd.f32 %v3909, %v4249
      %v4380 = vadd.f32 %v3910, %v4252
      %v4381 = vadd.f32 %v3911, %v4257
      %v4382 = vadd.f32 %v3912, %v4260
      %v4383 = vadd.f32 %v3913, %v4265
      %v4384 = vadd.f32 %v3914, %v4268
      %v4385 = vadd.f32 %v3915, %v4273
      %v4386 = vadd.f32 %v3916, %v4276
      %v4387 = vadd.f32 %v3917, %v4281
      %v4388 = vadd.f32 %v3918, %v4284
      %v4389 = vadd.f32 %v3919, %v4289
      %v4390 = vadd.f32 %v3920, %v4292
      %v4391 = vadd.f32 %v3921, %v4297
      %v4392 = vadd.f32 %v3922, %v4300
      %v4393 = vadd.f32 %v3923, %v4305
      %v4394 = vadd.f32 %v3924, %v4308
      %v4395 = vadd.f32 %v3925, %v4313
      %v4396 = vadd.f32 %v3926, %v4316
      %v4397 = vadd.f32 %v3927, %v4321
      %v4398 = vadd.f32 %v3928, %v4324
      %v4399 = vadd.f32 %v3929, %v4329
      %v4400 = vadd.f32 %v3930, %v4332
      %v4401 = vadd.f32 %v3931, %v4337
      %v4402 = vadd.f32 %v3932, %v4340
      %v4403 = vadd.f32 %v3933, %v4345
      %v4404 = vadd.f32 %v3934, %v4348
      %v4405 = vld [vmem:[%s2] sm:$0x1]
      %v4407 = vlaneseq
      %v4408 = vshrl.u32 %v4407, 7
      %v4409 = vsub.s32 0, %v4408
      %v4410 = vrot.slane %v4405, %v4409
      %v4412 = vadd.f32 %v4351, %v4410
      %v4413 = vadd.f32 %v4352, %v4410
      %v4414 = vadd.f32 %v4353, %v4410
      %v4415 = vadd.f32 %v4354, %v4410
      %v4416 = vadd.f32 %v4355, %v4410
      %v4417 = vadd.f32 %v4356, %v4410
      %v4418 = vadd.f32 %v4357, %v4410
      %v4419 = vadd.f32 %v4358, %v4410
      %v4420 = vadd.f32 %v4359, %v4410
      %v4421 = vadd.f32 %v4360, %v4410
      %v4422 = vadd.f32 %v4361, %v4410
      %v4423 = vadd.f32 %v4362, %v4410
      %v4424 = vadd.f32 %v4363, %v4410
      %v4425 = vadd.f32 %v4364, %v4410
      %v4426 = vadd.f32 %v4365, %v4410
      %v4427 = vadd.f32 %v4366, %v4410
      %v4428 = vadd.f32 %v4367, %v4410
      %v4429 = vadd.f32 %v4368, %v4410
      %v4430 = vadd.f32 %v4369, %v4410
      %v4431 = vadd.f32 %v4370, %v4410
      %v4432 = vadd.f32 %v4371, %v4410
      %v4433 = vadd.f32 %v4372, %v4410
      %v4434 = vadd.f32 %v4373, %v4410
      %v4435 = vadd.f32 %v4374, %v4410
      %v4436 = vadd.f32 %v4375, %v4410
      %v4437 = vadd.f32 %v4376, %v4410
      %v4438 = vadd.f32 %v4377, %v4410
      %v4439 = vadd.f32 %v4378, %v4410
      %v4440 = vadd.f32 %v4379, %v4410
      %v4441 = vadd.f32 %v4380, %v4410
      %v4442 = vadd.f32 %v4381, %v4410
      %v4443 = vadd.f32 %v4382, %v4410
      %v4444 = vadd.f32 %v4383, %v4410
      %v4445 = vadd.f32 %v4384, %v4410
      %v4446 = vadd.f32 %v4385, %v4410
      %v4447 = vadd.f32 %v4386, %v4410
      %v4448 = vadd.f32 %v4387, %v4410
      %v4449 = vadd.f32 %v4388, %v4410
      %v4450 = vadd.f32 %v4389, %v4410
      %v4451 = vadd.f32 %v4390, %v4410
      %v4452 = vadd.f32 %v4391, %v4410
      %v4453 = vadd.f32 %v4392, %v4410
      %v4454 = vadd.f32 %v4393, %v4410
      %v4455 = vadd.f32 %v4394, %v4410
      %v4456 = vadd.f32 %v4395, %v4410
      %v4457 = vadd.f32 %v4396, %v4410
      %v4458 = vadd.f32 %v4397, %v4410
      %v4459 = vadd.f32 %v4398, %v4410
      %v4460 = vadd.f32 %v4399, %v4410
      %v4461 = vadd.f32 %v4400, %v4410
      %v4462 = vadd.f32 %v4401, %v4410
      %v4463 = vadd.f32 %v4402, %v4410
      %v4464 = vadd.f32 %v4403, %v4410
      %v4465 = vadd.f32 %v4404, %v4410
      %vm4466 = vcmp.gt.f32.partialorder %v4412, 0.0
      %vm4467 = vcmp.gt.f32.partialorder %v4413, 0.0
      %vm4468 = vcmp.gt.f32.partialorder %v4414, 0.0
      %vm4469 = vcmp.gt.f32.partialorder %v4415, 0.0
      %vm4470 = vcmp.gt.f32.partialorder %v4416, 0.0
      %vm4471 = vcmp.gt.f32.partialorder %v4417, 0.0
      %vm4472 = vcmp.gt.f32.partialorder %v4418, 0.0
      %vm4473 = vcmp.gt.f32.partialorder %v4419, 0.0
      %vm4474 = vcmp.gt.f32.partialorder %v4420, 0.0
      %vm4475 = vcmp.gt.f32.partialorder %v4421, 0.0
      %vm4476 = vcmp.gt.f32.partialorder %v4422, 0.0
      %vm4477 = vcmp.gt.f32.partialorder %v4423, 0.0
      %vm4478 = vcmp.gt.f32.partialorder %v4424, 0.0
      %vm4479 = vcmp.gt.f32.partialorder %v4425, 0.0
      %vm4480 = vcmp.gt.f32.partialorder %v4426, 0.0
      %vm4481 = vcmp.gt.f32.partialorder %v4427, 0.0
      %vm4482 = vcmp.gt.f32.partialorder %v4428, 0.0
      %vm4483 = vcmp.gt.f32.partialorder %v4429, 0.0
      %vm4484 = vcmp.gt.f32.partialorder %v4430, 0.0
      %vm4485 = vcmp.gt.f32.partialorder %v4431, 0.0
      %vm4486 = vcmp.gt.f32.partialorder %v4432, 0.0
      %vm4487 = vcmp.gt.f32.partialorder %v4433, 0.0
      %vm4488 = vcmp.gt.f32.partialorder %v4434, 0.0
      %vm4489 = vcmp.gt.f32.partialorder %v4435, 0.0
      %vm4490 = vcmp.gt.f32.partialorder %v4436, 0.0
      %vm4491 = vcmp.gt.f32.partialorder %v4437, 0.0
      %vm4492 = vcmp.gt.f32.partialorder %v4438, 0.0
      %vm4493 = vcmp.gt.f32.partialorder %v4439, 0.0
      %vm4494 = vcmp.gt.f32.partialorder %v4440, 0.0
      %vm4495 = vcmp.gt.f32.partialorder %v4441, 0.0
      %vm4496 = vcmp.gt.f32.partialorder %v4442, 0.0
      %vm4497 = vcmp.gt.f32.partialorder %v4443, 0.0
      %vm4498 = vcmp.gt.f32.partialorder %v4444, 0.0
      %vm4499 = vcmp.gt.f32.partialorder %v4445, 0.0
      %vm4500 = vcmp.gt.f32.partialorder %v4446, 0.0
      %vm4501 = vcmp.gt.f32.partialorder %v4447, 0.0
      %vm4502 = vcmp.gt.f32.partialorder %v4448, 0.0
      %vm4503 = vcmp.gt.f32.partialorder %v4449, 0.0
      %vm4504 = vcmp.gt.f32.partialorder %v4450, 0.0
      %vm4505 = vcmp.gt.f32.partialorder %v4451, 0.0
      %vm4506 = vcmp.gt.f32.partialorder %v4452, 0.0
      %vm4507 = vcmp.gt.f32.partialorder %v4453, 0.0
      %vm4508 = vcmp.gt.f32.partialorder %v4454, 0.0
      %vm4509 = vcmp.gt.f32.partialorder %v4455, 0.0
      %vm4510 = vcmp.gt.f32.partialorder %v4456, 0.0
      %vm4511 = vcmp.gt.f32.partialorder %v4457, 0.0
      %vm4512 = vcmp.gt.f32.partialorder %v4458, 0.0
      %vm4513 = vcmp.gt.f32.partialorder %v4459, 0.0
      %vm4514 = vcmp.gt.f32.partialorder %v4460, 0.0
      %vm4515 = vcmp.gt.f32.partialorder %v4461, 0.0
      %vm4516 = vcmp.gt.f32.partialorder %v4462, 0.0
      %vm4517 = vcmp.gt.f32.partialorder %v4463, 0.0
      %vm4518 = vcmp.gt.f32.partialorder %v4464, 0.0
      %vm4519 = vcmp.gt.f32.partialorder %v4465, 0.0
      %v4520 = vmul.f32 %v4412, 0.01
      %v4521 = vmul.f32 %v4413, 0.01
      %v4522 = vmul.f32 %v4414, 0.01
      %v4523 = vmul.f32 %v4415, 0.01
      %v4524 = vmul.f32 %v4416, 0.01
      %v4525 = vmul.f32 %v4417, 0.01
      %v4526 = vmul.f32 %v4418, 0.01
      %v4527 = vmul.f32 %v4419, 0.01
      %v4528 = vmul.f32 %v4420, 0.01
      %v4529 = vmul.f32 %v4421, 0.01
      %v4530 = vmul.f32 %v4422, 0.01
      %v4531 = vmul.f32 %v4423, 0.01
      %v4532 = vmul.f32 %v4424, 0.01
      %v4533 = vmul.f32 %v4425, 0.01
      %v4534 = vmul.f32 %v4426, 0.01
      %v4535 = vmul.f32 %v4427, 0.01
      %v4536 = vmul.f32 %v4428, 0.01
      %v4537 = vmul.f32 %v4429, 0.01
      %v4538 = vmul.f32 %v4430, 0.01
      %v4539 = vmul.f32 %v4431, 0.01
      %v4540 = vmul.f32 %v4432, 0.01
      %v4541 = vmul.f32 %v4433, 0.01
      %v4542 = vmul.f32 %v4434, 0.01
      %v4543 = vmul.f32 %v4435, 0.01
      %v4544 = vmul.f32 %v4436, 0.01
      %v4545 = vmul.f32 %v4437, 0.01
      %v4546 = vmul.f32 %v4438, 0.01
      %v4547 = vmul.f32 %v4439, 0.01
      %v4548 = vmul.f32 %v4440, 0.01
      %v4549 = vmul.f32 %v4441, 0.01
      %v4550 = vmul.f32 %v4442, 0.01
      %v4551 = vmul.f32 %v4443, 0.01
      %v4552 = vmul.f32 %v4444, 0.01
      %v4553 = vmul.f32 %v4445, 0.01
      %v4554 = vmul.f32 %v4446, 0.01
      %v4555 = vmul.f32 %v4447, 0.01
      %v4556 = vmul.f32 %v4448, 0.01
      %v4557 = vmul.f32 %v4449, 0.01
      %v4558 = vmul.f32 %v4450, 0.01
      %v4559 = vmul.f32 %v4451, 0.01
      %v4560 = vmul.f32 %v4452, 0.01
      %v4561 = vmul.f32 %v4453, 0.01
      %v4562 = vmul.f32 %v4454, 0.01
      %v4563 = vmul.f32 %v4455, 0.01
      %v4564 = vmul.f32 %v4456, 0.01
      %v4565 = vmul.f32 %v4457, 0.01
      %v4566 = vmul.f32 %v4458, 0.01
      %v4567 = vmul.f32 %v4459, 0.01
      %v4568 = vmul.f32 %v4460, 0.01
      %v4569 = vmul.f32 %v4461, 0.01
      %v4570 = vmul.f32 %v4462, 0.01
      %v4571 = vmul.f32 %v4463, 0.01
      %v4572 = vmul.f32 %v4464, 0.01
      %v4573 = vmul.f32 %v4465, 0.01
      %v4574 = vsel %vm4466, %v4412, %v4520
      %v4575 = vsel %vm4467, %v4413, %v4521
      %v4576 = vsel %vm4468, %v4414, %v4522
      %v4577 = vsel %vm4469, %v4415, %v4523
      %v4578 = vsel %vm4470, %v4416, %v4524
      %v4579 = vsel %vm4471, %v4417, %v4525
      %v4580 = vsel %vm4472, %v4418, %v4526
      %v4581 = vsel %vm4473, %v4419, %v4527
      %v4582 = vsel %vm4474, %v4420, %v4528
      %v4583 = vsel %vm4475, %v4421, %v4529
      %v4584 = vsel %vm4476, %v4422, %v4530
      %v4585 = vsel %vm4477, %v4423, %v4531
      %v4586 = vsel %vm4478, %v4424, %v4532
      %v4587 = vsel %vm4479, %v4425, %v4533
      %v4588 = vsel %vm4480, %v4426, %v4534
      %v4589 = vsel %vm4481, %v4427, %v4535
      %v4590 = vsel %vm4482, %v4428, %v4536
      %v4591 = vsel %vm4483, %v4429, %v4537
      %v4592 = vsel %vm4484, %v4430, %v4538
      %v4593 = vsel %vm4485, %v4431, %v4539
      %v4594 = vsel %vm4486, %v4432, %v4540
      %v4595 = vsel %vm4487, %v4433, %v4541
      %v4596 = vsel %vm4488, %v4434, %v4542
      %v4597 = vsel %vm4489, %v4435, %v4543
      %v4598 = vsel %vm4490, %v4436, %v4544
      %v4599 = vsel %vm4491, %v4437, %v4545
      %v4600 = vsel %vm4492, %v4438, %v4546
      %v4601 = vsel %vm4493, %v4439, %v4547
      %v4602 = vsel %vm4494, %v4440, %v4548
      %v4603 = vsel %vm4495, %v4441, %v4549
      %v4604 = vsel %vm4496, %v4442, %v4550
      %v4605 = vsel %vm4497, %v4443, %v4551
      %v4606 = vsel %vm4498, %v4444, %v4552
      %v4607 = vsel %vm4499, %v4445, %v4553
      %v4608 = vsel %vm4500, %v4446, %v4554
      %v4609 = vsel %vm4501, %v4447, %v4555
      %v4610 = vsel %vm4502, %v4448, %v4556
      %v4611 = vsel %vm4503, %v4449, %v4557
      %v4612 = vsel %vm4504, %v4450, %v4558
      %v4613 = vsel %vm4505, %v4451, %v4559
      %v4614 = vsel %vm4506, %v4452, %v4560
      %v4615 = vsel %vm4507, %v4453, %v4561
      %v4616 = vsel %vm4508, %v4454, %v4562
      %v4617 = vsel %vm4509, %v4455, %v4563
      %v4618 = vsel %vm4510, %v4456, %v4564
      %v4619 = vsel %vm4511, %v4457, %v4565
      %v4620 = vsel %vm4512, %v4458, %v4566
      %v4621 = vsel %vm4513, %v4459, %v4567
      %v4622 = vsel %vm4514, %v4460, %v4568
      %v4623 = vsel %vm4515, %v4461, %v4569
      %v4624 = vsel %vm4516, %v4462, %v4570
      %v4625 = vsel %vm4517, %v4463, %v4571
      %v4626 = vsel %vm4518, %v4464, %v4572
      %v4627 = vsel %vm4519, %v4465, %v4573
      %v4628 = vlaneseq
      %v4629 = vshrl.u32 %v4628, 7
      %v4630 = vadd.s32 %v4629, 8
      %v4631 = vadd.s32 %v4629, 16
      %vm4632 = vcmp.ge.s32.totalorder %v4629, 1
      %vm4633 = vcmp.ge.s32.totalorder %v4630, 1
      %vm4634 = vcmp.ge.s32.totalorder %v4631, 1
      %v4635 = vsel %vm4632, 1, 0
      %v4636 = vsel %vm4633, 1, 0
      %v4637 = vsel %vm4634, 1, 0
      %vm4638 = vcmp.eq.s32.totalorder %v4635, 1
      %vm4639 = vcmp.eq.s32.totalorder %v4636, 1
      %vm4640 = vcmp.eq.s32.totalorder %v4637, 1
      %vm4641 = vmand 0, %vm4638
      %vm4642 = vmand 0, %vm4639
      %vm4643 = vmand 0, %vm4640
      %vm4644 = vmand 1, %vm4638
      %vm4645 = vmand 1, %vm4639
      %vm4646 = vmand 1, %vm4640
      %vm4647 = vcmp.le.s32.totalorder %v4629, 16
      %vm4648 = vcmp.le.s32.totalorder %v4630, 16
      %vm4649 = vcmp.le.s32.totalorder %v4631, 16
      %v4650 = vsel %vm4647, 1, 0
      %v4651 = vsel %vm4648, 1, 0
      %v4652 = vsel %vm4649, 1, 0
      %vm4653 = vcmp.eq.s32.totalorder %v4650, 1
      %vm4654 = vcmp.eq.s32.totalorder %v4651, 1
      %vm4655 = vcmp.eq.s32.totalorder %v4652, 1
      %vm4656 = vmand %vm4641, %vm4653
      %vm4657 = vmand %vm4642, %vm4654
      %vm4658 = vmand %vm4643, %vm4655
      %vm4659 = vmand %vm4644, %vm4653
      %vm4660 = vmand %vm4645, %vm4654
      %vm4661 = vmand %vm4646, %vm4655
      %v4662 = vsel %vm4656, 1, 0
      %v4663 = vsel %vm4657, 1, 0
      %v4664 = vsel %vm4658, 1, 0
      %v4665 = vsel %vm4659, 1, 0
      %v4666 = vsel %vm4660, 1, 0
      %v4667 = vsel %vm4661, 1, 0
      %vm4668 = vcmp.eq.s32.totalorder %v4662, 1
      %vm4669 = vcmp.eq.s32.totalorder %v4663, 1
      %vm4670 = vcmp.eq.s32.totalorder %v4664, 1
      %vm4671 = vcmp.eq.s32.totalorder %v4665, 1
      %vm4672 = vcmp.eq.s32.totalorder %v4666, 1
      %vm4673 = vcmp.eq.s32.totalorder %v4667, 1
      %v4674 = vsel %vm4668, %v4574, 0.0
      %v4675 = vsel %vm4669, %v4575, 0.0
      %v4676 = vsel %vm4670, %v4576, 0.0
      %v4677 = vsel %vm4671, %v4577, 0.0
      %v4678 = vsel %vm4672, %v4578, 0.0
      %v4679 = vsel %vm4673, %v4579, 0.0
      %v4680 = vsel %vm4671, %v4580, 0.0
      %v4681 = vsel %vm4672, %v4581, 0.0
      %v4682 = vsel %vm4673, %v4582, 0.0
      %v4683 = vsel %vm4671, %v4583, 0.0
      %v4684 = vsel %vm4672, %v4584, 0.0
      %v4685 = vsel %vm4673, %v4585, 0.0
      %v4686 = vsel %vm4671, %v4586, 0.0
      %v4687 = vsel %vm4672, %v4587, 0.0
      %v4688 = vsel %vm4673, %v4588, 0.0
      %v4689 = vsel %vm4671, %v4589, 0.0
      %v4690 = vsel %vm4672, %v4590, 0.0
      %v4691 = vsel %vm4673, %v4591, 0.0
      %v4692 = vsel %vm4671, %v4592, 0.0
      %v4693 = vsel %vm4672, %v4593, 0.0
      %v4694 = vsel %vm4673, %v4594, 0.0
      %v4695 = vsel %vm4671, %v4595, 0.0
      %v4696 = vsel %vm4672, %v4596, 0.0
      %v4697 = vsel %vm4673, %v4597, 0.0
      %v4698 = vsel %vm4671, %v4598, 0.0
      %v4699 = vsel %vm4672, %v4599, 0.0
      %v4700 = vsel %vm4673, %v4600, 0.0
      %v4701 = vsel %vm4671, %v4601, 0.0
      %v4702 = vsel %vm4672, %v4602, 0.0
      %v4703 = vsel %vm4673, %v4603, 0.0
      %v4704 = vsel %vm4671, %v4604, 0.0
      %v4705 = vsel %vm4672, %v4605, 0.0
      %v4706 = vsel %vm4673, %v4606, 0.0
      %v4707 = vsel %vm4671, %v4607, 0.0
      %v4708 = vsel %vm4672, %v4608, 0.0
      %v4709 = vsel %vm4673, %v4609, 0.0
      %v4710 = vsel %vm4671, %v4610, 0.0
      %v4711 = vsel %vm4672, %v4611, 0.0
      %v4712 = vsel %vm4673, %v4612, 0.0
      %v4713 = vsel %vm4671, %v4613, 0.0
      %v4714 = vsel %vm4672, %v4614, 0.0
      %v4715 = vsel %vm4673, %v4615, 0.0
      %v4716 = vsel %vm4671, %v4616, 0.0
      %v4717 = vsel %vm4672, %v4617, 0.0
      %v4718 = vsel %vm4673, %v4618, 0.0
      %v4719 = vsel %vm4671, %v4619, 0.0
      %v4720 = vsel %vm4672, %v4620, 0.0
      %v4721 = vsel %vm4673, %v4621, 0.0
      %v4722 = vsel %vm4671, %v4622, 0.0
      %v4723 = vsel %vm4672, %v4623, 0.0
      %v4724 = vsel %vm4673, %v4624, 0.0
      %v4725 = vsel %vm4668, %v4625, 0.0
      %v4726 = vsel %vm4669, %v4626, 0.0
      %v4727 = vsel %vm4670, %v4627, 0.0
      %v4728 = vpack.c.bf16 %v4675, %v4674
      %v4729 = vpack.c.bf16 %v4676, %v4676
      %v4730 = vpack.c.bf16 %v4678, %v4677
      %v4731 = vpack.c.bf16 %v4679, %v4679
      %v4732 = vpack.c.bf16 %v4681, %v4680
      %v4733 = vpack.c.bf16 %v4682, %v4682
      %v4734 = vpack.c.bf16 %v4684, %v4683
      %v4735 = vpack.c.bf16 %v4685, %v4685
      %v4736 = vpack.c.bf16 %v4687, %v4686
      %v4737 = vpack.c.bf16 %v4688, %v4688
      %v4738 = vpack.c.bf16 %v4690, %v4689
      %v4739 = vpack.c.bf16 %v4691, %v4691
      %v4740 = vpack.c.bf16 %v4693, %v4692
      %v4741 = vpack.c.bf16 %v4694, %v4694
      %v4742 = vpack.c.bf16 %v4696, %v4695
      %v4743 = vpack.c.bf16 %v4697, %v4697
      %v4744 = vpack.c.bf16 %v4699, %v4698
      %v4745 = vpack.c.bf16 %v4700, %v4700
      %v4746 = vpack.c.bf16 %v4702, %v4701
      %v4747 = vpack.c.bf16 %v4703, %v4703
      %v4748 = vpack.c.bf16 %v4705, %v4704
      %v4749 = vpack.c.bf16 %v4706, %v4706
      %v4750 = vpack.c.bf16 %v4708, %v4707
      %v4751 = vpack.c.bf16 %v4709, %v4709
      %v4752 = vpack.c.bf16 %v4711, %v4710
      %v4753 = vpack.c.bf16 %v4712, %v4712
      %v4754 = vpack.c.bf16 %v4714, %v4713
      %v4755 = vpack.c.bf16 %v4715, %v4715
      %v4756 = vpack.c.bf16 %v4717, %v4716
      %v4757 = vpack.c.bf16 %v4718, %v4718
      %v4758 = vpack.c.bf16 %v4720, %v4719
      %v4759 = vpack.c.bf16 %v4721, %v4721
      %v4760 = vpack.c.bf16 %v4723, %v4722
      %v4761 = vpack.c.bf16 %v4724, %v4724
      %v4762 = vpack.c.bf16 %v4726, %v4725
      %v4763 = vpack.c.bf16 %v4727, %v4727
      %v4800 = vunpack.c.l.b16 %v4728
      %v4801 = vunpack.c.h.b16 %v4728
      %v4802 = vunpack.c.l.b16 %v4729
      %v4803 = vunpack.c.l.b16 %v4730
      %v4804 = vunpack.c.h.b16 %v4730
      %v4805 = vunpack.c.l.b16 %v4731
      %v4806 = vunpack.c.l.b16 %v4732
      %v4807 = vunpack.c.h.b16 %v4732
      %v4808 = vunpack.c.l.b16 %v4733
      %v4809 = vunpack.c.l.b16 %v4734
      %v4810 = vunpack.c.h.b16 %v4734
      %v4811 = vunpack.c.l.b16 %v4735
      %v4812 = vunpack.c.l.b16 %v4736
      %v4813 = vunpack.c.h.b16 %v4736
      %v4814 = vunpack.c.l.b16 %v4737
      %v4815 = vunpack.c.l.b16 %v4738
      %v4816 = vunpack.c.h.b16 %v4738
      %v4817 = vunpack.c.l.b16 %v4739
      %v4818 = vunpack.c.l.b16 %v4740
      %v4819 = vunpack.c.h.b16 %v4740
      %v4820 = vunpack.c.l.b16 %v4741
      %v4821 = vunpack.c.l.b16 %v4742
      %v4822 = vunpack.c.h.b16 %v4742
      %v4823 = vunpack.c.l.b16 %v4743
      %v4824 = vunpack.c.l.b16 %v4744
      %v4825 = vunpack.c.h.b16 %v4744
      %v4826 = vunpack.c.l.b16 %v4745
      %v4827 = vunpack.c.l.b16 %v4746
      %v4828 = vunpack.c.h.b16 %v4746
      %v4829 = vunpack.c.l.b16 %v4747
      %v4830 = vunpack.c.l.b16 %v4748
      %v4831 = vunpack.c.h.b16 %v4748
      %v4832 = vunpack.c.l.b16 %v4749
      %v4833 = vunpack.c.l.b16 %v4750
      %v4834 = vunpack.c.h.b16 %v4750
      %v4835 = vunpack.c.l.b16 %v4751
      %v4836 = vunpack.c.l.b16 %v4752
      %v4837 = vunpack.c.h.b16 %v4752
      %v4838 = vunpack.c.l.b16 %v4753
      %v4839 = vunpack.c.l.b16 %v4754
      %v4840 = vunpack.c.h.b16 %v4754
      %v4841 = vunpack.c.l.b16 %v4755
      %v4842 = vunpack.c.l.b16 %v4756
      %v4843 = vunpack.c.h.b16 %v4756
      %v4844 = vunpack.c.l.b16 %v4757
      %v4845 = vunpack.c.l.b16 %v4758
      %v4846 = vunpack.c.h.b16 %v4758
      %v4847 = vunpack.c.l.b16 %v4759
      %v4848 = vunpack.c.l.b16 %v4760
      %v4849 = vunpack.c.h.b16 %v4760
      %v4850 = vunpack.c.l.b16 %v4761
      %v4851 = vunpack.c.l.b16 %v4762
      %v4852 = vunpack.c.h.b16 %v4762
      %v4853 = vunpack.c.l.b16 %v4763
      %v4854 = vpack.c.b16 %v4800, %v4800
      %v4855 = vpack.c.b16 %v4801, %v4801
      %v4856 = vpack.c.b16 %v4802, %v4802
      %v4857 = vpack.c.b16 %v4803, %v4803
      %v4858 = vpack.c.b16 %v4804, %v4804
      %v4859 = vpack.c.b16 %v4805, %v4805
      %v4860 = vpack.c.b16 %v4806, %v4806
      %v4861 = vpack.c.b16 %v4807, %v4807
      %v4862 = vpack.c.b16 %v4808, %v4808
      %v4863 = vpack.c.b16 %v4809, %v4809
      %v4864 = vpack.c.b16 %v4810, %v4810
      %v4865 = vpack.c.b16 %v4811, %v4811
      %v4866 = vpack.c.b16 %v4812, %v4812
      %v4867 = vpack.c.b16 %v4813, %v4813
      %v4868 = vpack.c.b16 %v4814, %v4814
      %v4869 = vpack.c.b16 %v4815, %v4815
      %v4870 = vpack.c.b16 %v4816, %v4816
      %v4871 = vpack.c.b16 %v4817, %v4817
      %v4872 = vpack.c.b16 %v4818, %v4818
      %v4873 = vpack.c.b16 %v4819, %v4819
      %v4874 = vpack.c.b16 %v4820, %v4820
      %v4875 = vpack.c.b16 %v4821, %v4821
      %v4876 = vpack.c.b16 %v4822, %v4822
      %v4877 = vpack.c.b16 %v4823, %v4823
      %v4878 = vpack.c.b16 %v4824, %v4824
      %v4879 = vpack.c.b16 %v4825, %v4825
      %v4880 = vpack.c.b16 %v4826, %v4826
      %v4881 = vpack.c.b16 %v4827, %v4827
      %v4882 = vpack.c.b16 %v4828, %v4828
      %v4883 = vpack.c.b16 %v4829, %v4829
      %v4884 = vpack.c.b16 %v4830, %v4830
      %v4885 = vpack.c.b16 %v4831, %v4831
      %v4886 = vpack.c.b16 %v4832, %v4832
      %v4887 = vpack.c.b16 %v4833, %v4833
      %v4888 = vpack.c.b16 %v4834, %v4834
      %v4889 = vpack.c.b16 %v4835, %v4835
      %v4890 = vpack.c.b16 %v4836, %v4836
      %v4891 = vpack.c.b16 %v4837, %v4837
      %v4892 = vpack.c.b16 %v4838, %v4838
      %v4893 = vpack.c.b16 %v4839, %v4839
      %v4894 = vpack.c.b16 %v4840, %v4840
      %v4895 = vpack.c.b16 %v4841, %v4841
      %v4896 = vpack.c.b16 %v4842, %v4842
      %v4897 = vpack.c.b16 %v4843, %v4843
      %v4898 = vpack.c.b16 %v4844, %v4844
      %v4899 = vpack.c.b16 %v4845, %v4845
      %v4900 = vpack.c.b16 %v4846, %v4846
      %v4901 = vpack.c.b16 %v4847, %v4847
      %v4902 = vpack.c.b16 %v4848, %v4848
      %v4903 = vpack.c.b16 %v4849, %v4849
      %v4904 = vpack.c.b16 %v4850, %v4850
      %v4905 = vpack.c.b16 %v4851, %v4851
      %v4906 = vpack.c.b16 %v4852, %v4852
      %v4907 = vpack.c.b16 %v4853, %v4853
      %vm4962 = vcmask 60416
      %4963 = vst.msk [vmem:[#allocation2] sm:$0xf] %vm4962, %v4854
      %4964 = vst.msk [vmem:[#allocation2 + $0x4] sm:$0xf] %vm4962, %v4855
      %4965 = vst.msk [vmem:[#allocation2 + $0x8] sm:$0xf] %vm4962, %v4856
      %4966 = vst.msk [vmem:[#allocation2 + $0xc] sm:$0xf] %vm4962, %v4857
      %4967 = vst.msk [vmem:[#allocation2 + $0x10] sm:$0xf] %vm4962, %v4858
      %4968 = vst.msk [vmem:[#allocation2 + $0x14] sm:$0xf] %vm4962, %v4859
      %4969 = vst.msk [vmem:[#allocation2 + $0x18] sm:$0xf] %vm4962, %v4860
      %4970 = vst.msk [vmem:[#allocation2 + $0x1c] sm:$0xf] %vm4962, %v4861
      %4971 = vst.msk [vmem:[#allocation2 + $0x20] sm:$0xf] %vm4962, %v4862
      %4972 = vst.msk [vmem:[#allocation2 + $0x24] sm:$0xf] %vm4962, %v4863
      %4973 = vst.msk [vmem:[#allocation2 + $0x28] sm:$0xf] %vm4962, %v4864
      %4974 = vst.msk [vmem:[#allocation2 + $0x2c] sm:$0xf] %vm4962, %v4865
      %4975 = vst.msk [vmem:[#allocation2 + $0x30] sm:$0xf] %vm4962, %v4866
      %4976 = vst.msk [vmem:[#allocation2 + $0x34] sm:$0xf] %vm4962, %v4867
      %4977 = vst.msk [vmem:[#allocation2 + $0x38] sm:$0xf] %vm4962, %v4868
      %4978 = vst.msk [vmem:[#allocation2 + $0x3c] sm:$0xf] %vm4962, %v4869
      %4979 = vst.msk [vmem:[#allocation2 + $0x40] sm:$0xf] %vm4962, %v4870
      %4980 = vst.msk [vmem:[#allocation2 + $0x44] sm:$0xf] %vm4962, %v4871
      %4981 = vst.msk [vmem:[#allocation2 + $0x48] sm:$0xf] %vm4962, %v4872
      %4982 = vst.msk [vmem:[#allocation2 + $0x4c] sm:$0xf] %vm4962, %v4873
      %4983 = vst.msk [vmem:[#allocation2 + $0x50] sm:$0xf] %vm4962, %v4874
      %4984 = vst.msk [vmem:[#allocation2 + $0x54] sm:$0xf] %vm4962, %v4875
      %4985 = vst.msk [vmem:[#allocation2 + $0x58] sm:$0xf] %vm4962, %v4876
      %4986 = vst.msk [vmem:[#allocation2 + $0x5c] sm:$0xf] %vm4962, %v4877
      %4987 = vst.msk [vmem:[#allocation2 + $0x60] sm:$0xf] %vm4962, %v4878
      %4988 = vst.msk [vmem:[#allocation2 + $0x64] sm:$0xf] %vm4962, %v4879
      %4989 = vst.msk [vmem:[#allocation2 + $0x68] sm:$0xf] %vm4962, %v4880
      %4990 = vst.msk [vmem:[#allocation2 + $0x6c] sm:$0xf] %vm4962, %v4881
      %4991 = vst.msk [vmem:[#allocation2 + $0x70] sm:$0xf] %vm4962, %v4882
      %4992 = vst.msk [vmem:[#allocation2 + $0x74] sm:$0xf] %vm4962, %v4883
      %4993 = vst.msk [vmem:[#allocation2 + $0x78] sm:$0xf] %vm4962, %v4884
      %4994 = vst.msk [vmem:[#allocation2 + $0x7c] sm:$0xf] %vm4962, %v4885
      %4995 = vst.msk [vmem:[#allocation2 + $0x80] sm:$0xf] %vm4962, %v4886
      %4996 = vst.msk [vmem:[#allocation2 + $0x84] sm:$0xf] %vm4962, %v4887
      %4997 = vst.msk [vmem:[#allocation2 + $0x88] sm:$0xf] %vm4962, %v4888
      %4998 = vst.msk [vmem:[#allocation2 + $0x8c] sm:$0xf] %vm4962, %v4889
      %4999 = vst.msk [vmem:[#allocation2 + $0x90] sm:$0xf] %vm4962, %v4890
      %5000 = vst.msk [vmem:[#allocation2 + $0x94] sm:$0xf] %vm4962, %v4891
      %5001 = vst.msk [vmem:[#allocation2 + $0x98] sm:$0xf] %vm4962, %v4892
      %5002 = vst.msk [vmem:[#allocation2 + $0x9c] sm:$0xf] %vm4962, %v4893
      %5003 = vst.msk [vmem:[#allocation2 + $0xa0] sm:$0xf] %vm4962, %v4894
      %5004 = vst.msk [vmem:[#allocation2 + $0xa4] sm:$0xf] %vm4962, %v4895
      %5005 = vst.msk [vmem:[#allocation2 + $0xa8] sm:$0xf] %vm4962, %v4896
      %5006 = vst.msk [vmem:[#allocation2 + $0xac] sm:$0xf] %vm4962, %v4897
      %5007 = vst.msk [vmem:[#allocation2 + $0xb0] sm:$0xf] %vm4962, %v4898
      %5008 = vst.msk [vmem:[#allocation2 + $0xb4] sm:$0xf] %vm4962, %v4899
      %5009 = vst.msk [vmem:[#allocation2 + $0xb8] sm:$0xf] %vm4962, %v4900
      %5010 = vst.msk [vmem:[#allocation2 + $0xbc] sm:$0xf] %vm4962, %v4901
      %5011 = vst.msk [vmem:[#allocation2 + $0xc0] sm:$0xf] %vm4962, %v4902
      %5012 = vst.msk [vmem:[#allocation2 + $0xc4] sm:$0xf] %vm4962, %v4903
      %5013 = vst.msk [vmem:[#allocation2 + $0xc8] sm:$0xf] %vm4962, %v4904
      %5014 = vst.msk [vmem:[#allocation2 + $0xcc] sm:$0xf] %vm4962, %v4905
      %5015 = vst.msk [vmem:[#allocation2 + $0xd0] sm:$0xf] %vm4962, %v4906
      %5016 = vst.msk [vmem:[#allocation2 + $0xd4] sm:$0xf] %vm4962, %v4907
      %v5017 = vld [vmem:[#allocation2] sm:$0xf]
      %v5018 = vld [vmem:[#allocation2 + $0x4] sm:$0xf]
      %v5019 = vld [vmem:[#allocation2 + $0xc] sm:$0xf]
      %v5020 = vld [vmem:[#allocation2 + $0x10] sm:$0xf]
      %v5021 = vld [vmem:[#allocation2 + $0x18] sm:$0xf]
      %v5022 = vld [vmem:[#allocation2 + $0x1c] sm:$0xf]
      %v5023 = vld [vmem:[#allocation2 + $0x24] sm:$0xf]
      %v5024 = vld [vmem:[#allocation2 + $0x28] sm:$0xf]
      %v5025 = vld [vmem:[#allocation2 + $0x30] sm:$0xf]
      %v5026 = vld [vmem:[#allocation2 + $0x34] sm:$0xf]
      %v5027 = vld [vmem:[#allocation2 + $0x3c] sm:$0xf]
      %v5028 = vld [vmem:[#allocation2 + $0x40] sm:$0xf]
      %v5029 = vld [vmem:[#allocation2 + $0x48] sm:$0xf]
      %v5030 = vld [vmem:[#allocation2 + $0x4c] sm:$0xf]
      %v5031 = vld [vmem:[#allocation2 + $0x54] sm:$0xf]
      %v5032 = vld [vmem:[#allocation2 + $0x58] sm:$0xf]
      %v5033 = vld [vmem:[#allocation2 + $0x60] sm:$0xf]
      %v5034 = vld [vmem:[#allocation2 + $0x64] sm:$0xf]
      %v5035 = vld [vmem:[#allocation2 + $0x6c] sm:$0xf]
      %v5036 = vld [vmem:[#allocation2 + $0x70] sm:$0xf]
      %v5037 = vld [vmem:[#allocation2 + $0x78] sm:$0xf]
      %v5038 = vld [vmem:[#allocation2 + $0x7c] sm:$0xf]
      %v5039 = vld [vmem:[#allocation2 + $0x84] sm:$0xf]
      %v5040 = vld [vmem:[#allocation2 + $0x88] sm:$0xf]
      %v5041 = vld [vmem:[#allocation2 + $0x90] sm:$0xf]
      %v5042 = vld [vmem:[#allocation2 + $0x94] sm:$0xf]
      %v5043 = vld [vmem:[#allocation2 + $0x9c] sm:$0xf]
      %v5044 = vld [vmem:[#allocation2 + $0xa0] sm:$0xf]
      %v5045 = vld [vmem:[#allocation2 + $0xa8] sm:$0xf]
      %v5046 = vld [vmem:[#allocation2 + $0xac] sm:$0xf]
      %v5047 = vld [vmem:[#allocation2 + $0xb4] sm:$0xf]
      %v5048 = vld [vmem:[#allocation2 + $0xb8] sm:$0xf]
      %v5049 = vld [vmem:[%s3] sm:$0xf]
      %v5050 = vld [vmem:[#allocation2 + $0x8] sm:$0x1]
      %v5051 = vld [vmem:[#allocation2 + $0x14] sm:$0x1]
      %v5052 = vld [vmem:[#allocation2 + $0x20] sm:$0x1]
      %v5053 = vld [vmem:[#allocation2 + $0x2c] sm:$0x1]
      %v5054 = vld [vmem:[#allocation2 + $0x38] sm:$0x1]
      %v5055 = vld [vmem:[#allocation2 + $0x44] sm:$0x1]
      %v5056 = vld [vmem:[#allocation2 + $0x50] sm:$0x1]
      %v5057 = vld [vmem:[#allocation2 + $0x5c] sm:$0x1]
      %v5058 = vld [vmem:[#allocation2 + $0x68] sm:$0x1]
      %v5059 = vld [vmem:[#allocation2 + $0x74] sm:$0x1]
      %v5060 = vld [vmem:[#allocation2 + $0x80] sm:$0x1]
      %v5061 = vld [vmem:[#allocation2 + $0x8c] sm:$0x1]
      %v5062 = vld [vmem:[#allocation2 + $0x98] sm:$0x1]
      %v5063 = vld [vmem:[#allocation2 + $0xa4] sm:$0x1]
      %v5064 = vld [vmem:[#allocation2 + $0xb0] sm:$0x1]
      %v5065 = vld [vmem:[#allocation2 + $0xbc] sm:$0x1]
      %vm5066 = vsmask.f32 3328
      %vm5067 = vsmask.f32 7440
      %vm5068 = vmor %vm5066, %vm5067
      %v5070 = vshrl.u32 %v5017, 16
      %v5072 = vrot.slane %v5070, 4
      %v5073 = vshll.u32 %v5017, 16
      %v5075 = vrot.slane %v5073, 5
      %v5076 = vor.u32 %v5072, %v5075
      %v5077 = vrot.slane %v5076, 4
      %v5079 = vshll.u32 %v5018, 16
      %v5081 = vrot.slane %v5079, 5
      %v5082 = vsel %vm5068, %v5077, %v5081
      %v5083 = vshrl.u32 %v5018, 16
      %v5085 = vrot.slane %v5083, 4
      %v5086 = vor.u32 %v5085, %v5081
      %v5087 = vrot.slane %v5086, 4
      %v5089 = vshll.u32 %v5050, 16
      %v5091 = vrot.slane %v5089, 5
      %v5092 = vsel %vm5068, %v5087, %v5091
      %v5094 = vshrl.u32 %v5019, 16
      %v5096 = vrot.slane %v5094, 4
      %v5097 = vshll.u32 %v5019, 16
      %v5099 = vrot.slane %v5097, 5
      %v5100 = vor.u32 %v5096, %v5099
      %v5101 = vrot.slane %v5100, 4
      %v5103 = vshll.u32 %v5020, 16
      %v5105 = vrot.slane %v5103, 5
      %v5106 = vsel %vm5068, %v5101, %v5105
      %v5107 = vshrl.u32 %v5020, 16
      %v5109 = vrot.slane %v5107, 4
      %v5110 = vor.u32 %v5109, %v5105
      %v5111 = vrot.slane %v5110, 4
      %v5113 = vshll.u32 %v5051, 16
      %v5115 = vrot.slane %v5113, 5
      %v5116 = vsel %vm5068, %v5111, %v5115
      %v5118 = vshrl.u32 %v5021, 16
      %v5120 = vrot.slane %v5118, 4
      %v5121 = vshll.u32 %v5021, 16
      %v5123 = vrot.slane %v5121, 5
      %v5124 = vor.u32 %v5120, %v5123
      %v5125 = vrot.slane %v5124, 4
      %v5127 = vshll.u32 %v5022, 16
      %v5129 = vrot.slane %v5127, 5
      %v5130 = vsel %vm5068, %v5125, %v5129
      %v5131 = vshrl.u32 %v5022, 16
      %v5133 = vrot.slane %v5131, 4
      %v5134 = vor.u32 %v5133, %v5129
      %v5135 = vrot.slane %v5134, 4
      %v5137 = vshll.u32 %v5052, 16
      %v5139 = vrot.slane %v5137, 5
      %v5140 = vsel %vm5068, %v5135, %v5139
      %v5142 = vshrl.u32 %v5023, 16
      %v5144 = vrot.slane %v5142, 4
      %v5145 = vshll.u32 %v5023, 16
      %v5147 = vrot.slane %v5145, 5
      %v5148 = vor.u32 %v5144, %v5147
      %v5149 = vrot.slane %v5148, 4
      %v5151 = vshll.u32 %v5024, 16
      %v5153 = vrot.slane %v5151, 5
      %v5154 = vsel %vm5068, %v5149, %v5153
      %v5155 = vshrl.u32 %v5024, 16
      %v5157 = vrot.slane %v5155, 4
      %v5158 = vor.u32 %v5157, %v5153
      %v5159 = vrot.slane %v5158, 4
      %v5161 = vshll.u32 %v5053, 16
      %v5163 = vrot.slane %v5161, 5
      %v5164 = vsel %vm5068, %v5159, %v5163
      %v5166 = vshrl.u32 %v5025, 16
      %v5168 = vrot.slane %v5166, 4
      %v5169 = vshll.u32 %v5025, 16
      %v5171 = vrot.slane %v5169, 5
      %v5172 = vor.u32 %v5168, %v5171
      %v5173 = vrot.slane %v5172, 4
      %v5175 = vshll.u32 %v5026, 16
      %v5177 = vrot.slane %v5175, 5
      %v5178 = vsel %vm5068, %v5173, %v5177
      %v5179 = vshrl.u32 %v5026, 16
      %v5181 = vrot.slane %v5179, 4
      %v5182 = vor.u32 %v5181, %v5177
      %v5183 = vrot.slane %v5182, 4
      %v5185 = vshll.u32 %v5054, 16
      %v5187 = vrot.slane %v5185, 5
      %v5188 = vsel %vm5068, %v5183, %v5187
      %v5190 = vshrl.u32 %v5027, 16
      %v5192 = vrot.slane %v5190, 4
      %v5193 = vshll.u32 %v5027, 16
      %v5195 = vrot.slane %v5193, 5
      %v5196 = vor.u32 %v5192, %v5195
      %v5197 = vrot.slane %v5196, 4
      %v5199 = vshll.u32 %v5028, 16
      %v5201 = vrot.slane %v5199, 5
      %v5202 = vsel %vm5068, %v5197, %v5201
      %v5203 = vshrl.u32 %v5028, 16
      %v5205 = vrot.slane %v5203, 4
      %v5206 = vor.u32 %v5205, %v5201
      %v5207 = vrot.slane %v5206, 4
      %v5209 = vshll.u32 %v5055, 16
      %v5211 = vrot.slane %v5209, 5
      %v5212 = vsel %vm5068, %v5207, %v5211
      %v5214 = vshrl.u32 %v5029, 16
      %v5216 = vrot.slane %v5214, 4
      %v5217 = vshll.u32 %v5029, 16
      %v5219 = vrot.slane %v5217, 5
      %v5220 = vor.u32 %v5216, %v5219
      %v5221 = vrot.slane %v5220, 4
      %v5223 = vshll.u32 %v5030, 16
      %v5225 = vrot.slane %v5223, 5
      %v5226 = vsel %vm5068, %v5221, %v5225
      %v5227 = vshrl.u32 %v5030, 16
      %v5229 = vrot.slane %v5227, 4
      %v5230 = vor.u32 %v5229, %v5225
      %v5231 = vrot.slane %v5230, 4
      %v5233 = vshll.u32 %v5056, 16
      %v5235 = vrot.slane %v5233, 5
      %v5236 = vsel %vm5068, %v5231, %v5235
      %v5238 = vshrl.u32 %v5031, 16
      %v5240 = vrot.slane %v5238, 4
      %v5241 = vshll.u32 %v5031, 16
      %v5243 = vrot.slane %v5241, 5
      %v5244 = vor.u32 %v5240, %v5243
      %v5245 = vrot.slane %v5244, 4
      %v5247 = vshll.u32 %v5032, 16
      %v5249 = vrot.slane %v5247, 5
      %v5250 = vsel %vm5068, %v5245, %v5249
      %v5251 = vshrl.u32 %v5032, 16
      %v5253 = vrot.slane %v5251, 4
      %v5254 = vor.u32 %v5253, %v5249
      %v5255 = vrot.slane %v5254, 4
      %v5257 = vshll.u32 %v5057, 16
      %v5259 = vrot.slane %v5257, 5
      %v5260 = vsel %vm5068, %v5255, %v5259
      %v5262 = vshrl.u32 %v5033, 16
      %v5264 = vrot.slane %v5262, 4
      %v5265 = vshll.u32 %v5033, 16
      %v5267 = vrot.slane %v5265, 5
      %v5268 = vor.u32 %v5264, %v5267
      %v5269 = vrot.slane %v5268, 4
      %v5271 = vshll.u32 %v5034, 16
      %v5273 = vrot.slane %v5271, 5
      %v5274 = vsel %vm5068, %v5269, %v5273
      %v5275 = vshrl.u32 %v5034, 16
      %v5277 = vrot.slane %v5275, 4
      %v5278 = vor.u32 %v5277, %v5273
      %v5279 = vrot.slane %v5278, 4
      %v5281 = vshll.u32 %v5058, 16
      %v5283 = vrot.slane %v5281, 5
      %v5284 = vsel %vm5068, %v5279, %v5283
      %v5286 = vshrl.u32 %v5035, 16
      %v5288 = vrot.slane %v5286, 4
      %v5289 = vshll.u32 %v5035, 16
      %v5291 = vrot.slane %v5289, 5
      %v5292 = vor.u32 %v5288, %v5291
      %v5293 = vrot.slane %v5292, 4
      %v5295 = vshll.u32 %v5036, 16
      %v5297 = vrot.slane %v5295, 5
      %v5298 = vsel %vm5068, %v5293, %v5297
      %v5299 = vshrl.u32 %v5036, 16
      %v5301 = vrot.slane %v5299, 4
      %v5302 = vor.u32 %v5301, %v5297
      %v5303 = vrot.slane %v5302, 4
      %v5305 = vshll.u32 %v5059, 16
      %v5307 = vrot.slane %v5305, 5
      %v5308 = vsel %vm5068, %v5303, %v5307
      %v5310 = vshrl.u32 %v5037, 16
      %v5312 = vrot.slane %v5310, 4
      %v5313 = vshll.u32 %v5037, 16
      %v5315 = vrot.slane %v5313, 5
      %v5316 = vor.u32 %v5312, %v5315
      %v5317 = vrot.slane %v5316, 4
      %v5319 = vshll.u32 %v5038, 16
      %v5321 = vrot.slane %v5319, 5
      %v5322 = vsel %vm5068, %v5317, %v5321
      %v5323 = vshrl.u32 %v5038, 16
      %v5325 = vrot.slane %v5323, 4
      %v5326 = vor.u32 %v5325, %v5321
      %v5327 = vrot.slane %v5326, 4
      %v5329 = vshll.u32 %v5060, 16
      %v5331 = vrot.slane %v5329, 5
      %v5332 = vsel %vm5068, %v5327, %v5331
      %v5334 = vshrl.u32 %v5039, 16
      %v5336 = vrot.slane %v5334, 4
      %v5337 = vshll.u32 %v5039, 16
      %v5339 = vrot.slane %v5337, 5
      %v5340 = vor.u32 %v5336, %v5339
      %v5341 = vrot.slane %v5340, 4
      %v5343 = vshll.u32 %v5040, 16
      %v5345 = vrot.slane %v5343, 5
      %v5346 = vsel %vm5068, %v5341, %v5345
      %v5347 = vshrl.u32 %v5040, 16
      %v5349 = vrot.slane %v5347, 4
      %v5350 = vor.u32 %v5349, %v5345
      %v5351 = vrot.slane %v5350, 4
      %v5353 = vshll.u32 %v5061, 16
      %v5355 = vrot.slane %v5353, 5
      %v5356 = vsel %vm5068, %v5351, %v5355
      %v5358 = vshrl.u32 %v5041, 16
      %v5360 = vrot.slane %v5358, 4
      %v5361 = vshll.u32 %v5041, 16
      %v5363 = vrot.slane %v5361, 5
      %v5364 = vor.u32 %v5360, %v5363
      %v5365 = vrot.slane %v5364, 4
      %v5367 = vshll.u32 %v5042, 16
      %v5369 = vrot.slane %v5367, 5
      %v5370 = vsel %vm5068, %v5365, %v5369
      %v5371 = vshrl.u32 %v5042, 16
      %v5373 = vrot.slane %v5371, 4
      %v5374 = vor.u32 %v5373, %v5369
      %v5375 = vrot.slane %v5374, 4
      %v5377 = vshll.u32 %v5062, 16
      %v5379 = vrot.slane %v5377, 5
      %v5380 = vsel %vm5068, %v5375, %v5379
      %v5382 = vshrl.u32 %v5043, 16
      %v5384 = vrot.slane %v5382, 4
      %v5385 = vshll.u32 %v5043, 16
      %v5387 = vrot.slane %v5385, 5
      %v5388 = vor.u32 %v5384, %v5387
      %v5389 = vrot.slane %v5388, 4
      %v5391 = vshll.u32 %v5044, 16
      %v5393 = vrot.slane %v5391, 5
      %v5394 = vsel %vm5068, %v5389, %v5393
      %v5395 = vshrl.u32 %v5044, 16
      %v5397 = vrot.slane %v5395, 4
      %v5398 = vor.u32 %v5397, %v5393
      %v5399 = vrot.slane %v5398, 4
      %v5401 = vshll.u32 %v5063, 16
      %v5403 = vrot.slane %v5401, 5
      %v5404 = vsel %vm5068, %v5399, %v5403
      %v5406 = vshrl.u32 %v5045, 16
      %v5408 = vrot.slane %v5406, 4
      %v5409 = vshll.u32 %v5045, 16
      %v5411 = vrot.slane %v5409, 5
      %v5412 = vor.u32 %v5408, %v5411
      %v5413 = vrot.slane %v5412, 4
      %v5415 = vshll.u32 %v5046, 16
      %v5417 = vrot.slane %v5415, 5
      %v5418 = vsel %vm5068, %v5413, %v5417
      %v5419 = vshrl.u32 %v5046, 16
      %v5421 = vrot.slane %v5419, 4
      %v5422 = vor.u32 %v5421, %v5417
      %v5423 = vrot.slane %v5422, 4
      %v5425 = vshll.u32 %v5064, 16
      %v5427 = vrot.slane %v5425, 5
      %v5428 = vsel %vm5068, %v5423, %v5427
      %v5430 = vshrl.u32 %v5047, 16
      %v5432 = vrot.slane %v5430, 4
      %v5433 = vshll.u32 %v5047, 16
      %v5435 = vrot.slane %v5433, 5
      %v5436 = vor.u32 %v5432, %v5435
      %v5437 = vrot.slane %v5436, 4
      %v5439 = vshll.u32 %v5048, 16
      %v5441 = vrot.slane %v5439, 5
      %v5442 = vsel %vm5068, %v5437, %v5441
      %v5443 = vshrl.u32 %v5048, 16
      %v5445 = vrot.slane %v5443, 4
      %v5446 = vor.u32 %v5445, %v5441
      %v5447 = vrot.slane %v5446, 4
      %v5449 = vshll.u32 %v5065, 16
      %v5451 = vrot.slane %v5449, 5
      %v5452 = vsel %vm5068, %v5447, %v5451
      %s5453 = scalar_lea.vmem %s3, 4
      %v5454 = vld [vmem:[%s5453] sm:$0xf]
      %v5455 = vunpack.c.l.b16 %v5082
      %v5456 = vunpack.c.l.b16 %v5092
      %v5457 = vunpack.c.l.b16 %v5106
      %v5458 = vunpack.c.l.b16 %v5116
      %v5459 = vunpack.c.l.b16 %v5130
      %v5460 = vunpack.c.l.b16 %v5140
      %v5461 = vunpack.c.l.b16 %v5154
      %v5462 = vunpack.c.l.b16 %v5164
      %v5463 = vunpack.c.l.b16 %v5178
      %v5464 = vunpack.c.l.b16 %v5188
      %v5465 = vunpack.c.l.b16 %v5202
      %v5466 = vunpack.c.l.b16 %v5212
      %v5467 = vunpack.c.l.b16 %v5226
      %v5468 = vunpack.c.l.b16 %v5236
      %v5469 = vunpack.c.l.b16 %v5250
      %v5470 = vunpack.c.l.b16 %v5260
      %v5471 = vunpack.c.l.b16 %v5274
      %v5472 = vunpack.c.l.b16 %v5284
      %v5473 = vunpack.c.l.b16 %v5298
      %v5474 = vunpack.c.l.b16 %v5308
      %v5475 = vunpack.c.l.b16 %v5322
      %v5476 = vunpack.c.l.b16 %v5332
      %v5477 = vunpack.c.l.b16 %v5346
      %v5478 = vunpack.c.l.b16 %v5356
      %v5479 = vunpack.c.l.b16 %v5370
      %v5480 = vunpack.c.l.b16 %v5380
      %v5481 = vunpack.c.l.b16 %v5394
      %v5482 = vunpack.c.l.b16 %v5404
      %v5483 = vunpack.c.l.b16 %v5418
      %v5484 = vunpack.c.l.b16 %v5428
      %v5485 = vunpack.c.l.b16 %v5442
      %v5486 = vunpack.c.l.b16 %v5452
      %v5487 = vpack.c.b16 %v5456, %v5455
      %v5488 = vpack.c.b16 %v5458, %v5457
      %v5489 = vpack.c.b16 %v5460, %v5459
      %v5490 = vpack.c.b16 %v5462, %v5461
      %v5491 = vpack.c.b16 %v5464, %v5463
      %v5492 = vpack.c.b16 %v5466, %v5465
      %v5493 = vpack.c.b16 %v5468, %v5467
      %v5494 = vpack.c.b16 %v5470, %v5469
      %v5495 = vpack.c.b16 %v5472, %v5471
      %v5496 = vpack.c.b16 %v5474, %v5473
      %v5497 = vpack.c.b16 %v5476, %v5475
      %v5498 = vpack.c.b16 %v5478, %v5477
      %v5499 = vpack.c.b16 %v5480, %v5479
      %v5500 = vpack.c.b16 %v5482, %v5481
      %v5501 = vpack.c.b16 %v5484, %v5483
      %v5502 = vpack.c.b16 %v5486, %v5485
      %vm5503 = vcmask 64512
      %v5505 = vsel %vm5503, %v5487, 0
      %v5508 = vsel %vm5503, %v5488, 0
      %v5511 = vsel %vm5503, %v5489, 0
      %v5514 = vsel %vm5503, %v5490, 0
      %v5517 = vsel %vm5503, %v5491, 0
      %v5520 = vsel %vm5503, %v5492, 0
      %v5523 = vsel %vm5503, %v5493, 0
      %v5526 = vsel %vm5503, %v5494, 0
      %v5529 = vsel %vm5503, %v5495, 0
      %v5532 = vsel %vm5503, %v5496, 0
      %v5535 = vsel %vm5503, %v5497, 0
      %v5538 = vsel %vm5503, %v5498, 0
      %v5541 = vsel %vm5503, %v5499, 0
      %v5544 = vsel %vm5503, %v5500, 0
      %v5547 = vsel %vm5503, %v5501, 0
      %v5550 = vsel %vm5503, %v5502, 0
      %vm5552 = vcmask 1043456
      %v5554 = vsel %vm5552, %v5454, 0
      %5556 = vmatprep.subr.bf16.mxu0 0
      %5557 = vmatpush1.bf16.msra.mxu0 %v5554
      %5558 = vmatprep.subr.bf16.mxu0 0
      %5559 = vmatpush1.bf16.msra.mxu0 0
      %5560 = vmatprep.subr.bf16.mxu0 0
      %5561 = vmatpush1.bf16.msra.mxu0 0
      %5562 = vmatprep.subr.bf16.mxu0 0
      %5563 = vmatpush1.bf16.msra.mxu0 0
      %5564 = vmatprep.subr.bf16.mxu0 0
      %5565 = vmatpush1.bf16.msra.mxu0 0
      %5566 = vmatprep.subr.bf16.mxu0 0
      %5567 = vmatpush1.bf16.msra.mxu0 0
      %5568 = vmatprep.subr.bf16.mxu0 0
      %5569 = vmatpush1.bf16.msra.mxu0 0
      %5570 = vmatprep.subr.bf16.mxu0 0
      %5571 = vmatpush1.bf16.msra.mxu0 0
      %5572 = vmatprep.subr.bf16.mxu0 0
      %5573 = vmatpush1.bf16.msra.mxu0 0
      %5574 = vmatprep.subr.bf16.mxu0 0
      %5575 = vmatpush1.bf16.msra.mxu0 0
      %5576 = vmatprep.subr.bf16.mxu0 0
      %5577 = vmatpush1.bf16.msra.mxu0 0
      %5578 = vmatprep.subr.bf16.mxu0 0
      %5579 = vmatpush1.bf16.msra.mxu0 0
      %5580 = vmatprep.subr.bf16.mxu0 0
      %5581 = vmatpush1.bf16.msra.mxu0 0
      %5582 = vmatprep.subr.bf16.mxu0 0
      %5583 = vmatpush1.bf16.msra.mxu0 0
      %5584 = vmatprep.subr.bf16.mxu0 0
      %5585 = vmatpush1.bf16.msra.mxu0 0
      %5586 = vmatprep.subr.bf16.mxu0 0
      %5587 = vmatpush1.bf16.msra.mxu0 0
      %5588 = vmatprep.mubr.bf16.mxu0 0
      %5589 = vmatmul.mubr.bf16.gmra.mrb[0].mxu0 %v5505
      %v5590 = vpop.f32.mrb[0].mxu0
      %v5591 = vadd.f32 0.0, %v5590
      %v5592 = vpop.f32.mrb[0].mxu0
      %v5593 = vpop.f32.mrb[0].mxu0
      %v5594 = vadd.f32 0.0, %v5593
      %v5595 = vpop.f32.mrb[0].mxu0
      %5596 = vmatprep.mubr.bf16.mxu0 0
      %5597 = vmatmul.mubr.bf16.gmra.mrb[0].mxu0 %v5508
      %v5598 = vpop.f32.mrb[0].mxu0
      %v5599 = vadd.f32 0.0, %v5598
      %v5600 = vpop.f32.mrb[0].mxu0
      %v5601 = vpop.f32.mrb[0].mxu0
      %v5602 = vadd.f32 0.0, %v5601
      %v5603 = vpop.f32.mrb[0].mxu0
      %5604 = vmatprep.mubr.bf16.mxu0 0
      %5605 = vmatmul.mubr.bf16.gmra.mrb[0].mxu0 %v5511
      %v5606 = vpop.f32.mrb[0].mxu0
      %v5607 = vadd.f32 0.0, %v5606
      %v5608 = vpop.f32.mrb[0].mxu0
      %v5609 = vpop.f32.mrb[0].mxu0
      %v5610 = vadd.f32 0.0, %v5609
      %v5611 = vpop.f32.mrb[0].mxu0
      %5612 = vmatprep.mubr.bf16.mxu0 0
      %5613 = vmatmul.mubr.bf16.gmra.mrb[0].mxu0 %v5514
      %v5614 = vpop.f32.mrb[0].mxu0
      %v5615 = vadd.f32 0.0, %v5614
      %v5616 = vpop.f32.mrb[0].mxu0
      %v5617 = vpop.f32.mrb[0].mxu0
      %v5618 = vadd.f32 0.0, %v5617
      %v5619 = vpop.f32.mrb[0].mxu0
      %5620 = vmatprep.mubr.bf16.mxu0 0
      %5621 = vmatmul.mubr.bf16.gmra.mrb[0].mxu0 %v5517
      %v5622 = vpop.f32.mrb[0].mxu0
      %v5623 = vadd.f32 0.0, %v5622
      %v5624 = vpop.f32.mrb[0].mxu0
      %v5625 = vpop.f32.mrb[0].mxu0
      %v5626 = vadd.f32 0.0, %v5625
      %v5627 = vpop.f32.mrb[0].mxu0
      %5628 = vmatprep.mubr.bf16.mxu0 0
      %5629 = vmatmul.mubr.bf16.gmra.mrb[0].mxu0 %v5520
      %v5630 = vpop.f32.mrb[0].mxu0
      %v5631 = vadd.f32 0.0, %v5630
      %v5632 = vpop.f32.mrb[0].mxu0
      %v5633 = vpop.f32.mrb[0].mxu0
      %v5634 = vadd.f32 0.0, %v5633
      %v5635 = vpop.f32.mrb[0].mxu0
      %5636 = vmatprep.mubr.bf16.mxu0 0
      %5637 = vmatmul.mubr.bf16.gmra.mrb[0].mxu0 %v5523
      %v5638 = vpop.f32.mrb[0].mxu0
      %v5639 = vadd.f32 0.0, %v5638
      %v5640 = vpop.f32.mrb[0].mxu0
      %v5641 = vpop.f32.mrb[0].mxu0
      %v5642 = vadd.f32 0.0, %v5641
      %v5643 = vpop.f32.mrb[0].mxu0
      %5644 = vmatprep.mubr.bf16.mxu0 0
      %5645 = vmatmul.mubr.bf16.gmra.mrb[0].mxu0 %v5526
      %v5646 = vpop.f32.mrb[0].mxu0
      %v5647 = vadd.f32 0.0, %v5646
      %v5648 = vpop.f32.mrb[0].mxu0
      %v5649 = vpop.f32.mrb[0].mxu0
      %v5650 = vadd.f32 0.0, %v5649
      %v5651 = vpop.f32.mrb[0].mxu0
      %5652 = vmatprep.mubr.bf16.mxu0 0
      %5653 = vmatmul.mubr.bf16.gmra.mrb[0].mxu0 %v5529
      %v5654 = vpop.f32.mrb[0].mxu0
      %v5655 = vadd.f32 0.0, %v5654
      %v5656 = vpop.f32.mrb[0].mxu0
      %v5657 = vpop.f32.mrb[0].mxu0
      %v5658 = vadd.f32 0.0, %v5657
      %v5659 = vpop.f32.mrb[0].mxu0
      %5660 = vmatprep.mubr.bf16.mxu0 0
      %5661 = vmatmul.mubr.bf16.gmra.mrb[0].mxu0 %v5532
      %v5662 = vpop.f32.mrb[0].mxu0
      %v5663 = vadd.f32 0.0, %v5662
      %v5664 = vpop.f32.mrb[0].mxu0
      %v5665 = vpop.f32.mrb[0].mxu0
      %v5666 = vadd.f32 0.0, %v5665
      %v5667 = vpop.f32.mrb[0].mxu0
      %5668 = vmatprep.mubr.bf16.mxu0 0
      %5669 = vmatmul.mubr.bf16.gmra.mrb[0].mxu0 %v5535
      %v5670 = vpop.f32.mrb[0].mxu0
      %v5671 = vadd.f32 0.0, %v5670
      %v5672 = vpop.f32.mrb[0].mxu0
      %v5673 = vpop.f32.mrb[0].mxu0
      %v5674 = vadd.f32 0.0, %v5673
      %v5675 = vpop.f32.mrb[0].mxu0
      %5676 = vmatprep.mubr.bf16.mxu0 0
      %5677 = vmatmul.mubr.bf16.gmra.mrb[0].mxu0 %v5538
      %v5678 = vpop.f32.mrb[0].mxu0
      %v5679 = vadd.f32 0.0, %v5678
      %v5680 = vpop.f32.mrb[0].mxu0
      %v5681 = vpop.f32.mrb[0].mxu0
      %v5682 = vadd.f32 0.0, %v5681
      %v5683 = vpop.f32.mrb[0].mxu0
      %5684 = vmatprep.mubr.bf16.mxu0 0
      %5685 = vmatmul.mubr.bf16.gmra.mrb[0].mxu0 %v5541
      %v5686 = vpop.f32.mrb[0].mxu0
      %v5687 = vadd.f32 0.0, %v5686
      %v5688 = vpop.f32.mrb[0].mxu0
      %v5689 = vpop.f32.mrb[0].mxu0
      %v5690 = vadd.f32 0.0, %v5689
      %v5691 = vpop.f32.mrb[0].mxu0
      %5692 = vmatprep.mubr.bf16.mxu0 0
      %5693 = vmatmul.mubr.bf16.gmra.mrb[0].mxu0 %v5544
      %v5694 = vpop.f32.mrb[0].mxu0
      %v5695 = vadd.f32 0.0, %v5694
      %v5696 = vpop.f32.mrb[0].mxu0
      %v5697 = vpop.f32.mrb[0].mxu0
      %v5698 = vadd.f32 0.0, %v5697
      %v5699 = vpop.f32.mrb[0].mxu0
      %5700 = vmatprep.mubr.bf16.mxu0 0
      %5701 = vmatmul.mubr.bf16.gmra.mrb[0].mxu0 %v5547
      %v5702 = vpop.f32.mrb[0].mxu0
      %v5703 = vadd.f32 0.0, %v5702
      %v5704 = vpop.f32.mrb[0].mxu0
      %v5705 = vpop.f32.mrb[0].mxu0
      %v5706 = vadd.f32 0.0, %v5705
      %v5707 = vpop.f32.mrb[0].mxu0
      %5708 = vmatprep.mubr.bf16.mxu0 0
      %5709 = vmatmul.mubr.bf16.gmra.mrb[0].mxu0 %v5550
      %v5710 = vpop.f32.mrb[0].mxu0
      %v5711 = vadd.f32 0.0, %v5710
      %v5712 = vpop.f32.mrb[0].mxu0
      %v5713 = vpop.f32.mrb[0].mxu0
      %v5714 = vadd.f32 0.0, %v5713
      %v5715 = vpop.f32.mrb[0].mxu0
      %5716 = vdwg.mxu0
      %v5749 = vunpack.c.l.b16 %v5017
      %v5750 = vunpack.c.l.b16 %v5018
      %v5751 = vunpack.c.l.b16 %v5019
      %v5752 = vunpack.c.l.b16 %v5020
      %v5753 = vunpack.c.l.b16 %v5021
      %v5754 = vunpack.c.l.b16 %v5022
      %v5755 = vunpack.c.l.b16 %v5023
      %v5756 = vunpack.c.l.b16 %v5024
      %v5757 = vunpack.c.l.b16 %v5025
      %v5758 = vunpack.c.l.b16 %v5026
      %v5759 = vunpack.c.l.b16 %v5027
      %v5760 = vunpack.c.l.b16 %v5028
      %v5761 = vunpack.c.l.b16 %v5029
      %v5762 = vunpack.c.l.b16 %v5030
      %v5763 = vunpack.c.l.b16 %v5031
      %v5764 = vunpack.c.l.b16 %v5032
      %v5765 = vunpack.c.l.b16 %v5033
      %v5766 = vunpack.c.l.b16 %v5034
      %v5767 = vunpack.c.l.b16 %v5035
      %v5768 = vunpack.c.l.b16 %v5036
      %v5769 = vunpack.c.l.b16 %v5037
      %v5770 = vunpack.c.l.b16 %v5038
      %v5771 = vunpack.c.l.b16 %v5039
      %v5772 = vunpack.c.l.b16 %v5040
      %v5773 = vunpack.c.l.b16 %v5041
      %v5774 = vunpack.c.l.b16 %v5042
      %v5775 = vunpack.c.l.b16 %v5043
      %v5776 = vunpack.c.l.b16 %v5044
      %v5777 = vunpack.c.l.b16 %v5045
      %v5778 = vunpack.c.l.b16 %v5046
      %v5779 = vunpack.c.l.b16 %v5047
      %v5780 = vunpack.c.l.b16 %v5048
      %v5781 = vpack.c.b16 %v5750, %v5749
      %v5782 = vpack.c.b16 %v5752, %v5751
      %v5783 = vpack.c.b16 %v5754, %v5753
      %v5784 = vpack.c.b16 %v5756, %v5755
      %v5785 = vpack.c.b16 %v5758, %v5757
      %v5786 = vpack.c.b16 %v5760, %v5759
      %v5787 = vpack.c.b16 %v5762, %v5761
      %v5788 = vpack.c.b16 %v5764, %v5763
      %v5789 = vpack.c.b16 %v5766, %v5765
      %v5790 = vpack.c.b16 %v5768, %v5767
      %v5791 = vpack.c.b16 %v5770, %v5769
      %v5792 = vpack.c.b16 %v5772, %v5771
      %v5793 = vpack.c.b16 %v5774, %v5773
      %v5794 = vpack.c.b16 %v5776, %v5775
      %v5795 = vpack.c.b16 %v5778, %v5777
      %v5796 = vpack.c.b16 %v5780, %v5779
      %v5798 = vsel %vm5503, %v5781, 0
      %v5801 = vsel %vm5503, %v5782, 0
      %v5804 = vsel %vm5503, %v5783, 0
      %v5807 = vsel %vm5503, %v5784, 0
      %v5810 = vsel %vm5503, %v5785, 0
      %v5813 = vsel %vm5503, %v5786, 0
      %v5816 = vsel %vm5503, %v5787, 0
      %v5819 = vsel %vm5503, %v5788, 0
      %v5822 = vsel %vm5503, %v5789, 0
      %v5825 = vsel %vm5503, %v5790, 0
      %v5828 = vsel %vm5503, %v5791, 0
      %v5831 = vsel %vm5503, %v5792, 0
      %v5834 = vsel %vm5503, %v5793, 0
      %v5837 = vsel %vm5503, %v5794, 0
      %v5840 = vsel %vm5503, %v5795, 0
      %v5843 = vsel %vm5503, %v5796, 0
      %v5846 = vsel %vm5552, %v5049, 0
      %5848 = vmatprep.subr.bf16.mxu0 0
      %5849 = vmatpush1.bf16.msra.mxu0 %v5846
      %5850 = vmatprep.subr.bf16.mxu0 0
      %5851 = vmatpush1.bf16.msra.mxu0 0
      %5852 = vmatprep.subr.bf16.mxu0 0
      %5853 = vmatpush1.bf16.msra.mxu0 0
      %5854 = vmatprep.subr.bf16.mxu0 0
      %5855 = vmatpush1.bf16.msra.mxu0 0
      %5856 = vmatprep.subr.bf16.mxu0 0
      %5857 = vmatpush1.bf16.msra.mxu0 0
      %5858 = vmatprep.subr.bf16.mxu0 0
      %5859 = vmatpush1.bf16.msra.mxu0 0
      %5860 = vmatprep.subr.bf16.mxu0 0
      %5861 = vmatpush1.bf16.msra.mxu0 0
      %5862 = vmatprep.subr.bf16.mxu0 0
      %5863 = vmatpush1.bf16.msra.mxu0 0
      %5864 = vmatprep.subr.bf16.mxu0 0
      %5865 = vmatpush1.bf16.msra.mxu0 0
      %5866 = vmatprep.subr.bf16.mxu0 0
      %5867 = vmatpush1.bf16.msra.mxu0 0
      %5868 = vmatprep.subr.bf16.mxu0 0
      %5869 = vmatpush1.bf16.msra.mxu0 0
      %5870 = vmatprep.subr.bf16.mxu0 0
      %5871 = vmatpush1.bf16.msra.mxu0 0
      %5872 = vmatprep.subr.bf16.mxu0 0
      %5873 = vmatpush1.bf16.msra.mxu0 0
      %5874 = vmatprep.subr.bf16.mxu0 0
      %5875 = vmatpush1.bf16.msra.mxu0 0
      %5876 = vmatprep.subr.bf16.mxu0 0
      %5877 = vmatpush1.bf16.msra.mxu0 0
      %5878 = vmatprep.subr.bf16.mxu0 0
      %5879 = vmatpush1.bf16.msra.mxu0 0
      %5880 = vmatprep.mubr.bf16.mxu0 0
      %5881 = vmatmul.mubr.bf16.gmra.mrb[0].mxu0 %v5798
      %v5882 = vpop.f32.mrb[0].mxu0
      %v5883 = vadd.f32 %v5591, %v5882
      %v5884 = vpop.f32.mrb[0].mxu0
      %v5885 = vpop.f32.mrb[0].mxu0
      %v5886 = vadd.f32 %v5594, %v5885
      %v5887 = vpop.f32.mrb[0].mxu0
      %5888 = vmatprep.mubr.bf16.mxu0 0
      %5889 = vmatmul.mubr.bf16.gmra.mrb[0].mxu0 %v5801
      %v5890 = vpop.f32.mrb[0].mxu0
      %v5891 = vadd.f32 %v5599, %v5890
      %v5892 = vpop.f32.mrb[0].mxu0
      %v5893 = vpop.f32.mrb[0].mxu0
      %v5894 = vadd.f32 %v5602, %v5893
      %v5895 = vpop.f32.mrb[0].mxu0
      %5896 = vmatprep.mubr.bf16.mxu0 0
      %5897 = vmatmul.mubr.bf16.gmra.mrb[0].mxu0 %v5804
      %v5898 = vpop.f32.mrb[0].mxu0
      %v5899 = vadd.f32 %v5607, %v5898
      %v5900 = vpop.f32.mrb[0].mxu0
      %v5901 = vpop.f32.mrb[0].mxu0
      %v5902 = vadd.f32 %v5610, %v5901
      %v5903 = vpop.f32.mrb[0].mxu0
      %5904 = vmatprep.mubr.bf16.mxu0 0
      %5905 = vmatmul.mubr.bf16.gmra.mrb[0].mxu0 %v5807
      %v5906 = vpop.f32.mrb[0].mxu0
      %v5907 = vadd.f32 %v5615, %v5906
      %v5908 = vpop.f32.mrb[0].mxu0
      %v5909 = vpop.f32.mrb[0].mxu0
      %v5910 = vadd.f32 %v5618, %v5909
      %v5911 = vpop.f32.mrb[0].mxu0
      %5912 = vmatprep.mubr.bf16.mxu0 0
      %5913 = vmatmul.mubr.bf16.gmra.mrb[0].mxu0 %v5810
      %v5914 = vpop.f32.mrb[0].mxu0
      %v5915 = vadd.f32 %v5623, %v5914
      %v5916 = vpop.f32.mrb[0].mxu0
      %v5917 = vpop.f32.mrb[0].mxu0
      %v5918 = vadd.f32 %v5626, %v5917
      %v5919 = vpop.f32.mrb[0].mxu0
      %5920 = vmatprep.mubr.bf16.mxu0 0
      %5921 = vmatmul.mubr.bf16.gmra.mrb[0].mxu0 %v5813
      %v5922 = vpop.f32.mrb[0].mxu0
      %v5923 = vadd.f32 %v5631, %v5922
      %v5924 = vpop.f32.mrb[0].mxu0
      %v5925 = vpop.f32.mrb[0].mxu0
      %v5926 = vadd.f32 %v5634, %v5925
      %v5927 = vpop.f32.mrb[0].mxu0
      %5928 = vmatprep.mubr.bf16.mxu0 0
      %5929 = vmatmul.mubr.bf16.gmra.mrb[0].mxu0 %v5816
      %v5930 = vpop.f32.mrb[0].mxu0
      %v5931 = vadd.f32 %v5639, %v5930
      %v5932 = vpop.f32.mrb[0].mxu0
      %v5933 = vpop.f32.mrb[0].mxu0
      %v5934 = vadd.f32 %v5642, %v5933
      %v5935 = vpop.f32.mrb[0].mxu0
      %5936 = vmatprep.mubr.bf16.mxu0 0
      %5937 = vmatmul.mubr.bf16.gmra.mrb[0].mxu0 %v5819
      %v5938 = vpop.f32.mrb[0].mxu0
      %v5939 = vadd.f32 %v5647, %v5938
      %v5940 = vpop.f32.mrb[0].mxu0
      %v5941 = vpop.f32.mrb[0].mxu0
      %v5942 = vadd.f32 %v5650, %v5941
      %v5943 = vpop.f32.mrb[0].mxu0
      %5944 = vmatprep.mubr.bf16.mxu0 0
      %5945 = vmatmul.mubr.bf16.gmra.mrb[0].mxu0 %v5822
      %v5946 = vpop.f32.mrb[0].mxu0
      %v5947 = vadd.f32 %v5655, %v5946
      %v5948 = vpop.f32.mrb[0].mxu0
      %v5949 = vpop.f32.mrb[0].mxu0
      %v5950 = vadd.f32 %v5658, %v5949
      %v5951 = vpop.f32.mrb[0].mxu0
      %5952 = vmatprep.mubr.bf16.mxu0 0
      %5953 = vmatmul.mubr.bf16.gmra.mrb[0].mxu0 %v5825
      %v5954 = vpop.f32.mrb[0].mxu0
      %v5955 = vadd.f32 %v5663, %v5954
      %v5956 = vpop.f32.mrb[0].mxu0
      %v5957 = vpop.f32.mrb[0].mxu0
      %v5958 = vadd.f32 %v5666, %v5957
      %v5959 = vpop.f32.mrb[0].mxu0
      %5960 = vmatprep.mubr.bf16.mxu0 0
      %5961 = vmatmul.mubr.bf16.gmra.mrb[0].mxu0 %v5828
      %v5962 = vpop.f32.mrb[0].mxu0
      %v5963 = vadd.f32 %v5671, %v5962
      %v5964 = vpop.f32.mrb[0].mxu0
      %v5965 = vpop.f32.mrb[0].mxu0
      %v5966 = vadd.f32 %v5674, %v5965
      %v5967 = vpop.f32.mrb[0].mxu0
      %5968 = vmatprep.mubr.bf16.mxu0 0
      %5969 = vmatmul.mubr.bf16.gmra.mrb[0].mxu0 %v5831
      %v5970 = vpop.f32.mrb[0].mxu0
      %v5971 = vadd.f32 %v5679, %v5970
      %v5972 = vpop.f32.mrb[0].mxu0
      %v5973 = vpop.f32.mrb[0].mxu0
      %v5974 = vadd.f32 %v5682, %v5973
      %v5975 = vpop.f32.mrb[0].mxu0
      %5976 = vmatprep.mubr.bf16.mxu0 0
      %5977 = vmatmul.mubr.bf16.gmra.mrb[0].mxu0 %v5834
      %v5978 = vpop.f32.mrb[0].mxu0
      %v5979 = vadd.f32 %v5687, %v5978
      %v5980 = vpop.f32.mrb[0].mxu0
      %v5981 = vpop.f32.mrb[0].mxu0
      %v5982 = vadd.f32 %v5690, %v5981
      %v5983 = vpop.f32.mrb[0].mxu0
      %5984 = vmatprep.mubr.bf16.mxu0 0
      %5985 = vmatmul.mubr.bf16.gmra.mrb[0].mxu0 %v5837
      %v5986 = vpop.f32.mrb[0].mxu0
      %v5987 = vadd.f32 %v5695, %v5986
      %v5988 = vpop.f32.mrb[0].mxu0
      %v5989 = vpop.f32.mrb[0].mxu0
      %v5990 = vadd.f32 %v5698, %v5989
      %v5991 = vpop.f32.mrb[0].mxu0
      %5992 = vmatprep.mubr.bf16.mxu0 0
      %5993 = vmatmul.mubr.bf16.gmra.mrb[0].mxu0 %v5840
      %v5994 = vpop.f32.mrb[0].mxu0
      %v5995 = vadd.f32 %v5703, %v5994
      %v5996 = vpop.f32.mrb[0].mxu0
      %v5997 = vpop.f32.mrb[0].mxu0
      %v5998 = vadd.f32 %v5706, %v5997
      %v5999 = vpop.f32.mrb[0].mxu0
      %6000 = vmatprep.mubr.bf16.mxu0 0
      %6001 = vmatmul.mubr.bf16.gmra.mrb[0].mxu0 %v5843
      %v6002 = vpop.f32.mrb[0].mxu0
      %v6003 = vadd.f32 %v5711, %v6002
      %v6004 = vpop.f32.mrb[0].mxu0
      %v6005 = vpop.f32.mrb[0].mxu0
      %v6006 = vadd.f32 %v5714, %v6005
      %v6007 = vpop.f32.mrb[0].mxu0
      %6008 = vdwg.mxu0
      %v6009 = vld [vmem:[#allocation2] sm:$0xe]
      %v6010 = vld [vmem:[#allocation2 + $0xc] sm:$0xe]
      %v6011 = vld [vmem:[#allocation2 + $0x18] sm:$0xe]
      %v6012 = vld [vmem:[#allocation2 + $0x24] sm:$0xe]
      %v6013 = vld [vmem:[#allocation2 + $0x30] sm:$0xe]
      %v6014 = vld [vmem:[#allocation2 + $0x3c] sm:$0xe]
      %v6015 = vld [vmem:[#allocation2 + $0x48] sm:$0xe]
      %v6016 = vld [vmem:[#allocation2 + $0x54] sm:$0xe]
      %v6017 = vld [vmem:[#allocation2 + $0x60] sm:$0xe]
      %v6018 = vld [vmem:[#allocation2 + $0x6c] sm:$0xe]
      %v6019 = vld [vmem:[#allocation2 + $0x78] sm:$0xe]
      %v6020 = vld [vmem:[#allocation2 + $0x84] sm:$0xe]
      %v6021 = vld [vmem:[#allocation2 + $0x90] sm:$0xe]
      %v6022 = vld [vmem:[#allocation2 + $0x9c] sm:$0xe]
      %v6023 = vld [vmem:[#allocation2 + $0xa8] sm:$0xe]
      %v6024 = vld [vmem:[#allocation2 + $0xb4] sm:$0xe]
      %vm6057 = vcmask 1042432
      %vm6058 = vcmask 1046532
      %vm6059 = vmor %vm6057, %vm6058
      %v6060 = vrot.slane %v6009, 5
      %v6061 = vrot.slane %v6060, 4
      %v6062 = vrot.slane %v5018, 5
      %v6063 = vsel %vm6059, %v6061, %v6062
      %v6064 = vrot.slane %v6062, 4
      %v6065 = vrot.slane %v5050, 5
      %v6066 = vsel %vm6059, %v6064, %v6065
      %v6067 = vrot.slane %v6010, 5
      %v6068 = vrot.slane %v6067, 4
      %v6069 = vrot.slane %v5020, 5
      %v6070 = vsel %vm6059, %v6068, %v6069
      %v6071 = vrot.slane %v6069, 4
      %v6072 = vrot.slane %v5051, 5
      %v6073 = vsel %vm6059, %v6071, %v6072
      %v6074 = vrot.slane %v6011, 5
      %v6075 = vrot.slane %v6074, 4
      %v6076 = vrot.slane %v5022, 5
      %v6077 = vsel %vm6059, %v6075, %v6076
      %v6078 = vrot.slane %v6076, 4
      %v6079 = vrot.slane %v5052, 5
      %v6080 = vsel %vm6059, %v6078, %v6079
      %v6081 = vrot.slane %v6012, 5
      %v6082 = vrot.slane %v6081, 4
      %v6083 = vrot.slane %v5024, 5
      %v6084 = vsel %vm6059, %v6082, %v6083
      %v6085 = vrot.slane %v6083, 4
      %v6086 = vrot.slane %v5053, 5
      %v6087 = vsel %vm6059, %v6085, %v6086
      %v6088 = vrot.slane %v6013, 5
      %v6089 = vrot.slane %v6088, 4
      %v6090 = vrot.slane %v5026, 5
      %v6091 = vsel %vm6059, %v6089, %v6090
      %v6092 = vrot.slane %v6090, 4
      %v6093 = vrot.slane %v5054, 5
      %v6094 = vsel %vm6059, %v6092, %v6093
      %v6095 = vrot.slane %v6014, 5
      %v6096 = vrot.slane %v6095, 4
      %v6097 = vrot.slane %v5028, 5
      %v6098 = vsel %vm6059, %v6096, %v6097
      %v6099 = vrot.slane %v6097, 4
      %v6100 = vrot.slane %v5055, 5
      %v6101 = vsel %vm6059, %v6099, %v6100
      %v6102 = vrot.slane %v6015, 5
      %v6103 = vrot.slane %v6102, 4
      %v6104 = vrot.slane %v5030, 5
      %v6105 = vsel %vm6059, %v6103, %v6104
      %v6106 = vrot.slane %v6104, 4
      %v6107 = vrot.slane %v5056, 5
      %v6108 = vsel %vm6059, %v6106, %v6107
      %v6109 = vrot.slane %v6016, 5
      %v6110 = vrot.slane %v6109, 4
      %v6111 = vrot.slane %v5032, 5
      %v6112 = vsel %vm6059, %v6110, %v6111
      %v6113 = vrot.slane %v6111, 4
      %v6114 = vrot.slane %v5057, 5
      %v6115 = vsel %vm6059, %v6113, %v6114
      %v6116 = vrot.slane %v6017, 5
      %v6117 = vrot.slane %v6116, 4
      %v6118 = vrot.slane %v5034, 5
      %v6119 = vsel %vm6059, %v6117, %v6118
      %v6120 = vrot.slane %v6118, 4
      %v6121 = vrot.slane %v5058, 5
      %v6122 = vsel %vm6059, %v6120, %v6121
      %v6123 = vrot.slane %v6018, 5
      %v6124 = vrot.slane %v6123, 4
      %v6125 = vrot.slane %v5036, 5
      %v6126 = vsel %vm6059, %v6124, %v6125
      %v6127 = vrot.slane %v6125, 4
      %v6128 = vrot.slane %v5059, 5
      %v6129 = vsel %vm6059, %v6127, %v6128
      %v6130 = vrot.slane %v6019, 5
      %v6131 = vrot.slane %v6130, 4
      %v6132 = vrot.slane %v5038, 5
      %v6133 = vsel %vm6059, %v6131, %v6132
      %v6134 = vrot.slane %v6132, 4
      %v6135 = vrot.slane %v5060, 5
      %v6136 = vsel %vm6059, %v6134, %v6135
      %v6137 = vrot.slane %v6020, 5
      %v6138 = vrot.slane %v6137, 4
      %v6139 = vrot.slane %v5040, 5
      %v6140 = vsel %vm6059, %v6138, %v6139
      %v6141 = vrot.slane %v6139, 4
      %v6142 = vrot.slane %v5061, 5
      %v6143 = vsel %vm6059, %v6141, %v6142
      %v6144 = vrot.slane %v6021, 5
      %v6145 = vrot.slane %v6144, 4
      %v6146 = vrot.slane %v5042, 5
      %v6147 = vsel %vm6059, %v6145, %v6146
      %v6148 = vrot.slane %v6146, 4
      %v6149 = vrot.slane %v5062, 5
      %v6150 = vsel %vm6059, %v6148, %v6149
      %v6151 = vrot.slane %v6022, 5
      %v6152 = vrot.slane %v6151, 4
      %v6153 = vrot.slane %v5044, 5
      %v6154 = vsel %vm6059, %v6152, %v6153
      %v6155 = vrot.slane %v6153, 4
      %v6156 = vrot.slane %v5063, 5
      %v6157 = vsel %vm6059, %v6155, %v6156
      %v6158 = vrot.slane %v6023, 5
      %v6159 = vrot.slane %v6158, 4
      %v6160 = vrot.slane %v5046, 5
      %v6161 = vsel %vm6059, %v6159, %v6160
      %v6162 = vrot.slane %v6160, 4
      %v6163 = vrot.slane %v5064, 5
      %v6164 = vsel %vm6059, %v6162, %v6163
      %v6165 = vrot.slane %v6024, 5
      %v6166 = vrot.slane %v6165, 4
      %v6167 = vrot.slane %v5048, 5
      %v6168 = vsel %vm6059, %v6166, %v6167
      %v6169 = vrot.slane %v6167, 4
      %v6170 = vrot.slane %v5065, 5
      %v6171 = vsel %vm6059, %v6169, %v6170
      %s6172 = scalar_lea.vmem %s3, 8
      %v6173 = vld [vmem:[%s6172] sm:$0xf]
      %v6174 = vunpack.c.l.b16 %v6063
      %v6175 = vunpack.c.l.b16 %v6066
      %v6176 = vunpack.c.l.b16 %v6070
      %v6177 = vunpack.c.l.b16 %v6073
      %v6178 = vunpack.c.l.b16 %v6077
      %v6179 = vunpack.c.l.b16 %v6080
      %v6180 = vunpack.c.l.b16 %v6084
      %v6181 = vunpack.c.l.b16 %v6087
      %v6182 = vunpack.c.l.b16 %v6091
      %v6183 = vunpack.c.l.b16 %v6094
      %v6184 = vunpack.c.l.b16 %v6098
      %v6185 = vunpack.c.l.b16 %v6101
      %v6186 = vunpack.c.l.b16 %v6105
      %v6187 = vunpack.c.l.b16 %v6108
      %v6188 = vunpack.c.l.b16 %v6112
      %v6189 = vunpack.c.l.b16 %v6115
      %v6190 = vunpack.c.l.b16 %v6119
      %v6191 = vunpack.c.l.b16 %v6122
      %v6192 = vunpack.c.l.b16 %v6126
      %v6193 = vunpack.c.l.b16 %v6129
      %v6194 = vunpack.c.l.b16 %v6133
      %v6195 = vunpack.c.l.b16 %v6136
      %v6196 = vunpack.c.l.b16 %v6140
      %v6197 = vunpack.c.l.b16 %v6143
      %v6198 = vunpack.c.l.b16 %v6147
      %v6199 = vunpack.c.l.b16 %v6150
      %v6200 = vunpack.c.l.b16 %v6154
      %v6201 = vunpack.c.l.b16 %v6157
      %v6202 = vunpack.c.l.b16 %v6161
      %v6203 = vunpack.c.l.b16 %v6164
      %v6204 = vunpack.c.l.b16 %v6168
      %v6205 = vunpack.c.l.b16 %v6171
      %v6206 = vpack.c.b16 %v6175, %v6174
      %v6207 = vpack.c.b16 %v6177, %v6176
      %v6208 = vpack.c.b16 %v6179, %v6178
      %v6209 = vpack.c.b16 %v6181, %v6180
      %v6210 = vpack.c.b16 %v6183, %v6182
      %v6211 = vpack.c.b16 %v6185, %v6184
      %v6212 = vpack.c.b16 %v6187, %v6186
      %v6213 = vpack.c.b16 %v6189, %v6188
      %v6214 = vpack.c.b16 %v6191, %v6190
      %v6215 = vpack.c.b16 %v6193, %v6192
      %v6216 = vpack.c.b16 %v6195, %v6194
      %v6217 = vpack.c.b16 %v6197, %v6196
      %v6218 = vpack.c.b16 %v6199, %v6198
      %v6219 = vpack.c.b16 %v6201, %v6200
      %v6220 = vpack.c.b16 %v6203, %v6202
      %v6221 = vpack.c.b16 %v6205, %v6204
      %v6223 = vsel %vm5503, %v6206, 0
      %v6226 = vsel %vm5503, %v6207, 0
      %v6229 = vsel %vm5503, %v6208, 0
      %v6232 = vsel %vm5503, %v6209, 0
      %v6235 = vsel %vm5503, %v6210, 0
      %v6238 = vsel %vm5503, %v6211, 0
      %v6241 = vsel %vm5503, %v6212, 0
      %v6244 = vsel %vm5503, %v6213, 0
      %v6247 = vsel %vm5503, %v6214, 0
      %v6250 = vsel %vm5503, %v6215, 0
      %v6253 = vsel %vm5503, %v6216, 0
      %v6256 = vsel %vm5503, %v6217, 0
      %v6259 = vsel %vm5503, %v6218, 0
      %v6262 = vsel %vm5503, %v6219, 0
      %v6265 = vsel %vm5503, %v6220, 0
      %v6268 = vsel %vm5503, %v6221, 0
      %v6271 = vsel %vm5552, %v6173, 0
      %6273 = vmatprep.subr.bf16.mxu0 0
      %6274 = vmatpush1.bf16.msra.mxu0 %v6271
      %6275 = vmatprep.subr.bf16.mxu0 0
      %6276 = vmatpush1.bf16.msra.mxu0 0
      %6277 = vmatprep.subr.bf16.mxu0 0
      %6278 = vmatpush1.bf16.msra.mxu0 0
      %6279 = vmatprep.subr.bf16.mxu0 0
      %6280 = vmatpush1.bf16.msra.mxu0 0
      %6281 = vmatprep.subr.bf16.mxu0 0
      %6282 = vmatpush1.bf16.msra.mxu0 0
      %6283 = vmatprep.subr.bf16.mxu0 0
      %6284 = vmatpush1.bf16.msra.mxu0 0
      %6285 = vmatprep.subr.bf16.mxu0 0
      %6286 = vmatpush1.bf16.msra.mxu0 0
      %6287 = vmatprep.subr.bf16.mxu0 0
      %6288 = vmatpush1.bf16.msra.mxu0 0
      %6289 = vmatprep.subr.bf16.mxu0 0
      %6290 = vmatpush1.bf16.msra.mxu0 0
      %6291 = vmatprep.subr.bf16.mxu0 0
      %6292 = vmatpush1.bf16.msra.mxu0 0
      %6293 = vmatprep.subr.bf16.mxu0 0
      %6294 = vmatpush1.bf16.msra.mxu0 0
      %6295 = vmatprep.subr.bf16.mxu0 0
      %6296 = vmatpush1.bf16.msra.mxu0 0
      %6297 = vmatprep.subr.bf16.mxu0 0
      %6298 = vmatpush1.bf16.msra.mxu0 0
      %6299 = vmatprep.subr.bf16.mxu0 0
      %6300 = vmatpush1.bf16.msra.mxu0 0
      %6301 = vmatprep.subr.bf16.mxu0 0
      %6302 = vmatpush1.bf16.msra.mxu0 0
      %6303 = vmatprep.subr.bf16.mxu0 0
      %6304 = vmatpush1.bf16.msra.mxu0 0
      %6305 = vmatprep.mubr.bf16.mxu0 0
      %6306 = vmatmul.mubr.bf16.gmra.mrb[0].mxu0 %v6223
      %v6307 = vpop.f32.mrb[0].mxu0
      %v6308 = vadd.f32 0.0, %v6307
      %v6309 = vpop.f32.mrb[0].mxu0
      %v6310 = vpop.f32.mrb[0].mxu0
      %v6311 = vadd.f32 0.0, %v6310
      %v6312 = vpop.f32.mrb[0].mxu0
      %6313 = vmatprep.mubr.bf16.mxu0 0
      %6314 = vmatmul.mubr.bf16.gmra.mrb[0].mxu0 %v6226
      %v6315 = vpop.f32.mrb[0].mxu0
      %v6316 = vadd.f32 0.0, %v6315
      %v6317 = vpop.f32.mrb[0].mxu0
      %v6318 = vpop.f32.mrb[0].mxu0
      %v6319 = vadd.f32 0.0, %v6318
      %v6320 = vpop.f32.mrb[0].mxu0
      %6321 = vmatprep.mubr.bf16.mxu0 0
      %6322 = vmatmul.mubr.bf16.gmra.mrb[0].mxu0 %v6229
      %v6323 = vpop.f32.mrb[0].mxu0
      %v6324 = vadd.f32 0.0, %v6323
      %v6325 = vpop.f32.mrb[0].mxu0
      %v6326 = vpop.f32.mrb[0].mxu0
      %v6327 = vadd.f32 0.0, %v6326
      %v6328 = vpop.f32.mrb[0].mxu0
      %6329 = vmatprep.mubr.bf16.mxu0 0
      %6330 = vmatmul.mubr.bf16.gmra.mrb[0].mxu0 %v6232
      %v6331 = vpop.f32.mrb[0].mxu0
      %v6332 = vadd.f32 0.0, %v6331
      %v6333 = vpop.f32.mrb[0].mxu0
      %v6334 = vpop.f32.mrb[0].mxu0
      %v6335 = vadd.f32 0.0, %v6334
      %v6336 = vpop.f32.mrb[0].mxu0
      %6337 = vmatprep.mubr.bf16.mxu0 0
      %6338 = vmatmul.mubr.bf16.gmra.mrb[0].mxu0 %v6235
      %v6339 = vpop.f32.mrb[0].mxu0
      %v6340 = vadd.f32 0.0, %v6339
      %v6341 = vpop.f32.mrb[0].mxu0
      %v6342 = vpop.f32.mrb[0].mxu0
      %v6343 = vadd.f32 0.0, %v6342
      %v6344 = vpop.f32.mrb[0].mxu0
      %6345 = vmatprep.mubr.bf16.mxu0 0
      %6346 = vmatmul.mubr.bf16.gmra.mrb[0].mxu0 %v6238
      %v6347 = vpop.f32.mrb[0].mxu0
      %v6348 = vadd.f32 0.0, %v6347
      %v6349 = vpop.f32.mrb[0].mxu0
      %v6350 = vpop.f32.mrb[0].mxu0
      %v6351 = vadd.f32 0.0, %v6350
      %v6352 = vpop.f32.mrb[0].mxu0
      %6353 = vmatprep.mubr.bf16.mxu0 0
      %6354 = vmatmul.mubr.bf16.gmra.mrb[0].mxu0 %v6241
      %v6355 = vpop.f32.mrb[0].mxu0
      %v6356 = vadd.f32 0.0, %v6355
      %v6357 = vpop.f32.mrb[0].mxu0
      %v6358 = vpop.f32.mrb[0].mxu0
      %v6359 = vadd.f32 0.0, %v6358
      %v6360 = vpop.f32.mrb[0].mxu0
      %6361 = vmatprep.mubr.bf16.mxu0 0
      %6362 = vmatmul.mubr.bf16.gmra.mrb[0].mxu0 %v6244
      %v6363 = vpop.f32.mrb[0].mxu0
      %v6364 = vadd.f32 0.0, %v6363
      %v6365 = vpop.f32.mrb[0].mxu0
      %v6366 = vpop.f32.mrb[0].mxu0
      %v6367 = vadd.f32 0.0, %v6366
      %v6368 = vpop.f32.mrb[0].mxu0
      %6369 = vmatprep.mubr.bf16.mxu0 0
      %6370 = vmatmul.mubr.bf16.gmra.mrb[0].mxu0 %v6247
      %v6371 = vpop.f32.mrb[0].mxu0
      %v6372 = vadd.f32 0.0, %v6371
      %v6373 = vpop.f32.mrb[0].mxu0
      %v6374 = vpop.f32.mrb[0].mxu0
      %v6375 = vadd.f32 0.0, %v6374
      %v6376 = vpop.f32.mrb[0].mxu0
      %6377 = vmatprep.mubr.bf16.mxu0 0
      %6378 = vmatmul.mubr.bf16.gmra.mrb[0].mxu0 %v6250
      %v6379 = vpop.f32.mrb[0].mxu0
      %v6380 = vadd.f32 0.0, %v6379
      %v6381 = vpop.f32.mrb[0].mxu0
      %v6382 = vpop.f32.mrb[0].mxu0
      %v6383 = vadd.f32 0.0, %v6382
      %v6384 = vpop.f32.mrb[0].mxu0
      %6385 = vmatprep.mubr.bf16.mxu0 0
      %6386 = vmatmul.mubr.bf16.gmra.mrb[0].mxu0 %v6253
      %v6387 = vpop.f32.mrb[0].mxu0
      %v6388 = vadd.f32 0.0, %v6387
      %v6389 = vpop.f32.mrb[0].mxu0
      %v6390 = vpop.f32.mrb[0].mxu0
      %v6391 = vadd.f32 0.0, %v6390
      %v6392 = vpop.f32.mrb[0].mxu0
      %6393 = vmatprep.mubr.bf16.mxu0 0
      %6394 = vmatmul.mubr.bf16.gmra.mrb[0].mxu0 %v6256
      %v6395 = vpop.f32.mrb[0].mxu0
      %v6396 = vadd.f32 0.0, %v6395
      %v6397 = vpop.f32.mrb[0].mxu0
      %v6398 = vpop.f32.mrb[0].mxu0
      %v6399 = vadd.f32 0.0, %v6398
      %v6400 = vpop.f32.mrb[0].mxu0
      %6401 = vmatprep.mubr.bf16.mxu0 0
      %6402 = vmatmul.mubr.bf16.gmra.mrb[0].mxu0 %v6259
      %v6403 = vpop.f32.mrb[0].mxu0
      %v6404 = vadd.f32 0.0, %v6403
      %v6405 = vpop.f32.mrb[0].mxu0
      %v6406 = vpop.f32.mrb[0].mxu0
      %v6407 = vadd.f32 0.0, %v6406
      %v6408 = vpop.f32.mrb[0].mxu0
      %6409 = vmatprep.mubr.bf16.mxu0 0
      %6410 = vmatmul.mubr.bf16.gmra.mrb[0].mxu0 %v6262
      %v6411 = vpop.f32.mrb[0].mxu0
      %v6412 = vadd.f32 0.0, %v6411
      %v6413 = vpop.f32.mrb[0].mxu0
      %v6414 = vpop.f32.mrb[0].mxu0
      %v6415 = vadd.f32 0.0, %v6414
      %v6416 = vpop.f32.mrb[0].mxu0
      %6417 = vmatprep.mubr.bf16.mxu0 0
      %6418 = vmatmul.mubr.bf16.gmra.mrb[0].mxu0 %v6265
      %v6419 = vpop.f32.mrb[0].mxu0
      %v6420 = vadd.f32 0.0, %v6419
      %v6421 = vpop.f32.mrb[0].mxu0
      %v6422 = vpop.f32.mrb[0].mxu0
      %v6423 = vadd.f32 0.0, %v6422
      %v6424 = vpop.f32.mrb[0].mxu0
      %6425 = vmatprep.mubr.bf16.mxu0 0
      %6426 = vmatmul.mubr.bf16.gmra.mrb[0].mxu0 %v6268
      %v6427 = vpop.f32.mrb[0].mxu0
      %v6428 = vadd.f32 0.0, %v6427
      %v6429 = vpop.f32.mrb[0].mxu0
      %v6430 = vpop.f32.mrb[0].mxu0
      %v6431 = vadd.f32 0.0, %v6430
      %v6432 = vpop.f32.mrb[0].mxu0
      %6433 = vdwg.mxu0
      %v6434 = vadd.f32 %v5883, %v6308
      %v6435 = vadd.f32 %v5886, %v6311
      %v6436 = vadd.f32 %v5891, %v6316
      %v6437 = vadd.f32 %v5894, %v6319
      %v6438 = vadd.f32 %v5899, %v6324
      %v6439 = vadd.f32 %v5902, %v6327
      %v6440 = vadd.f32 %v5907, %v6332
      %v6441 = vadd.f32 %v5910, %v6335
      %v6442 = vadd.f32 %v5915, %v6340
      %v6443 = vadd.f32 %v5918, %v6343
      %v6444 = vadd.f32 %v5923, %v6348
      %v6445 = vadd.f32 %v5926, %v6351
      %v6446 = vadd.f32 %v5931, %v6356
      %v6447 = vadd.f32 %v5934, %v6359
      %v6448 = vadd.f32 %v5939, %v6364
      %v6449 = vadd.f32 %v5942, %v6367
      %v6450 = vadd.f32 %v5947, %v6372
      %v6451 = vadd.f32 %v5950, %v6375
      %v6452 = vadd.f32 %v5955, %v6380
      %v6453 = vadd.f32 %v5958, %v6383
      %v6454 = vadd.f32 %v5963, %v6388
      %v6455 = vadd.f32 %v5966, %v6391
      %v6456 = vadd.f32 %v5971, %v6396
      %v6457 = vadd.f32 %v5974, %v6399
      %v6458 = vadd.f32 %v5979, %v6404
      %v6459 = vadd.f32 %v5982, %v6407
      %v6460 = vadd.f32 %v5987, %v6412
      %v6461 = vadd.f32 %v5990, %v6415
      %v6462 = vadd.f32 %v5995, %v6420
      %v6463 = vadd.f32 %v5998, %v6423
      %v6464 = vadd.f32 %v6003, %v6428
      %v6465 = vadd.f32 %v6006, %v6431
      %s6466 = scalar_lea.vmem [#allocation2], 12
      %v6467 = vld [vmem:[%s6466] sm:$0xf]
      %v6468 = vld [vmem:[%s6466 + $0x4] sm:$0xf]
      %v6469 = vld [vmem:[%s6466 + $0xc] sm:$0xf]
      %v6470 = vld [vmem:[%s6466 + $0x10] sm:$0xf]
      %v6471 = vld [vmem:[%s6466 + $0x18] sm:$0xf]
      %v6472 = vld [vmem:[%s6466 + $0x1c] sm:$0xf]
      %v6473 = vld [vmem:[%s6466 + $0x24] sm:$0xf]
      %v6474 = vld [vmem:[%s6466 + $0x28] sm:$0xf]
      %v6475 = vld [vmem:[%s6466 + $0x30] sm:$0xf]
      %v6476 = vld [vmem:[%s6466 + $0x34] sm:$0xf]
      %v6477 = vld [vmem:[%s6466 + $0x3c] sm:$0xf]
      %v6478 = vld [vmem:[%s6466 + $0x40] sm:$0xf]
      %v6479 = vld [vmem:[%s6466 + $0x48] sm:$0xf]
      %v6480 = vld [vmem:[%s6466 + $0x4c] sm:$0xf]
      %v6481 = vld [vmem:[%s6466 + $0x54] sm:$0xf]
      %v6482 = vld [vmem:[%s6466 + $0x58] sm:$0xf]
      %v6483 = vld [vmem:[%s6466 + $0x60] sm:$0xf]
      %v6484 = vld [vmem:[%s6466 + $0x64] sm:$0xf]
      %v6485 = vld [vmem:[%s6466 + $0x6c] sm:$0xf]
      %v6486 = vld [vmem:[%s6466 + $0x70] sm:$0xf]
      %v6487 = vld [vmem:[%s6466 + $0x78] sm:$0xf]
      %v6488 = vld [vmem:[%s6466 + $0x7c] sm:$0xf]
      %v6489 = vld [vmem:[%s6466 + $0x84] sm:$0xf]
      %v6490 = vld [vmem:[%s6466 + $0x88] sm:$0xf]
      %v6491 = vld [vmem:[%s6466 + $0x90] sm:$0xf]
      %v6492 = vld [vmem:[%s6466 + $0x94] sm:$0xf]
      %v6493 = vld [vmem:[%s6466 + $0x9c] sm:$0xf]
      %v6494 = vld [vmem:[%s6466 + $0xa0] sm:$0xf]
      %v6495 = vld [vmem:[%s6466 + $0xa8] sm:$0xf]
      %v6496 = vld [vmem:[%s6466 + $0xac] sm:$0xf]
      %v6497 = vld [vmem:[%s6466 + $0xb4] sm:$0xf]
      %v6498 = vld [vmem:[%s6466 + $0xb8] sm:$0xf]
      %s6499 = scalar_lea.vmem %s3, 12
      %v6500 = vld [vmem:[%s6499] sm:$0xf]
      %v6533 = vunpack.c.l.b16 %v6467
      %v6534 = vunpack.c.l.b16 %v6468
      %v6535 = vunpack.c.l.b16 %v6469
      %v6536 = vunpack.c.l.b16 %v6470
      %v6537 = vunpack.c.l.b16 %v6471
      %v6538 = vunpack.c.l.b16 %v6472
      %v6539 = vunpack.c.l.b16 %v6473
      %v6540 = vunpack.c.l.b16 %v6474
      %v6541 = vunpack.c.l.b16 %v6475
      %v6542 = vunpack.c.l.b16 %v6476
      %v6543 = vunpack.c.l.b16 %v6477
      %v6544 = vunpack.c.l.b16 %v6478
      %v6545 = vunpack.c.l.b16 %v6479
      %v6546 = vunpack.c.l.b16 %v6480
      %v6547 = vunpack.c.l.b16 %v6481
      %v6548 = vunpack.c.l.b16 %v6482
      %v6549 = vunpack.c.l.b16 %v6483
      %v6550 = vunpack.c.l.b16 %v6484
      %v6551 = vunpack.c.l.b16 %v6485
      %v6552 = vunpack.c.l.b16 %v6486
      %v6553 = vunpack.c.l.b16 %v6487
      %v6554 = vunpack.c.l.b16 %v6488
      %v6555 = vunpack.c.l.b16 %v6489
      %v6556 = vunpack.c.l.b16 %v6490
      %v6557 = vunpack.c.l.b16 %v6491
      %v6558 = vunpack.c.l.b16 %v6492
      %v6559 = vunpack.c.l.b16 %v6493
      %v6560 = vunpack.c.l.b16 %v6494
      %v6561 = vunpack.c.l.b16 %v6495
      %v6562 = vunpack.c.l.b16 %v6496
      %v6563 = vunpack.c.l.b16 %v6497
      %v6564 = vunpack.c.l.b16 %v6498
      %v6565 = vpack.c.b16 %v6534, %v6533
      %v6566 = vpack.c.b16 %v6536, %v6535
      %v6567 = vpack.c.b16 %v6538, %v6537
      %v6568 = vpack.c.b16 %v6540, %v6539
      %v6569 = vpack.c.b16 %v6542, %v6541
      %v6570 = vpack.c.b16 %v6544, %v6543
      %v6571 = vpack.c.b16 %v6546, %v6545
      %v6572 = vpack.c.b16 %v6548, %v6547
      %v6573 = vpack.c.b16 %v6550, %v6549
      %v6574 = vpack.c.b16 %v6552, %v6551
      %v6575 = vpack.c.b16 %v6554, %v6553
      %v6576 = vpack.c.b16 %v6556, %v6555
      %v6577 = vpack.c.b16 %v6558, %v6557
      %v6578 = vpack.c.b16 %v6560, %v6559
      %v6579 = vpack.c.b16 %v6562, %v6561
      %v6580 = vpack.c.b16 %v6564, %v6563
      %v6582 = vsel %vm5503, %v6565, 0
      %v6585 = vsel %vm5503, %v6566, 0
      %v6588 = vsel %vm5503, %v6567, 0
      %v6591 = vsel %vm5503, %v6568, 0
      %v6594 = vsel %vm5503, %v6569, 0
      %v6597 = vsel %vm5503, %v6570, 0
      %v6600 = vsel %vm5503, %v6571, 0
      %v6603 = vsel %vm5503, %v6572, 0
      %v6606 = vsel %vm5503, %v6573, 0
      %v6609 = vsel %vm5503, %v6574, 0
      %v6612 = vsel %vm5503, %v6575, 0
      %v6615 = vsel %vm5503, %v6576, 0
      %v6618 = vsel %vm5503, %v6577, 0
      %v6621 = vsel %vm5503, %v6578, 0
      %v6624 = vsel %vm5503, %v6579, 0
      %v6627 = vsel %vm5503, %v6580, 0
      %v6630 = vsel %vm5552, %v6500, 0
      %6632 = vmatprep.subr.bf16.mxu0 0
      %6633 = vmatpush1.bf16.msra.mxu0 %v6630
      %6634 = vmatprep.subr.bf16.mxu0 0
      %6635 = vmatpush1.bf16.msra.mxu0 0
      %6636 = vmatprep.subr.bf16.mxu0 0
      %6637 = vmatpush1.bf16.msra.mxu0 0
      %6638 = vmatprep.subr.bf16.mxu0 0
      %6639 = vmatpush1.bf16.msra.mxu0 0
      %6640 = vmatprep.subr.bf16.mxu0 0
      %6641 = vmatpush1.bf16.msra.mxu0 0
      %6642 = vmatprep.subr.bf16.mxu0 0
      %6643 = vmatpush1.bf16.msra.mxu0 0
      %6644 = vmatprep.subr.bf16.mxu0 0
      %6645 = vmatpush1.bf16.msra.mxu0 0
      %6646 = vmatprep.subr.bf16.mxu0 0
      %6647 = vmatpush1.bf16.msra.mxu0 0
      %6648 = vmatprep.subr.bf16.mxu0 0
      %6649 = vmatpush1.bf16.msra.mxu0 0
      %6650 = vmatprep.subr.bf16.mxu0 0
      %6651 = vmatpush1.bf16.msra.mxu0 0
      %6652 = vmatprep.subr.bf16.mxu0 0
      %6653 = vmatpush1.bf16.msra.mxu0 0
      %6654 = vmatprep.subr.bf16.mxu0 0
      %6655 = vmatpush1.bf16.msra.mxu0 0
      %6656 = vmatprep.subr.bf16.mxu0 0
      %6657 = vmatpush1.bf16.msra.mxu0 0
      %6658 = vmatprep.subr.bf16.mxu0 0
      %6659 = vmatpush1.bf16.msra.mxu0 0
      %6660 = vmatprep.subr.bf16.mxu0 0
      %6661 = vmatpush1.bf16.msra.mxu0 0
      %6662 = vmatprep.subr.bf16.mxu0 0
      %6663 = vmatpush1.bf16.msra.mxu0 0
      %6664 = vmatprep.mubr.bf16.mxu0 0
      %6665 = vmatmul.mubr.bf16.gmra.mrb[0].mxu0 %v6582
      %v6666 = vpop.f32.mrb[0].mxu0
      %v6667 = vadd.f32 0.0, %v6666
      %v6668 = vpop.f32.mrb[0].mxu0
      %v6669 = vpop.f32.mrb[0].mxu0
      %v6670 = vadd.f32 0.0, %v6669
      %v6671 = vpop.f32.mrb[0].mxu0
      %6672 = vmatprep.mubr.bf16.mxu0 0
      %6673 = vmatmul.mubr.bf16.gmra.mrb[0].mxu0 %v6585
      %v6674 = vpop.f32.mrb[0].mxu0
      %v6675 = vadd.f32 0.0, %v6674
      %v6676 = vpop.f32.mrb[0].mxu0
      %v6677 = vpop.f32.mrb[0].mxu0
      %v6678 = vadd.f32 0.0, %v6677
      %v6679 = vpop.f32.mrb[0].mxu0
      %6680 = vmatprep.mubr.bf16.mxu0 0
      %6681 = vmatmul.mubr.bf16.gmra.mrb[0].mxu0 %v6588
      %v6682 = vpop.f32.mrb[0].mxu0
      %v6683 = vadd.f32 0.0, %v6682
      %v6684 = vpop.f32.mrb[0].mxu0
      %v6685 = vpop.f32.mrb[0].mxu0
      %v6686 = vadd.f32 0.0, %v6685
      %v6687 = vpop.f32.mrb[0].mxu0
      %6688 = vmatprep.mubr.bf16.mxu0 0
      %6689 = vmatmul.mubr.bf16.gmra.mrb[0].mxu0 %v6591
      %v6690 = vpop.f32.mrb[0].mxu0
      %v6691 = vadd.f32 0.0, %v6690
      %v6692 = vpop.f32.mrb[0].mxu0
      %v6693 = vpop.f32.mrb[0].mxu0
      %v6694 = vadd.f32 0.0, %v6693
      %v6695 = vpop.f32.mrb[0].mxu0
      %6696 = vmatprep.mubr.bf16.mxu0 0
      %6697 = vmatmul.mubr.bf16.gmra.mrb[0].mxu0 %v6594
      %v6698 = vpop.f32.mrb[0].mxu0
      %v6699 = vadd.f32 0.0, %v6698
      %v6700 = vpop.f32.mrb[0].mxu0
      %v6701 = vpop.f32.mrb[0].mxu0
      %v6702 = vadd.f32 0.0, %v6701
      %v6703 = vpop.f32.mrb[0].mxu0
      %6704 = vmatprep.mubr.bf16.mxu0 0
      %6705 = vmatmul.mubr.bf16.gmra.mrb[0].mxu0 %v6597
      %v6706 = vpop.f32.mrb[0].mxu0
      %v6707 = vadd.f32 0.0, %v6706
      %v6708 = vpop.f32.mrb[0].mxu0
      %v6709 = vpop.f32.mrb[0].mxu0
      %v6710 = vadd.f32 0.0, %v6709
      %v6711 = vpop.f32.mrb[0].mxu0
      %6712 = vmatprep.mubr.bf16.mxu0 0
      %6713 = vmatmul.mubr.bf16.gmra.mrb[0].mxu0 %v6600
      %v6714 = vpop.f32.mrb[0].mxu0
      %v6715 = vadd.f32 0.0, %v6714
      %v6716 = vpop.f32.mrb[0].mxu0
      %v6717 = vpop.f32.mrb[0].mxu0
      %v6718 = vadd.f32 0.0, %v6717
      %v6719 = vpop.f32.mrb[0].mxu0
      %6720 = vmatprep.mubr.bf16.mxu0 0
      %6721 = vmatmul.mubr.bf16.gmra.mrb[0].mxu0 %v6603
      %v6722 = vpop.f32.mrb[0].mxu0
      %v6723 = vadd.f32 0.0, %v6722
      %v6724 = vpop.f32.mrb[0].mxu0
      %v6725 = vpop.f32.mrb[0].mxu0
      %v6726 = vadd.f32 0.0, %v6725
      %v6727 = vpop.f32.mrb[0].mxu0
      %6728 = vmatprep.mubr.bf16.mxu0 0
      %6729 = vmatmul.mubr.bf16.gmra.mrb[0].mxu0 %v6606
      %v6730 = vpop.f32.mrb[0].mxu0
      %v6731 = vadd.f32 0.0, %v6730
      %v6732 = vpop.f32.mrb[0].mxu0
      %v6733 = vpop.f32.mrb[0].mxu0
      %v6734 = vadd.f32 0.0, %v6733
      %v6735 = vpop.f32.mrb[0].mxu0
      %6736 = vmatprep.mubr.bf16.mxu0 0
      %6737 = vmatmul.mubr.bf16.gmra.mrb[0].mxu0 %v6609
      %v6738 = vpop.f32.mrb[0].mxu0
      %v6739 = vadd.f32 0.0, %v6738
      %v6740 = vpop.f32.mrb[0].mxu0
      %v6741 = vpop.f32.mrb[0].mxu0
      %v6742 = vadd.f32 0.0, %v6741
      %v6743 = vpop.f32.mrb[0].mxu0
      %6744 = vmatprep.mubr.bf16.mxu0 0
      %6745 = vmatmul.mubr.bf16.gmra.mrb[0].mxu0 %v6612
      %v6746 = vpop.f32.mrb[0].mxu0
      %v6747 = vadd.f32 0.0, %v6746
      %v6748 = vpop.f32.mrb[0].mxu0
      %v6749 = vpop.f32.mrb[0].mxu0
      %v6750 = vadd.f32 0.0, %v6749
      %v6751 = vpop.f32.mrb[0].mxu0
      %6752 = vmatprep.mubr.bf16.mxu0 0
      %6753 = vmatmul.mubr.bf16.gmra.mrb[0].mxu0 %v6615
      %v6754 = vpop.f32.mrb[0].mxu0
      %v6755 = vadd.f32 0.0, %v6754
      %v6756 = vpop.f32.mrb[0].mxu0
      %v6757 = vpop.f32.mrb[0].mxu0
      %v6758 = vadd.f32 0.0, %v6757
      %v6759 = vpop.f32.mrb[0].mxu0
      %6760 = vmatprep.mubr.bf16.mxu0 0
      %6761 = vmatmul.mubr.bf16.gmra.mrb[0].mxu0 %v6618
      %v6762 = vpop.f32.mrb[0].mxu0
      %v6763 = vadd.f32 0.0, %v6762
      %v6764 = vpop.f32.mrb[0].mxu0
      %v6765 = vpop.f32.mrb[0].mxu0
      %v6766 = vadd.f32 0.0, %v6765
      %v6767 = vpop.f32.mrb[0].mxu0
      %6768 = vmatprep.mubr.bf16.mxu0 0
      %6769 = vmatmul.mubr.bf16.gmra.mrb[0].mxu0 %v6621
      %v6770 = vpop.f32.mrb[0].mxu0
      %v6771 = vadd.f32 0.0, %v6770
      %v6772 = vpop.f32.mrb[0].mxu0
      %v6773 = vpop.f32.mrb[0].mxu0
      %v6774 = vadd.f32 0.0, %v6773
      %v6775 = vpop.f32.mrb[0].mxu0
      %6776 = vmatprep.mubr.bf16.mxu0 0
      %6777 = vmatmul.mubr.bf16.gmra.mrb[0].mxu0 %v6624
      %v6778 = vpop.f32.mrb[0].mxu0
      %v6779 = vadd.f32 0.0, %v6778
      %v6780 = vpop.f32.mrb[0].mxu0
      %v6781 = vpop.f32.mrb[0].mxu0
      %v6782 = vadd.f32 0.0, %v6781
      %v6783 = vpop.f32.mrb[0].mxu0
      %6784 = vmatprep.mubr.bf16.mxu0 0
      %6785 = vmatmul.mubr.bf16.gmra.mrb[0].mxu0 %v6627
      %v6786 = vpop.f32.mrb[0].mxu0
      %v6787 = vadd.f32 0.0, %v6786
      %v6788 = vpop.f32.mrb[0].mxu0
      %v6789 = vpop.f32.mrb[0].mxu0
      %v6790 = vadd.f32 0.0, %v6789
      %v6791 = vpop.f32.mrb[0].mxu0
      %6792 = vdwg.mxu0
      %v6793 = vadd.f32 %v6434, %v6667
      %v6794 = vadd.f32 %v6435, %v6670
      %v6795 = vadd.f32 %v6436, %v6675
      %v6796 = vadd.f32 %v6437, %v6678
      %v6797 = vadd.f32 %v6438, %v6683
      %v6798 = vadd.f32 %v6439, %v6686
      %v6799 = vadd.f32 %v6440, %v6691
      %v6800 = vadd.f32 %v6441, %v6694
      %v6801 = vadd.f32 %v6442, %v6699
      %v6802 = vadd.f32 %v6443, %v6702
      %v6803 = vadd.f32 %v6444, %v6707
      %v6804 = vadd.f32 %v6445, %v6710
      %v6805 = vadd.f32 %v6446, %v6715
      %v6806 = vadd.f32 %v6447, %v6718
      %v6807 = vadd.f32 %v6448, %v6723
      %v6808 = vadd.f32 %v6449, %v6726
      %v6809 = vadd.f32 %v6450, %v6731
      %v6810 = vadd.f32 %v6451, %v6734
      %v6811 = vadd.f32 %v6452, %v6739
      %v6812 = vadd.f32 %v6453, %v6742
      %v6813 = vadd.f32 %v6454, %v6747
      %v6814 = vadd.f32 %v6455, %v6750
      %v6815 = vadd.f32 %v6456, %v6755
      %v6816 = vadd.f32 %v6457, %v6758
      %v6817 = vadd.f32 %v6458, %v6763
      %v6818 = vadd.f32 %v6459, %v6766
      %v6819 = vadd.f32 %v6460, %v6771
      %v6820 = vadd.f32 %v6461, %v6774
      %v6821 = vadd.f32 %v6462, %v6779
      %v6822 = vadd.f32 %v6463, %v6782
      %v6823 = vadd.f32 %v6464, %v6787
      %v6824 = vadd.f32 %v6465, %v6790
      %v6825 = vld [vmem:[%s6466] sm:$0xf]
      %v6826 = vld [vmem:[%s6466 + $0x4] sm:$0xf]
      %v6827 = vld [vmem:[%s6466 + $0x8] sm:$0x1]
      %v6828 = vld [vmem:[%s6466 + $0xc] sm:$0xf]
      %v6829 = vld [vmem:[%s6466 + $0x10] sm:$0xf]
      %v6830 = vld [vmem:[%s6466 + $0x14] sm:$0x1]
      %v6831 = vld [vmem:[%s6466 + $0x18] sm:$0xf]
      %v6832 = vld [vmem:[%s6466 + $0x1c] sm:$0xf]
      %v6833 = vld [vmem:[%s6466 + $0x20] sm:$0x1]
      %v6834 = vld [vmem:[%s6466 + $0x24] sm:$0xf]
      %v6835 = vld [vmem:[%s6466 + $0x28] sm:$0xf]
      %v6836 = vld [vmem:[%s6466 + $0x2c] sm:$0x1]
      %v6837 = vld [vmem:[%s6466 + $0x30] sm:$0xf]
      %v6838 = vld [vmem:[%s6466 + $0x34] sm:$0xf]
      %v6839 = vld [vmem:[%s6466 + $0x38] sm:$0x1]
      %v6840 = vld [vmem:[%s6466 + $0x3c] sm:$0xf]
      %v6841 = vld [vmem:[%s6466 + $0x40] sm:$0xf]
      %v6842 = vld [vmem:[%s6466 + $0x44] sm:$0x1]
      %v6843 = vld [vmem:[%s6466 + $0x48] sm:$0xf]
      %v6844 = vld [vmem:[%s6466 + $0x4c] sm:$0xf]
      %v6845 = vld [vmem:[%s6466 + $0x50] sm:$0x1]
      %v6846 = vld [vmem:[%s6466 + $0x54] sm:$0xf]
      %v6847 = vld [vmem:[%s6466 + $0x58] sm:$0xf]
      %v6848 = vld [vmem:[%s6466 + $0x5c] sm:$0x1]
      %v6849 = vld [vmem:[%s6466 + $0x60] sm:$0xf]
      %v6850 = vld [vmem:[%s6466 + $0x64] sm:$0xf]
      %v6851 = vld [vmem:[%s6466 + $0x68] sm:$0x1]
      %v6852 = vld [vmem:[%s6466 + $0x6c] sm:$0xf]
      %v6853 = vld [vmem:[%s6466 + $0x70] sm:$0xf]
      %v6854 = vld [vmem:[%s6466 + $0x74] sm:$0x1]
      %v6855 = vld [vmem:[%s6466 + $0x78] sm:$0xf]
      %v6856 = vld [vmem:[%s6466 + $0x7c] sm:$0xf]
      %v6857 = vld [vmem:[%s6466 + $0x80] sm:$0x1]
      %v6858 = vld [vmem:[%s6466 + $0x84] sm:$0xf]
      %v6859 = vld [vmem:[%s6466 + $0x88] sm:$0xf]
      %v6860 = vld [vmem:[%s6466 + $0x8c] sm:$0x1]
      %v6861 = vld [vmem:[%s6466 + $0x90] sm:$0xf]
      %v6862 = vld [vmem:[%s6466 + $0x94] sm:$0xf]
      %v6863 = vld [vmem:[%s6466 + $0x98] sm:$0x1]
      %v6864 = vld [vmem:[%s6466 + $0x9c] sm:$0xf]
      %v6865 = vld [vmem:[%s6466 + $0xa0] sm:$0xf]
      %v6866 = vld [vmem:[%s6466 + $0xa4] sm:$0x1]
      %v6867 = vld [vmem:[%s6466 + $0xa8] sm:$0xf]
      %v6868 = vld [vmem:[%s6466 + $0xac] sm:$0xf]
      %v6869 = vld [vmem:[%s6466 + $0xb0] sm:$0x1]
      %v6870 = vld [vmem:[%s6466 + $0xb4] sm:$0xf]
      %v6871 = vld [vmem:[%s6466 + $0xb8] sm:$0xf]
      %v6872 = vld [vmem:[%s6466 + $0xbc] sm:$0x1]
      %v6874 = vshrl.u32 %v6825, 16
      %v6876 = vrot.slane %v6874, 4
      %v6877 = vshll.u32 %v6825, 16
      %v6879 = vrot.slane %v6877, 5
      %v6880 = vor.u32 %v6876, %v6879
      %v6881 = vrot.slane %v6880, 4
      %v6883 = vshll.u32 %v6826, 16
      %v6885 = vrot.slane %v6883, 5
      %v6886 = vsel %vm5068, %v6881, %v6885
      %v6887 = vshrl.u32 %v6826, 16
      %v6889 = vrot.slane %v6887, 4
      %v6890 = vor.u32 %v6889, %v6885
      %v6891 = vrot.slane %v6890, 4
      %v6893 = vshll.u32 %v6827, 16
      %v6895 = vrot.slane %v6893, 5
      %v6896 = vsel %vm5068, %v6891, %v6895
      %v6898 = vshrl.u32 %v6828, 16
      %v6900 = vrot.slane %v6898, 4
      %v6901 = vshll.u32 %v6828, 16
      %v6903 = vrot.slane %v6901, 5
      %v6904 = vor.u32 %v6900, %v6903
      %v6905 = vrot.slane %v6904, 4
      %v6907 = vshll.u32 %v6829, 16
      %v6909 = vrot.slane %v6907, 5
      %v6910 = vsel %vm5068, %v6905, %v6909
      %v6911 = vshrl.u32 %v6829, 16
      %v6913 = vrot.slane %v6911, 4
      %v6914 = vor.u32 %v6913, %v6909
      %v6915 = vrot.slane %v6914, 4
      %v6917 = vshll.u32 %v6830, 16
      %v6919 = vrot.slane %v6917, 5
      %v6920 = vsel %vm5068, %v6915, %v6919
      %v6922 = vshrl.u32 %v6831, 16
      %v6924 = vrot.slane %v6922, 4
      %v6925 = vshll.u32 %v6831, 16
      %v6927 = vrot.slane %v6925, 5
      %v6928 = vor.u32 %v6924, %v6927
      %v6929 = vrot.slane %v6928, 4
      %v6931 = vshll.u32 %v6832, 16
      %v6933 = vrot.slane %v6931, 5
      %v6934 = vsel %vm5068, %v6929, %v6933
      %v6935 = vshrl.u32 %v6832, 16
      %v6937 = vrot.slane %v6935, 4
      %v6938 = vor.u32 %v6937, %v6933
      %v6939 = vrot.slane %v6938, 4
      %v6941 = vshll.u32 %v6833, 16
      %v6943 = vrot.slane %v6941, 5
      %v6944 = vsel %vm5068, %v6939, %v6943
      %v6946 = vshrl.u32 %v6834, 16
      %v6948 = vrot.slane %v6946, 4
      %v6949 = vshll.u32 %v6834, 16
      %v6951 = vrot.slane %v6949, 5
      %v6952 = vor.u32 %v6948, %v6951
      %v6953 = vrot.slane %v6952, 4
      %v6955 = vshll.u32 %v6835, 16
      %v6957 = vrot.slane %v6955, 5
      %v6958 = vsel %vm5068, %v6953, %v6957
      %v6959 = vshrl.u32 %v6835, 16
      %v6961 = vrot.slane %v6959, 4
      %v6962 = vor.u32 %v6961, %v6957
      %v6963 = vrot.slane %v6962, 4
      %v6965 = vshll.u32 %v6836, 16
      %v6967 = vrot.slane %v6965, 5
      %v6968 = vsel %vm5068, %v6963, %v6967
      %v6970 = vshrl.u32 %v6837, 16
      %v6972 = vrot.slane %v6970, 4
      %v6973 = vshll.u32 %v6837, 16
      %v6975 = vrot.slane %v6973, 5
      %v6976 = vor.u32 %v6972, %v6975
      %v6977 = vrot.slane %v6976, 4
      %v6979 = vshll.u32 %v6838, 16
      %v6981 = vrot.slane %v6979, 5
      %v6982 = vsel %vm5068, %v6977, %v6981
      %v6983 = vshrl.u32 %v6838, 16
      %v6985 = vrot.slane %v6983, 4
      %v6986 = vor.u32 %v6985, %v6981
      %v6987 = vrot.slane %v6986, 4
      %v6989 = vshll.u32 %v6839, 16
      %v6991 = vrot.slane %v6989, 5
      %v6992 = vsel %vm5068, %v6987, %v6991
      %v6994 = vshrl.u32 %v6840, 16
      %v6996 = vrot.slane %v6994, 4
      %v6997 = vshll.u32 %v6840, 16
      %v6999 = vrot.slane %v6997, 5
      %v7000 = vor.u32 %v6996, %v6999
      %v7001 = vrot.slane %v7000, 4
      %v7003 = vshll.u32 %v6841, 16
      %v7005 = vrot.slane %v7003, 5
      %v7006 = vsel %vm5068, %v7001, %v7005
      %v7007 = vshrl.u32 %v6841, 16
      %v7009 = vrot.slane %v7007, 4
      %v7010 = vor.u32 %v7009, %v7005
      %v7011 = vrot.slane %v7010, 4
      %v7013 = vshll.u32 %v6842, 16
      %v7015 = vrot.slane %v7013, 5
      %v7016 = vsel %vm5068, %v7011, %v7015
      %v7018 = vshrl.u32 %v6843, 16
      %v7020 = vrot.slane %v7018, 4
      %v7021 = vshll.u32 %v6843, 16
      %v7023 = vrot.slane %v7021, 5
      %v7024 = vor.u32 %v7020, %v7023
      %v7025 = vrot.slane %v7024, 4
      %v7027 = vshll.u32 %v6844, 16
      %v7029 = vrot.slane %v7027, 5
      %v7030 = vsel %vm5068, %v7025, %v7029
      %v7031 = vshrl.u32 %v6844, 16
      %v7033 = vrot.slane %v7031, 4
      %v7034 = vor.u32 %v7033, %v7029
      %v7035 = vrot.slane %v7034, 4
      %v7037 = vshll.u32 %v6845, 16
      %v7039 = vrot.slane %v7037, 5
      %v7040 = vsel %vm5068, %v7035, %v7039
      %v7042 = vshrl.u32 %v6846, 16
      %v7044 = vrot.slane %v7042, 4
      %v7045 = vshll.u32 %v6846, 16
      %v7047 = vrot.slane %v7045, 5
      %v7048 = vor.u32 %v7044, %v7047
      %v7049 = vrot.slane %v7048, 4
      %v7051 = vshll.u32 %v6847, 16
      %v7053 = vrot.slane %v7051, 5
      %v7054 = vsel %vm5068, %v7049, %v7053
      %v7055 = vshrl.u32 %v6847, 16
      %v7057 = vrot.slane %v7055, 4
      %v7058 = vor.u32 %v7057, %v7053
      %v7059 = vrot.slane %v7058, 4
      %v7061 = vshll.u32 %v6848, 16
      %v7063 = vrot.slane %v7061, 5
      %v7064 = vsel %vm5068, %v7059, %v7063
      %v7066 = vshrl.u32 %v6849, 16
      %v7068 = vrot.slane %v7066, 4
      %v7069 = vshll.u32 %v6849, 16
      %v7071 = vrot.slane %v7069, 5
      %v7072 = vor.u32 %v7068, %v7071
      %v7073 = vrot.slane %v7072, 4
      %v7075 = vshll.u32 %v6850, 16
      %v7077 = vrot.slane %v7075, 5
      %v7078 = vsel %vm5068, %v7073, %v7077
      %v7079 = vshrl.u32 %v6850, 16
      %v7081 = vrot.slane %v7079, 4
      %v7082 = vor.u32 %v7081, %v7077
      %v7083 = vrot.slane %v7082, 4
      %v7085 = vshll.u32 %v6851, 16
      %v7087 = vrot.slane %v7085, 5
      %v7088 = vsel %vm5068, %v7083, %v7087
      %v7090 = vshrl.u32 %v6852, 16
      %v7092 = vrot.slane %v7090, 4
      %v7093 = vshll.u32 %v6852, 16
      %v7095 = vrot.slane %v7093, 5
      %v7096 = vor.u32 %v7092, %v7095
      %v7097 = vrot.slane %v7096, 4
      %v7099 = vshll.u32 %v6853, 16
      %v7101 = vrot.slane %v7099, 5
      %v7102 = vsel %vm5068, %v7097, %v7101
      %v7103 = vshrl.u32 %v6853, 16
      %v7105 = vrot.slane %v7103, 4
      %v7106 = vor.u32 %v7105, %v7101
      %v7107 = vrot.slane %v7106, 4
      %v7109 = vshll.u32 %v6854, 16
      %v7111 = vrot.slane %v7109, 5
      %v7112 = vsel %vm5068, %v7107, %v7111
      %v7114 = vshrl.u32 %v6855, 16
      %v7116 = vrot.slane %v7114, 4
      %v7117 = vshll.u32 %v6855, 16
      %v7119 = vrot.slane %v7117, 5
      %v7120 = vor.u32 %v7116, %v7119
      %v7121 = vrot.slane %v7120, 4
      %v7123 = vshll.u32 %v6856, 16
      %v7125 = vrot.slane %v7123, 5
      %v7126 = vsel %vm5068, %v7121, %v7125
      %v7127 = vshrl.u32 %v6856, 16
      %v7129 = vrot.slane %v7127, 4
      %v7130 = vor.u32 %v7129, %v7125
      %v7131 = vrot.slane %v7130, 4
      %v7133 = vshll.u32 %v6857, 16
      %v7135 = vrot.slane %v7133, 5
      %v7136 = vsel %vm5068, %v7131, %v7135
      %v7138 = vshrl.u32 %v6858, 16
      %v7140 = vrot.slane %v7138, 4
      %v7141 = vshll.u32 %v6858, 16
      %v7143 = vrot.slane %v7141, 5
      %v7144 = vor.u32 %v7140, %v7143
      %v7145 = vrot.slane %v7144, 4
      %v7147 = vshll.u32 %v6859, 16
      %v7149 = vrot.slane %v7147, 5
      %v7150 = vsel %vm5068, %v7145, %v7149
      %v7151 = vshrl.u32 %v6859, 16
      %v7153 = vrot.slane %v7151, 4
      %v7154 = vor.u32 %v7153, %v7149
      %v7155 = vrot.slane %v7154, 4
      %v7157 = vshll.u32 %v6860, 16
      %v7159 = vrot.slane %v7157, 5
      %v7160 = vsel %vm5068, %v7155, %v7159
      %v7162 = vshrl.u32 %v6861, 16
      %v7164 = vrot.slane %v7162, 4
      %v7165 = vshll.u32 %v6861, 16
      %v7167 = vrot.slane %v7165, 5
      %v7168 = vor.u32 %v7164, %v7167
      %v7169 = vrot.slane %v7168, 4
      %v7171 = vshll.u32 %v6862, 16
      %v7173 = vrot.slane %v7171, 5
      %v7174 = vsel %vm5068, %v7169, %v7173
      %v7175 = vshrl.u32 %v6862, 16
      %v7177 = vrot.slane %v7175, 4
      %v7178 = vor.u32 %v7177, %v7173
      %v7179 = vrot.slane %v7178, 4
      %v7181 = vshll.u32 %v6863, 16
      %v7183 = vrot.slane %v7181, 5
      %v7184 = vsel %vm5068, %v7179, %v7183
      %v7186 = vshrl.u32 %v6864, 16
      %v7188 = vrot.slane %v7186, 4
      %v7189 = vshll.u32 %v6864, 16
      %v7191 = vrot.slane %v7189, 5
      %v7192 = vor.u32 %v7188, %v7191
      %v7193 = vrot.slane %v7192, 4
      %v7195 = vshll.u32 %v6865, 16
      %v7197 = vrot.slane %v7195, 5
      %v7198 = vsel %vm5068, %v7193, %v7197
      %v7199 = vshrl.u32 %v6865, 16
      %v7201 = vrot.slane %v7199, 4
      %v7202 = vor.u32 %v7201, %v7197
      %v7203 = vrot.slane %v7202, 4
      %v7205 = vshll.u32 %v6866, 16
      %v7207 = vrot.slane %v7205, 5
      %v7208 = vsel %vm5068, %v7203, %v7207
      %v7210 = vshrl.u32 %v6867, 16
      %v7212 = vrot.slane %v7210, 4
      %v7213 = vshll.u32 %v6867, 16
      %v7215 = vrot.slane %v7213, 5
      %v7216 = vor.u32 %v7212, %v7215
      %v7217 = vrot.slane %v7216, 4
      %v7219 = vshll.u32 %v6868, 16
      %v7221 = vrot.slane %v7219, 5
      %v7222 = vsel %vm5068, %v7217, %v7221
      %v7223 = vshrl.u32 %v6868, 16
      %v7225 = vrot.slane %v7223, 4
      %v7226 = vor.u32 %v7225, %v7221
      %v7227 = vrot.slane %v7226, 4
      %v7229 = vshll.u32 %v6869, 16
      %v7231 = vrot.slane %v7229, 5
      %v7232 = vsel %vm5068, %v7227, %v7231
      %v7234 = vshrl.u32 %v6870, 16
      %v7236 = vrot.slane %v7234, 4
      %v7237 = vshll.u32 %v6870, 16
      %v7239 = vrot.slane %v7237, 5
      %v7240 = vor.u32 %v7236, %v7239
      %v7241 = vrot.slane %v7240, 4
      %v7243 = vshll.u32 %v6871, 16
      %v7245 = vrot.slane %v7243, 5
      %v7246 = vsel %vm5068, %v7241, %v7245
      %v7247 = vshrl.u32 %v6871, 16
      %v7249 = vrot.slane %v7247, 4
      %v7250 = vor.u32 %v7249, %v7245
      %v7251 = vrot.slane %v7250, 4
      %v7253 = vshll.u32 %v6872, 16
      %v7255 = vrot.slane %v7253, 5
      %v7256 = vsel %vm5068, %v7251, %v7255
      %s7257 = scalar_lea.vmem %s3, 16
      %v7258 = vld [vmem:[%s7257] sm:$0xf]
      %v7259 = vunpack.c.l.b16 %v6886
      %v7260 = vunpack.c.l.b16 %v6896
      %v7261 = vunpack.c.l.b16 %v6910
      %v7262 = vunpack.c.l.b16 %v6920
      %v7263 = vunpack.c.l.b16 %v6934
      %v7264 = vunpack.c.l.b16 %v6944
      %v7265 = vunpack.c.l.b16 %v6958
      %v7266 = vunpack.c.l.b16 %v6968
      %v7267 = vunpack.c.l.b16 %v6982
      %v7268 = vunpack.c.l.b16 %v6992
      %v7269 = vunpack.c.l.b16 %v7006
      %v7270 = vunpack.c.l.b16 %v7016
      %v7271 = vunpack.c.l.b16 %v7030
      %v7272 = vunpack.c.l.b16 %v7040
      %v7273 = vunpack.c.l.b16 %v7054
      %v7274 = vunpack.c.l.b16 %v7064
      %v7275 = vunpack.c.l.b16 %v7078
      %v7276 = vunpack.c.l.b16 %v7088
      %v7277 = vunpack.c.l.b16 %v7102
      %v7278 = vunpack.c.l.b16 %v7112
      %v7279 = vunpack.c.l.b16 %v7126
      %v7280 = vunpack.c.l.b16 %v7136
      %v7281 = vunpack.c.l.b16 %v7150
      %v7282 = vunpack.c.l.b16 %v7160
      %v7283 = vunpack.c.l.b16 %v7174
      %v7284 = vunpack.c.l.b16 %v7184
      %v7285 = vunpack.c.l.b16 %v7198
      %v7286 = vunpack.c.l.b16 %v7208
      %v7287 = vunpack.c.l.b16 %v7222
      %v7288 = vunpack.c.l.b16 %v7232
      %v7289 = vunpack.c.l.b16 %v7246
      %v7290 = vunpack.c.l.b16 %v7256
      %v7291 = vpack.c.b16 %v7260, %v7259
      %v7292 = vpack.c.b16 %v7262, %v7261
      %v7293 = vpack.c.b16 %v7264, %v7263
      %v7294 = vpack.c.b16 %v7266, %v7265
      %v7295 = vpack.c.b16 %v7268, %v7267
      %v7296 = vpack.c.b16 %v7270, %v7269
      %v7297 = vpack.c.b16 %v7272, %v7271
      %v7298 = vpack.c.b16 %v7274, %v7273
      %v7299 = vpack.c.b16 %v7276, %v7275
      %v7300 = vpack.c.b16 %v7278, %v7277
      %v7301 = vpack.c.b16 %v7280, %v7279
      %v7302 = vpack.c.b16 %v7282, %v7281
      %v7303 = vpack.c.b16 %v7284, %v7283
      %v7304 = vpack.c.b16 %v7286, %v7285
      %v7305 = vpack.c.b16 %v7288, %v7287
      %v7306 = vpack.c.b16 %v7290, %v7289
      %v7308 = vsel %vm5503, %v7291, 0
      %v7311 = vsel %vm5503, %v7292, 0
      %v7314 = vsel %vm5503, %v7293, 0
      %v7317 = vsel %vm5503, %v7294, 0
      %v7320 = vsel %vm5503, %v7295, 0
      %v7323 = vsel %vm5503, %v7296, 0
      %v7326 = vsel %vm5503, %v7297, 0
      %v7329 = vsel %vm5503, %v7298, 0
      %v7332 = vsel %vm5503, %v7299, 0
      %v7335 = vsel %vm5503, %v7300, 0
      %v7338 = vsel %vm5503, %v7301, 0
      %v7341 = vsel %vm5503, %v7302, 0
      %v7344 = vsel %vm5503, %v7303, 0
      %v7347 = vsel %vm5503, %v7304, 0
      %v7350 = vsel %vm5503, %v7305, 0
      %v7353 = vsel %vm5503, %v7306, 0
      %v7356 = vsel %vm5552, %v7258, 0
      %7358 = vmatprep.subr.bf16.mxu0 0
      %7359 = vmatpush1.bf16.msra.mxu0 %v7356
      %7360 = vmatprep.subr.bf16.mxu0 0
      %7361 = vmatpush1.bf16.msra.mxu0 0
      %7362 = vmatprep.subr.bf16.mxu0 0
      %7363 = vmatpush1.bf16.msra.mxu0 0
      %7364 = vmatprep.subr.bf16.mxu0 0
      %7365 = vmatpush1.bf16.msra.mxu0 0
      %7366 = vmatprep.subr.bf16.mxu0 0
      %7367 = vmatpush1.bf16.msra.mxu0 0
      %7368 = vmatprep.subr.bf16.mxu0 0
      %7369 = vmatpush1.bf16.msra.mxu0 0
      %7370 = vmatprep.subr.bf16.mxu0 0
      %7371 = vmatpush1.bf16.msra.mxu0 0
      %7372 = vmatprep.subr.bf16.mxu0 0
      %7373 = vmatpush1.bf16.msra.mxu0 0
      %7374 = vmatprep.subr.bf16.mxu0 0
      %7375 = vmatpush1.bf16.msra.mxu0 0
      %7376 = vmatprep.subr.bf16.mxu0 0
      %7377 = vmatpush1.bf16.msra.mxu0 0
      %7378 = vmatprep.subr.bf16.mxu0 0
      %7379 = vmatpush1.bf16.msra.mxu0 0
      %7380 = vmatprep.subr.bf16.mxu0 0
      %7381 = vmatpush1.bf16.msra.mxu0 0
      %7382 = vmatprep.subr.bf16.mxu0 0
      %7383 = vmatpush1.bf16.msra.mxu0 0
      %7384 = vmatprep.subr.bf16.mxu0 0
      %7385 = vmatpush1.bf16.msra.mxu0 0
      %7386 = vmatprep.subr.bf16.mxu0 0
      %7387 = vmatpush1.bf16.msra.mxu0 0
      %7388 = vmatprep.subr.bf16.mxu0 0
      %7389 = vmatpush1.bf16.msra.mxu0 0
      %7390 = vmatprep.mubr.bf16.mxu0 0
      %7391 = vmatmul.mubr.bf16.gmra.mrb[0].mxu0 %v7308
      %v7392 = vpop.f32.mrb[0].mxu0
      %v7393 = vadd.f32 0.0, %v7392
      %v7394 = vpop.f32.mrb[0].mxu0
      %v7395 = vpop.f32.mrb[0].mxu0
      %v7396 = vadd.f32 0.0, %v7395
      %v7397 = vpop.f32.mrb[0].mxu0
      %7398 = vmatprep.mubr.bf16.mxu0 0
      %7399 = vmatmul.mubr.bf16.gmra.mrb[0].mxu0 %v7311
      %v7400 = vpop.f32.mrb[0].mxu0
      %v7401 = vadd.f32 0.0, %v7400
      %v7402 = vpop.f32.mrb[0].mxu0
      %v7403 = vpop.f32.mrb[0].mxu0
      %v7404 = vadd.f32 0.0, %v7403
      %v7405 = vpop.f32.mrb[0].mxu0
      %7406 = vmatprep.mubr.bf16.mxu0 0
      %7407 = vmatmul.mubr.bf16.gmra.mrb[0].mxu0 %v7314
      %v7408 = vpop.f32.mrb[0].mxu0
      %v7409 = vadd.f32 0.0, %v7408
      %v7410 = vpop.f32.mrb[0].mxu0
      %v7411 = vpop.f32.mrb[0].mxu0
      %v7412 = vadd.f32 0.0, %v7411
      %v7413 = vpop.f32.mrb[0].mxu0
      %7414 = vmatprep.mubr.bf16.mxu0 0
      %7415 = vmatmul.mubr.bf16.gmra.mrb[0].mxu0 %v7317
      %v7416 = vpop.f32.mrb[0].mxu0
      %v7417 = vadd.f32 0.0, %v7416
      %v7418 = vpop.f32.mrb[0].mxu0
      %v7419 = vpop.f32.mrb[0].mxu0
      %v7420 = vadd.f32 0.0, %v7419
      %v7421 = vpop.f32.mrb[0].mxu0
      %7422 = vmatprep.mubr.bf16.mxu0 0
      %7423 = vmatmul.mubr.bf16.gmra.mrb[0].mxu0 %v7320
      %v7424 = vpop.f32.mrb[0].mxu0
      %v7425 = vadd.f32 0.0, %v7424
      %v7426 = vpop.f32.mrb[0].mxu0
      %v7427 = vpop.f32.mrb[0].mxu0
      %v7428 = vadd.f32 0.0, %v7427
      %v7429 = vpop.f32.mrb[0].mxu0
      %7430 = vmatprep.mubr.bf16.mxu0 0
      %7431 = vmatmul.mubr.bf16.gmra.mrb[0].mxu0 %v7323
      %v7432 = vpop.f32.mrb[0].mxu0
      %v7433 = vadd.f32 0.0, %v7432
      %v7434 = vpop.f32.mrb[0].mxu0
      %v7435 = vpop.f32.mrb[0].mxu0
      %v7436 = vadd.f32 0.0, %v7435
      %v7437 = vpop.f32.mrb[0].mxu0
      %7438 = vmatprep.mubr.bf16.mxu0 0
      %7439 = vmatmul.mubr.bf16.gmra.mrb[0].mxu0 %v7326
      %v7440 = vpop.f32.mrb[0].mxu0
      %v7441 = vadd.f32 0.0, %v7440
      %v7442 = vpop.f32.mrb[0].mxu0
      %v7443 = vpop.f32.mrb[0].mxu0
      %v7444 = vadd.f32 0.0, %v7443
      %v7445 = vpop.f32.mrb[0].mxu0
      %7446 = vmatprep.mubr.bf16.mxu0 0
      %7447 = vmatmul.mubr.bf16.gmra.mrb[0].mxu0 %v7329
      %v7448 = vpop.f32.mrb[0].mxu0
      %v7449 = vadd.f32 0.0, %v7448
      %v7450 = vpop.f32.mrb[0].mxu0
      %v7451 = vpop.f32.mrb[0].mxu0
      %v7452 = vadd.f32 0.0, %v7451
      %v7453 = vpop.f32.mrb[0].mxu0
      %7454 = vmatprep.mubr.bf16.mxu0 0
      %7455 = vmatmul.mubr.bf16.gmra.mrb[0].mxu0 %v7332
      %v7456 = vpop.f32.mrb[0].mxu0
      %v7457 = vadd.f32 0.0, %v7456
      %v7458 = vpop.f32.mrb[0].mxu0
      %v7459 = vpop.f32.mrb[0].mxu0
      %v7460 = vadd.f32 0.0, %v7459
      %v7461 = vpop.f32.mrb[0].mxu0
      %7462 = vmatprep.mubr.bf16.mxu0 0
      %7463 = vmatmul.mubr.bf16.gmra.mrb[0].mxu0 %v7335
      %v7464 = vpop.f32.mrb[0].mxu0
      %v7465 = vadd.f32 0.0, %v7464
      %v7466 = vpop.f32.mrb[0].mxu0
      %v7467 = vpop.f32.mrb[0].mxu0
      %v7468 = vadd.f32 0.0, %v7467
      %v7469 = vpop.f32.mrb[0].mxu0
      %7470 = vmatprep.mubr.bf16.mxu0 0
      %7471 = vmatmul.mubr.bf16.gmra.mrb[0].mxu0 %v7338
      %v7472 = vpop.f32.mrb[0].mxu0
      %v7473 = vadd.f32 0.0, %v7472
      %v7474 = vpop.f32.mrb[0].mxu0
      %v7475 = vpop.f32.mrb[0].mxu0
      %v7476 = vadd.f32 0.0, %v7475
      %v7477 = vpop.f32.mrb[0].mxu0
      %7478 = vmatprep.mubr.bf16.mxu0 0
      %7479 = vmatmul.mubr.bf16.gmra.mrb[0].mxu0 %v7341
      %v7480 = vpop.f32.mrb[0].mxu0
      %v7481 = vadd.f32 0.0, %v7480
      %v7482 = vpop.f32.mrb[0].mxu0
      %v7483 = vpop.f32.mrb[0].mxu0
      %v7484 = vadd.f32 0.0, %v7483
      %v7485 = vpop.f32.mrb[0].mxu0
      %7486 = vmatprep.mubr.bf16.mxu0 0
      %7487 = vmatmul.mubr.bf16.gmra.mrb[0].mxu0 %v7344
      %v7488 = vpop.f32.mrb[0].mxu0
      %v7489 = vadd.f32 0.0, %v7488
      %v7490 = vpop.f32.mrb[0].mxu0
      %v7491 = vpop.f32.mrb[0].mxu0
      %v7492 = vadd.f32 0.0, %v7491
      %v7493 = vpop.f32.mrb[0].mxu0
      %7494 = vmatprep.mubr.bf16.mxu0 0
      %7495 = vmatmul.mubr.bf16.gmra.mrb[0].mxu0 %v7347
      %v7496 = vpop.f32.mrb[0].mxu0
      %v7497 = vadd.f32 0.0, %v7496
      %v7498 = vpop.f32.mrb[0].mxu0
      %v7499 = vpop.f32.mrb[0].mxu0
      %v7500 = vadd.f32 0.0, %v7499
      %v7501 = vpop.f32.mrb[0].mxu0
      %7502 = vmatprep.mubr.bf16.mxu0 0
      %7503 = vmatmul.mubr.bf16.gmra.mrb[0].mxu0 %v7350
      %v7504 = vpop.f32.mrb[0].mxu0
      %v7505 = vadd.f32 0.0, %v7504
      %v7506 = vpop.f32.mrb[0].mxu0
      %v7507 = vpop.f32.mrb[0].mxu0
      %v7508 = vadd.f32 0.0, %v7507
      %v7509 = vpop.f32.mrb[0].mxu0
      %7510 = vmatprep.mubr.bf16.mxu0 0
      %7511 = vmatmul.mubr.bf16.gmra.mrb[0].mxu0 %v7353
      %v7512 = vpop.f32.mrb[0].mxu0
      %v7513 = vadd.f32 0.0, %v7512
      %v7514 = vpop.f32.mrb[0].mxu0
      %v7515 = vpop.f32.mrb[0].mxu0
      %v7516 = vadd.f32 0.0, %v7515
      %v7517 = vpop.f32.mrb[0].mxu0
      %7518 = vdwg.mxu0
      %v7519 = vadd.f32 %v6793, %v7393
      %v7520 = vadd.f32 %v6794, %v7396
      %v7521 = vadd.f32 %v6795, %v7401
      %v7522 = vadd.f32 %v6796, %v7404
      %v7523 = vadd.f32 %v6797, %v7409
      %v7524 = vadd.f32 %v6798, %v7412
      %v7525 = vadd.f32 %v6799, %v7417
      %v7526 = vadd.f32 %v6800, %v7420
      %v7527 = vadd.f32 %v6801, %v7425
      %v7528 = vadd.f32 %v6802, %v7428
      %v7529 = vadd.f32 %v6803, %v7433
      %v7530 = vadd.f32 %v6804, %v7436
      %v7531 = vadd.f32 %v6805, %v7441
      %v7532 = vadd.f32 %v6806, %v7444
      %v7533 = vadd.f32 %v6807, %v7449
      %v7534 = vadd.f32 %v6808, %v7452
      %v7535 = vadd.f32 %v6809, %v7457
      %v7536 = vadd.f32 %v6810, %v7460
      %v7537 = vadd.f32 %v6811, %v7465
      %v7538 = vadd.f32 %v6812, %v7468
      %v7539 = vadd.f32 %v6813, %v7473
      %v7540 = vadd.f32 %v6814, %v7476
      %v7541 = vadd.f32 %v6815, %v7481
      %v7542 = vadd.f32 %v6816, %v7484
      %v7543 = vadd.f32 %v6817, %v7489
      %v7544 = vadd.f32 %v6818, %v7492
      %v7545 = vadd.f32 %v6819, %v7497
      %v7546 = vadd.f32 %v6820, %v7500
      %v7547 = vadd.f32 %v6821, %v7505
      %v7548 = vadd.f32 %v6822, %v7508
      %v7549 = vadd.f32 %v6823, %v7513
      %v7550 = vadd.f32 %v6824, %v7516
      %v7551 = vld [vmem:[%s6466] sm:$0xe]
      %v7552 = vld [vmem:[%s6466 + $0xc] sm:$0xe]
      %v7553 = vld [vmem:[%s6466 + $0x18] sm:$0xe]
      %v7554 = vld [vmem:[%s6466 + $0x24] sm:$0xe]
      %v7555 = vld [vmem:[%s6466 + $0x30] sm:$0xe]
      %v7556 = vld [vmem:[%s6466 + $0x3c] sm:$0xe]
      %v7557 = vld [vmem:[%s6466 + $0x48] sm:$0xe]
      %v7558 = vld [vmem:[%s6466 + $0x54] sm:$0xe]
      %v7559 = vld [vmem:[%s6466 + $0x60] sm:$0xe]
      %v7560 = vld [vmem:[%s6466 + $0x6c] sm:$0xe]
      %v7561 = vld [vmem:[%s6466 + $0x78] sm:$0xe]
      %v7562 = vld [vmem:[%s6466 + $0x84] sm:$0xe]
      %v7563 = vld [vmem:[%s6466 + $0x90] sm:$0xe]
      %v7564 = vld [vmem:[%s6466 + $0x9c] sm:$0xe]
      %v7565 = vld [vmem:[%s6466 + $0xa8] sm:$0xe]
      %v7566 = vld [vmem:[%s6466 + $0xb4] sm:$0xe]
      %v7615 = vrot.slane %v7551, 5
      %v7616 = vrot.slane %v7615, 4
      %v7617 = vrot.slane %v6826, 5
      %v7618 = vsel %vm6059, %v7616, %v7617
      %v7619 = vrot.slane %v7617, 4
      %v7620 = vrot.slane %v6827, 5
      %v7621 = vsel %vm6059, %v7619, %v7620
      %v7622 = vrot.slane %v7552, 5
      %v7623 = vrot.slane %v7622, 4
      %v7624 = vrot.slane %v6829, 5
      %v7625 = vsel %vm6059, %v7623, %v7624
      %v7626 = vrot.slane %v7624, 4
      %v7627 = vrot.slane %v6830, 5
      %v7628 = vsel %vm6059, %v7626, %v7627
      %v7629 = vrot.slane %v7553, 5
      %v7630 = vrot.slane %v7629, 4
      %v7631 = vrot.slane %v6832, 5
      %v7632 = vsel %vm6059, %v7630, %v7631
      %v7633 = vrot.slane %v7631, 4
      %v7634 = vrot.slane %v6833, 5
      %v7635 = vsel %vm6059, %v7633, %v7634
      %v7636 = vrot.slane %v7554, 5
      %v7637 = vrot.slane %v7636, 4
      %v7638 = vrot.slane %v6835, 5
      %v7639 = vsel %vm6059, %v7637, %v7638
      %v7640 = vrot.slane %v7638, 4
      %v7641 = vrot.slane %v6836, 5
      %v7642 = vsel %vm6059, %v7640, %v7641
      %v7643 = vrot.slane %v7555, 5
      %v7644 = vrot.slane %v7643, 4
      %v7645 = vrot.slane %v6838, 5
      %v7646 = vsel %vm6059, %v7644, %v7645
      %v7647 = vrot.slane %v7645, 4
      %v7648 = vrot.slane %v6839, 5
      %v7649 = vsel %vm6059, %v7647, %v7648
      %v7650 = vrot.slane %v7556, 5
      %v7651 = vrot.slane %v7650, 4
      %v7652 = vrot.slane %v6841, 5
      %v7653 = vsel %vm6059, %v7651, %v7652
      %v7654 = vrot.slane %v7652, 4
      %v7655 = vrot.slane %v6842, 5
      %v7656 = vsel %vm6059, %v7654, %v7655
      %v7657 = vrot.slane %v7557, 5
      %v7658 = vrot.slane %v7657, 4
      %v7659 = vrot.slane %v6844, 5
      %v7660 = vsel %vm6059, %v7658, %v7659
      %v7661 = vrot.slane %v7659, 4
      %v7662 = vrot.slane %v6845, 5
      %v7663 = vsel %vm6059, %v7661, %v7662
      %v7664 = vrot.slane %v7558, 5
      %v7665 = vrot.slane %v7664, 4
      %v7666 = vrot.slane %v6847, 5
      %v7667 = vsel %vm6059, %v7665, %v7666
      %v7668 = vrot.slane %v7666, 4
      %v7669 = vrot.slane %v6848, 5
      %v7670 = vsel %vm6059, %v7668, %v7669
      %v7671 = vrot.slane %v7559, 5
      %v7672 = vrot.slane %v7671, 4
      %v7673 = vrot.slane %v6850, 5
      %v7674 = vsel %vm6059, %v7672, %v7673
      %v7675 = vrot.slane %v7673, 4
      %v7676 = vrot.slane %v6851, 5
      %v7677 = vsel %vm6059, %v7675, %v7676
      %v7678 = vrot.slane %v7560, 5
      %v7679 = vrot.slane %v7678, 4
      %v7680 = vrot.slane %v6853, 5
      %v7681 = vsel %vm6059, %v7679, %v7680
      %v7682 = vrot.slane %v7680, 4
      %v7683 = vrot.slane %v6854, 5
      %v7684 = vsel %vm6059, %v7682, %v7683
      %v7685 = vrot.slane %v7561, 5
      %v7686 = vrot.slane %v7685, 4
      %v7687 = vrot.slane %v6856, 5
      %v7688 = vsel %vm6059, %v7686, %v7687
      %v7689 = vrot.slane %v7687, 4
      %v7690 = vrot.slane %v6857, 5
      %v7691 = vsel %vm6059, %v7689, %v7690
      %v7692 = vrot.slane %v7562, 5
      %v7693 = vrot.slane %v7692, 4
      %v7694 = vrot.slane %v6859, 5
      %v7695 = vsel %vm6059, %v7693, %v7694
      %v7696 = vrot.slane %v7694, 4
      %v7697 = vrot.slane %v6860, 5
      %v7698 = vsel %vm6059, %v7696, %v7697
      %v7699 = vrot.slane %v7563, 5
      %v7700 = vrot.slane %v7699, 4
      %v7701 = vrot.slane %v6862, 5
      %v7702 = vsel %vm6059, %v7700, %v7701
      %v7703 = vrot.slane %v7701, 4
      %v7704 = vrot.slane %v6863, 5
      %v7705 = vsel %vm6059, %v7703, %v7704
      %v7706 = vrot.slane %v7564, 5
      %v7707 = vrot.slane %v7706, 4
      %v7708 = vrot.slane %v6865, 5
      %v7709 = vsel %vm6059, %v7707, %v7708
      %v7710 = vrot.slane %v7708, 4
      %v7711 = vrot.slane %v6866, 5
      %v7712 = vsel %vm6059, %v7710, %v7711
      %v7713 = vrot.slane %v7565, 5
      %v7714 = vrot.slane %v7713, 4
      %v7715 = vrot.slane %v6868, 5
      %v7716 = vsel %vm6059, %v7714, %v7715
      %v7717 = vrot.slane %v7715, 4
      %v7718 = vrot.slane %v6869, 5
      %v7719 = vsel %vm6059, %v7717, %v7718
      %v7720 = vrot.slane %v7566, 5
      %v7721 = vrot.slane %v7720, 4
      %v7722 = vrot.slane %v6871, 5
      %v7723 = vsel %vm6059, %v7721, %v7722
      %v7724 = vrot.slane %v7722, 4
      %v7725 = vrot.slane %v6872, 5
      %v7726 = vsel %vm6059, %v7724, %v7725
      %s7727 = scalar_lea.vmem %s3, 20
      %v7728 = vld [vmem:[%s7727] sm:$0xf]
      %v7729 = vunpack.c.l.b16 %v7618
      %v7730 = vunpack.c.l.b16 %v7621
      %v7731 = vunpack.c.l.b16 %v7625
      %v7732 = vunpack.c.l.b16 %v7628
      %v7733 = vunpack.c.l.b16 %v7632
      %v7734 = vunpack.c.l.b16 %v7635
      %v7735 = vunpack.c.l.b16 %v7639
      %v7736 = vunpack.c.l.b16 %v7642
      %v7737 = vunpack.c.l.b16 %v7646
      %v7738 = vunpack.c.l.b16 %v7649
      %v7739 = vunpack.c.l.b16 %v7653
      %v7740 = vunpack.c.l.b16 %v7656
      %v7741 = vunpack.c.l.b16 %v7660
      %v7742 = vunpack.c.l.b16 %v7663
      %v7743 = vunpack.c.l.b16 %v7667
      %v7744 = vunpack.c.l.b16 %v7670
      %v7745 = vunpack.c.l.b16 %v7674
      %v7746 = vunpack.c.l.b16 %v7677
      %v7747 = vunpack.c.l.b16 %v7681
      %v7748 = vunpack.c.l.b16 %v7684
      %v7749 = vunpack.c.l.b16 %v7688
      %v7750 = vunpack.c.l.b16 %v7691
      %v7751 = vunpack.c.l.b16 %v7695
      %v7752 = vunpack.c.l.b16 %v7698
      %v7753 = vunpack.c.l.b16 %v7702
      %v7754 = vunpack.c.l.b16 %v7705
      %v7755 = vunpack.c.l.b16 %v7709
      %v7756 = vunpack.c.l.b16 %v7712
      %v7757 = vunpack.c.l.b16 %v7716
      %v7758 = vunpack.c.l.b16 %v7719
      %v7759 = vunpack.c.l.b16 %v7723
      %v7760 = vunpack.c.l.b16 %v7726
      %v7761 = vpack.c.b16 %v7730, %v7729
      %v7762 = vpack.c.b16 %v7732, %v7731
      %v7763 = vpack.c.b16 %v7734, %v7733
      %v7764 = vpack.c.b16 %v7736, %v7735
      %v7765 = vpack.c.b16 %v7738, %v7737
      %v7766 = vpack.c.b16 %v7740, %v7739
      %v7767 = vpack.c.b16 %v7742, %v7741
      %v7768 = vpack.c.b16 %v7744, %v7743
      %v7769 = vpack.c.b16 %v7746, %v7745
      %v7770 = vpack.c.b16 %v7748, %v7747
      %v7771 = vpack.c.b16 %v7750, %v7749
      %v7772 = vpack.c.b16 %v7752, %v7751
      %v7773 = vpack.c.b16 %v7754, %v7753
      %v7774 = vpack.c.b16 %v7756, %v7755
      %v7775 = vpack.c.b16 %v7758, %v7757
      %v7776 = vpack.c.b16 %v7760, %v7759
      %v7778 = vsel %vm5503, %v7761, 0
      %v7781 = vsel %vm5503, %v7762, 0
      %v7784 = vsel %vm5503, %v7763, 0
      %v7787 = vsel %vm5503, %v7764, 0
      %v7790 = vsel %vm5503, %v7765, 0
      %v7793 = vsel %vm5503, %v7766, 0
      %v7796 = vsel %vm5503, %v7767, 0
      %v7799 = vsel %vm5503, %v7768, 0
      %v7802 = vsel %vm5503, %v7769, 0
      %v7805 = vsel %vm5503, %v7770, 0
      %v7808 = vsel %vm5503, %v7771, 0
      %v7811 = vsel %vm5503, %v7772, 0
      %v7814 = vsel %vm5503, %v7773, 0
      %v7817 = vsel %vm5503, %v7774, 0
      %v7820 = vsel %vm5503, %v7775, 0
      %v7823 = vsel %vm5503, %v7776, 0
      %v7826 = vsel %vm5552, %v7728, 0
      %7828 = vmatprep.subr.bf16.mxu0 0
      %7829 = vmatpush1.bf16.msra.mxu0 %v7826
      %7830 = vmatprep.subr.bf16.mxu0 0
      %7831 = vmatpush1.bf16.msra.mxu0 0
      %7832 = vmatprep.subr.bf16.mxu0 0
      %7833 = vmatpush1.bf16.msra.mxu0 0
      %7834 = vmatprep.subr.bf16.mxu0 0
      %7835 = vmatpush1.bf16.msra.mxu0 0
      %7836 = vmatprep.subr.bf16.mxu0 0
      %7837 = vmatpush1.bf16.msra.mxu0 0
      %7838 = vmatprep.subr.bf16.mxu0 0
      %7839 = vmatpush1.bf16.msra.mxu0 0
      %7840 = vmatprep.subr.bf16.mxu0 0
      %7841 = vmatpush1.bf16.msra.mxu0 0
      %7842 = vmatprep.subr.bf16.mxu0 0
      %7843 = vmatpush1.bf16.msra.mxu0 0
      %7844 = vmatprep.subr.bf16.mxu0 0
      %7845 = vmatpush1.bf16.msra.mxu0 0
      %7846 = vmatprep.subr.bf16.mxu0 0
      %7847 = vmatpush1.bf16.msra.mxu0 0
      %7848 = vmatprep.subr.bf16.mxu0 0
      %7849 = vmatpush1.bf16.msra.mxu0 0
      %7850 = vmatprep.subr.bf16.mxu0 0
      %7851 = vmatpush1.bf16.msra.mxu0 0
      %7852 = vmatprep.subr.bf16.mxu0 0
      %7853 = vmatpush1.bf16.msra.mxu0 0
      %7854 = vmatprep.subr.bf16.mxu0 0
      %7855 = vmatpush1.bf16.msra.mxu0 0
      %7856 = vmatprep.subr.bf16.mxu0 0
      %7857 = vmatpush1.bf16.msra.mxu0 0
      %7858 = vmatprep.subr.bf16.mxu0 0
      %7859 = vmatpush1.bf16.msra.mxu0 0
      %7860 = vmatprep.mubr.bf16.mxu0 0
      %7861 = vmatmul.mubr.bf16.gmra.mrb[0].mxu0 %v7778
      %v7862 = vpop.f32.mrb[0].mxu0
      %v7863 = vadd.f32 0.0, %v7862
      %v7864 = vpop.f32.mrb[0].mxu0
      %v7865 = vpop.f32.mrb[0].mxu0
      %v7866 = vadd.f32 0.0, %v7865
      %v7867 = vpop.f32.mrb[0].mxu0
      %7868 = vmatprep.mubr.bf16.mxu0 0
      %7869 = vmatmul.mubr.bf16.gmra.mrb[0].mxu0 %v7781
      %v7870 = vpop.f32.mrb[0].mxu0
      %v7871 = vadd.f32 0.0, %v7870
      %v7872 = vpop.f32.mrb[0].mxu0
      %v7873 = vpop.f32.mrb[0].mxu0
      %v7874 = vadd.f32 0.0, %v7873
      %v7875 = vpop.f32.mrb[0].mxu0
      %7876 = vmatprep.mubr.bf16.mxu0 0
      %7877 = vmatmul.mubr.bf16.gmra.mrb[0].mxu0 %v7784
      %v7878 = vpop.f32.mrb[0].mxu0
      %v7879 = vadd.f32 0.0, %v7878
      %v7880 = vpop.f32.mrb[0].mxu0
      %v7881 = vpop.f32.mrb[0].mxu0
      %v7882 = vadd.f32 0.0, %v7881
      %v7883 = vpop.f32.mrb[0].mxu0
      %7884 = vmatprep.mubr.bf16.mxu0 0
      %7885 = vmatmul.mubr.bf16.gmra.mrb[0].mxu0 %v7787
      %v7886 = vpop.f32.mrb[0].mxu0
      %v7887 = vadd.f32 0.0, %v7886
      %v7888 = vpop.f32.mrb[0].mxu0
      %v7889 = vpop.f32.mrb[0].mxu0
      %v7890 = vadd.f32 0.0, %v7889
      %v7891 = vpop.f32.mrb[0].mxu0
      %7892 = vmatprep.mubr.bf16.mxu0 0
      %7893 = vmatmul.mubr.bf16.gmra.mrb[0].mxu0 %v7790
      %v7894 = vpop.f32.mrb[0].mxu0
      %v7895 = vadd.f32 0.0, %v7894
      %v7896 = vpop.f32.mrb[0].mxu0
      %v7897 = vpop.f32.mrb[0].mxu0
      %v7898 = vadd.f32 0.0, %v7897
      %v7899 = vpop.f32.mrb[0].mxu0
      %7900 = vmatprep.mubr.bf16.mxu0 0
      %7901 = vmatmul.mubr.bf16.gmra.mrb[0].mxu0 %v7793
      %v7902 = vpop.f32.mrb[0].mxu0
      %v7903 = vadd.f32 0.0, %v7902
      %v7904 = vpop.f32.mrb[0].mxu0
      %v7905 = vpop.f32.mrb[0].mxu0
      %v7906 = vadd.f32 0.0, %v7905
      %v7907 = vpop.f32.mrb[0].mxu0
      %7908 = vmatprep.mubr.bf16.mxu0 0
      %7909 = vmatmul.mubr.bf16.gmra.mrb[0].mxu0 %v7796
      %v7910 = vpop.f32.mrb[0].mxu0
      %v7911 = vadd.f32 0.0, %v7910
      %v7912 = vpop.f32.mrb[0].mxu0
      %v7913 = vpop.f32.mrb[0].mxu0
      %v7914 = vadd.f32 0.0, %v7913
      %v7915 = vpop.f32.mrb[0].mxu0
      %7916 = vmatprep.mubr.bf16.mxu0 0
      %7917 = vmatmul.mubr.bf16.gmra.mrb[0].mxu0 %v7799
      %v7918 = vpop.f32.mrb[0].mxu0
      %v7919 = vadd.f32 0.0, %v7918
      %v7920 = vpop.f32.mrb[0].mxu0
      %v7921 = vpop.f32.mrb[0].mxu0
      %v7922 = vadd.f32 0.0, %v7921
      %v7923 = vpop.f32.mrb[0].mxu0
      %7924 = vmatprep.mubr.bf16.mxu0 0
      %7925 = vmatmul.mubr.bf16.gmra.mrb[0].mxu0 %v7802
      %v7926 = vpop.f32.mrb[0].mxu0
      %v7927 = vadd.f32 0.0, %v7926
      %v7928 = vpop.f32.mrb[0].mxu0
      %v7929 = vpop.f32.mrb[0].mxu0
      %v7930 = vadd.f32 0.0, %v7929
      %v7931 = vpop.f32.mrb[0].mxu0
      %7932 = vmatprep.mubr.bf16.mxu0 0
      %7933 = vmatmul.mubr.bf16.gmra.mrb[0].mxu0 %v7805
      %v7934 = vpop.f32.mrb[0].mxu0
      %v7935 = vadd.f32 0.0, %v7934
      %v7936 = vpop.f32.mrb[0].mxu0
      %v7937 = vpop.f32.mrb[0].mxu0
      %v7938 = vadd.f32 0.0, %v7937
      %v7939 = vpop.f32.mrb[0].mxu0
      %7940 = vmatprep.mubr.bf16.mxu0 0
      %7941 = vmatmul.mubr.bf16.gmra.mrb[0].mxu0 %v7808
      %v7942 = vpop.f32.mrb[0].mxu0
      %v7943 = vadd.f32 0.0, %v7942
      %v7944 = vpop.f32.mrb[0].mxu0
      %v7945 = vpop.f32.mrb[0].mxu0
      %v7946 = vadd.f32 0.0, %v7945
      %v7947 = vpop.f32.mrb[0].mxu0
      %7948 = vmatprep.mubr.bf16.mxu0 0
      %7949 = vmatmul.mubr.bf16.gmra.mrb[0].mxu0 %v7811
      %v7950 = vpop.f32.mrb[0].mxu0
      %v7951 = vadd.f32 0.0, %v7950
      %v7952 = vpop.f32.mrb[0].mxu0
      %v7953 = vpop.f32.mrb[0].mxu0
      %v7954 = vadd.f32 0.0, %v7953
      %v7955 = vpop.f32.mrb[0].mxu0
      %7956 = vmatprep.mubr.bf16.mxu0 0
      %7957 = vmatmul.mubr.bf16.gmra.mrb[0].mxu0 %v7814
      %v7958 = vpop.f32.mrb[0].mxu0
      %v7959 = vadd.f32 0.0, %v7958
      %v7960 = vpop.f32.mrb[0].mxu0
      %v7961 = vpop.f32.mrb[0].mxu0
      %v7962 = vadd.f32 0.0, %v7961
      %v7963 = vpop.f32.mrb[0].mxu0
      %7964 = vmatprep.mubr.bf16.mxu0 0
      %7965 = vmatmul.mubr.bf16.gmra.mrb[0].mxu0 %v7817
      %v7966 = vpop.f32.mrb[0].mxu0
      %v7967 = vadd.f32 0.0, %v7966
      %v7968 = vpop.f32.mrb[0].mxu0
      %v7969 = vpop.f32.mrb[0].mxu0
      %v7970 = vadd.f32 0.0, %v7969
      %v7971 = vpop.f32.mrb[0].mxu0
      %7972 = vmatprep.mubr.bf16.mxu0 0
      %7973 = vmatmul.mubr.bf16.gmra.mrb[0].mxu0 %v7820
      %v7974 = vpop.f32.mrb[0].mxu0
      %v7975 = vadd.f32 0.0, %v7974
      %v7976 = vpop.f32.mrb[0].mxu0
      %v7977 = vpop.f32.mrb[0].mxu0
      %v7978 = vadd.f32 0.0, %v7977
      %v7979 = vpop.f32.mrb[0].mxu0
      %7980 = vmatprep.mubr.bf16.mxu0 0
      %7981 = vmatmul.mubr.bf16.gmra.mrb[0].mxu0 %v7823
      %v7982 = vpop.f32.mrb[0].mxu0
      %v7983 = vadd.f32 0.0, %v7982
      %v7984 = vpop.f32.mrb[0].mxu0
      %v7985 = vpop.f32.mrb[0].mxu0
      %v7986 = vadd.f32 0.0, %v7985
      %v7987 = vpop.f32.mrb[0].mxu0
      %7988 = vdwg.mxu0
      %v7989 = vadd.f32 %v7519, %v7863
      %v7990 = vadd.f32 %v7520, %v7866
      %v7991 = vadd.f32 %v7521, %v7871
      %v7992 = vadd.f32 %v7522, %v7874
      %v7993 = vadd.f32 %v7523, %v7879
      %v7994 = vadd.f32 %v7524, %v7882
      %v7995 = vadd.f32 %v7525, %v7887
      %v7996 = vadd.f32 %v7526, %v7890
      %v7997 = vadd.f32 %v7527, %v7895
      %v7998 = vadd.f32 %v7528, %v7898
      %v7999 = vadd.f32 %v7529, %v7903
      %v8000 = vadd.f32 %v7530, %v7906
      %v8001 = vadd.f32 %v7531, %v7911
      %v8002 = vadd.f32 %v7532, %v7914
      %v8003 = vadd.f32 %v7533, %v7919
      %v8004 = vadd.f32 %v7534, %v7922
      %v8005 = vadd.f32 %v7535, %v7927
      %v8006 = vadd.f32 %v7536, %v7930
      %v8007 = vadd.f32 %v7537, %v7935
      %v8008 = vadd.f32 %v7538, %v7938
      %v8009 = vadd.f32 %v7539, %v7943
      %v8010 = vadd.f32 %v7540, %v7946
      %v8011 = vadd.f32 %v7541, %v7951
      %v8012 = vadd.f32 %v7542, %v7954
      %v8013 = vadd.f32 %v7543, %v7959
      %v8014 = vadd.f32 %v7544, %v7962
      %v8015 = vadd.f32 %v7545, %v7967
      %v8016 = vadd.f32 %v7546, %v7970
      %v8017 = vadd.f32 %v7547, %v7975
      %v8018 = vadd.f32 %v7548, %v7978
      %v8019 = vadd.f32 %v7549, %v7983
      %v8020 = vadd.f32 %v7550, %v7986
      %s8021 = scalar_lea.vmem [#allocation2], 24
      %v8022 = vld [vmem:[%s8021] sm:$0xf]
      %v8023 = vld [vmem:[%s8021 + $0x4] sm:$0xf]
      %v8024 = vld [vmem:[%s8021 + $0xc] sm:$0xf]
      %v8025 = vld [vmem:[%s8021 + $0x10] sm:$0xf]
      %v8026 = vld [vmem:[%s8021 + $0x18] sm:$0xf]
      %v8027 = vld [vmem:[%s8021 + $0x1c] sm:$0xf]
      %v8028 = vld [vmem:[%s8021 + $0x24] sm:$0xf]
      %v8029 = vld [vmem:[%s8021 + $0x28] sm:$0xf]
      %v8030 = vld [vmem:[%s8021 + $0x30] sm:$0xf]
      %v8031 = vld [vmem:[%s8021 + $0x34] sm:$0xf]
      %v8032 = vld [vmem:[%s8021 + $0x3c] sm:$0xf]
      %v8033 = vld [vmem:[%s8021 + $0x40] sm:$0xf]
      %v8034 = vld [vmem:[%s8021 + $0x48] sm:$0xf]
      %v8035 = vld [vmem:[%s8021 + $0x4c] sm:$0xf]
      %v8036 = vld [vmem:[%s8021 + $0x54] sm:$0xf]
      %v8037 = vld [vmem:[%s8021 + $0x58] sm:$0xf]
      %v8038 = vld [vmem:[%s8021 + $0x60] sm:$0xf]
      %v8039 = vld [vmem:[%s8021 + $0x64] sm:$0xf]
      %v8040 = vld [vmem:[%s8021 + $0x6c] sm:$0xf]
      %v8041 = vld [vmem:[%s8021 + $0x70] sm:$0xf]
      %v8042 = vld [vmem:[%s8021 + $0x78] sm:$0xf]
      %v8043 = vld [vmem:[%s8021 + $0x7c] sm:$0xf]
      %v8044 = vld [vmem:[%s8021 + $0x84] sm:$0xf]
      %v8045 = vld [vmem:[%s8021 + $0x88] sm:$0xf]
      %v8046 = vld [vmem:[%s8021 + $0x90] sm:$0xf]
      %v8047 = vld [vmem:[%s8021 + $0x94] sm:$0xf]
      %v8048 = vld [vmem:[%s8021 + $0x9c] sm:$0xf]
      %v8049 = vld [vmem:[%s8021 + $0xa0] sm:$0xf]
      %v8050 = vld [vmem:[%s8021 + $0xa8] sm:$0xf]
      %v8051 = vld [vmem:[%s8021 + $0xac] sm:$0xf]
      %v8052 = vld [vmem:[%s8021 + $0xb4] sm:$0xf]
      %v8053 = vld [vmem:[%s8021 + $0xb8] sm:$0xf]
      %s8054 = scalar_lea.vmem %s3, 24
      %v8055 = vld [vmem:[%s8054] sm:$0xf]
      %v8088 = vunpack.c.l.b16 %v8022
      %v8089 = vunpack.c.l.b16 %v8023
      %v8090 = vunpack.c.l.b16 %v8024
      %v8091 = vunpack.c.l.b16 %v8025
      %v8092 = vunpack.c.l.b16 %v8026
      %v8093 = vunpack.c.l.b16 %v8027
      %v8094 = vunpack.c.l.b16 %v8028
      %v8095 = vunpack.c.l.b16 %v8029
      %v8096 = vunpack.c.l.b16 %v8030
      %v8097 = vunpack.c.l.b16 %v8031
      %v8098 = vunpack.c.l.b16 %v8032
      %v8099 = vunpack.c.l.b16 %v8033
      %v8100 = vunpack.c.l.b16 %v8034
      %v8101 = vunpack.c.l.b16 %v8035
      %v8102 = vunpack.c.l.b16 %v8036
      %v8103 = vunpack.c.l.b16 %v8037
      %v8104 = vunpack.c.l.b16 %v8038
      %v8105 = vunpack.c.l.b16 %v8039
      %v8106 = vunpack.c.l.b16 %v8040
      %v8107 = vunpack.c.l.b16 %v8041
      %v8108 = vunpack.c.l.b16 %v8042
      %v8109 = vunpack.c.l.b16 %v8043
      %v8110 = vunpack.c.l.b16 %v8044
      %v8111 = vunpack.c.l.b16 %v8045
      %v8112 = vunpack.c.l.b16 %v8046
      %v8113 = vunpack.c.l.b16 %v8047
      %v8114 = vunpack.c.l.b16 %v8048
      %v8115 = vunpack.c.l.b16 %v8049
      %v8116 = vunpack.c.l.b16 %v8050
      %v8117 = vunpack.c.l.b16 %v8051
      %v8118 = vunpack.c.l.b16 %v8052
      %v8119 = vunpack.c.l.b16 %v8053
      %v8120 = vpack.c.b16 %v8089, %v8088
      %v8121 = vpack.c.b16 %v8091, %v8090
      %v8122 = vpack.c.b16 %v8093, %v8092
      %v8123 = vpack.c.b16 %v8095, %v8094
      %v8124 = vpack.c.b16 %v8097, %v8096
      %v8125 = vpack.c.b16 %v8099, %v8098
      %v8126 = vpack.c.b16 %v8101, %v8100
      %v8127 = vpack.c.b16 %v8103, %v8102
      %v8128 = vpack.c.b16 %v8105, %v8104
      %v8129 = vpack.c.b16 %v8107, %v8106
      %v8130 = vpack.c.b16 %v8109, %v8108
      %v8131 = vpack.c.b16 %v8111, %v8110
      %v8132 = vpack.c.b16 %v8113, %v8112
      %v8133 = vpack.c.b16 %v8115, %v8114
      %v8134 = vpack.c.b16 %v8117, %v8116
      %v8135 = vpack.c.b16 %v8119, %v8118
      %v8137 = vsel %vm5503, %v8120, 0
      %v8140 = vsel %vm5503, %v8121, 0
      %v8143 = vsel %vm5503, %v8122, 0
      %v8146 = vsel %vm5503, %v8123, 0
      %v8149 = vsel %vm5503, %v8124, 0
      %v8152 = vsel %vm5503, %v8125, 0
      %v8155 = vsel %vm5503, %v8126, 0
      %v8158 = vsel %vm5503, %v8127, 0
      %v8161 = vsel %vm5503, %v8128, 0
      %v8164 = vsel %vm5503, %v8129, 0
      %v8167 = vsel %vm5503, %v8130, 0
      %v8170 = vsel %vm5503, %v8131, 0
      %v8173 = vsel %vm5503, %v8132, 0
      %v8176 = vsel %vm5503, %v8133, 0
      %v8179 = vsel %vm5503, %v8134, 0
      %v8182 = vsel %vm5503, %v8135, 0
      %v8185 = vsel %vm5552, %v8055, 0
      %8187 = vmatprep.subr.bf16.mxu0 0
      %8188 = vmatpush1.bf16.msra.mxu0 %v8185
      %8189 = vmatprep.subr.bf16.mxu0 0
      %8190 = vmatpush1.bf16.msra.mxu0 0
      %8191 = vmatprep.subr.bf16.mxu0 0
      %8192 = vmatpush1.bf16.msra.mxu0 0
      %8193 = vmatprep.subr.bf16.mxu0 0
      %8194 = vmatpush1.bf16.msra.mxu0 0
      %8195 = vmatprep.subr.bf16.mxu0 0
      %8196 = vmatpush1.bf16.msra.mxu0 0
      %8197 = vmatprep.subr.bf16.mxu0 0
      %8198 = vmatpush1.bf16.msra.mxu0 0
      %8199 = vmatprep.subr.bf16.mxu0 0
      %8200 = vmatpush1.bf16.msra.mxu0 0
      %8201 = vmatprep.subr.bf16.mxu0 0
      %8202 = vmatpush1.bf16.msra.mxu0 0
      %8203 = vmatprep.subr.bf16.mxu0 0
      %8204 = vmatpush1.bf16.msra.mxu0 0
      %8205 = vmatprep.subr.bf16.mxu0 0
      %8206 = vmatpush1.bf16.msra.mxu0 0
      %8207 = vmatprep.subr.bf16.mxu0 0
      %8208 = vmatpush1.bf16.msra.mxu0 0
      %8209 = vmatprep.subr.bf16.mxu0 0
      %8210 = vmatpush1.bf16.msra.mxu0 0
      %8211 = vmatprep.subr.bf16.mxu0 0
      %8212 = vmatpush1.bf16.msra.mxu0 0
      %8213 = vmatprep.subr.bf16.mxu0 0
      %8214 = vmatpush1.bf16.msra.mxu0 0
      %8215 = vmatprep.subr.bf16.mxu0 0
      %8216 = vmatpush1.bf16.msra.mxu0 0
      %8217 = vmatprep.subr.bf16.mxu0 0
      %8218 = vmatpush1.bf16.msra.mxu0 0
      %8219 = vmatprep.mubr.bf16.mxu0 0
      %8220 = vmatmul.mubr.bf16.gmra.mrb[0].mxu0 %v8137
      %v8221 = vpop.f32.mrb[0].mxu0
      %v8222 = vadd.f32 0.0, %v8221
      %v8223 = vpop.f32.mrb[0].mxu0
      %v8224 = vpop.f32.mrb[0].mxu0
      %v8225 = vadd.f32 0.0, %v8224
      %v8226 = vpop.f32.mrb[0].mxu0
      %8227 = vmatprep.mubr.bf16.mxu0 0
      %8228 = vmatmul.mubr.bf16.gmra.mrb[0].mxu0 %v8140
      %v8229 = vpop.f32.mrb[0].mxu0
      %v8230 = vadd.f32 0.0, %v8229
      %v8231 = vpop.f32.mrb[0].mxu0
      %v8232 = vpop.f32.mrb[0].mxu0
      %v8233 = vadd.f32 0.0, %v8232
      %v8234 = vpop.f32.mrb[0].mxu0
      %8235 = vmatprep.mubr.bf16.mxu0 0
      %8236 = vmatmul.mubr.bf16.gmra.mrb[0].mxu0 %v8143
      %v8237 = vpop.f32.mrb[0].mxu0
      %v8238 = vadd.f32 0.0, %v8237
      %v8239 = vpop.f32.mrb[0].mxu0
      %v8240 = vpop.f32.mrb[0].mxu0
      %v8241 = vadd.f32 0.0, %v8240
      %v8242 = vpop.f32.mrb[0].mxu0
      %8243 = vmatprep.mubr.bf16.mxu0 0
      %8244 = vmatmul.mubr.bf16.gmra.mrb[0].mxu0 %v8146
      %v8245 = vpop.f32.mrb[0].mxu0
      %v8246 = vadd.f32 0.0, %v8245
      %v8247 = vpop.f32.mrb[0].mxu0
      %v8248 = vpop.f32.mrb[0].mxu0
      %v8249 = vadd.f32 0.0, %v8248
      %v8250 = vpop.f32.mrb[0].mxu0
      %8251 = vmatprep.mubr.bf16.mxu0 0
      %8252 = vmatmul.mubr.bf16.gmra.mrb[0].mxu0 %v8149
      %v8253 = vpop.f32.mrb[0].mxu0
      %v8254 = vadd.f32 0.0, %v8253
      %v8255 = vpop.f32.mrb[0].mxu0
      %v8256 = vpop.f32.mrb[0].mxu0
      %v8257 = vadd.f32 0.0, %v8256
      %v8258 = vpop.f32.mrb[0].mxu0
      %8259 = vmatprep.mubr.bf16.mxu0 0
      %8260 = vmatmul.mubr.bf16.gmra.mrb[0].mxu0 %v8152
      %v8261 = vpop.f32.mrb[0].mxu0
      %v8262 = vadd.f32 0.0, %v8261
      %v8263 = vpop.f32.mrb[0].mxu0
      %v8264 = vpop.f32.mrb[0].mxu0
      %v8265 = vadd.f32 0.0, %v8264
      %v8266 = vpop.f32.mrb[0].mxu0
      %8267 = vmatprep.mubr.bf16.mxu0 0
      %8268 = vmatmul.mubr.bf16.gmra.mrb[0].mxu0 %v8155
      %v8269 = vpop.f32.mrb[0].mxu0
      %v8270 = vadd.f32 0.0, %v8269
      %v8271 = vpop.f32.mrb[0].mxu0
      %v8272 = vpop.f32.mrb[0].mxu0
      %v8273 = vadd.f32 0.0, %v8272
      %v8274 = vpop.f32.mrb[0].mxu0
      %8275 = vmatprep.mubr.bf16.mxu0 0
      %8276 = vmatmul.mubr.bf16.gmra.mrb[0].mxu0 %v8158
      %v8277 = vpop.f32.mrb[0].mxu0
      %v8278 = vadd.f32 0.0, %v8277
      %v8279 = vpop.f32.mrb[0].mxu0
      %v8280 = vpop.f32.mrb[0].mxu0
      %v8281 = vadd.f32 0.0, %v8280
      %v8282 = vpop.f32.mrb[0].mxu0
      %8283 = vmatprep.mubr.bf16.mxu0 0
      %8284 = vmatmul.mubr.bf16.gmra.mrb[0].mxu0 %v8161
      %v8285 = vpop.f32.mrb[0].mxu0
      %v8286 = vadd.f32 0.0, %v8285
      %v8287 = vpop.f32.mrb[0].mxu0
      %v8288 = vpop.f32.mrb[0].mxu0
      %v8289 = vadd.f32 0.0, %v8288
      %v8290 = vpop.f32.mrb[0].mxu0
      %8291 = vmatprep.mubr.bf16.mxu0 0
      %8292 = vmatmul.mubr.bf16.gmra.mrb[0].mxu0 %v8164
      %v8293 = vpop.f32.mrb[0].mxu0
      %v8294 = vadd.f32 0.0, %v8293
      %v8295 = vpop.f32.mrb[0].mxu0
      %v8296 = vpop.f32.mrb[0].mxu0
      %v8297 = vadd.f32 0.0, %v8296
      %v8298 = vpop.f32.mrb[0].mxu0
      %8299 = vmatprep.mubr.bf16.mxu0 0
      %8300 = vmatmul.mubr.bf16.gmra.mrb[0].mxu0 %v8167
      %v8301 = vpop.f32.mrb[0].mxu0
      %v8302 = vadd.f32 0.0, %v8301
      %v8303 = vpop.f32.mrb[0].mxu0
      %v8304 = vpop.f32.mrb[0].mxu0
      %v8305 = vadd.f32 0.0, %v8304
      %v8306 = vpop.f32.mrb[0].mxu0
      %8307 = vmatprep.mubr.bf16.mxu0 0
      %8308 = vmatmul.mubr.bf16.gmra.mrb[0].mxu0 %v8170
      %v8309 = vpop.f32.mrb[0].mxu0
      %v8310 = vadd.f32 0.0, %v8309
      %v8311 = vpop.f32.mrb[0].mxu0
      %v8312 = vpop.f32.mrb[0].mxu0
      %v8313 = vadd.f32 0.0, %v8312
      %v8314 = vpop.f32.mrb[0].mxu0
      %8315 = vmatprep.mubr.bf16.mxu0 0
      %8316 = vmatmul.mubr.bf16.gmra.mrb[0].mxu0 %v8173
      %v8317 = vpop.f32.mrb[0].mxu0
      %v8318 = vadd.f32 0.0, %v8317
      %v8319 = vpop.f32.mrb[0].mxu0
      %v8320 = vpop.f32.mrb[0].mxu0
      %v8321 = vadd.f32 0.0, %v8320
      %v8322 = vpop.f32.mrb[0].mxu0
      %8323 = vmatprep.mubr.bf16.mxu0 0
      %8324 = vmatmul.mubr.bf16.gmra.mrb[0].mxu0 %v8176
      %v8325 = vpop.f32.mrb[0].mxu0
      %v8326 = vadd.f32 0.0, %v8325
      %v8327 = vpop.f32.mrb[0].mxu0
      %v8328 = vpop.f32.mrb[0].mxu0
      %v8329 = vadd.f32 0.0, %v8328
      %v8330 = vpop.f32.mrb[0].mxu0
      %8331 = vmatprep.mubr.bf16.mxu0 0
      %8332 = vmatmul.mubr.bf16.gmra.mrb[0].mxu0 %v8179
      %v8333 = vpop.f32.mrb[0].mxu0
      %v8334 = vadd.f32 0.0, %v8333
      %v8335 = vpop.f32.mrb[0].mxu0
      %v8336 = vpop.f32.mrb[0].mxu0
      %v8337 = vadd.f32 0.0, %v8336
      %v8338 = vpop.f32.mrb[0].mxu0
      %8339 = vmatprep.mubr.bf16.mxu0 0
      %8340 = vmatmul.mubr.bf16.gmra.mrb[0].mxu0 %v8182
      %v8341 = vpop.f32.mrb[0].mxu0
      %v8342 = vadd.f32 0.0, %v8341
      %v8343 = vpop.f32.mrb[0].mxu0
      %v8344 = vpop.f32.mrb[0].mxu0
      %v8345 = vadd.f32 0.0, %v8344
      %v8346 = vpop.f32.mrb[0].mxu0
      %8347 = vdwg.mxu0
      %v8348 = vadd.f32 %v7989, %v8222
      %v8349 = vadd.f32 %v7990, %v8225
      %v8350 = vadd.f32 %v7991, %v8230
      %v8351 = vadd.f32 %v7992, %v8233
      %v8352 = vadd.f32 %v7993, %v8238
      %v8353 = vadd.f32 %v7994, %v8241
      %v8354 = vadd.f32 %v7995, %v8246
      %v8355 = vadd.f32 %v7996, %v8249
      %v8356 = vadd.f32 %v7997, %v8254
      %v8357 = vadd.f32 %v7998, %v8257
      %v8358 = vadd.f32 %v7999, %v8262
      %v8359 = vadd.f32 %v8000, %v8265
      %v8360 = vadd.f32 %v8001, %v8270
      %v8361 = vadd.f32 %v8002, %v8273
      %v8362 = vadd.f32 %v8003, %v8278
      %v8363 = vadd.f32 %v8004, %v8281
      %v8364 = vadd.f32 %v8005, %v8286
      %v8365 = vadd.f32 %v8006, %v8289
      %v8366 = vadd.f32 %v8007, %v8294
      %v8367 = vadd.f32 %v8008, %v8297
      %v8368 = vadd.f32 %v8009, %v8302
      %v8369 = vadd.f32 %v8010, %v8305
      %v8370 = vadd.f32 %v8011, %v8310
      %v8371 = vadd.f32 %v8012, %v8313
      %v8372 = vadd.f32 %v8013, %v8318
      %v8373 = vadd.f32 %v8014, %v8321
      %v8374 = vadd.f32 %v8015, %v8326
      %v8375 = vadd.f32 %v8016, %v8329
      %v8376 = vadd.f32 %v8017, %v8334
      %v8377 = vadd.f32 %v8018, %v8337
      %v8378 = vadd.f32 %v8019, %v8342
      %v8379 = vadd.f32 %v8020, %v8345
      %v8380 = vld [vmem:[%s8021] sm:$0xf]
      %v8381 = vld [vmem:[%s8021 + $0x4] sm:$0xf]
      %v8382 = vld [vmem:[%s8021 + $0x8] sm:$0x1]
      %v8383 = vld [vmem:[%s8021 + $0xc] sm:$0xf]
      %v8384 = vld [vmem:[%s8021 + $0x10] sm:$0xf]
      %v8385 = vld [vmem:[%s8021 + $0x14] sm:$0x1]
      %v8386 = vld [vmem:[%s8021 + $0x18] sm:$0xf]
      %v8387 = vld [vmem:[%s8021 + $0x1c] sm:$0xf]
      %v8388 = vld [vmem:[%s8021 + $0x20] sm:$0x1]
      %v8389 = vld [vmem:[%s8021 + $0x24] sm:$0xf]
      %v8390 = vld [vmem:[%s8021 + $0x28] sm:$0xf]
      %v8391 = vld [vmem:[%s8021 + $0x2c] sm:$0x1]
      %v8392 = vld [vmem:[%s8021 + $0x30] sm:$0xf]
      %v8393 = vld [vmem:[%s8021 + $0x34] sm:$0xf]
      %v8394 = vld [vmem:[%s8021 + $0x38] sm:$0x1]
      %v8395 = vld [vmem:[%s8021 + $0x3c] sm:$0xf]
      %v8396 = vld [vmem:[%s8021 + $0x40] sm:$0xf]
      %v8397 = vld [vmem:[%s8021 + $0x44] sm:$0x1]
      %v8398 = vld [vmem:[%s8021 + $0x48] sm:$0xf]
      %v8399 = vld [vmem:[%s8021 + $0x4c] sm:$0xf]
      %v8400 = vld [vmem:[%s8021 + $0x50] sm:$0x1]
      %v8401 = vld [vmem:[%s8021 + $0x54] sm:$0xf]
      %v8402 = vld [vmem:[%s8021 + $0x58] sm:$0xf]
      %v8403 = vld [vmem:[%s8021 + $0x5c] sm:$0x1]
      %v8404 = vld [vmem:[%s8021 + $0x60] sm:$0xf]
      %v8405 = vld [vmem:[%s8021 + $0x64] sm:$0xf]
      %v8406 = vld [vmem:[%s8021 + $0x68] sm:$0x1]
      %v8407 = vld [vmem:[%s8021 + $0x6c] sm:$0xf]
      %v8408 = vld [vmem:[%s8021 + $0x70] sm:$0xf]
      %v8409 = vld [vmem:[%s8021 + $0x74] sm:$0x1]
      %v8410 = vld [vmem:[%s8021 + $0x78] sm:$0xf]
      %v8411 = vld [vmem:[%s8021 + $0x7c] sm:$0xf]
      %v8412 = vld [vmem:[%s8021 + $0x80] sm:$0x1]
      %v8413 = vld [vmem:[%s8021 + $0x84] sm:$0xf]
      %v8414 = vld [vmem:[%s8021 + $0x88] sm:$0xf]
      %v8415 = vld [vmem:[%s8021 + $0x8c] sm:$0x1]
      %v8416 = vld [vmem:[%s8021 + $0x90] sm:$0xf]
      %v8417 = vld [vmem:[%s8021 + $0x94] sm:$0xf]
      %v8418 = vld [vmem:[%s8021 + $0x98] sm:$0x1]
      %v8419 = vld [vmem:[%s8021 + $0x9c] sm:$0xf]
      %v8420 = vld [vmem:[%s8021 + $0xa0] sm:$0xf]
      %v8421 = vld [vmem:[%s8021 + $0xa4] sm:$0x1]
      %v8422 = vld [vmem:[%s8021 + $0xa8] sm:$0xf]
      %v8423 = vld [vmem:[%s8021 + $0xac] sm:$0xf]
      %v8424 = vld [vmem:[%s8021 + $0xb0] sm:$0x1]
      %v8425 = vld [vmem:[%s8021 + $0xb4] sm:$0xf]
      %v8426 = vld [vmem:[%s8021 + $0xb8] sm:$0xf]
      %v8427 = vld [vmem:[%s8021 + $0xbc] sm:$0x1]
      %v8429 = vshrl.u32 %v8380, 16
      %v8431 = vrot.slane %v8429, 4
      %v8432 = vshll.u32 %v8380, 16
      %v8434 = vrot.slane %v8432, 5
      %v8435 = vor.u32 %v8431, %v8434
      %v8436 = vrot.slane %v8435, 4
      %v8438 = vshll.u32 %v8381, 16
      %v8440 = vrot.slane %v8438, 5
      %v8441 = vsel %vm5068, %v8436, %v8440
      %v8442 = vshrl.u32 %v8381, 16
      %v8444 = vrot.slane %v8442, 4
      %v8445 = vor.u32 %v8444, %v8440
      %v8446 = vrot.slane %v8445, 4
      %v8448 = vshll.u32 %v8382, 16
      %v8450 = vrot.slane %v8448, 5
      %v8451 = vsel %vm5068, %v8446, %v8450
      %v8453 = vshrl.u32 %v8383, 16
      %v8455 = vrot.slane %v8453, 4
      %v8456 = vshll.u32 %v8383, 16
      %v8458 = vrot.slane %v8456, 5
      %v8459 = vor.u32 %v8455, %v8458
      %v8460 = vrot.slane %v8459, 4
      %v8462 = vshll.u32 %v8384, 16
      %v8464 = vrot.slane %v8462, 5
      %v8465 = vsel %vm5068, %v8460, %v8464
      %v8466 = vshrl.u32 %v8384, 16
      %v8468 = vrot.slane %v8466, 4
      %v8469 = vor.u32 %v8468, %v8464
      %v8470 = vrot.slane %v8469, 4
      %v8472 = vshll.u32 %v8385, 16
      %v8474 = vrot.slane %v8472, 5
      %v8475 = vsel %vm5068, %v8470, %v8474
      %v8477 = vshrl.u32 %v8386, 16
      %v8479 = vrot.slane %v8477, 4
      %v8480 = vshll.u32 %v8386, 16
      %v8482 = vrot.slane %v8480, 5
      %v8483 = vor.u32 %v8479, %v8482
      %v8484 = vrot.slane %v8483, 4
      %v8486 = vshll.u32 %v8387, 16
      %v8488 = vrot.slane %v8486, 5
      %v8489 = vsel %vm5068, %v8484, %v8488
      %v8490 = vshrl.u32 %v8387, 16
      %v8492 = vrot.slane %v8490, 4
      %v8493 = vor.u32 %v8492, %v8488
      %v8494 = vrot.slane %v8493, 4
      %v8496 = vshll.u32 %v8388, 16
      %v8498 = vrot.slane %v8496, 5
      %v8499 = vsel %vm5068, %v8494, %v8498
      %v8501 = vshrl.u32 %v8389, 16
      %v8503 = vrot.slane %v8501, 4
      %v8504 = vshll.u32 %v8389, 16
      %v8506 = vrot.slane %v8504, 5
      %v8507 = vor.u32 %v8503, %v8506
      %v8508 = vrot.slane %v8507, 4
      %v8510 = vshll.u32 %v8390, 16
      %v8512 = vrot.slane %v8510, 5
      %v8513 = vsel %vm5068, %v8508, %v8512
      %v8514 = vshrl.u32 %v8390, 16
      %v8516 = vrot.slane %v8514, 4
      %v8517 = vor.u32 %v8516, %v8512
      %v8518 = vrot.slane %v8517, 4
      %v8520 = vshll.u32 %v8391, 16
      %v8522 = vrot.slane %v8520, 5
      %v8523 = vsel %vm5068, %v8518, %v8522
      %v8525 = vshrl.u32 %v8392, 16
      %v8527 = vrot.slane %v8525, 4
      %v8528 = vshll.u32 %v8392, 16
      %v8530 = vrot.slane %v8528, 5
      %v8531 = vor.u32 %v8527, %v8530
      %v8532 = vrot.slane %v8531, 4
      %v8534 = vshll.u32 %v8393, 16
      %v8536 = vrot.slane %v8534, 5
      %v8537 = vsel %vm5068, %v8532, %v8536
      %v8538 = vshrl.u32 %v8393, 16
      %v8540 = vrot.slane %v8538, 4
      %v8541 = vor.u32 %v8540, %v8536
      %v8542 = vrot.slane %v8541, 4
      %v8544 = vshll.u32 %v8394, 16
      %v8546 = vrot.slane %v8544, 5
      %v8547 = vsel %vm5068, %v8542, %v8546
      %v8549 = vshrl.u32 %v8395, 16
      %v8551 = vrot.slane %v8549, 4
      %v8552 = vshll.u32 %v8395, 16
      %v8554 = vrot.slane %v8552, 5
      %v8555 = vor.u32 %v8551, %v8554
      %v8556 = vrot.slane %v8555, 4
      %v8558 = vshll.u32 %v8396, 16
      %v8560 = vrot.slane %v8558, 5
      %v8561 = vsel %vm5068, %v8556, %v8560
      %v8562 = vshrl.u32 %v8396, 16
      %v8564 = vrot.slane %v8562, 4
      %v8565 = vor.u32 %v8564, %v8560
      %v8566 = vrot.slane %v8565, 4
      %v8568 = vshll.u32 %v8397, 16
      %v8570 = vrot.slane %v8568, 5
      %v8571 = vsel %vm5068, %v8566, %v8570
      %v8573 = vshrl.u32 %v8398, 16
      %v8575 = vrot.slane %v8573, 4
      %v8576 = vshll.u32 %v8398, 16
      %v8578 = vrot.slane %v8576, 5
      %v8579 = vor.u32 %v8575, %v8578
      %v8580 = vrot.slane %v8579, 4
      %v8582 = vshll.u32 %v8399, 16
      %v8584 = vrot.slane %v8582, 5
      %v8585 = vsel %vm5068, %v8580, %v8584
      %v8586 = vshrl.u32 %v8399, 16
      %v8588 = vrot.slane %v8586, 4
      %v8589 = vor.u32 %v8588, %v8584
      %v8590 = vrot.slane %v8589, 4
      %v8592 = vshll.u32 %v8400, 16
      %v8594 = vrot.slane %v8592, 5
      %v8595 = vsel %vm5068, %v8590, %v8594
      %v8597 = vshrl.u32 %v8401, 16
      %v8599 = vrot.slane %v8597, 4
      %v8600 = vshll.u32 %v8401, 16
      %v8602 = vrot.slane %v8600, 5
      %v8603 = vor.u32 %v8599, %v8602
      %v8604 = vrot.slane %v8603, 4
      %v8606 = vshll.u32 %v8402, 16
      %v8608 = vrot.slane %v8606, 5
      %v8609 = vsel %vm5068, %v8604, %v8608
      %v8610 = vshrl.u32 %v8402, 16
      %v8612 = vrot.slane %v8610, 4
      %v8613 = vor.u32 %v8612, %v8608
      %v8614 = vrot.slane %v8613, 4
      %v8616 = vshll.u32 %v8403, 16
      %v8618 = vrot.slane %v8616, 5
      %v8619 = vsel %vm5068, %v8614, %v8618
      %v8621 = vshrl.u32 %v8404, 16
      %v8623 = vrot.slane %v8621, 4
      %v8624 = vshll.u32 %v8404, 16
      %v8626 = vrot.slane %v8624, 5
      %v8627 = vor.u32 %v8623, %v8626
      %v8628 = vrot.slane %v8627, 4
      %v8630 = vshll.u32 %v8405, 16
      %v8632 = vrot.slane %v8630, 5
      %v8633 = vsel %vm5068, %v8628, %v8632
      %v8634 = vshrl.u32 %v8405, 16
      %v8636 = vrot.slane %v8634, 4
      %v8637 = vor.u32 %v8636, %v8632
      %v8638 = vrot.slane %v8637, 4
      %v8640 = vshll.u32 %v8406, 16
      %v8642 = vrot.slane %v8640, 5
      %v8643 = vsel %vm5068, %v8638, %v8642
      %v8645 = vshrl.u32 %v8407, 16
      %v8647 = vrot.slane %v8645, 4
      %v8648 = vshll.u32 %v8407, 16
      %v8650 = vrot.slane %v8648, 5
      %v8651 = vor.u32 %v8647, %v8650
      %v8652 = vrot.slane %v8651, 4
      %v8654 = vshll.u32 %v8408, 16
      %v8656 = vrot.slane %v8654, 5
      %v8657 = vsel %vm5068, %v8652, %v8656
      %v8658 = vshrl.u32 %v8408, 16
      %v8660 = vrot.slane %v8658, 4
      %v8661 = vor.u32 %v8660, %v8656
      %v8662 = vrot.slane %v8661, 4
      %v8664 = vshll.u32 %v8409, 16
      %v8666 = vrot.slane %v8664, 5
      %v8667 = vsel %vm5068, %v8662, %v8666
      %v8669 = vshrl.u32 %v8410, 16
      %v8671 = vrot.slane %v8669, 4
      %v8672 = vshll.u32 %v8410, 16
      %v8674 = vrot.slane %v8672, 5
      %v8675 = vor.u32 %v8671, %v8674
      %v8676 = vrot.slane %v8675, 4
      %v8678 = vshll.u32 %v8411, 16
      %v8680 = vrot.slane %v8678, 5
      %v8681 = vsel %vm5068, %v8676, %v8680
      %v8682 = vshrl.u32 %v8411, 16
      %v8684 = vrot.slane %v8682, 4
      %v8685 = vor.u32 %v8684, %v8680
      %v8686 = vrot.slane %v8685, 4
      %v8688 = vshll.u32 %v8412, 16
      %v8690 = vrot.slane %v8688, 5
      %v8691 = vsel %vm5068, %v8686, %v8690
      %v8693 = vshrl.u32 %v8413, 16
      %v8695 = vrot.slane %v8693, 4
      %v8696 = vshll.u32 %v8413, 16
      %v8698 = vrot.slane %v8696, 5
      %v8699 = vor.u32 %v8695, %v8698
      %v8700 = vrot.slane %v8699, 4
      %v8702 = vshll.u32 %v8414, 16
      %v8704 = vrot.slane %v8702, 5
      %v8705 = vsel %vm5068, %v8700, %v8704
      %v8706 = vshrl.u32 %v8414, 16
      %v8708 = vrot.slane %v8706, 4
      %v8709 = vor.u32 %v8708, %v8704
      %v8710 = vrot.slane %v8709, 4
      %v8712 = vshll.u32 %v8415, 16
      %v8714 = vrot.slane %v8712, 5
      %v8715 = vsel %vm5068, %v8710, %v8714
      %v8717 = vshrl.u32 %v8416, 16
      %v8719 = vrot.slane %v8717, 4
      %v8720 = vshll.u32 %v8416, 16
      %v8722 = vrot.slane %v8720, 5
      %v8723 = vor.u32 %v8719, %v8722
      %v8724 = vrot.slane %v8723, 4
      %v8726 = vshll.u32 %v8417, 16
      %v8728 = vrot.slane %v8726, 5
      %v8729 = vsel %vm5068, %v8724, %v8728
      %v8730 = vshrl.u32 %v8417, 16
      %v8732 = vrot.slane %v8730, 4
      %v8733 = vor.u32 %v8732, %v8728
      %v8734 = vrot.slane %v8733, 4
      %v8736 = vshll.u32 %v8418, 16
      %v8738 = vrot.slane %v8736, 5
      %v8739 = vsel %vm5068, %v8734, %v8738
      %v8741 = vshrl.u32 %v8419, 16
      %v8743 = vrot.slane %v8741, 4
      %v8744 = vshll.u32 %v8419, 16
      %v8746 = vrot.slane %v8744, 5
      %v8747 = vor.u32 %v8743, %v8746
      %v8748 = vrot.slane %v8747, 4
      %v8750 = vshll.u32 %v8420, 16
      %v8752 = vrot.slane %v8750, 5
      %v8753 = vsel %vm5068, %v8748, %v8752
      %v8754 = vshrl.u32 %v8420, 16
      %v8756 = vrot.slane %v8754, 4
      %v8757 = vor.u32 %v8756, %v8752
      %v8758 = vrot.slane %v8757, 4
      %v8760 = vshll.u32 %v8421, 16
      %v8762 = vrot.slane %v8760, 5
      %v8763 = vsel %vm5068, %v8758, %v8762
      %v8765 = vshrl.u32 %v8422, 16
      %v8767 = vrot.slane %v8765, 4
      %v8768 = vshll.u32 %v8422, 16
      %v8770 = vrot.slane %v8768, 5
      %v8771 = vor.u32 %v8767, %v8770
      %v8772 = vrot.slane %v8771, 4
      %v8774 = vshll.u32 %v8423, 16
      %v8776 = vrot.slane %v8774, 5
      %v8777 = vsel %vm5068, %v8772, %v8776
      %v8778 = vshrl.u32 %v8423, 16
      %v8780 = vrot.slane %v8778, 4
      %v8781 = vor.u32 %v8780, %v8776
      %v8782 = vrot.slane %v8781, 4
      %v8784 = vshll.u32 %v8424, 16
      %v8786 = vrot.slane %v8784, 5
      %v8787 = vsel %vm5068, %v8782, %v8786
      %v8789 = vshrl.u32 %v8425, 16
      %v8791 = vrot.slane %v8789, 4
      %v8792 = vshll.u32 %v8425, 16
      %v8794 = vrot.slane %v8792, 5
      %v8795 = vor.u32 %v8791, %v8794
      %v8796 = vrot.slane %v8795, 4
      %v8798 = vshll.u32 %v8426, 16
      %v8800 = vrot.slane %v8798, 5
      %v8801 = vsel %vm5068, %v8796, %v8800
      %v8802 = vshrl.u32 %v8426, 16
      %v8804 = vrot.slane %v8802, 4
      %v8805 = vor.u32 %v8804, %v8800
      %v8806 = vrot.slane %v8805, 4
      %v8808 = vshll.u32 %v8427, 16
      %v8810 = vrot.slane %v8808, 5
      %v8811 = vsel %vm5068, %v8806, %v8810
      %s8812 = scalar_lea.vmem %s3, 28
      %v8813 = vld [vmem:[%s8812] sm:$0xf]
      %v8814 = vunpack.c.l.b16 %v8441
      %v8815 = vunpack.c.l.b16 %v8451
      %v8816 = vunpack.c.l.b16 %v8465
      %v8817 = vunpack.c.l.b16 %v8475
      %v8818 = vunpack.c.l.b16 %v8489
      %v8819 = vunpack.c.l.b16 %v8499
      %v8820 = vunpack.c.l.b16 %v8513
      %v8821 = vunpack.c.l.b16 %v8523
      %v8822 = vunpack.c.l.b16 %v8537
      %v8823 = vunpack.c.l.b16 %v8547
      %v8824 = vunpack.c.l.b16 %v8561
      %v8825 = vunpack.c.l.b16 %v8571
      %v8826 = vunpack.c.l.b16 %v8585
      %v8827 = vunpack.c.l.b16 %v8595
      %v8828 = vunpack.c.l.b16 %v8609
      %v8829 = vunpack.c.l.b16 %v8619
      %v8830 = vunpack.c.l.b16 %v8633
      %v8831 = vunpack.c.l.b16 %v8643
      %v8832 = vunpack.c.l.b16 %v8657
      %v8833 = vunpack.c.l.b16 %v8667
      %v8834 = vunpack.c.l.b16 %v8681
      %v8835 = vunpack.c.l.b16 %v8691
      %v8836 = vunpack.c.l.b16 %v8705
      %v8837 = vunpack.c.l.b16 %v8715
      %v8838 = vunpack.c.l.b16 %v8729
      %v8839 = vunpack.c.l.b16 %v8739
      %v8840 = vunpack.c.l.b16 %v8753
      %v8841 = vunpack.c.l.b16 %v8763
      %v8842 = vunpack.c.l.b16 %v8777
      %v8843 = vunpack.c.l.b16 %v8787
      %v8844 = vunpack.c.l.b16 %v8801
      %v8845 = vunpack.c.l.b16 %v8811
      %v8846 = vpack.c.b16 %v8815, %v8814
      %v8847 = vpack.c.b16 %v8817, %v8816
      %v8848 = vpack.c.b16 %v8819, %v8818
      %v8849 = vpack.c.b16 %v8821, %v8820
      %v8850 = vpack.c.b16 %v8823, %v8822
      %v8851 = vpack.c.b16 %v8825, %v8824
      %v8852 = vpack.c.b16 %v8827, %v8826
      %v8853 = vpack.c.b16 %v8829, %v8828
      %v8854 = vpack.c.b16 %v8831, %v8830
      %v8855 = vpack.c.b16 %v8833, %v8832
      %v8856 = vpack.c.b16 %v8835, %v8834
      %v8857 = vpack.c.b16 %v8837, %v8836
      %v8858 = vpack.c.b16 %v8839, %v8838
      %v8859 = vpack.c.b16 %v8841, %v8840
      %v8860 = vpack.c.b16 %v8843, %v8842
      %v8861 = vpack.c.b16 %v8845, %v8844
      %v8863 = vsel %vm5503, %v8846, 0
      %v8866 = vsel %vm5503, %v8847, 0
      %v8869 = vsel %vm5503, %v8848, 0
      %v8872 = vsel %vm5503, %v8849, 0
      %v8875 = vsel %vm5503, %v8850, 0
      %v8878 = vsel %vm5503, %v8851, 0
      %v8881 = vsel %vm5503, %v8852, 0
      %v8884 = vsel %vm5503, %v8853, 0
      %v8887 = vsel %vm5503, %v8854, 0
      %v8890 = vsel %vm5503, %v8855, 0
      %v8893 = vsel %vm5503, %v8856, 0
      %v8896 = vsel %vm5503, %v8857, 0
      %v8899 = vsel %vm5503, %v8858, 0
      %v8902 = vsel %vm5503, %v8859, 0
      %v8905 = vsel %vm5503, %v8860, 0
      %v8908 = vsel %vm5503, %v8861, 0
      %v8911 = vsel %vm5552, %v8813, 0
      %8913 = vmatprep.subr.bf16.mxu0 0
      %8914 = vmatpush1.bf16.msra.mxu0 %v8911
      %8915 = vmatprep.subr.bf16.mxu0 0
      %8916 = vmatpush1.bf16.msra.mxu0 0
      %8917 = vmatprep.subr.bf16.mxu0 0
      %8918 = vmatpush1.bf16.msra.mxu0 0
      %8919 = vmatprep.subr.bf16.mxu0 0
      %8920 = vmatpush1.bf16.msra.mxu0 0
      %8921 = vmatprep.subr.bf16.mxu0 0
      %8922 = vmatpush1.bf16.msra.mxu0 0
      %8923 = vmatprep.subr.bf16.mxu0 0
      %8924 = vmatpush1.bf16.msra.mxu0 0
      %8925 = vmatprep.subr.bf16.mxu0 0
      %8926 = vmatpush1.bf16.msra.mxu0 0
      %8927 = vmatprep.subr.bf16.mxu0 0
      %8928 = vmatpush1.bf16.msra.mxu0 0
      %8929 = vmatprep.subr.bf16.mxu0 0
      %8930 = vmatpush1.bf16.msra.mxu0 0
      %8931 = vmatprep.subr.bf16.mxu0 0
      %8932 = vmatpush1.bf16.msra.mxu0 0
      %8933 = vmatprep.subr.bf16.mxu0 0
      %8934 = vmatpush1.bf16.msra.mxu0 0
      %8935 = vmatprep.subr.bf16.mxu0 0
      %8936 = vmatpush1.bf16.msra.mxu0 0
      %8937 = vmatprep.subr.bf16.mxu0 0
      %8938 = vmatpush1.bf16.msra.mxu0 0
      %8939 = vmatprep.subr.bf16.mxu0 0
      %8940 = vmatpush1.bf16.msra.mxu0 0
      %8941 = vmatprep.subr.bf16.mxu0 0
      %8942 = vmatpush1.bf16.msra.mxu0 0
      %8943 = vmatprep.subr.bf16.mxu0 0
      %8944 = vmatpush1.bf16.msra.mxu0 0
      %8945 = vmatprep.mubr.bf16.mxu0 0
      %8946 = vmatmul.mubr.bf16.gmra.mrb[0].mxu0 %v8863
      %v8947 = vpop.f32.mrb[0].mxu0
      %v8948 = vadd.f32 0.0, %v8947
      %v8949 = vpop.f32.mrb[0].mxu0
      %v8950 = vpop.f32.mrb[0].mxu0
      %v8951 = vadd.f32 0.0, %v8950
      %v8952 = vpop.f32.mrb[0].mxu0
      %8953 = vmatprep.mubr.bf16.mxu0 0
      %8954 = vmatmul.mubr.bf16.gmra.mrb[0].mxu0 %v8866
      %v8955 = vpop.f32.mrb[0].mxu0
      %v8956 = vadd.f32 0.0, %v8955
      %v8957 = vpop.f32.mrb[0].mxu0
      %v8958 = vpop.f32.mrb[0].mxu0
      %v8959 = vadd.f32 0.0, %v8958
      %v8960 = vpop.f32.mrb[0].mxu0
      %8961 = vmatprep.mubr.bf16.mxu0 0
      %8962 = vmatmul.mubr.bf16.gmra.mrb[0].mxu0 %v8869
      %v8963 = vpop.f32.mrb[0].mxu0
      %v8964 = vadd.f32 0.0, %v8963
      %v8965 = vpop.f32.mrb[0].mxu0
      %v8966 = vpop.f32.mrb[0].mxu0
      %v8967 = vadd.f32 0.0, %v8966
      %v8968 = vpop.f32.mrb[0].mxu0
      %8969 = vmatprep.mubr.bf16.mxu0 0
      %8970 = vmatmul.mubr.bf16.gmra.mrb[0].mxu0 %v8872
      %v8971 = vpop.f32.mrb[0].mxu0
      %v8972 = vadd.f32 0.0, %v8971
      %v8973 = vpop.f32.mrb[0].mxu0
      %v8974 = vpop.f32.mrb[0].mxu0
      %v8975 = vadd.f32 0.0, %v8974
      %v8976 = vpop.f32.mrb[0].mxu0
      %8977 = vmatprep.mubr.bf16.mxu0 0
      %8978 = vmatmul.mubr.bf16.gmra.mrb[0].mxu0 %v8875
      %v8979 = vpop.f32.mrb[0].mxu0
      %v8980 = vadd.f32 0.0, %v8979
      %v8981 = vpop.f32.mrb[0].mxu0
      %v8982 = vpop.f32.mrb[0].mxu0
      %v8983 = vadd.f32 0.0, %v8982
      %v8984 = vpop.f32.mrb[0].mxu0
      %8985 = vmatprep.mubr.bf16.mxu0 0
      %8986 = vmatmul.mubr.bf16.gmra.mrb[0].mxu0 %v8878
      %v8987 = vpop.f32.mrb[0].mxu0
      %v8988 = vadd.f32 0.0, %v8987
      %v8989 = vpop.f32.mrb[0].mxu0
      %v8990 = vpop.f32.mrb[0].mxu0
      %v8991 = vadd.f32 0.0, %v8990
      %v8992 = vpop.f32.mrb[0].mxu0
      %8993 = vmatprep.mubr.bf16.mxu0 0
      %8994 = vmatmul.mubr.bf16.gmra.mrb[0].mxu0 %v8881
      %v8995 = vpop.f32.mrb[0].mxu0
      %v8996 = vadd.f32 0.0, %v8995
      %v8997 = vpop.f32.mrb[0].mxu0
      %v8998 = vpop.f32.mrb[0].mxu0
      %v8999 = vadd.f32 0.0, %v8998
      %v9000 = vpop.f32.mrb[0].mxu0
      %9001 = vmatprep.mubr.bf16.mxu0 0
      %9002 = vmatmul.mubr.bf16.gmra.mrb[0].mxu0 %v8884
      %v9003 = vpop.f32.mrb[0].mxu0
      %v9004 = vadd.f32 0.0, %v9003
      %v9005 = vpop.f32.mrb[0].mxu0
      %v9006 = vpop.f32.mrb[0].mxu0
      %v9007 = vadd.f32 0.0, %v9006
      %v9008 = vpop.f32.mrb[0].mxu0
      %9009 = vmatprep.mubr.bf16.mxu0 0
      %9010 = vmatmul.mubr.bf16.gmra.mrb[0].mxu0 %v8887
      %v9011 = vpop.f32.mrb[0].mxu0
      %v9012 = vadd.f32 0.0, %v9011
      %v9013 = vpop.f32.mrb[0].mxu0
      %v9014 = vpop.f32.mrb[0].mxu0
      %v9015 = vadd.f32 0.0, %v9014
      %v9016 = vpop.f32.mrb[0].mxu0
      %9017 = vmatprep.mubr.bf16.mxu0 0
      %9018 = vmatmul.mubr.bf16.gmra.mrb[0].mxu0 %v8890
      %v9019 = vpop.f32.mrb[0].mxu0
      %v9020 = vadd.f32 0.0, %v9019
      %v9021 = vpop.f32.mrb[0].mxu0
      %v9022 = vpop.f32.mrb[0].mxu0
      %v9023 = vadd.f32 0.0, %v9022
      %v9024 = vpop.f32.mrb[0].mxu0
      %9025 = vmatprep.mubr.bf16.mxu0 0
      %9026 = vmatmul.mubr.bf16.gmra.mrb[0].mxu0 %v8893
      %v9027 = vpop.f32.mrb[0].mxu0
      %v9028 = vadd.f32 0.0, %v9027
      %v9029 = vpop.f32.mrb[0].mxu0
      %v9030 = vpop.f32.mrb[0].mxu0
      %v9031 = vadd.f32 0.0, %v9030
      %v9032 = vpop.f32.mrb[0].mxu0
      %9033 = vmatprep.mubr.bf16.mxu0 0
      %9034 = vmatmul.mubr.bf16.gmra.mrb[0].mxu0 %v8896
      %v9035 = vpop.f32.mrb[0].mxu0
      %v9036 = vadd.f32 0.0, %v9035
      %v9037 = vpop.f32.mrb[0].mxu0
      %v9038 = vpop.f32.mrb[0].mxu0
      %v9039 = vadd.f32 0.0, %v9038
      %v9040 = vpop.f32.mrb[0].mxu0
      %9041 = vmatprep.mubr.bf16.mxu0 0
      %9042 = vmatmul.mubr.bf16.gmra.mrb[0].mxu0 %v8899
      %v9043 = vpop.f32.mrb[0].mxu0
      %v9044 = vadd.f32 0.0, %v9043
      %v9045 = vpop.f32.mrb[0].mxu0
      %v9046 = vpop.f32.mrb[0].mxu0
      %v9047 = vadd.f32 0.0, %v9046
      %v9048 = vpop.f32.mrb[0].mxu0
      %9049 = vmatprep.mubr.bf16.mxu0 0
      %9050 = vmatmul.mubr.bf16.gmra.mrb[0].mxu0 %v8902
      %v9051 = vpop.f32.mrb[0].mxu0
      %v9052 = vadd.f32 0.0, %v9051
      %v9053 = vpop.f32.mrb[0].mxu0
      %v9054 = vpop.f32.mrb[0].mxu0
      %v9055 = vadd.f32 0.0, %v9054
      %v9056 = vpop.f32.mrb[0].mxu0
      %9057 = vmatprep.mubr.bf16.mxu0 0
      %9058 = vmatmul.mubr.bf16.gmra.mrb[0].mxu0 %v8905
      %v9059 = vpop.f32.mrb[0].mxu0
      %v9060 = vadd.f32 0.0, %v9059
      %v9061 = vpop.f32.mrb[0].mxu0
      %v9062 = vpop.f32.mrb[0].mxu0
      %v9063 = vadd.f32 0.0, %v9062
      %v9064 = vpop.f32.mrb[0].mxu0
      %9065 = vmatprep.mubr.bf16.mxu0 0
      %9066 = vmatmul.mubr.bf16.gmra.mrb[0].mxu0 %v8908
      %v9067 = vpop.f32.mrb[0].mxu0
      %v9068 = vadd.f32 0.0, %v9067
      %v9069 = vpop.f32.mrb[0].mxu0
      %v9070 = vpop.f32.mrb[0].mxu0
      %v9071 = vadd.f32 0.0, %v9070
      %v9072 = vpop.f32.mrb[0].mxu0
      %9073 = vdwg.mxu0
      %v9074 = vadd.f32 %v8348, %v8948
      %v9075 = vadd.f32 %v8349, %v8951
      %v9076 = vadd.f32 %v8350, %v8956
      %v9077 = vadd.f32 %v8351, %v8959
      %v9078 = vadd.f32 %v8352, %v8964
      %v9079 = vadd.f32 %v8353, %v8967
      %v9080 = vadd.f32 %v8354, %v8972
      %v9081 = vadd.f32 %v8355, %v8975
      %v9082 = vadd.f32 %v8356, %v8980
      %v9083 = vadd.f32 %v8357, %v8983
      %v9084 = vadd.f32 %v8358, %v8988
      %v9085 = vadd.f32 %v8359, %v8991
      %v9086 = vadd.f32 %v8360, %v8996
      %v9087 = vadd.f32 %v8361, %v8999
      %v9088 = vadd.f32 %v8362, %v9004
      %v9089 = vadd.f32 %v8363, %v9007
      %v9090 = vadd.f32 %v8364, %v9012
      %v9091 = vadd.f32 %v8365, %v9015
      %v9092 = vadd.f32 %v8366, %v9020
      %v9093 = vadd.f32 %v8367, %v9023
      %v9094 = vadd.f32 %v8368, %v9028
      %v9095 = vadd.f32 %v8369, %v9031
      %v9096 = vadd.f32 %v8370, %v9036
      %v9097 = vadd.f32 %v8371, %v9039
      %v9098 = vadd.f32 %v8372, %v9044
      %v9099 = vadd.f32 %v8373, %v9047
      %v9100 = vadd.f32 %v8374, %v9052
      %v9101 = vadd.f32 %v8375, %v9055
      %v9102 = vadd.f32 %v8376, %v9060
      %v9103 = vadd.f32 %v8377, %v9063
      %v9104 = vadd.f32 %v8378, %v9068
      %v9105 = vadd.f32 %v8379, %v9071
      %v9106 = vld [vmem:[%s8021] sm:$0xe]
      %v9107 = vld [vmem:[%s8021 + $0xc] sm:$0xe]
      %v9108 = vld [vmem:[%s8021 + $0x18] sm:$0xe]
      %v9109 = vld [vmem:[%s8021 + $0x24] sm:$0xe]
      %v9110 = vld [vmem:[%s8021 + $0x30] sm:$0xe]
      %v9111 = vld [vmem:[%s8021 + $0x3c] sm:$0xe]
      %v9112 = vld [vmem:[%s8021 + $0x48] sm:$0xe]
      %v9113 = vld [vmem:[%s8021 + $0x54] sm:$0xe]
      %v9114 = vld [vmem:[%s8021 + $0x60] sm:$0xe]
      %v9115 = vld [vmem:[%s8021 + $0x6c] sm:$0xe]
      %v9116 = vld [vmem:[%s8021 + $0x78] sm:$0xe]
      %v9117 = vld [vmem:[%s8021 + $0x84] sm:$0xe]
      %v9118 = vld [vmem:[%s8021 + $0x90] sm:$0xe]
      %v9119 = vld [vmem:[%s8021 + $0x9c] sm:$0xe]
      %v9120 = vld [vmem:[%s8021 + $0xa8] sm:$0xe]
      %v9121 = vld [vmem:[%s8021 + $0xb4] sm:$0xe]
      %v9170 = vrot.slane %v9106, 5
      %v9171 = vrot.slane %v9170, 4
      %v9172 = vrot.slane %v8381, 5
      %v9173 = vsel %vm6059, %v9171, %v9172
      %v9174 = vrot.slane %v9172, 4
      %v9175 = vrot.slane %v8382, 5
      %v9176 = vsel %vm6059, %v9174, %v9175
      %v9177 = vrot.slane %v9107, 5
      %v9178 = vrot.slane %v9177, 4
      %v9179 = vrot.slane %v8384, 5
      %v9180 = vsel %vm6059, %v9178, %v9179
      %v9181 = vrot.slane %v9179, 4
      %v9182 = vrot.slane %v8385, 5
      %v9183 = vsel %vm6059, %v9181, %v9182
      %v9184 = vrot.slane %v9108, 5
      %v9185 = vrot.slane %v9184, 4
      %v9186 = vrot.slane %v8387, 5
      %v9187 = vsel %vm6059, %v9185, %v9186
      %v9188 = vrot.slane %v9186, 4
      %v9189 = vrot.slane %v8388, 5
      %v9190 = vsel %vm6059, %v9188, %v9189
      %v9191 = vrot.slane %v9109, 5
      %v9192 = vrot.slane %v9191, 4
      %v9193 = vrot.slane %v8390, 5
      %v9194 = vsel %vm6059, %v9192, %v9193
      %v9195 = vrot.slane %v9193, 4
      %v9196 = vrot.slane %v8391, 5
      %v9197 = vsel %vm6059, %v9195, %v9196
      %v9198 = vrot.slane %v9110, 5
      %v9199 = vrot.slane %v9198, 4
      %v9200 = vrot.slane %v8393, 5
      %v9201 = vsel %vm6059, %v9199, %v9200
      %v9202 = vrot.slane %v9200, 4
      %v9203 = vrot.slane %v8394, 5
      %v9204 = vsel %vm6059, %v9202, %v9203
      %v9205 = vrot.slane %v9111, 5
      %v9206 = vrot.slane %v9205, 4
      %v9207 = vrot.slane %v8396, 5
      %v9208 = vsel %vm6059, %v9206, %v9207
      %v9209 = vrot.slane %v9207, 4
      %v9210 = vrot.slane %v8397, 5
      %v9211 = vsel %vm6059, %v9209, %v9210
      %v9212 = vrot.slane %v9112, 5
      %v9213 = vrot.slane %v9212, 4
      %v9214 = vrot.slane %v8399, 5
      %v9215 = vsel %vm6059, %v9213, %v9214
      %v9216 = vrot.slane %v9214, 4
      %v9217 = vrot.slane %v8400, 5
      %v9218 = vsel %vm6059, %v9216, %v9217
      %v9219 = vrot.slane %v9113, 5
      %v9220 = vrot.slane %v9219, 4
      %v9221 = vrot.slane %v8402, 5
      %v9222 = vsel %vm6059, %v9220, %v9221
      %v9223 = vrot.slane %v9221, 4
      %v9224 = vrot.slane %v8403, 5
      %v9225 = vsel %vm6059, %v9223, %v9224
      %v9226 = vrot.slane %v9114, 5
      %v9227 = vrot.slane %v9226, 4
      %v9228 = vrot.slane %v8405, 5
      %v9229 = vsel %vm6059, %v9227, %v9228
      %v9230 = vrot.slane %v9228, 4
      %v9231 = vrot.slane %v8406, 5
      %v9232 = vsel %vm6059, %v9230, %v9231
      %v9233 = vrot.slane %v9115, 5
      %v9234 = vrot.slane %v9233, 4
      %v9235 = vrot.slane %v8408, 5
      %v9236 = vsel %vm6059, %v9234, %v9235
      %v9237 = vrot.slane %v9235, 4
      %v9238 = vrot.slane %v8409, 5
      %v9239 = vsel %vm6059, %v9237, %v9238
      %v9240 = vrot.slane %v9116, 5
      %v9241 = vrot.slane %v9240, 4
      %v9242 = vrot.slane %v8411, 5
      %v9243 = vsel %vm6059, %v9241, %v9242
      %v9244 = vrot.slane %v9242, 4
      %v9245 = vrot.slane %v8412, 5
      %v9246 = vsel %vm6059, %v9244, %v9245
      %v9247 = vrot.slane %v9117, 5
      %v9248 = vrot.slane %v9247, 4
      %v9249 = vrot.slane %v8414, 5
      %v9250 = vsel %vm6059, %v9248, %v9249
      %v9251 = vrot.slane %v9249, 4
      %v9252 = vrot.slane %v8415, 5
      %v9253 = vsel %vm6059, %v9251, %v9252
      %v9254 = vrot.slane %v9118, 5
      %v9255 = vrot.slane %v9254, 4
      %v9256 = vrot.slane %v8417, 5
      %v9257 = vsel %vm6059, %v9255, %v9256
      %v9258 = vrot.slane %v9256, 4
      %v9259 = vrot.slane %v8418, 5
      %v9260 = vsel %vm6059, %v9258, %v9259
      %v9261 = vrot.slane %v9119, 5
      %v9262 = vrot.slane %v9261, 4
      %v9263 = vrot.slane %v8420, 5
      %v9264 = vsel %vm6059, %v9262, %v9263
      %v9265 = vrot.slane %v9263, 4
      %v9266 = vrot.slane %v8421, 5
      %v9267 = vsel %vm6059, %v9265, %v9266
      %v9268 = vrot.slane %v9120, 5
      %v9269 = vrot.slane %v9268, 4
      %v9270 = vrot.slane %v8423, 5
      %v9271 = vsel %vm6059, %v9269, %v9270
      %v9272 = vrot.slane %v9270, 4
      %v9273 = vrot.slane %v8424, 5
      %v9274 = vsel %vm6059, %v9272, %v9273
      %v9275 = vrot.slane %v9121, 5
      %v9276 = vrot.slane %v9275, 4
      %v9277 = vrot.slane %v8426, 5
      %v9278 = vsel %vm6059, %v9276, %v9277
      %v9279 = vrot.slane %v9277, 4
      %v9280 = vrot.slane %v8427, 5
      %v9281 = vsel %vm6059, %v9279, %v9280
      %s9282 = scalar_lea.vmem %s3, 32
      %v9283 = vld [vmem:[%s9282] sm:$0xf]
      %v9284 = vunpack.c.l.b16 %v9173
      %v9285 = vunpack.c.l.b16 %v9176
      %v9286 = vunpack.c.l.b16 %v9180
      %v9287 = vunpack.c.l.b16 %v9183
      %v9288 = vunpack.c.l.b16 %v9187
      %v9289 = vunpack.c.l.b16 %v9190
      %v9290 = vunpack.c.l.b16 %v9194
      %v9291 = vunpack.c.l.b16 %v9197
      %v9292 = vunpack.c.l.b16 %v9201
      %v9293 = vunpack.c.l.b16 %v9204
      %v9294 = vunpack.c.l.b16 %v9208
      %v9295 = vunpack.c.l.b16 %v9211
      %v9296 = vunpack.c.l.b16 %v9215
      %v9297 = vunpack.c.l.b16 %v9218
      %v9298 = vunpack.c.l.b16 %v9222
      %v9299 = vunpack.c.l.b16 %v9225
      %v9300 = vunpack.c.l.b16 %v9229
      %v9301 = vunpack.c.l.b16 %v9232
      %v9302 = vunpack.c.l.b16 %v9236
      %v9303 = vunpack.c.l.b16 %v9239
      %v9304 = vunpack.c.l.b16 %v9243
      %v9305 = vunpack.c.l.b16 %v9246
      %v9306 = vunpack.c.l.b16 %v9250
      %v9307 = vunpack.c.l.b16 %v9253
      %v9308 = vunpack.c.l.b16 %v9257
      %v9309 = vunpack.c.l.b16 %v9260
      %v9310 = vunpack.c.l.b16 %v9264
      %v9311 = vunpack.c.l.b16 %v9267
      %v9312 = vunpack.c.l.b16 %v9271
      %v9313 = vunpack.c.l.b16 %v9274
      %v9314 = vunpack.c.l.b16 %v9278
      %v9315 = vunpack.c.l.b16 %v9281
      %v9316 = vpack.c.b16 %v9285, %v9284
      %v9317 = vpack.c.b16 %v9287, %v9286
      %v9318 = vpack.c.b16 %v9289, %v9288
      %v9319 = vpack.c.b16 %v9291, %v9290
      %v9320 = vpack.c.b16 %v9293, %v9292
      %v9321 = vpack.c.b16 %v9295, %v9294
      %v9322 = vpack.c.b16 %v9297, %v9296
      %v9323 = vpack.c.b16 %v9299, %v9298
      %v9324 = vpack.c.b16 %v9301, %v9300
      %v9325 = vpack.c.b16 %v9303, %v9302
      %v9326 = vpack.c.b16 %v9305, %v9304
      %v9327 = vpack.c.b16 %v9307, %v9306
      %v9328 = vpack.c.b16 %v9309, %v9308
      %v9329 = vpack.c.b16 %v9311, %v9310
      %v9330 = vpack.c.b16 %v9313, %v9312
      %v9331 = vpack.c.b16 %v9315, %v9314
      %v9333 = vsel %vm5503, %v9316, 0
      %v9336 = vsel %vm5503, %v9317, 0
      %v9339 = vsel %vm5503, %v9318, 0
      %v9342 = vsel %vm5503, %v9319, 0
      %v9345 = vsel %vm5503, %v9320, 0
      %v9348 = vsel %vm5503, %v9321, 0
      %v9351 = vsel %vm5503, %v9322, 0
      %v9354 = vsel %vm5503, %v9323, 0
      %v9357 = vsel %vm5503, %v9324, 0
      %v9360 = vsel %vm5503, %v9325, 0
      %v9363 = vsel %vm5503, %v9326, 0
      %v9366 = vsel %vm5503, %v9327, 0
      %v9369 = vsel %vm5503, %v9328, 0
      %v9372 = vsel %vm5503, %v9329, 0
      %v9375 = vsel %vm5503, %v9330, 0
      %v9378 = vsel %vm5503, %v9331, 0
      %v9381 = vsel %vm5552, %v9283, 0
      %9383 = vmatprep.subr.bf16.mxu0 0
      %9384 = vmatpush1.bf16.msra.mxu0 %v9381
      %9385 = vmatprep.subr.bf16.mxu0 0
      %9386 = vmatpush1.bf16.msra.mxu0 0
      %9387 = vmatprep.subr.bf16.mxu0 0
      %9388 = vmatpush1.bf16.msra.mxu0 0
      %9389 = vmatprep.subr.bf16.mxu0 0
      %9390 = vmatpush1.bf16.msra.mxu0 0
      %9391 = vmatprep.subr.bf16.mxu0 0
      %9392 = vmatpush1.bf16.msra.mxu0 0
      %9393 = vmatprep.subr.bf16.mxu0 0
      %9394 = vmatpush1.bf16.msra.mxu0 0
      %9395 = vmatprep.subr.bf16.mxu0 0
      %9396 = vmatpush1.bf16.msra.mxu0 0
      %9397 = vmatprep.subr.bf16.mxu0 0
      %9398 = vmatpush1.bf16.msra.mxu0 0
      %9399 = vmatprep.subr.bf16.mxu0 0
      %9400 = vmatpush1.bf16.msra.mxu0 0
      %9401 = vmatprep.subr.bf16.mxu0 0
      %9402 = vmatpush1.bf16.msra.mxu0 0
      %9403 = vmatprep.subr.bf16.mxu0 0
      %9404 = vmatpush1.bf16.msra.mxu0 0
      %9405 = vmatprep.subr.bf16.mxu0 0
      %9406 = vmatpush1.bf16.msra.mxu0 0
      %9407 = vmatprep.subr.bf16.mxu0 0
      %9408 = vmatpush1.bf16.msra.mxu0 0
      %9409 = vmatprep.subr.bf16.mxu0 0
      %9410 = vmatpush1.bf16.msra.mxu0 0
      %9411 = vmatprep.subr.bf16.mxu0 0
      %9412 = vmatpush1.bf16.msra.mxu0 0
      %9413 = vmatprep.subr.bf16.mxu0 0
      %9414 = vmatpush1.bf16.msra.mxu0 0
      %9415 = vmatprep.mubr.bf16.mxu0 0
      %9416 = vmatmul.mubr.bf16.gmra.mrb[0].mxu0 %v9333
      %v9417 = vpop.f32.mrb[0].mxu0
      %v9418 = vadd.f32 0.0, %v9417
      %v9419 = vpop.f32.mrb[0].mxu0
      %v9420 = vpop.f32.mrb[0].mxu0
      %v9421 = vadd.f32 0.0, %v9420
      %v9422 = vpop.f32.mrb[0].mxu0
      %9423 = vmatprep.mubr.bf16.mxu0 0
      %9424 = vmatmul.mubr.bf16.gmra.mrb[0].mxu0 %v9336
      %v9425 = vpop.f32.mrb[0].mxu0
      %v9426 = vadd.f32 0.0, %v9425
      %v9427 = vpop.f32.mrb[0].mxu0
      %v9428 = vpop.f32.mrb[0].mxu0
      %v9429 = vadd.f32 0.0, %v9428
      %v9430 = vpop.f32.mrb[0].mxu0
      %9431 = vmatprep.mubr.bf16.mxu0 0
      %9432 = vmatmul.mubr.bf16.gmra.mrb[0].mxu0 %v9339
      %v9433 = vpop.f32.mrb[0].mxu0
      %v9434 = vadd.f32 0.0, %v9433
      %v9435 = vpop.f32.mrb[0].mxu0
      %v9436 = vpop.f32.mrb[0].mxu0
      %v9437 = vadd.f32 0.0, %v9436
      %v9438 = vpop.f32.mrb[0].mxu0
      %9439 = vmatprep.mubr.bf16.mxu0 0
      %9440 = vmatmul.mubr.bf16.gmra.mrb[0].mxu0 %v9342
      %v9441 = vpop.f32.mrb[0].mxu0
      %v9442 = vadd.f32 0.0, %v9441
      %v9443 = vpop.f32.mrb[0].mxu0
      %v9444 = vpop.f32.mrb[0].mxu0
      %v9445 = vadd.f32 0.0, %v9444
      %v9446 = vpop.f32.mrb[0].mxu0
      %9447 = vmatprep.mubr.bf16.mxu0 0
      %9448 = vmatmul.mubr.bf16.gmra.mrb[0].mxu0 %v9345
      %v9449 = vpop.f32.mrb[0].mxu0
      %v9450 = vadd.f32 0.0, %v9449
      %v9451 = vpop.f32.mrb[0].mxu0
      %v9452 = vpop.f32.mrb[0].mxu0
      %v9453 = vadd.f32 0.0, %v9452
      %v9454 = vpop.f32.mrb[0].mxu0
      %9455 = vmatprep.mubr.bf16.mxu0 0
      %9456 = vmatmul.mubr.bf16.gmra.mrb[0].mxu0 %v9348
      %v9457 = vpop.f32.mrb[0].mxu0
      %v9458 = vadd.f32 0.0, %v9457
      %v9459 = vpop.f32.mrb[0].mxu0
      %v9460 = vpop.f32.mrb[0].mxu0
      %v9461 = vadd.f32 0.0, %v9460
      %v9462 = vpop.f32.mrb[0].mxu0
      %9463 = vmatprep.mubr.bf16.mxu0 0
      %9464 = vmatmul.mubr.bf16.gmra.mrb[0].mxu0 %v9351
      %v9465 = vpop.f32.mrb[0].mxu0
      %v9466 = vadd.f32 0.0, %v9465
      %v9467 = vpop.f32.mrb[0].mxu0
      %v9468 = vpop.f32.mrb[0].mxu0
      %v9469 = vadd.f32 0.0, %v9468
      %v9470 = vpop.f32.mrb[0].mxu0
      %9471 = vmatprep.mubr.bf16.mxu0 0
      %9472 = vmatmul.mubr.bf16.gmra.mrb[0].mxu0 %v9354
      %v9473 = vpop.f32.mrb[0].mxu0
      %v9474 = vadd.f32 0.0, %v9473
      %v9475 = vpop.f32.mrb[0].mxu0
      %v9476 = vpop.f32.mrb[0].mxu0
      %v9477 = vadd.f32 0.0, %v9476
      %v9478 = vpop.f32.mrb[0].mxu0
      %9479 = vmatprep.mubr.bf16.mxu0 0
      %9480 = vmatmul.mubr.bf16.gmra.mrb[0].mxu0 %v9357
      %v9481 = vpop.f32.mrb[0].mxu0
      %v9482 = vadd.f32 0.0, %v9481
      %v9483 = vpop.f32.mrb[0].mxu0
      %v9484 = vpop.f32.mrb[0].mxu0
      %v9485 = vadd.f32 0.0, %v9484
      %v9486 = vpop.f32.mrb[0].mxu0
      %9487 = vmatprep.mubr.bf16.mxu0 0
      %9488 = vmatmul.mubr.bf16.gmra.mrb[0].mxu0 %v9360
      %v9489 = vpop.f32.mrb[0].mxu0
      %v9490 = vadd.f32 0.0, %v9489
      %v9491 = vpop.f32.mrb[0].mxu0
      %v9492 = vpop.f32.mrb[0].mxu0
      %v9493 = vadd.f32 0.0, %v9492
      %v9494 = vpop.f32.mrb[0].mxu0
      %9495 = vmatprep.mubr.bf16.mxu0 0
      %9496 = vmatmul.mubr.bf16.gmra.mrb[0].mxu0 %v9363
      %v9497 = vpop.f32.mrb[0].mxu0
      %v9498 = vadd.f32 0.0, %v9497
      %v9499 = vpop.f32.mrb[0].mxu0
      %v9500 = vpop.f32.mrb[0].mxu0
      %v9501 = vadd.f32 0.0, %v9500
      %v9502 = vpop.f32.mrb[0].mxu0
      %9503 = vmatprep.mubr.bf16.mxu0 0
      %9504 = vmatmul.mubr.bf16.gmra.mrb[0].mxu0 %v9366
      %v9505 = vpop.f32.mrb[0].mxu0
      %v9506 = vadd.f32 0.0, %v9505
      %v9507 = vpop.f32.mrb[0].mxu0
      %v9508 = vpop.f32.mrb[0].mxu0
      %v9509 = vadd.f32 0.0, %v9508
      %v9510 = vpop.f32.mrb[0].mxu0
      %9511 = vmatprep.mubr.bf16.mxu0 0
      %9512 = vmatmul.mubr.bf16.gmra.mrb[0].mxu0 %v9369
      %v9513 = vpop.f32.mrb[0].mxu0
      %v9514 = vadd.f32 0.0, %v9513
      %v9515 = vpop.f32.mrb[0].mxu0
      %v9516 = vpop.f32.mrb[0].mxu0
      %v9517 = vadd.f32 0.0, %v9516
      %v9518 = vpop.f32.mrb[0].mxu0
      %9519 = vmatprep.mubr.bf16.mxu0 0
      %9520 = vmatmul.mubr.bf16.gmra.mrb[0].mxu0 %v9372
      %v9521 = vpop.f32.mrb[0].mxu0
      %v9522 = vadd.f32 0.0, %v9521
      %v9523 = vpop.f32.mrb[0].mxu0
      %v9524 = vpop.f32.mrb[0].mxu0
      %v9525 = vadd.f32 0.0, %v9524
      %v9526 = vpop.f32.mrb[0].mxu0
      %9527 = vmatprep.mubr.bf16.mxu0 0
      %9528 = vmatmul.mubr.bf16.gmra.mrb[0].mxu0 %v9375
      %v9529 = vpop.f32.mrb[0].mxu0
      %v9530 = vadd.f32 0.0, %v9529
      %v9531 = vpop.f32.mrb[0].mxu0
      %v9532 = vpop.f32.mrb[0].mxu0
      %v9533 = vadd.f32 0.0, %v9532
      %v9534 = vpop.f32.mrb[0].mxu0
      %9535 = vmatprep.mubr.bf16.mxu0 0
      %9536 = vmatmul.mubr.bf16.gmra.mrb[0].mxu0 %v9378
      %v9537 = vpop.f32.mrb[0].mxu0
      %v9538 = vadd.f32 0.0, %v9537
      %v9539 = vpop.f32.mrb[0].mxu0
      %v9540 = vpop.f32.mrb[0].mxu0
      %v9541 = vadd.f32 0.0, %v9540
      %v9542 = vpop.f32.mrb[0].mxu0
      %9543 = vdwg.mxu0
      %v9544 = vadd.f32 %v9074, %v9418
      %v9545 = vadd.f32 %v9075, %v9421
      %v9546 = vadd.f32 %v9076, %v9426
      %v9547 = vadd.f32 %v9077, %v9429
      %v9548 = vadd.f32 %v9078, %v9434
      %v9549 = vadd.f32 %v9079, %v9437
      %v9550 = vadd.f32 %v9080, %v9442
      %v9551 = vadd.f32 %v9081, %v9445
      %v9552 = vadd.f32 %v9082, %v9450
      %v9553 = vadd.f32 %v9083, %v9453
      %v9554 = vadd.f32 %v9084, %v9458
      %v9555 = vadd.f32 %v9085, %v9461
      %v9556 = vadd.f32 %v9086, %v9466
      %v9557 = vadd.f32 %v9087, %v9469
      %v9558 = vadd.f32 %v9088, %v9474
      %v9559 = vadd.f32 %v9089, %v9477
      %v9560 = vadd.f32 %v9090, %v9482
      %v9561 = vadd.f32 %v9091, %v9485
      %v9562 = vadd.f32 %v9092, %v9490
      %v9563 = vadd.f32 %v9093, %v9493
      %v9564 = vadd.f32 %v9094, %v9498
      %v9565 = vadd.f32 %v9095, %v9501
      %v9566 = vadd.f32 %v9096, %v9506
      %v9567 = vadd.f32 %v9097, %v9509
      %v9568 = vadd.f32 %v9098, %v9514
      %v9569 = vadd.f32 %v9099, %v9517
      %v9570 = vadd.f32 %v9100, %v9522
      %v9571 = vadd.f32 %v9101, %v9525
      %v9572 = vadd.f32 %v9102, %v9530
      %v9573 = vadd.f32 %v9103, %v9533
      %v9574 = vadd.f32 %v9104, %v9538
      %v9575 = vadd.f32 %v9105, %v9541
      %v9576 = vld [vmem:[%s4] sm:$0x1]
      %v9578 = vlaneseq
      %v9579 = vshrl.u32 %v9578, 7
      %v9580 = vsub.s32 0, %v9579
      %v9581 = vrot.slane %v9576, %v9580
      %v9583 = vadd.f32 %v9544, %v9581
      %v9584 = vadd.f32 %v9545, %v9581
      %v9585 = vadd.f32 %v9546, %v9581
      %v9586 = vadd.f32 %v9547, %v9581
      %v9587 = vadd.f32 %v9548, %v9581
      %v9588 = vadd.f32 %v9549, %v9581
      %v9589 = vadd.f32 %v9550, %v9581
      %v9590 = vadd.f32 %v9551, %v9581
      %v9591 = vadd.f32 %v9552, %v9581
      %v9592 = vadd.f32 %v9553, %v9581
      %v9593 = vadd.f32 %v9554, %v9581
      %v9594 = vadd.f32 %v9555, %v9581
      %v9595 = vadd.f32 %v9556, %v9581
      %v9596 = vadd.f32 %v9557, %v9581
      %v9597 = vadd.f32 %v9558, %v9581
      %v9598 = vadd.f32 %v9559, %v9581
      %v9599 = vadd.f32 %v9560, %v9581
      %v9600 = vadd.f32 %v9561, %v9581
      %v9601 = vadd.f32 %v9562, %v9581
      %v9602 = vadd.f32 %v9563, %v9581
      %v9603 = vadd.f32 %v9564, %v9581
      %v9604 = vadd.f32 %v9565, %v9581
      %v9605 = vadd.f32 %v9566, %v9581
      %v9606 = vadd.f32 %v9567, %v9581
      %v9607 = vadd.f32 %v9568, %v9581
      %v9608 = vadd.f32 %v9569, %v9581
      %v9609 = vadd.f32 %v9570, %v9581
      %v9610 = vadd.f32 %v9571, %v9581
      %v9611 = vadd.f32 %v9572, %v9581
      %v9612 = vadd.f32 %v9573, %v9581
      %v9613 = vadd.f32 %v9574, %v9581
      %v9614 = vadd.f32 %v9575, %v9581
      %vm9615 = vcmp.gt.f32.partialorder %v9583, 0.0
      %vm9616 = vcmp.gt.f32.partialorder %v9584, 0.0
      %vm9617 = vcmp.gt.f32.partialorder %v9585, 0.0
      %vm9618 = vcmp.gt.f32.partialorder %v9586, 0.0
      %vm9619 = vcmp.gt.f32.partialorder %v9587, 0.0
      %vm9620 = vcmp.gt.f32.partialorder %v9588, 0.0
      %vm9621 = vcmp.gt.f32.partialorder %v9589, 0.0
      %vm9622 = vcmp.gt.f32.partialorder %v9590, 0.0
      %vm9623 = vcmp.gt.f32.partialorder %v9591, 0.0
      %vm9624 = vcmp.gt.f32.partialorder %v9592, 0.0
      %vm9625 = vcmp.gt.f32.partialorder %v9593, 0.0
      %vm9626 = vcmp.gt.f32.partialorder %v9594, 0.0
      %vm9627 = vcmp.gt.f32.partialorder %v9595, 0.0
      %vm9628 = vcmp.gt.f32.partialorder %v9596, 0.0
      %vm9629 = vcmp.gt.f32.partialorder %v9597, 0.0
      %vm9630 = vcmp.gt.f32.partialorder %v9598, 0.0
      %vm9631 = vcmp.gt.f32.partialorder %v9599, 0.0
      %vm9632 = vcmp.gt.f32.partialorder %v9600, 0.0
      %vm9633 = vcmp.gt.f32.partialorder %v9601, 0.0
      %vm9634 = vcmp.gt.f32.partialorder %v9602, 0.0
      %vm9635 = vcmp.gt.f32.partialorder %v9603, 0.0
      %vm9636 = vcmp.gt.f32.partialorder %v9604, 0.0
      %vm9637 = vcmp.gt.f32.partialorder %v9605, 0.0
      %vm9638 = vcmp.gt.f32.partialorder %v9606, 0.0
      %vm9639 = vcmp.gt.f32.partialorder %v9607, 0.0
      %vm9640 = vcmp.gt.f32.partialorder %v9608, 0.0
      %vm9641 = vcmp.gt.f32.partialorder %v9609, 0.0
      %vm9642 = vcmp.gt.f32.partialorder %v9610, 0.0
      %vm9643 = vcmp.gt.f32.partialorder %v9611, 0.0
      %vm9644 = vcmp.gt.f32.partialorder %v9612, 0.0
      %vm9645 = vcmp.gt.f32.partialorder %v9613, 0.0
      %vm9646 = vcmp.gt.f32.partialorder %v9614, 0.0
      %v9647 = vmul.f32 %v9583, 0.01
      %v9648 = vmul.f32 %v9584, 0.01
      %v9649 = vmul.f32 %v9585, 0.01
      %v9650 = vmul.f32 %v9586, 0.01
      %v9651 = vmul.f32 %v9587, 0.01
      %v9652 = vmul.f32 %v9588, 0.01
      %v9653 = vmul.f32 %v9589, 0.01
      %v9654 = vmul.f32 %v9590, 0.01
      %v9655 = vmul.f32 %v9591, 0.01
      %v9656 = vmul.f32 %v9592, 0.01
      %v9657 = vmul.f32 %v9593, 0.01
      %v9658 = vmul.f32 %v9594, 0.01
      %v9659 = vmul.f32 %v9595, 0.01
      %v9660 = vmul.f32 %v9596, 0.01
      %v9661 = vmul.f32 %v9597, 0.01
      %v9662 = vmul.f32 %v9598, 0.01
      %v9663 = vmul.f32 %v9599, 0.01
      %v9664 = vmul.f32 %v9600, 0.01
      %v9665 = vmul.f32 %v9601, 0.01
      %v9666 = vmul.f32 %v9602, 0.01
      %v9667 = vmul.f32 %v9603, 0.01
      %v9668 = vmul.f32 %v9604, 0.01
      %v9669 = vmul.f32 %v9605, 0.01
      %v9670 = vmul.f32 %v9606, 0.01
      %v9671 = vmul.f32 %v9607, 0.01
      %v9672 = vmul.f32 %v9608, 0.01
      %v9673 = vmul.f32 %v9609, 0.01
      %v9674 = vmul.f32 %v9610, 0.01
      %v9675 = vmul.f32 %v9611, 0.01
      %v9676 = vmul.f32 %v9612, 0.01
      %v9677 = vmul.f32 %v9613, 0.01
      %v9678 = vmul.f32 %v9614, 0.01
      %v9679 = vsel %vm9615, %v9583, %v9647
      %v9680 = vsel %vm9616, %v9584, %v9648
      %v9681 = vsel %vm9617, %v9585, %v9649
      %v9682 = vsel %vm9618, %v9586, %v9650
      %v9683 = vsel %vm9619, %v9587, %v9651
      %v9684 = vsel %vm9620, %v9588, %v9652
      %v9685 = vsel %vm9621, %v9589, %v9653
      %v9686 = vsel %vm9622, %v9590, %v9654
      %v9687 = vsel %vm9623, %v9591, %v9655
      %v9688 = vsel %vm9624, %v9592, %v9656
      %v9689 = vsel %vm9625, %v9593, %v9657
      %v9690 = vsel %vm9626, %v9594, %v9658
      %v9691 = vsel %vm9627, %v9595, %v9659
      %v9692 = vsel %vm9628, %v9596, %v9660
      %v9693 = vsel %vm9629, %v9597, %v9661
      %v9694 = vsel %vm9630, %v9598, %v9662
      %v9695 = vsel %vm9631, %v9599, %v9663
      %v9696 = vsel %vm9632, %v9600, %v9664
      %v9697 = vsel %vm9633, %v9601, %v9665
      %v9698 = vsel %vm9634, %v9602, %v9666
      %v9699 = vsel %vm9635, %v9603, %v9667
      %v9700 = vsel %vm9636, %v9604, %v9668
      %v9701 = vsel %vm9637, %v9605, %v9669
      %v9702 = vsel %vm9638, %v9606, %v9670
      %v9703 = vsel %vm9639, %v9607, %v9671
      %v9704 = vsel %vm9640, %v9608, %v9672
      %v9705 = vsel %vm9641, %v9609, %v9673
      %v9706 = vsel %vm9642, %v9610, %v9674
      %v9707 = vsel %vm9643, %v9611, %v9675
      %v9708 = vsel %vm9644, %v9612, %v9676
      %v9709 = vsel %vm9645, %v9613, %v9677
      %v9710 = vsel %vm9646, %v9614, %v9678
      %v9711 = vld [vmem:[%s2994 + $0x2] sm:$0xff]
      %v9712 = vld [vmem:[%s2994 + $0xa] sm:$0xff]
      %v9713 = vld [vmem:[%s2994 + $0x22] sm:$0xff]
      %v9714 = vld [vmem:[%s2994 + $0x2a] sm:$0xff]
      %v9715 = vld [vmem:[%s2994 + $0x42] sm:$0xff]
      %v9716 = vld [vmem:[%s2994 + $0x4a] sm:$0xff]
      %v9717 = vld [vmem:[%s2994 + $0x62] sm:$0xff]
      %v9718 = vld [vmem:[%s2994 + $0x6a] sm:$0xff]
      %v9719 = vld [vmem:[%s2994 + $0x82] sm:$0xff]
      %v9720 = vld [vmem:[%s2994 + $0x8a] sm:$0xff]
      %v9721 = vld [vmem:[%s2994 + $0xa2] sm:$0xff]
      %v9722 = vld [vmem:[%s2994 + $0xaa] sm:$0xff]
      %v9723 = vld [vmem:[%s2994 + $0xc2] sm:$0xff]
      %v9724 = vld [vmem:[%s2994 + $0xca] sm:$0xff]
      %v9725 = vld [vmem:[%s2994 + $0xe2] sm:$0xff]
      %v9726 = vld [vmem:[%s2994 + $0xea] sm:$0xff]
      %v9727 = vld [vmem:[%s2994 + $0x102] sm:$0xff]
      %v9728 = vld [vmem:[%s2994 + $0x10a] sm:$0xff]
      %v9729 = vld [vmem:[%s2994 + $0x122] sm:$0xff]
      %v9730 = vld [vmem:[%s2994 + $0x12a] sm:$0xff]
      %v9731 = vld [vmem:[%s2994 + $0x142] sm:$0xff]
      %v9732 = vld [vmem:[%s2994 + $0x14a] sm:$0xff]
      %v9733 = vld [vmem:[%s2994 + $0x162] sm:$0xff]
      %v9734 = vld [vmem:[%s2994 + $0x16a] sm:$0xff]
      %v9735 = vld [vmem:[%s2994 + $0x182] sm:$0xff]
      %v9736 = vld [vmem:[%s2994 + $0x18a] sm:$0xff]
      %v9737 = vld [vmem:[%s2994 + $0x1a2] sm:$0xff]
      %v9738 = vld [vmem:[%s2994 + $0x1aa] sm:$0xff]
      %v9739 = vld [vmem:[%s2994 + $0x1c2] sm:$0xff]
      %v9740 = vld [vmem:[%s2994 + $0x1ca] sm:$0xff]
      %v9741 = vld [vmem:[%s2994 + $0x1e2] sm:$0xff]
      %v9742 = vld [vmem:[%s2994 + $0x1ea] sm:$0xff]
      %v9743 = vpack.c.bf16 %v9712, %v9711
      %v9744 = vpack.c.bf16 %v9714, %v9713
      %v9745 = vpack.c.bf16 %v9716, %v9715
      %v9746 = vpack.c.bf16 %v9718, %v9717
      %v9747 = vpack.c.bf16 %v9720, %v9719
      %v9748 = vpack.c.bf16 %v9722, %v9721
      %v9749 = vpack.c.bf16 %v9724, %v9723
      %v9750 = vpack.c.bf16 %v9726, %v9725
      %v9751 = vpack.c.bf16 %v9728, %v9727
      %v9752 = vpack.c.bf16 %v9730, %v9729
      %v9753 = vpack.c.bf16 %v9732, %v9731
      %v9754 = vpack.c.bf16 %v9734, %v9733
      %v9755 = vpack.c.bf16 %v9736, %v9735
      %v9756 = vpack.c.bf16 %v9738, %v9737
      %v9757 = vpack.c.bf16 %v9740, %v9739
      %v9758 = vpack.c.bf16 %v9742, %v9741
      %v9759 = vld [vmem:[%s5] sm:$0x3]
      %v9760 = vld [vmem:[%s6] sm:$0x1]
      %v9762 = vlaneseq
      %v9763 = vshrl.u32 %v9762, 7
      %v9764 = vsub.s32 0, %v9763
      %v9765 = vrot.slane %v9760, %v9764
      %v9768 = vsel %vm445, %v9743, 0
      %v9771 = vsel %vm445, %v9744, 0
      %v9774 = vsel %vm445, %v9745, 0
      %v9777 = vsel %vm445, %v9746, 0
      %v9780 = vsel %vm445, %v9747, 0
      %v9783 = vsel %vm445, %v9748, 0
      %v9786 = vsel %vm445, %v9749, 0
      %v9789 = vsel %vm445, %v9750, 0
      %v9792 = vsel %vm445, %v9751, 0
      %v9795 = vsel %vm445, %v9752, 0
      %v9798 = vsel %vm445, %v9753, 0
      %v9801 = vsel %vm445, %v9754, 0
      %v9804 = vsel %vm445, %v9755, 0
      %v9807 = vsel %vm445, %v9756, 0
      %v9810 = vsel %vm445, %v9757, 0
      %v9813 = vsel %vm445, %v9758, 0
      %v9816 = vsel %vm527, %v9759, 0
      %9818 = vmatprep.subr.bf16.mxu0 0
      %9819 = vmatpush1.bf16.msra.mxu0 %v9816
      %9820 = vmatprep.subr.bf16.mxu0 0
      %9821 = vmatpush1.bf16.msra.mxu0 0
      %9822 = vmatprep.subr.bf16.mxu0 0
      %9823 = vmatpush1.bf16.msra.mxu0 0
      %9824 = vmatprep.subr.bf16.mxu0 0
      %9825 = vmatpush1.bf16.msra.mxu0 0
      %9826 = vmatprep.subr.bf16.mxu0 0
      %9827 = vmatpush1.bf16.msra.mxu0 0
      %9828 = vmatprep.subr.bf16.mxu0 0
      %9829 = vmatpush1.bf16.msra.mxu0 0
      %9830 = vmatprep.subr.bf16.mxu0 0
      %9831 = vmatpush1.bf16.msra.mxu0 0
      %9832 = vmatprep.subr.bf16.mxu0 0
      %9833 = vmatpush1.bf16.msra.mxu0 0
      %9834 = vmatprep.subr.bf16.mxu0 0
      %9835 = vmatpush1.bf16.msra.mxu0 0
      %9836 = vmatprep.subr.bf16.mxu0 0
      %9837 = vmatpush1.bf16.msra.mxu0 0
      %9838 = vmatprep.subr.bf16.mxu0 0
      %9839 = vmatpush1.bf16.msra.mxu0 0
      %9840 = vmatprep.subr.bf16.mxu0 0
      %9841 = vmatpush1.bf16.msra.mxu0 0
      %9842 = vmatprep.subr.bf16.mxu0 0
      %9843 = vmatpush1.bf16.msra.mxu0 0
      %9844 = vmatprep.subr.bf16.mxu0 0
      %9845 = vmatpush1.bf16.msra.mxu0 0
      %9846 = vmatprep.subr.bf16.mxu0 0
      %9847 = vmatpush1.bf16.msra.mxu0 0
      %9848 = vmatprep.subr.bf16.mxu0 0
      %9849 = vmatpush1.bf16.msra.mxu0 0
      %9850 = vmatprep.mubr.bf16.mxu0 0
      %9851 = vmatmul.mubr.bf16.gmra.mrb[0].mxu0 %v9768
      %v9852 = vpop.f32.mrb[0].mxu0
      %v9853 = vadd.f32 %v9765, %v9852
      %v9854 = vpop.f32.mrb[0].mxu0
      %v9855 = vpop.f32.mrb[0].mxu0
      %v9856 = vadd.f32 %v9765, %v9855
      %v9857 = vpop.f32.mrb[0].mxu0
      %9858 = vmatprep.mubr.bf16.mxu0 0
      %9859 = vmatmul.mubr.bf16.gmra.mrb[0].mxu0 %v9771
      %v9860 = vpop.f32.mrb[0].mxu0
      %v9861 = vadd.f32 %v9765, %v9860
      %v9862 = vpop.f32.mrb[0].mxu0
      %v9863 = vpop.f32.mrb[0].mxu0
      %v9864 = vadd.f32 %v9765, %v9863
      %v9865 = vpop.f32.mrb[0].mxu0
      %9866 = vmatprep.mubr.bf16.mxu0 0
      %9867 = vmatmul.mubr.bf16.gmra.mrb[0].mxu0 %v9774
      %v9868 = vpop.f32.mrb[0].mxu0
      %v9869 = vadd.f32 %v9765, %v9868
      %v9870 = vpop.f32.mrb[0].mxu0
      %v9871 = vpop.f32.mrb[0].mxu0
      %v9872 = vadd.f32 %v9765, %v9871
      %v9873 = vpop.f32.mrb[0].mxu0
      %9874 = vmatprep.mubr.bf16.mxu0 0
      %9875 = vmatmul.mubr.bf16.gmra.mrb[0].mxu0 %v9777
      %v9876 = vpop.f32.mrb[0].mxu0
      %v9877 = vadd.f32 %v9765, %v9876
      %v9878 = vpop.f32.mrb[0].mxu0
      %v9879 = vpop.f32.mrb[0].mxu0
      %v9880 = vadd.f32 %v9765, %v9879
      %v9881 = vpop.f32.mrb[0].mxu0
      %9882 = vmatprep.mubr.bf16.mxu0 0
      %9883 = vmatmul.mubr.bf16.gmra.mrb[0].mxu0 %v9780
      %v9884 = vpop.f32.mrb[0].mxu0
      %v9885 = vadd.f32 %v9765, %v9884
      %v9886 = vpop.f32.mrb[0].mxu0
      %v9887 = vpop.f32.mrb[0].mxu0
      %v9888 = vadd.f32 %v9765, %v9887
      %v9889 = vpop.f32.mrb[0].mxu0
      %9890 = vmatprep.mubr.bf16.mxu0 0
      %9891 = vmatmul.mubr.bf16.gmra.mrb[0].mxu0 %v9783
      %v9892 = vpop.f32.mrb[0].mxu0
      %v9893 = vadd.f32 %v9765, %v9892
      %v9894 = vpop.f32.mrb[0].mxu0
      %v9895 = vpop.f32.mrb[0].mxu0
      %v9896 = vadd.f32 %v9765, %v9895
      %v9897 = vpop.f32.mrb[0].mxu0
      %9898 = vmatprep.mubr.bf16.mxu0 0
      %9899 = vmatmul.mubr.bf16.gmra.mrb[0].mxu0 %v9786
      %v9900 = vpop.f32.mrb[0].mxu0
      %v9901 = vadd.f32 %v9765, %v9900
      %v9902 = vpop.f32.mrb[0].mxu0
      %v9903 = vpop.f32.mrb[0].mxu0
      %v9904 = vadd.f32 %v9765, %v9903
      %v9905 = vpop.f32.mrb[0].mxu0
      %9906 = vmatprep.mubr.bf16.mxu0 0
      %9907 = vmatmul.mubr.bf16.gmra.mrb[0].mxu0 %v9789
      %v9908 = vpop.f32.mrb[0].mxu0
      %v9909 = vadd.f32 %v9765, %v9908
      %v9910 = vpop.f32.mrb[0].mxu0
      %v9911 = vpop.f32.mrb[0].mxu0
      %v9912 = vadd.f32 %v9765, %v9911
      %v9913 = vpop.f32.mrb[0].mxu0
      %9914 = vmatprep.mubr.bf16.mxu0 0
      %9915 = vmatmul.mubr.bf16.gmra.mrb[0].mxu0 %v9792
      %v9916 = vpop.f32.mrb[0].mxu0
      %v9917 = vadd.f32 %v9765, %v9916
      %v9918 = vpop.f32.mrb[0].mxu0
      %v9919 = vpop.f32.mrb[0].mxu0
      %v9920 = vadd.f32 %v9765, %v9919
      %v9921 = vpop.f32.mrb[0].mxu0
      %9922 = vmatprep.mubr.bf16.mxu0 0
      %9923 = vmatmul.mubr.bf16.gmra.mrb[0].mxu0 %v9795
      %v9924 = vpop.f32.mrb[0].mxu0
      %v9925 = vadd.f32 %v9765, %v9924
      %v9926 = vpop.f32.mrb[0].mxu0
      %v9927 = vpop.f32.mrb[0].mxu0
      %v9928 = vadd.f32 %v9765, %v9927
      %v9929 = vpop.f32.mrb[0].mxu0
      %9930 = vmatprep.mubr.bf16.mxu0 0
      %9931 = vmatmul.mubr.bf16.gmra.mrb[0].mxu0 %v9798
      %v9932 = vpop.f32.mrb[0].mxu0
      %v9933 = vadd.f32 %v9765, %v9932
      %v9934 = vpop.f32.mrb[0].mxu0
      %v9935 = vpop.f32.mrb[0].mxu0
      %v9936 = vadd.f32 %v9765, %v9935
      %v9937 = vpop.f32.mrb[0].mxu0
      %9938 = vmatprep.mubr.bf16.mxu0 0
      %9939 = vmatmul.mubr.bf16.gmra.mrb[0].mxu0 %v9801
      %v9940 = vpop.f32.mrb[0].mxu0
      %v9941 = vadd.f32 %v9765, %v9940
      %v9942 = vpop.f32.mrb[0].mxu0
      %v9943 = vpop.f32.mrb[0].mxu0
      %v9944 = vadd.f32 %v9765, %v9943
      %v9945 = vpop.f32.mrb[0].mxu0
      %9946 = vmatprep.mubr.bf16.mxu0 0
      %9947 = vmatmul.mubr.bf16.gmra.mrb[0].mxu0 %v9804
      %v9948 = vpop.f32.mrb[0].mxu0
      %v9949 = vadd.f32 %v9765, %v9948
      %v9950 = vpop.f32.mrb[0].mxu0
      %v9951 = vpop.f32.mrb[0].mxu0
      %v9952 = vadd.f32 %v9765, %v9951
      %v9953 = vpop.f32.mrb[0].mxu0
      %9954 = vmatprep.mubr.bf16.mxu0 0
      %9955 = vmatmul.mubr.bf16.gmra.mrb[0].mxu0 %v9807
      %v9956 = vpop.f32.mrb[0].mxu0
      %v9957 = vadd.f32 %v9765, %v9956
      %v9958 = vpop.f32.mrb[0].mxu0
      %v9959 = vpop.f32.mrb[0].mxu0
      %v9960 = vadd.f32 %v9765, %v9959
      %v9961 = vpop.f32.mrb[0].mxu0
      %9962 = vmatprep.mubr.bf16.mxu0 0
      %9963 = vmatmul.mubr.bf16.gmra.mrb[0].mxu0 %v9810
      %v9964 = vpop.f32.mrb[0].mxu0
      %v9965 = vadd.f32 %v9765, %v9964
      %v9966 = vpop.f32.mrb[0].mxu0
      %v9967 = vpop.f32.mrb[0].mxu0
      %v9968 = vadd.f32 %v9765, %v9967
      %v9969 = vpop.f32.mrb[0].mxu0
      %9970 = vmatprep.mubr.bf16.mxu0 0
      %9971 = vmatmul.mubr.bf16.gmra.mrb[0].mxu0 %v9813
      %v9972 = vpop.f32.mrb[0].mxu0
      %v9973 = vadd.f32 %v9765, %v9972
      %v9974 = vpop.f32.mrb[0].mxu0
      %v9975 = vpop.f32.mrb[0].mxu0
      %v9976 = vadd.f32 %v9765, %v9975
      %v9977 = vpop.f32.mrb[0].mxu0
      %9978 = vdwg.mxu0
      %v9979 = vadd.f32 %v9679, %v9853
      %v9980 = vadd.f32 %v9680, %v9856
      %v9981 = vadd.f32 %v9681, %v9861
      %v9982 = vadd.f32 %v9682, %v9864
      %v9983 = vadd.f32 %v9683, %v9869
      %v9984 = vadd.f32 %v9684, %v9872
      %v9985 = vadd.f32 %v9685, %v9877
      %v9986 = vadd.f32 %v9686, %v9880
      %v9987 = vadd.f32 %v9687, %v9885
      %v9988 = vadd.f32 %v9688, %v9888
      %v9989 = vadd.f32 %v9689, %v9893
      %v9990 = vadd.f32 %v9690, %v9896
      %v9991 = vadd.f32 %v9691, %v9901
      %v9992 = vadd.f32 %v9692, %v9904
      %v9993 = vadd.f32 %v9693, %v9909
      %v9994 = vadd.f32 %v9694, %v9912
      %v9995 = vadd.f32 %v9695, %v9917
      %v9996 = vadd.f32 %v9696, %v9920
      %v9997 = vadd.f32 %v9697, %v9925
      %v9998 = vadd.f32 %v9698, %v9928
      %v9999 = vadd.f32 %v9699, %v9933
      %v10000 = vadd.f32 %v9700, %v9936
      %v10001 = vadd.f32 %v9701, %v9941
      %v10002 = vadd.f32 %v9702, %v9944
      %v10003 = vadd.f32 %v9703, %v9949
      %v10004 = vadd.f32 %v9704, %v9952
      %v10005 = vadd.f32 %v9705, %v9957
      %v10006 = vadd.f32 %v9706, %v9960
      %v10007 = vadd.f32 %v9707, %v9965
      %v10008 = vadd.f32 %v9708, %v9968
      %v10009 = vadd.f32 %v9709, %v9973
      %v10010 = vadd.f32 %v9710, %v9976
      %10011 = vst.msk [vmem:[%s278] sm:$0xff] %vm5503, %v9979
      %10012 = vst.msk [vmem:[%s278 + $0x8] sm:$0xff] %vm5503, %v9980
      %10013 = vst.msk [vmem:[%s278 + $0x10] sm:$0xff] %vm5503, %v9981
      %10014 = vst.msk [vmem:[%s278 + $0x18] sm:$0xff] %vm5503, %v9982
      %10015 = vst.msk [vmem:[%s278 + $0x20] sm:$0xff] %vm5503, %v9983
      %10016 = vst.msk [vmem:[%s278 + $0x28] sm:$0xff] %vm5503, %v9984
      %10017 = vst.msk [vmem:[%s278 + $0x30] sm:$0xff] %vm5503, %v9985
      %10018 = vst.msk [vmem:[%s278 + $0x38] sm:$0xff] %vm5503, %v9986
      %10019 = vst.msk [vmem:[%s278 + $0x40] sm:$0xff] %vm5503, %v9987
      %10020 = vst.msk [vmem:[%s278 + $0x48] sm:$0xff] %vm5503, %v9988
      %10021 = vst.msk [vmem:[%s278 + $0x50] sm:$0xff] %vm5503, %v9989
      %10022 = vst.msk [vmem:[%s278 + $0x58] sm:$0xff] %vm5503, %v9990
      %10023 = vst.msk [vmem:[%s278 + $0x60] sm:$0xff] %vm5503, %v9991
      %10024 = vst.msk [vmem:[%s278 + $0x68] sm:$0xff] %vm5503, %v9992
      %10025 = vst.msk [vmem:[%s278 + $0x70] sm:$0xff] %vm5503, %v9993
      %10026 = vst.msk [vmem:[%s278 + $0x78] sm:$0xff] %vm5503, %v9994
      %10027 = vst.msk [vmem:[%s278 + $0x80] sm:$0xff] %vm5503, %v9995
      %10028 = vst.msk [vmem:[%s278 + $0x88] sm:$0xff] %vm5503, %v9996
      %10029 = vst.msk [vmem:[%s278 + $0x90] sm:$0xff] %vm5503, %v9997
      %10030 = vst.msk [vmem:[%s278 + $0x98] sm:$0xff] %vm5503, %v9998
      %10031 = vst.msk [vmem:[%s278 + $0xa0] sm:$0xff] %vm5503, %v9999
      %10032 = vst.msk [vmem:[%s278 + $0xa8] sm:$0xff] %vm5503, %v10000
      %10033 = vst.msk [vmem:[%s278 + $0xb0] sm:$0xff] %vm5503, %v10001
      %10034 = vst.msk [vmem:[%s278 + $0xb8] sm:$0xff] %vm5503, %v10002
      %10035 = vst.msk [vmem:[%s278 + $0xc0] sm:$0xff] %vm5503, %v10003
      %10036 = vst.msk [vmem:[%s278 + $0xc8] sm:$0xff] %vm5503, %v10004
      %10037 = vst.msk [vmem:[%s278 + $0xd0] sm:$0xff] %vm5503, %v10005
      %10038 = vst.msk [vmem:[%s278 + $0xd8] sm:$0xff] %vm5503, %v10006
      %10039 = vst.msk [vmem:[%s278 + $0xe0] sm:$0xff] %vm5503, %v10007
      %10040 = vst.msk [vmem:[%s278 + $0xe8] sm:$0xff] %vm5503, %v10008
      %10041 = vst.msk [vmem:[%s278 + $0xf0] sm:$0xff] %vm5503, %v10009
      %10042 = vst.msk [vmem:[%s278 + $0xf8] sm:$0xff] %vm5503, %v10010
      %p10043 = scmp.lt.s32.totalorder %s18, 1
      %s10044 = scalar_select %p10043, %s18, 1
      %s10045 = smul.addr %s10044, 32
      %s10046 = smul.addr %s10045, 8
      %s10047 = scalar_lea.vmem %s7, %s10046
      // Predicated region
      $region49: #{tpu_custom_call.1} parent=47 // pred_check
        %p10048 = pneg %p188
      $region50: #{tpu_custom_call.1} parent=47 // pred_check_branch
        %10050 = sbr.rel (%p10048) target = $region52
      $region51: #{tpu_custom_call.1} parent=47 // pred_region
        _
      $region52: #{tpu_custom_call.1} parent=47 // pred_fallthru
        _
    $region48: #{tpu_custom_call.1} parent=5 // pred_fallthru
      _
    %p10051 = scmp.le.s32.totalorder 2, %s13
    // Predicated region
    $region53: #{tpu_custom_call.1} parent=5 // pred_check
      %p10052 = pneg %p10051
    $region54: #{tpu_custom_call.1} parent=5 // pred_check_branch
      %10054 = sbr.rel (%p10052) target = $region56
    $region55: #{tpu_custom_call.1} parent=5 // pred_region
      %s10055 = ssub.s32 %s13, 2
      // Predicated region
      $region57: #{tpu_custom_call.1} parent=55 // pred_check
        %p10056 = pneg %p194
      $region58: #{tpu_custom_call.1} parent=55 // pred_check_branch
        %10058 = sbr.rel (%p10056) target = $region60
      $region59: #{tpu_custom_call.1} parent=55 // pred_region
        %p10059 = scmp.lt.s32.totalorder %s19, 1
        %s10060 = scalar_select %p10059, %s19, 1
        %s10061 = smul.addr %s10060, 32
        %s10062 = smul.addr %s10061, 8
        %s10063 = scalar_lea.vmem %s7, %s10062
      $region60: #{tpu_custom_call.1} parent=55 // pred_fallthru
        _
    $region56: #{tpu_custom_call.1} parent=5 // pred_fallthru
      _
  $region6: #{tpu_custom_call.1} parent=0 // loop_footer
    %s17 = sadd.s32 1, %s13
  $region7: #{tpu_custom_call.1} parent=0 // loop_footer_branch
    %12 = sbr.rel target = $region3
  $region8: #{tpu_custom_call.1} parent=0 // loop_exit
    _

</llo_original>
